<compile_context>
chip_gen: v5e
topology: v5e:2x2
jax: 0.10.0
libtpu: 0.0.40
codegen_flags: <defaults>
</compile_context>

<pallas_src>
import functools

import jax
import jax.numpy as jnp
from jax import lax
from jax.experimental import pallas as pl
from jax.experimental.pallas import tpu as pltpu

_BN_EPS = 1e-5
_LANES = 128                      # lane width: pad matmul N to a multiple of this
_TM_MAX = 512                     # row-tile size (fits comfortably in 64 MiB VMEM on v7x)
_VMEM_LIMIT_BYTES = 48 * 1024 * 1024


def _ceil_to(n, m):
    return ((n + m - 1) // m) * m


def _sigmoid_fast(x):
    # exp and the approximate reciprocal both execute on the EUP slot, keeping
    # the LSTM's serial critical path off the VPU divide.
    return pl.reciprocal(1.0 + jnp.exp(-x), approx=True)


# ---------------- Pallas kernels ----------------

def _mm_scale_bias_act_kernel(x_ref, w_ref, s_ref, b_ref, o_ref, *, act):
    # x: (TM, K) bf16 row tile, w: (K, N) bf16 resident, s/b: (1, N) f32.
    y = jnp.dot(x_ref[...], w_ref[...], preferred_element_type=jnp.float32)
    y = y * s_ref[...] + b_ref[...]
    if act == 'relu':
        y = jnp.maximum(y, 0.0)
    elif act == 'sigmoid':
        # exact sigmoid on the (small) final head outputs to preserve [0,1] range
        y = 1.0 / (1.0 + jnp.exp(-y))
    o_ref[...] = y.astype(o_ref.dtype)


def _lstm_direction_kernel(xp_ref, wh_ref, o_ref):
    # One LSTM direction per grid program (program 0 = forward, 1 = backward).
    # The two programs are independent -> "parallel" (v7x can split them over
    # its two TensorCores).
    #   xp_ref: (T, B, 4H) f32, precomputed x_t @ W_ih + (b_ih + b_hh),
    #           gate order i, f, g, o (PyTorch nn.LSTM order)
    #   wh_ref: (H, 4H) bf16 fused recurrent weights
    #   o_ref : (T, B, H) f32 hidden states for this direction
    T, B, G4 = xp_ref.shape
    H = G4 // 4
    direction = pl.program_id(0)
    wh = wh_ref[...]                      # hoisted out of the recurrence

    def step(s, carry):
        h, c = carry
        t = jnp.where(direction == 0, s, T - 1 - s)
        g = xp_ref[t] + jnp.dot(h.astype(jnp.bfloat16), wh,
                                preferred_element_type=jnp.float32)
        i = _sigmoid_fast(g[:, 0 * H:1 * H])
        f = _sigmoid_fast(g[:, 1 * H:2 * H])
        gg = jnp.tanh(g[:, 2 * H:3 * H])
        o = _sigmoid_fast(g[:, 3 * H:4 * H])
        c_new = f * c + i * gg
        h_new = o * jnp.tanh(c_new)
        o_ref[t] = h_new
        return (h_new, c_new)

    h0 = jnp.zeros((B, H), jnp.float32)
    lax.fori_loop(0, T, step, (h0, h0))


# ---------------- wrappers (glue + pallas_call) ----------------

def _matmul_fused(x, w, scale, bias, *, act='none', out_dtype=jnp.float32,
                  pad_lanes=True):
    """y = act((x @ w) * scale + bias), row-tiled on the MXU.

    x: (M, K); w: (K, N); scale, bias: (1, N).  Operands are fed to the MXU in
    bfloat16; accumulation and the scale/bias/activation epilogue are f32.
    If pad_lanes, N is zero-padded to a multiple of 128 for lane-dense stores
    and sliced back afterwards.
    """
    M, K = x.shape
    N = w.shape[1]
    Np = _ceil_to(N, _LANES) if pad_lanes else N
    if Np != N:
        w = jnp.pad(w, ((0, 0), (0, Np - N)))
        scale = jnp.pad(scale, ((0, 0), (0, Np - N)))
        bias = jnp.pad(bias, ((0, 0), (0, Np - N)))
    TM = _TM_MAX if M >= _TM_MAX else _ceil_to(M, 8)
    Mp = _ceil_to(M, TM)
    if Mp != M:
        x = jnp.pad(x, ((0, Mp - M), (0, 0)))

    xb = x.astype(jnp.bfloat16)
    wb = w.astype(jnp.bfloat16)
    sf = scale.astype(jnp.float32)
    bf = bias.astype(jnp.float32)

    kern = functools.partial(_mm_scale_bias_act_kernel, act=act)
    y = pl.pallas_call(
        kern,
        out_shape=jax.ShapeDtypeStruct((Mp, Np), out_dtype),
        grid=(Mp // TM,),
        in_specs=[
            pl.BlockSpec((TM, K), lambda i: (i, 0)),   # row tile, streamed/pipelined
            pl.BlockSpec((K, Np), lambda i: (0, 0)),   # weights resident in VMEM
            pl.BlockSpec((1, Np), lambda i: (0, 0)),
            pl.BlockSpec((1, Np), lambda i: (0, 0)),
        ],
        out_specs=pl.BlockSpec((TM, Np), lambda i: (i, 0)),
        compiler_params=pltpu.CompilerParams(
            dimension_semantics=("parallel",),
            vmem_limit_bytes=_VMEM_LIMIT_BYTES),
    )(xb, wb, sf, bf)
    if Mp != M or Np != N:
        y = y[:M, :N]
    return y


def _im2col_3x3(x):
    # (B, T, F, C) -> (B*T*F, 9*C); tap order (dy, dx, cin), padding=1.
    B, T, F, C = x.shape
    xp = jnp.pad(x, ((0, 0), (1, 1), (1, 1), (0, 0)))
    cols = [xp[:, dy:dy + T, dx:dx + F, :] for dy in range(3) for dx in range(3)]
    return jnp.concatenate(cols, axis=-1).reshape(B * T * F, 9 * C)


def conv3x3_bn_relu(x, W, scale, bias):
    # Conv2d(3x3, padding=1) + folded BatchNorm2d(eval) + ReLU, channels-last.
    B, T, F, _ = x.shape
    patches = _im2col_3x3(x)             # (B*T*F, 9*Cin), bf16
    # TODO(synk): move the im2col taps inside the kernel (halo-tile DMA + 9
    # shifted matmuls) to cut conv-path HBM traffic ~8x at realistic sizes.
    # Conv channel counts are small (< 128); they are deliberately NOT
    # lane-padded so the intermediate activations / im2col tensors are not
    # inflated 2-16x in HBM (the conv path is im2col-read bound).
    y = _matmul_fused(patches, W, scale, bias, act='relu',
                      out_dtype=jnp.bfloat16, pad_lanes=False)
    return y.reshape(B, T, F, -1)


def linear(x, W, b, *, act='none', out_dtype=jnp.float32):
    # x: (B, T, D) -> (B, T, N); N padded to a multiple of 128 inside.
    B, T, D = x.shape
    N = W.shape[1]
    ones = jnp.ones((1, N), jnp.float32)
    y = _matmul_fused(x.reshape(B * T, D), W, ones, b, act=act,
                      out_dtype=out_dtype, pad_lanes=True)
    return y.reshape(B, T, N)


def bilstm(x, p):
    # PyTorch nn.LSTM(batch_first=True, bidirectional=True): (B,T,D) -> (B,T,2H)
    B, T, D = x.shape
    H = p['wh_f'].shape[0]
    # Hoisted input projection for every timestep and both directions: one big
    # pipelined MXU matmul (lane-dense N = 8H) instead of 8 tiny per-step matmuls.
    xp = linear(x, p['wi'], p['b'], act='none', out_dtype=jnp.float32)   # (B,T,8H)
    xp = jnp.transpose(xp.reshape(B, T, 2, 4 * H), (2, 1, 0, 3))         # (2,T,B,4H)
    wh = jnp.stack([p['wh_f'], p['wh_b']]).astype(jnp.bfloat16)          # (2,H,4H)
    hs = pl.pallas_call(
        _lstm_direction_kernel,
        out_shape=jax.ShapeDtypeStruct((2, T, B, H), jnp.float32),
        grid=(2,),                                    # program 0 = fwd, 1 = bwd
        in_specs=[
            pl.BlockSpec((None, T, B, 4 * H), lambda d: (d, 0, 0, 0)),
            pl.BlockSpec((None, H, 4 * H), lambda d: (d, 0, 0)),
        ],
        out_specs=pl.BlockSpec((None, T, B, H), lambda d: (d, 0, 0, 0)),
        compiler_params=pltpu.CompilerParams(
            dimension_semantics=("parallel",),        # independent directions
            vmem_limit_bytes=_VMEM_LIMIT_BYTES),
    )(xp, wh)
    # (2,T,B,H) -> (B,T,2H); fwd hidden in [..., :H], bwd in [..., H:] (PyTorch order)
    return jnp.transpose(hs, (2, 1, 0, 3)).reshape(B, T, 2 * H)


def _maxpool_freq2(x):
    # nn.MaxPool2d((1, 2)) on NCHW == pool the mel/freq axis by 2 (NHWC here).
    B, T, F, C = x.shape
    return jnp.max(x.reshape(B, T, F // 2, 2, C), axis=3)


def conv_stack_forward(mel, p):
    B, T, F = mel.shape
    x = mel.astype(jnp.bfloat16)[..., None]      # (B, T, F, 1)  <- NCHW with C=1
    x = conv3x3_bn_relu(x, *p['conv1'])
    x = conv3x3_bn_relu(x, *p['conv2'])
    x = _maxpool_freq2(x)
    # TODO(synk): Dropout(0.25) is train-time only; identity in this inference kernel.
    x = conv3x3_bn_relu(x, *p['conv3'])
    x = _maxpool_freq2(x)
    # PyTorch: x.transpose(1, 2).flatten(-2) on (B, C, T, F/4) -> (B, T, C*F/4)
    x = jnp.transpose(x, (0, 1, 3, 2)).reshape(B, T, -1)
    x = linear(x, p['fc_w'], p['fc_b'], act='none', out_dtype=jnp.bfloat16)
    # Dropout(0.5): identity at inference.
    return x


def onsets_and_frames_forward(mel, params):
    onset = conv_stack_forward(mel, params['onset_conv'])
    onset = bilstm(onset, params['onset_lstm'])
    onset_pred = linear(onset, params['onset_out_w'], params['onset_out_b'],
                        act='sigmoid', out_dtype=jnp.float32)
    vel = conv_stack_forward(mel, params['vel_conv'])
    velocity_pred = linear(vel, params['vel_out_w'], params['vel_out_b'],
                           act='sigmoid', out_dtype=jnp.float32)
    return onset_pred, velocity_pred


# ---------------- deterministic parameter init ----------------

def _init_conv(key, cin, cout):
    kw, kg, kb, km, kv = jax.random.split(key, 5)
    W = 0.1 * jax.random.normal(kw, (9 * cin, cout), jnp.float32)   # im2col weight
    gamma = 1.0 + 0.1 * jax.random.normal(kg, (cout,), jnp.float32)
    beta = 0.1 * jax.random.normal(kb, (cout,), jnp.float32)
    running_mean = 0.1 * jax.random.normal(km, (cout,), jnp.float32)
    running_var = 1.0 + 0.1 * jnp.abs(jax.random.normal(kv, (cout,), jnp.float32))
    # BatchNorm2d folded at inference: y = gamma*(x - mean)/sqrt(var + eps) + beta
    scale = gamma / jnp.sqrt(running_var + _BN_EPS)
    bias = beta - running_mean * scale
    return (W, scale.reshape(1, cout), bias.reshape(1, cout))


def _init_convstack(key, input_features, output_features):
    c1 = output_features // 16
    c2 = output_features // 8
    k = jax.random.split(key, 5)
    return {
        'conv1': _init_conv(k[0], 1, c1),
        'conv2': _init_conv(k[1], c1, c1),
        'conv3': _init_conv(k[2], c1, c2),
        'fc_w': 0.1 * jax.random.normal(
            k[3], (c2 * (input_features // 4), output_features), jnp.float32),
        'fc_b': 0.1 * jax.random.normal(k[4], (1, output_features), jnp.float32),
    }


def _init_bilstm(key, input_size, hidden):
    # wi: (D, 8H) = [fwd i,f,g,o | bwd i,f,g,o] along columns.
    # b : (1, 8H) pre-summed b_ih + b_hh (per direction).  wh_*: (H, 4H) fused gates.
    k = jax.random.split(key, 4)
    s = 0.1
    return {
        'wi':   s * jax.random.normal(k[0], (input_size, 8 * hidden), jnp.float32),
        'b':    s * jax.random.normal(k[1], (1, 8 * hidden), jnp.float32),
        'wh_f': s * jax.random.normal(k[2], (hidden, 4 * hidden), jnp.float32),
        'wh_b': s * jax.random.normal(k[3], (hidden, 4 * hidden), jnp.float32),
    }


def init_params(key, input_features, output_features, model_complexity=16):
    model_size = model_complexity * 16
    k = jax.random.split(key, 7)
    return {
        # onset_stack: ConvStack(F, ms/4) -> BiLSTM(ms/4, ms/4) -> Linear(ms/2, out) -> Sigmoid
        'onset_conv': _init_convstack(k[0], input_features, model_size // 4),
        'onset_lstm': _init_bilstm(k[1], model_size // 4, (model_size // 2) // 2),
        'onset_out_w': 0.1 * jax.random.normal(
            k[2], (model_size // 2, output_features), jnp.float32),
        'onset_out_b': 0.1 * jax.random.normal(k[3], (1, output_features), jnp.float32),
        # velocity_stack: ConvStack(F, ms) -> Linear(ms, out) -> Sigmoid
        'vel_conv': _init_convstack(k[4], input_features, model_size),
        'vel_out_w': 0.1 * jax.random.normal(
            k[5], (model_size, output_features), jnp.float32),
        'vel_out_b': 0.1 * jax.random.normal(k[6], (1, output_features), jnp.float32),
    }


if __name__ == "__main__":
    key = jax.random.PRNGKey(0)
    B, T, F = 2, 32, 16          # batch, time frames, input_features (n_mels)
    output_features = 12         # number of keys
    model_complexity = 16        # model_size = 256 (small, divisibility-consistent)

    kp, kx = jax.random.split(key)
    params = init_params(kp, F, output_features, model_complexity)
    mel = jax.random.normal(kx, (B, T, F), jnp.float32)

    fwd = jax.jit(lambda m: onsets_and_frames_forward(m, params))
    onset_pred, velocity_pred = fwd(mel)
    jax.block_until_ready((onset_pred, velocity_pred))

    assert onset_pred.shape == (B, T, output_features)
    assert velocity_pred.shape == (B, T, output_features)
    assert bool(jnp.all(jnp.isfinite(onset_pred)))
    assert bool(jnp.all(jnp.isfinite(velocity_pred)))
    assert bool(jnp.all((onset_pred >= 0) & (onset_pred <= 1)))
    print("KERNEL_OK")
</pallas_src>

<mosaic_0001>
module attributes {stable_mosaic.version = 11 : i64} {
  func.func @_mm_scale_bias_act_kernel(%arg0: i32, %arg1: memref<512x9xbf16, #tpu.memory_space<vmem>>, %arg2: memref<9x4xbf16, #tpu.memory_space<vmem>>, %arg3: memref<1x4xf32, #tpu.memory_space<vmem>>, %arg4: memref<1x4xf32, #tpu.memory_space<vmem>>, %arg5: memref<512x4xbf16, #tpu.memory_space<vmem>>) attributes {dimension_semantics = [#tpu.dimension_semantics<parallel>], iteration_bounds = array<i64: 2>, scalar_prefetch = 0 : i64, scratch_operands = 0 : i64, tpu.core_type = #tpu.core_type<tc>, window_params = [{transform_indices = @transform_0, window_bounds = array<i64: 512, 9>}, {pipeline_mode = #tpu.pipeline_mode<synchronous>, transform_indices = @transform_1, window_bounds = array<i64: 9, 4>}, {pipeline_mode = #tpu.pipeline_mode<synchronous>, transform_indices = @transform_2, window_bounds = array<i64: 1, 4>}, {pipeline_mode = #tpu.pipeline_mode<synchronous>, transform_indices = @transform_3, window_bounds = array<i64: 1, 4>}, {transform_indices = @transform_4, window_bounds = array<i64: 512, 4>}]} {
    %c0 = arith.constant 0 : index
    %c0_0 = arith.constant 0 : index
    %0 = vector.load %arg1[%c0, %c0_0] : memref<512x9xbf16, #tpu.memory_space<vmem>>, vector<512x9xbf16>
    %c0_1 = arith.constant 0 : index
    %c0_2 = arith.constant 0 : index
    %1 = vector.load %arg2[%c0_1, %c0_2] : memref<9x4xbf16, #tpu.memory_space<vmem>>, vector<9x4xbf16>
    %cst = arith.constant dense<0.000000e+00> : vector<512x4xf32>
    %2 = tpu.matmul %0, %1, %cst {dimension_numbers = #tpu.dot_dimension_numbers<[1], [0], [0], [1], [0, 0, 1, 1], [], []>} : vector<512x9xbf16>, vector<9x4xbf16>, vector<512x4xf32> -> vector<512x4xf32>
    %c0_3 = arith.constant 0 : index
    %c0_4 = arith.constant 0 : index
    %3 = vector.load %arg3[%c0_3, %c0_4] : memref<1x4xf32, #tpu.memory_space<vmem>>, vector<1x4xf32>
    %4 = vector.broadcast %3 : vector<1x4xf32> to vector<512x4xf32>
    %5 = arith.mulf %2, %4 : vector<512x4xf32>
    %c0_5 = arith.constant 0 : index
    %c0_6 = arith.constant 0 : index
    %6 = vector.load %arg4[%c0_5, %c0_6] : memref<1x4xf32, #tpu.memory_space<vmem>>, vector<1x4xf32>
    %7 = vector.broadcast %6 : vector<1x4xf32> to vector<512x4xf32>
    %8 = arith.addf %5, %7 : vector<512x4xf32>
    %cst_7 = arith.constant 0.000000e+00 : f32
    %9 = vector.broadcast %cst_7 : f32 to vector<512x4xf32>
    %10 = arith.maximumf %8, %9 : vector<512x4xf32>
    %11 = arith.truncf %10 : vector<512x4xf32> to vector<512x4xbf16>
    %c0_8 = arith.constant 0 : index
    %c0_9 = arith.constant 0 : index
    %12 = vector.load %arg5[%c0_8, %c0_9] : memref<512x4xbf16, #tpu.memory_space<vmem>>, vector<512x4xbf16>
    tpu.vector_store %arg5[%c0_8, %c0_9], %11 {strides = array<i32>} : memref<512x4xbf16, #tpu.memory_space<vmem>>, vector<512x4xbf16>,
    return
  }
  func.func @transform_0(%arg0: i32) -> (i32, i32) {
    %c0_i32 = arith.constant 0 : i32
    %c0_i32_0 = arith.constant 0 : i32
    return %arg0, %c0_i32 : i32, i32
  }
  func.func @transform_1(%arg0: i32) -> (i32, i32) {
    %c0_i32 = arith.constant 0 : i32
    %c0_i32_0 = arith.constant 0 : i32
    %c0_i32_1 = arith.constant 0 : i32
    return %c0_i32, %c0_i32_0 : i32, i32
  }
  func.func @transform_2(%arg0: i32) -> (i32, i32) {
    %c0_i32 = arith.constant 0 : i32
    %c0_i32_0 = arith.constant 0 : i32
    %c0_i32_1 = arith.constant 0 : i32
    return %c0_i32, %c0_i32_0 : i32, i32
  }
  func.func @transform_3(%arg0: i32) -> (i32, i32) {
    %c0_i32 = arith.constant 0 : i32
    %c0_i32_0 = arith.constant 0 : i32
    %c0_i32_1 = arith.constant 0 : i32
    return %c0_i32, %c0_i32_0 : i32, i32
  }
  func.func @transform_4(%arg0: i32) -> (i32, i32) {
    %c0_i32 = arith.constant 0 : i32
    %c0_i32_0 = arith.constant 0 : i32
    return %arg0, %c0_i32 : i32, i32
  }
}

module attributes {stable_mosaic.version = 11 : i64} {
  func.func @_mm_scale_bias_act_kernel(%arg0: i32, %arg1: memref<512x36xbf16, #tpu.memory_space<vmem>>, %arg2: memref<36x4xbf16, #tpu.memory_space<vmem>>, %arg3: memref<1x4xf32, #tpu.memory_space<vmem>>, %arg4: memref<1x4xf32, #tpu.memory_space<vmem>>, %arg5: memref<512x4xbf16, #tpu.memory_space<vmem>>) attributes {dimension_semantics = [#tpu.dimension_semantics<parallel>], iteration_bounds = array<i64: 2>, scalar_prefetch = 0 : i64, scratch_operands = 0 : i64, tpu.core_type = #tpu.core_type<tc>, window_params = [{transform_indices = @transform_0, window_bounds = array<i64: 512, 36>}, {pipeline_mode = #tpu.pipeline_mode<synchronous>, transform_indices = @transform_1, window_bounds = array<i64: 36, 4>}, {pipeline_mode = #tpu.pipeline_mode<synchronous>, transform_indices = @transform_2, window_bounds = array<i64: 1, 4>}, {pipeline_mode = #tpu.pipeline_mode<synchronous>, transform_indices = @transform_3, window_bounds = array<i64: 1, 4>}, {transform_indices = @transform_4, window_bounds = array<i64: 512, 4>}]} {
    %c0 = arith.constant 0 : index
    %c0_0 = arith.constant 0 : index
    %0 = vector.load %arg1[%c0, %c0_0] : memref<512x36xbf16, #tpu.memory_space<vmem>>, vector<512x36xbf16>
    %c0_1 = arith.constant 0 : index
    %c0_2 = arith.constant 0 : index
    %1 = vector.load %arg2[%c0_1, %c0_2] : memref<36x4xbf16, #tpu.memory_space<vmem>>, vector<36x4xbf16>
    %cst = arith.constant dense<0.000000e+00> : vector<512x4xf32>
    %2 = tpu.matmul %0, %1, %cst {dimension_numbers = #tpu.dot_dimension_numbers<[1], [0], [0], [1], [0, 0, 1, 1], [], []>} : vector<512x36xbf16>, vector<36x4xbf16>, vector<512x4xf32> -> vector<512x4xf32>
    %c0_3 = arith.constant 0 : index
    %c0_4 = arith.constant 0 : index
    %3 = vector.load %arg3[%c0_3, %c0_4] : memref<1x4xf32, #tpu.memory_space<vmem>>, vector<1x4xf32>
    %4 = vector.broadcast %3 : vector<1x4xf32> to vector<512x4xf32>
    %5 = arith.mulf %2, %4 : vector<512x4xf32>
    %c0_5 = arith.constant 0 : index
    %c0_6 = arith.constant 0 : index
    %6 = vector.load %arg4[%c0_5, %c0_6] : memref<1x4xf32, #tpu.memory_space<vmem>>, vector<1x4xf32>
    %7 = vector.broadcast %6 : vector<1x4xf32> to vector<512x4xf32>
    %8 = arith.addf %5, %7 : vector<512x4xf32>
    %cst_7 = arith.constant 0.000000e+00 : f32
    %9 = vector.broadcast %cst_7 : f32 to vector<512x4xf32>
    %10 = arith.maximumf %8, %9 : vector<512x4xf32>
    %11 = arith.truncf %10 : vector<512x4xf32> to vector<512x4xbf16>
    %c0_8 = arith.constant 0 : index
    %c0_9 = arith.constant 0 : index
    %12 = vector.load %arg5[%c0_8, %c0_9] : memref<512x4xbf16, #tpu.memory_space<vmem>>, vector<512x4xbf16>
    tpu.vector_store %arg5[%c0_8, %c0_9], %11 {strides = array<i32>} : memref<512x4xbf16, #tpu.memory_space<vmem>>, vector<512x4xbf16>,
    return
  }
  func.func @transform_0(%arg0: i32) -> (i32, i32) {
    %c0_i32 = arith.constant 0 : i32
    %c0_i32_0 = arith.constant 0 : i32
    return %arg0, %c0_i32 : i32, i32
  }
  func.func @transform_1(%arg0: i32) -> (i32, i32) {
    %c0_i32 = arith.constant 0 : i32
    %c0_i32_0 = arith.constant 0 : i32
    %c0_i32_1 = arith.constant 0 : i32
    return %c0_i32, %c0_i32_0 : i32, i32
  }
  func.func @transform_2(%arg0: i32) -> (i32, i32) {
    %c0_i32 = arith.constant 0 : i32
    %c0_i32_0 = arith.constant 0 : i32
    %c0_i32_1 = arith.constant 0 : i32
    return %c0_i32, %c0_i32_0 : i32, i32
  }
  func.func @transform_3(%arg0: i32) -> (i32, i32) {
    %c0_i32 = arith.constant 0 : i32
    %c0_i32_0 = arith.constant 0 : i32
    %c0_i32_1 = arith.constant 0 : i32
    return %c0_i32, %c0_i32_0 : i32, i32
  }
  func.func @transform_4(%arg0: i32) -> (i32, i32) {
    %c0_i32 = arith.constant 0 : i32
    %c0_i32_0 = arith.constant 0 : i32
    return %arg0, %c0_i32 : i32, i32
  }
}

module attributes {stable_mosaic.version = 11 : i64} {
  func.func @_mm_scale_bias_act_kernel(%arg0: i32, %arg1: memref<512x36xbf16, #tpu.memory_space<vmem>>, %arg2: memref<36x8xbf16, #tpu.memory_space<vmem>>, %arg3: memref<1x8xf32, #tpu.memory_space<vmem>>, %arg4: memref<1x8xf32, #tpu.memory_space<vmem>>, %arg5: memref<512x8xbf16, #tpu.memory_space<vmem>>) attributes {dimension_semantics = [#tpu.dimension_semantics<parallel>], iteration_bounds = array<i64: 1>, scalar_prefetch = 0 : i64, scratch_operands = 0 : i64, tpu.core_type = #tpu.core_type<tc>, window_params = [{transform_indices = @transform_0, window_bounds = array<i64: 512, 36>}, {pipeline_mode = #tpu.pipeline_mode<synchronous>, transform_indices = @transform_1, window_bounds = array<i64: 36, 8>}, {pipeline_mode = #tpu.pipeline_mode<synchronous>, transform_indices = @transform_2, window_bounds = array<i64: 1, 8>}, {pipeline_mode = #tpu.pipeline_mode<synchronous>, transform_indices = @transform_3, window_bounds = array<i64: 1, 8>}, {transform_indices = @transform_4, window_bounds = array<i64: 512, 8>}]} {
    %c0 = arith.constant 0 : index
    %c0_0 = arith.constant 0 : index
    %0 = vector.load %arg1[%c0, %c0_0] : memref<512x36xbf16, #tpu.memory_space<vmem>>, vector<512x36xbf16>
    %c0_1 = arith.constant 0 : index
    %c0_2 = arith.constant 0 : index
    %1 = vector.load %arg2[%c0_1, %c0_2] : memref<36x8xbf16, #tpu.memory_space<vmem>>, vector<36x8xbf16>
    %cst = arith.constant dense<0.000000e+00> : vector<512x8xf32>
    %2 = tpu.matmul %0, %1, %cst {dimension_numbers = #tpu.dot_dimension_numbers<[1], [0], [0], [1], [0, 0, 1, 1], [], []>} : vector<512x36xbf16>, vector<36x8xbf16>, vector<512x8xf32> -> vector<512x8xf32>
    %c0_3 = arith.constant 0 : index
    %c0_4 = arith.constant 0 : index
    %3 = vector.load %arg3[%c0_3, %c0_4] : memref<1x8xf32, #tpu.memory_space<vmem>>, vector<1x8xf32>
    %4 = vector.broadcast %3 : vector<1x8xf32> to vector<512x8xf32>
    %5 = arith.mulf %2, %4 : vector<512x8xf32>
    %c0_5 = arith.constant 0 : index
    %c0_6 = arith.constant 0 : index
    %6 = vector.load %arg4[%c0_5, %c0_6] : memref<1x8xf32, #tpu.memory_space<vmem>>, vector<1x8xf32>
    %7 = vector.broadcast %6 : vector<1x8xf32> to vector<512x8xf32>
    %8 = arith.addf %5, %7 : vector<512x8xf32>
    %cst_7 = arith.constant 0.000000e+00 : f32
    %9 = vector.broadcast %cst_7 : f32 to vector<512x8xf32>
    %10 = arith.maximumf %8, %9 : vector<512x8xf32>
    %11 = arith.truncf %10 : vector<512x8xf32> to vector<512x8xbf16>
    %c0_8 = arith.constant 0 : index
    %c0_9 = arith.constant 0 : index
    %12 = vector.load %arg5[%c0_8, %c0_9] : memref<512x8xbf16, #tpu.memory_space<vmem>>, vector<512x8xbf16>
    tpu.vector_store %arg5[%c0_8, %c0_9], %11 {strides = array<i32>} : memref<512x8xbf16, #tpu.memory_space<vmem>>, vector<512x8xbf16>,
    return
  }
  func.func @transform_0(%arg0: i32) -> (i32, i32) {
    %c0_i32 = arith.constant 0 : i32
    %c0_i32_0 = arith.constant 0 : i32
    return %arg0, %c0_i32 : i32, i32
  }
  func.func @transform_1(%arg0: i32) -> (i32, i32) {
    %c0_i32 = arith.constant 0 : i32
    %c0_i32_0 = arith.constant 0 : i32
    %c0_i32_1 = arith.constant 0 : i32
    return %c0_i32, %c0_i32_0 : i32, i32
  }
  func.func @transform_2(%arg0: i32) -> (i32, i32) {
    %c0_i32 = arith.constant 0 : i32
    %c0_i32_0 = arith.constant 0 : i32
    %c0_i32_1 = arith.constant 0 : i32
    return %c0_i32, %c0_i32_0 : i32, i32
  }
  func.func @transform_3(%arg0: i32) -> (i32, i32) {
    %c0_i32 = arith.constant 0 : i32
    %c0_i32_0 = arith.constant 0 : i32
    %c0_i32_1 = arith.constant 0 : i32
    return %c0_i32, %c0_i32_0 : i32, i32
  }
  func.func @transform_4(%arg0: i32) -> (i32, i32) {
    %c0_i32 = arith.constant 0 : i32
    %c0_i32_0 = arith.constant 0 : i32
    return %arg0, %c0_i32 : i32, i32
  }
}

module attributes {stable_mosaic.version = 11 : i64} {
  func.func @_mm_scale_bias_act_kernel(%arg0: i32, %arg1: memref<64x32xbf16, #tpu.memory_space<vmem>>, %arg2: memref<32x128xbf16, #tpu.memory_space<vmem>>, %arg3: memref<1x128xf32, #tpu.memory_space<vmem>>, %arg4: memref<1x128xf32, #tpu.memory_space<vmem>>, %arg5: memref<64x128xbf16, #tpu.memory_space<vmem>>) attributes {dimension_semantics = [#tpu.dimension_semantics<parallel>], iteration_bounds = array<i64: 1>, scalar_prefetch = 0 : i64, scratch_operands = 0 : i64, tpu.core_type = #tpu.core_type<tc>, window_params = [{transform_indices = @transform_0, window_bounds = array<i64: 64, 32>}, {pipeline_mode = #tpu.pipeline_mode<synchronous>, transform_indices = @transform_1, window_bounds = array<i64: 32, 128>}, {pipeline_mode = #tpu.pipeline_mode<synchronous>, transform_indices = @transform_2, window_bounds = array<i64: 1, 128>}, {pipeline_mode = #tpu.pipeline_mode<synchronous>, transform_indices = @transform_3, window_bounds = array<i64: 1, 128>}, {transform_indices = @transform_4, window_bounds = array<i64: 64, 128>}]} {
    %c0 = arith.constant 0 : index
    %c0_0 = arith.constant 0 : index
    %0 = vector.load %arg1[%c0, %c0_0] : memref<64x32xbf16, #tpu.memory_space<vmem>>, vector<64x32xbf16>
    %c0_1 = arith.constant 0 : index
    %c0_2 = arith.constant 0 : index
    %1 = vector.load %arg2[%c0_1, %c0_2] : memref<32x128xbf16, #tpu.memory_space<vmem>>, vector<32x128xbf16>
    %cst = arith.constant dense<0.000000e+00> : vector<64x128xf32>
    %2 = tpu.matmul %0, %1, %cst {dimension_numbers = #tpu.dot_dimension_numbers<[1], [0], [0], [1], [0, 0, 1, 1], [], []>} : vector<64x32xbf16>, vector<32x128xbf16>, vector<64x128xf32> -> vector<64x128xf32>
    %c0_3 = arith.constant 0 : index
    %c0_4 = arith.constant 0 : index
    %3 = vector.load %arg3[%c0_3, %c0_4] : memref<1x128xf32, #tpu.memory_space<vmem>>, vector<1x128xf32>
    %4 = vector.broadcast %3 : vector<1x128xf32> to vector<64x128xf32>
    %5 = arith.mulf %2, %4 : vector<64x128xf32>
    %c0_5 = arith.constant 0 : index
    %c0_6 = arith.constant 0 : index
    %6 = vector.load %arg4[%c0_5, %c0_6] : memref<1x128xf32, #tpu.memory_space<vmem>>, vector<1x128xf32>
    %7 = vector.broadcast %6 : vector<1x128xf32> to vector<64x128xf32>
    %8 = arith.addf %5, %7 : vector<64x128xf32>
    %9 = arith.truncf %8 : vector<64x128xf32> to vector<64x128xbf16>
    %c0_7 = arith.constant 0 : index
    %c0_8 = arith.constant 0 : index
    %10 = vector.load %arg5[%c0_7, %c0_8] : memref<64x128xbf16, #tpu.memory_space<vmem>>, vector<64x128xbf16>
    tpu.vector_store %arg5[%c0_7, %c0_8], %9 {strides = array<i32>} : memref<64x128xbf16, #tpu.memory_space<vmem>>, vector<64x128xbf16>,
    return
  }
  func.func @transform_0(%arg0: i32) -> (i32, i32) {
    %c0_i32 = arith.constant 0 : i32
    %c0_i32_0 = arith.constant 0 : i32
    return %arg0, %c0_i32 : i32, i32
  }
  func.func @transform_1(%arg0: i32) -> (i32, i32) {
    %c0_i32 = arith.constant 0 : i32
    %c0_i32_0 = arith.constant 0 : i32
    %c0_i32_1 = arith.constant 0 : i32
    return %c0_i32, %c0_i32_0 : i32, i32
  }
  func.func @transform_2(%arg0: i32) -> (i32, i32) {
    %c0_i32 = arith.constant 0 : i32
    %c0_i32_0 = arith.constant 0 : i32
    %c0_i32_1 = arith.constant 0 : i32
    return %c0_i32, %c0_i32_0 : i32, i32
  }
  func.func @transform_3(%arg0: i32) -> (i32, i32) {
    %c0_i32 = arith.constant 0 : i32
    %c0_i32_0 = arith.constant 0 : i32
    %c0_i32_1 = arith.constant 0 : i32
    return %c0_i32, %c0_i32_0 : i32, i32
  }
  func.func @transform_4(%arg0: i32) -> (i32, i32) {
    %c0_i32 = arith.constant 0 : i32
    %c0_i32_0 = arith.constant 0 : i32
    return %arg0, %c0_i32 : i32, i32
  }
}

module attributes {stable_mosaic.version = 11 : i64} {
  func.func @_mm_scale_bias_act_kernel(%arg0: i32, %arg1: memref<64x64xbf16, #tpu.memory_space<vmem>>, %arg2: memref<64x512xbf16, #tpu.memory_space<vmem>>, %arg3: memref<1x512xf32, #tpu.memory_space<vmem>>, %arg4: memref<1x512xf32, #tpu.memory_space<vmem>>, %arg5: memref<64x512xf32, #tpu.memory_space<vmem>>) attributes {dimension_semantics = [#tpu.dimension_semantics<parallel>], iteration_bounds = array<i64: 1>, scalar_prefetch = 0 : i64, scratch_operands = 0 : i64, tpu.core_type = #tpu.core_type<tc>, window_params = [{transform_indices = @transform_0, window_bounds = array<i64: 64, 64>}, {pipeline_mode = #tpu.pipeline_mode<synchronous>, transform_indices = @transform_1, window_bounds = array<i64: 64, 512>}, {pipeline_mode = #tpu.pipeline_mode<synchronous>, transform_indices = @transform_2, window_bounds = array<i64: 1, 512>}, {pipeline_mode = #tpu.pipeline_mode<synchronous>, transform_indices = @transform_3, window_bounds = array<i64: 1, 512>}, {transform_indices = @transform_4, window_bounds = array<i64: 64, 512>}]} {
    %c0 = arith.constant 0 : index
    %c0_0 = arith.constant 0 : index
    %0 = vector.load %arg1[%c0, %c0_0] : memref<64x64xbf16, #tpu.memory_space<vmem>>, vector<64x64xbf16>
    %c0_1 = arith.constant 0 : index
    %c0_2 = arith.constant 0 : index
    %1 = vector.load %arg2[%c0_1, %c0_2] : memref<64x512xbf16, #tpu.memory_space<vmem>>, vector<64x512xbf16>
    %cst = arith.constant dense<0.000000e+00> : vector<64x512xf32>
    %2 = tpu.matmul %0, %1, %cst {dimension_numbers = #tpu.dot_dimension_numbers<[1], [0], [0], [1], [0, 0, 1, 1], [], []>} : vector<64x64xbf16>, vector<64x512xbf16>, vector<64x512xf32> -> vector<64x512xf32>
    %c0_3 = arith.constant 0 : index
    %c0_4 = arith.constant 0 : index
    %3 = vector.load %arg3[%c0_3, %c0_4] : memref<1x512xf32, #tpu.memory_space<vmem>>, vector<1x512xf32>
    %4 = vector.broadcast %3 : vector<1x512xf32> to vector<64x512xf32>
    %5 = arith.mulf %2, %4 : vector<64x512xf32>
    %c0_5 = arith.constant 0 : index
    %c0_6 = arith.constant 0 : index
    %6 = vector.load %arg4[%c0_5, %c0_6] : memref<1x512xf32, #tpu.memory_space<vmem>>, vector<1x512xf32>
    %7 = vector.broadcast %6 : vector<1x512xf32> to vector<64x512xf32>
    %8 = arith.addf %5, %7 : vector<64x512xf32>
    %c0_7 = arith.constant 0 : index
    %c0_8 = arith.constant 0 : index
    %9 = vector.load %arg5[%c0_7, %c0_8] : memref<64x512xf32, #tpu.memory_space<vmem>>, vector<64x512xf32>
    tpu.vector_store %arg5[%c0_7, %c0_8], %8 {strides = array<i32>} : memref<64x512xf32, #tpu.memory_space<vmem>>, vector<64x512xf32>,
    return
  }
  func.func @transform_0(%arg0: i32) -> (i32, i32) {
    %c0_i32 = arith.constant 0 : i32
    %c0_i32_0 = arith.constant 0 : i32
    return %arg0, %c0_i32 : i32, i32
  }
  func.func @transform_1(%arg0: i32) -> (i32, i32) {
    %c0_i32 = arith.constant 0 : i32
    %c0_i32_0 = arith.constant 0 : i32
    %c0_i32_1 = arith.constant 0 : i32
    return %c0_i32, %c0_i32_0 : i32, i32
  }
  func.func @transform_2(%arg0: i32) -> (i32, i32) {
    %c0_i32 = arith.constant 0 : i32
    %c0_i32_0 = arith.constant 0 : i32
    %c0_i32_1 = arith.constant 0 : i32
    return %c0_i32, %c0_i32_0 : i32, i32
  }
  func.func @transform_3(%arg0: i32) -> (i32, i32) {
    %c0_i32 = arith.constant 0 : i32
    %c0_i32_0 = arith.constant 0 : i32
    %c0_i32_1 = arith.constant 0 : i32
    return %c0_i32, %c0_i32_0 : i32, i32
  }
  func.func @transform_4(%arg0: i32) -> (i32, i32) {
    %c0_i32 = arith.constant 0 : i32
    %c0_i32_0 = arith.constant 0 : i32
    return %arg0, %c0_i32 : i32, i32
  }
}

module attributes {stable_mosaic.version = 11 : i64} {
  func.func @_lstm_direction_kernel(%arg0: i32, %arg1: memref<1x32x2x256xf32, #tpu.memory_space<vmem>>, %arg2: memref<1x64x256xbf16, #tpu.memory_space<vmem>>, %arg3: memref<1x32x2x64xf32, #tpu.memory_space<vmem>>) attributes {dimension_semantics = [#tpu.dimension_semantics<parallel>], iteration_bounds = array<i64: 2>, scalar_prefetch = 0 : i64, scratch_operands = 0 : i64, tpu.core_type = #tpu.core_type<tc>, window_params = [{transform_indices = @transform_0, window_bounds = array<i64: 1, 32, 2, 256>}, {transform_indices = @transform_1, window_bounds = array<i64: 1, 64, 256>}, {transform_indices = @transform_2, window_bounds = array<i64: 1, 32, 2, 64>}]} {
    %c0 = arith.constant 0 : index
    %c0_0 = arith.constant 0 : index
    %c0_1 = arith.constant 0 : index
    %0 = vector.load %arg2[%c0, %c0_0, %c0_1] : memref<1x64x256xbf16, #tpu.memory_space<vmem>>, vector<1x64x256xbf16>
    %1 = vector.shape_cast %0 : vector<1x64x256xbf16> to vector<64x256xbf16>
    %cst = arith.constant 0.000000e+00 : f32
    %2 = vector.broadcast %cst : f32 to vector<2x64xf32>
    %c0_i32 = arith.constant 0 : i32
    %c32_i32 = arith.constant 32 : i32
    %3 = arith.addi %c0_i32, %c32_i32 : i32
    %c1_i32 = arith.constant 1 : i32
    %4:2 = scf.for %arg4 = %c0_i32 to %3 step %c1_i32 iter_args(%arg5 = %2, %arg6 = %2) -> (vector<2x64xf32>, vector<2x64xf32>)  : i32 {
      %c0_i32_3 = arith.constant 0 : i32
      %5 = arith.cmpi eq, %arg0, %c0_i32_3 : i32
      %c31_i32 = arith.constant 31 : i32
      %6 = arith.subi %c31_i32, %arg4 : i32
      %7 = arith.select %5, %arg4, %6 : i32
      %c0_4 = arith.constant 0 : index
      %8 = arith.index_cast %7 : i32 to index
      %c0_5 = arith.constant 0 : index
      %c0_6 = arith.constant 0 : index
      %9 = vector.load %arg1[%c0_4, %8, %c0_5, %c0_6] : memref<1x32x2x256xf32, #tpu.memory_space<vmem>>, vector<1x1x2x256xf32>
      %10 = vector.shape_cast %9 : vector<1x1x2x256xf32> to vector<2x256xf32>
      %11 = arith.truncf %arg5 : vector<2x64xf32> to vector<2x64xbf16>
      %cst_7 = arith.constant dense<0.000000e+00> : vector<2x256xf32>
      %12 = tpu.matmul %11, %1, %cst_7 {dimension_numbers = #tpu.dot_dimension_numbers<[1], [0], [0], [1], [0, 0, 1, 1], [], []>} : vector<2x64xbf16>, vector<64x256xbf16>, vector<2x256xf32> -> vector<2x256xf32>
      %13 = arith.addf %10, %12 : vector<2x256xf32>
      %14 = vector.extract_strided_slice %13 {offsets = [0, 0], sizes = [2, 64], strides = [1, 1]} : vector<2x256xf32> to vector<2x64xf32>
      %cst_8 = arith.constant 0.000000e+00 : f32
      %15 = vector.broadcast %cst_8 : f32 to vector<2x64xf32>
      %16 = arith.subf %15, %14 : vector<2x64xf32>
      %17 = math.exp %16 : vector<2x64xf32>
      %cst_9 = arith.constant 1.000000e+00 : f32
      %18 = vector.broadcast %cst_9 : f32 to vector<2x64xf32>
      %19 = arith.addf %18, %17 : vector<2x64xf32>
      %20 = tpu.reciprocal %19 {approx = true} : vector<2x64xf32> -> vector<2x64xf32>
      %21 = vector.extract_strided_slice %13 {offsets = [0, 64], sizes = [2, 64], strides = [1, 1]} : vector<2x256xf32> to vector<2x64xf32>
      %cst_10 = arith.constant 0.000000e+00 : f32
      %22 = vector.broadcast %cst_10 : f32 to vector<2x64xf32>
      %23 = arith.subf %22, %21 : vector<2x64xf32>
      %24 = math.exp %23 : vector<2x64xf32>
      %cst_11 = arith.constant 1.000000e+00 : f32
      %25 = vector.broadcast %cst_11 : f32 to vector<2x64xf32>
      %26 = arith.addf %25, %24 : vector<2x64xf32>
      %27 = tpu.reciprocal %26 {approx = true} : vector<2x64xf32> -> vector<2x64xf32>
      %28 = vector.extract_strided_slice %13 {offsets = [0, 128], sizes = [2, 64], strides = [1, 1]} : vector<2x256xf32> to vector<2x64xf32>
      %29 = math.tanh %28 : vector<2x64xf32>
      %30 = vector.extract_strided_slice %13 {offsets = [0, 192], sizes = [2, 64], strides = [1, 1]} : vector<2x256xf32> to vector<2x64xf32>
      %cst_12 = arith.constant 0.000000e+00 : f32
      %31 = vector.broadcast %cst_12 : f32 to vector<2x64xf32>
      %32 = arith.subf %31, %30 : vector<2x64xf32>
      %33 = math.exp %32 : vector<2x64xf32>
      %cst_13 = arith.constant 1.000000e+00 : f32
      %34 = vector.broadcast %cst_13 : f32 to vector<2x64xf32>
      %35 = arith.addf %34, %33 : vector<2x64xf32>
      %36 = tpu.reciprocal %35 {approx = true} : vector<2x64xf32> -> vector<2x64xf32>
      %37 = arith.mulf %27, %arg6 : vector<2x64xf32>
      %38 = arith.mulf %20, %29 : vector<2x64xf32>
      %39 = arith.addf %37, %38 : vector<2x64xf32>
      %40 = math.tanh %39 : vector<2x64xf32>
      %41 = arith.mulf %36, %40 : vector<2x64xf32>
      %c0_14 = arith.constant 0 : index
      %42 = arith.index_cast %7 : i32 to index
      %c0_15 = arith.constant 0 : index
      %c0_16 = arith.constant 0 : index
      %43 = vector.load %arg3[%c0_14, %42, %c0_15, %c0_16] : memref<1x32x2x64xf32, #tpu.memory_space<vmem>>, vector<1x1x2x64xf32>
      %44 = vector.shape_cast %43 : vector<1x1x2x64xf32> to vector<2x64xf32>
      %45 = vector.shape_cast %41 : vector<2x64xf32> to vector<1x1x2x64xf32>
      tpu.vector_store %arg3[%c0_14, %42, %c0_15, %c0_16], %45 {strides = array<i32>} : memref<1x32x2x64xf32, #tpu.memory_space<vmem>>, vector<1x1x2x64xf32>,
      scf.yield %41, %39 : vector<2x64xf32>, vector<2x64xf32>
    }
    %c32_i32_2 = arith.constant 32 : i32
    return
  }
  func.func @transform_0(%arg0: i32) -> (i32, i32, i32, i32) {
    %c0_i32 = arith.constant 0 : i32
    %c0_i32_0 = arith.constant 0 : i32
    %c0_i32_1 = arith.constant 0 : i32
    %c0_i32_2 = arith.constant 0 : i32
    return %arg0, %c0_i32, %c0_i32_0, %c0_i32_1 : i32, i32, i32, i32
  }
  func.func @transform_1(%arg0: i32) -> (i32, i32, i32) {
    %c0_i32 = arith.constant 0 : i32
    %c0_i32_0 = arith.constant 0 : i32
    %c0_i32_1 = arith.constant 0 : i32
    return %arg0, %c0_i32, %c0_i32_0 : i32, i32, i32
  }
  func.func @transform_2(%arg0: i32) -> (i32, i32, i32, i32) {
    %c0_i32 = arith.constant 0 : i32
    %c0_i32_0 = arith.constant 0 : i32
    %c0_i32_1 = arith.constant 0 : i32
    %c0_i32_2 = arith.constant 0 : i32
    return %arg0, %c0_i32, %c0_i32_0, %c0_i32_1 : i32, i32, i32, i32
  }
}

module attributes {stable_mosaic.version = 11 : i64} {
  func.func @_mm_scale_bias_act_kernel(%arg0: i32, %arg1: memref<64x128xbf16, #tpu.memory_space<vmem>>, %arg2: memref<128x128xbf16, #tpu.memory_space<vmem>>, %arg3: memref<1x128xf32, #tpu.memory_space<vmem>>, %arg4: memref<1x128xf32, #tpu.memory_space<vmem>>, %arg5: memref<64x128xf32, #tpu.memory_space<vmem>>) attributes {dimension_semantics = [#tpu.dimension_semantics<parallel>], iteration_bounds = array<i64: 1>, scalar_prefetch = 0 : i64, scratch_operands = 0 : i64, tpu.core_type = #tpu.core_type<tc>, window_params = [{transform_indices = @transform_0, window_bounds = array<i64: 64, 128>}, {pipeline_mode = #tpu.pipeline_mode<synchronous>, transform_indices = @transform_1, window_bounds = array<i64: 128, 128>}, {pipeline_mode = #tpu.pipeline_mode<synchronous>, transform_indices = @transform_2, window_bounds = array<i64: 1, 128>}, {pipeline_mode = #tpu.pipeline_mode<synchronous>, transform_indices = @transform_3, window_bounds = array<i64: 1, 128>}, {transform_indices = @transform_4, window_bounds = array<i64: 64, 128>}]} {
    %c0 = arith.constant 0 : index
    %c0_0 = arith.constant 0 : index
    %0 = vector.load %arg1[%c0, %c0_0] : memref<64x128xbf16, #tpu.memory_space<vmem>>, vector<64x128xbf16>
    %c0_1 = arith.constant 0 : index
    %c0_2 = arith.constant 0 : index
    %1 = vector.load %arg2[%c0_1, %c0_2] : memref<128x128xbf16, #tpu.memory_space<vmem>>, vector<128x128xbf16>
    %cst = arith.constant dense<0.000000e+00> : vector<64x128xf32>
    %2 = tpu.matmul %0, %1, %cst {dimension_numbers = #tpu.dot_dimension_numbers<[1], [0], [0], [1], [0, 0, 1, 1], [], []>} : vector<64x128xbf16>, vector<128x128xbf16>, vector<64x128xf32> -> vector<64x128xf32>
    %c0_3 = arith.constant 0 : index
    %c0_4 = arith.constant 0 : index
    %3 = vector.load %arg3[%c0_3, %c0_4] : memref<1x128xf32, #tpu.memory_space<vmem>>, vector<1x128xf32>
    %4 = vector.broadcast %3 : vector<1x128xf32> to vector<64x128xf32>
    %5 = arith.mulf %2, %4 : vector<64x128xf32>
    %c0_5 = arith.constant 0 : index
    %c0_6 = arith.constant 0 : index
    %6 = vector.load %arg4[%c0_5, %c0_6] : memref<1x128xf32, #tpu.memory_space<vmem>>, vector<1x128xf32>
    %7 = vector.broadcast %6 : vector<1x128xf32> to vector<64x128xf32>
    %8 = arith.addf %5, %7 : vector<64x128xf32>
    %cst_7 = arith.constant 0.000000e+00 : f32
    %9 = vector.broadcast %cst_7 : f32 to vector<64x128xf32>
    %10 = arith.subf %9, %8 : vector<64x128xf32>
    %11 = math.exp %10 : vector<64x128xf32>
    %cst_8 = arith.constant 1.000000e+00 : f32
    %12 = vector.broadcast %cst_8 : f32 to vector<64x128xf32>
    %13 = arith.addf %12, %11 : vector<64x128xf32>
    %cst_9 = arith.constant 1.000000e+00 : f32
    %14 = vector.broadcast %cst_9 : f32 to vector<64x128xf32>
    %15 = arith.divf %14, %13 : vector<64x128xf32>
    %c0_10 = arith.constant 0 : index
    %c0_11 = arith.constant 0 : index
    %16 = vector.load %arg5[%c0_10, %c0_11] : memref<64x128xf32, #tpu.memory_space<vmem>>, vector<64x128xf32>
    tpu.vector_store %arg5[%c0_10, %c0_11], %15 {strides = array<i32>} : memref<64x128xf32, #tpu.memory_space<vmem>>, vector<64x128xf32>,
    return
  }
  func.func @transform_0(%arg0: i32) -> (i32, i32) {
    %c0_i32 = arith.constant 0 : i32
    %c0_i32_0 = arith.constant 0 : i32
    return %arg0, %c0_i32 : i32, i32
  }
  func.func @transform_1(%arg0: i32) -> (i32, i32) {
    %c0_i32 = arith.constant 0 : i32
    %c0_i32_0 = arith.constant 0 : i32
    %c0_i32_1 = arith.constant 0 : i32
    return %c0_i32, %c0_i32_0 : i32, i32
  }
  func.func @transform_2(%arg0: i32) -> (i32, i32) {
    %c0_i32 = arith.constant 0 : i32
    %c0_i32_0 = arith.constant 0 : i32
    %c0_i32_1 = arith.constant 0 : i32
    return %c0_i32, %c0_i32_0 : i32, i32
  }
  func.func @transform_3(%arg0: i32) -> (i32, i32) {
    %c0_i32 = arith.constant 0 : i32
    %c0_i32_0 = arith.constant 0 : i32
    %c0_i32_1 = arith.constant 0 : i32
    return %c0_i32, %c0_i32_0 : i32, i32
  }
  func.func @transform_4(%arg0: i32) -> (i32, i32) {
    %c0_i32 = arith.constant 0 : i32
    %c0_i32_0 = arith.constant 0 : i32
    return %arg0, %c0_i32 : i32, i32
  }
}

module attributes {stable_mosaic.version = 11 : i64} {
  func.func @_mm_scale_bias_act_kernel(%arg0: i32, %arg1: memref<512x9xbf16, #tpu.memory_space<vmem>>, %arg2: memref<9x16xbf16, #tpu.memory_space<vmem>>, %arg3: memref<1x16xf32, #tpu.memory_space<vmem>>, %arg4: memref<1x16xf32, #tpu.memory_space<vmem>>, %arg5: memref<512x16xbf16, #tpu.memory_space<vmem>>) attributes {dimension_semantics = [#tpu.dimension_semantics<parallel>], iteration_bounds = array<i64: 2>, scalar_prefetch = 0 : i64, scratch_operands = 0 : i64, tpu.core_type = #tpu.core_type<tc>, window_params = [{transform_indices = @transform_0, window_bounds = array<i64: 512, 9>}, {pipeline_mode = #tpu.pipeline_mode<synchronous>, transform_indices = @transform_1, window_bounds = array<i64: 9, 16>}, {pipeline_mode = #tpu.pipeline_mode<synchronous>, transform_indices = @transform_2, window_bounds = array<i64: 1, 16>}, {pipeline_mode = #tpu.pipeline_mode<synchronous>, transform_indices = @transform_3, window_bounds = array<i64: 1, 16>}, {transform_indices = @transform_4, window_bounds = array<i64: 512, 16>}]} {
    %c0 = arith.constant 0 : index
    %c0_0 = arith.constant 0 : index
    %0 = vector.load %arg1[%c0, %c0_0] : memref<512x9xbf16, #tpu.memory_space<vmem>>, vector<512x9xbf16>
    %c0_1 = arith.constant 0 : index
    %c0_2 = arith.constant 0 : index
    %1 = vector.load %arg2[%c0_1, %c0_2] : memref<9x16xbf16, #tpu.memory_space<vmem>>, vector<9x16xbf16>
    %cst = arith.constant dense<0.000000e+00> : vector<512x16xf32>
    %2 = tpu.matmul %0, %1, %cst {dimension_numbers = #tpu.dot_dimension_numbers<[1], [0], [0], [1], [0, 0, 1, 1], [], []>} : vector<512x9xbf16>, vector<9x16xbf16>, vector<512x16xf32> -> vector<512x16xf32>
    %c0_3 = arith.constant 0 : index
    %c0_4 = arith.constant 0 : index
    %3 = vector.load %arg3[%c0_3, %c0_4] : memref<1x16xf32, #tpu.memory_space<vmem>>, vector<1x16xf32>
    %4 = vector.broadcast %3 : vector<1x16xf32> to vector<512x16xf32>
    %5 = arith.mulf %2, %4 : vector<512x16xf32>
    %c0_5 = arith.constant 0 : index
    %c0_6 = arith.constant 0 : index
    %6 = vector.load %arg4[%c0_5, %c0_6] : memref<1x16xf32, #tpu.memory_space<vmem>>, vector<1x16xf32>
    %7 = vector.broadcast %6 : vector<1x16xf32> to vector<512x16xf32>
    %8 = arith.addf %5, %7 : vector<512x16xf32>
    %cst_7 = arith.constant 0.000000e+00 : f32
    %9 = vector.broadcast %cst_7 : f32 to vector<512x16xf32>
    %10 = arith.maximumf %8, %9 : vector<512x16xf32>
    %11 = arith.truncf %10 : vector<512x16xf32> to vector<512x16xbf16>
    %c0_8 = arith.constant 0 : index
    %c0_9 = arith.constant 0 : index
    %12 = vector.load %arg5[%c0_8, %c0_9] : memref<512x16xbf16, #tpu.memory_space<vmem>>, vector<512x16xbf16>
    tpu.vector_store %arg5[%c0_8, %c0_9], %11 {strides = array<i32>} : memref<512x16xbf16, #tpu.memory_space<vmem>>, vector<512x16xbf16>,
    return
  }
  func.func @transform_0(%arg0: i32) -> (i32, i32) {
    %c0_i32 = arith.constant 0 : i32
    %c0_i32_0 = arith.constant 0 : i32
    return %arg0, %c0_i32 : i32, i32
  }
  func.func @transform_1(%arg0: i32) -> (i32, i32) {
    %c0_i32 = arith.constant 0 : i32
    %c0_i32_0 = arith.constant 0 : i32
    %c0_i32_1 = arith.constant 0 : i32
    return %c0_i32, %c0_i32_0 : i32, i32
  }
  func.func @transform_2(%arg0: i32) -> (i32, i32) {
    %c0_i32 = arith.constant 0 : i32
    %c0_i32_0 = arith.constant 0 : i32
    %c0_i32_1 = arith.constant 0 : i32
    return %c0_i32, %c0_i32_0 : i32, i32
  }
  func.func @transform_3(%arg0: i32) -> (i32, i32) {
    %c0_i32 = arith.constant 0 : i32
    %c0_i32_0 = arith.constant 0 : i32
    %c0_i32_1 = arith.constant 0 : i32
    return %c0_i32, %c0_i32_0 : i32, i32
  }
  func.func @transform_4(%arg0: i32) -> (i32, i32) {
    %c0_i32 = arith.constant 0 : i32
    %c0_i32_0 = arith.constant 0 : i32
    return %arg0, %c0_i32 : i32, i32
  }
}

module attributes {stable_mosaic.version = 11 : i64} {
  func.func @_mm_scale_bias_act_kernel(%arg0: i32, %arg1: memref<512x144xbf16, #tpu.memory_space<vmem>>, %arg2: memref<144x16xbf16, #tpu.memory_space<vmem>>, %arg3: memref<1x16xf32, #tpu.memory_space<vmem>>, %arg4: memref<1x16xf32, #tpu.memory_space<vmem>>, %arg5: memref<512x16xbf16, #tpu.memory_space<vmem>>) attributes {dimension_semantics = [#tpu.dimension_semantics<parallel>], iteration_bounds = array<i64: 2>, scalar_prefetch = 0 : i64, scratch_operands = 0 : i64, tpu.core_type = #tpu.core_type<tc>, window_params = [{transform_indices = @transform_0, window_bounds = array<i64: 512, 144>}, {pipeline_mode = #tpu.pipeline_mode<synchronous>, transform_indices = @transform_1, window_bounds = array<i64: 144, 16>}, {pipeline_mode = #tpu.pipeline_mode<synchronous>, transform_indices = @transform_2, window_bounds = array<i64: 1, 16>}, {pipeline_mode = #tpu.pipeline_mode<synchronous>, transform_indices = @transform_3, window_bounds = array<i64: 1, 16>}, {transform_indices = @transform_4, window_bounds = array<i64: 512, 16>}]} {
    %c0 = arith.constant 0 : index
    %c0_0 = arith.constant 0 : index
    %0 = vector.load %arg1[%c0, %c0_0] : memref<512x144xbf16, #tpu.memory_space<vmem>>, vector<512x144xbf16>
    %c0_1 = arith.constant 0 : index
    %c0_2 = arith.constant 0 : index
    %1 = vector.load %arg2[%c0_1, %c0_2] : memref<144x16xbf16, #tpu.memory_space<vmem>>, vector<144x16xbf16>
    %cst = arith.constant dense<0.000000e+00> : vector<512x16xf32>
    %2 = tpu.matmul %0, %1, %cst {dimension_numbers = #tpu.dot_dimension_numbers<[1], [0], [0], [1], [0, 0, 1, 1], [], []>} : vector<512x144xbf16>, vector<144x16xbf16>, vector<512x16xf32> -> vector<512x16xf32>
    %c0_3 = arith.constant 0 : index
    %c0_4 = arith.constant 0 : index
    %3 = vector.load %arg3[%c0_3, %c0_4] : memref<1x16xf32, #tpu.memory_space<vmem>>, vector<1x16xf32>
    %4 = vector.broadcast %3 : vector<1x16xf32> to vector<512x16xf32>
    %5 = arith.mulf %2, %4 : vector<512x16xf32>
    %c0_5 = arith.constant 0 : index
    %c0_6 = arith.constant 0 : index
    %6 = vector.load %arg4[%c0_5, %c0_6] : memref<1x16xf32, #tpu.memory_space<vmem>>, vector<1x16xf32>
    %7 = vector.broadcast %6 : vector<1x16xf32> to vector<512x16xf32>
    %8 = arith.addf %5, %7 : vector<512x16xf32>
    %cst_7 = arith.constant 0.000000e+00 : f32
    %9 = vector.broadcast %cst_7 : f32 to vector<512x16xf32>
    %10 = arith.maximumf %8, %9 : vector<512x16xf32>
    %11 = arith.truncf %10 : vector<512x16xf32> to vector<512x16xbf16>
    %c0_8 = arith.constant 0 : index
    %c0_9 = arith.constant 0 : index
    %12 = vector.load %arg5[%c0_8, %c0_9] : memref<512x16xbf16, #tpu.memory_space<vmem>>, vector<512x16xbf16>
    tpu.vector_store %arg5[%c0_8, %c0_9], %11 {strides = array<i32>} : memref<512x16xbf16, #tpu.memory_space<vmem>>, vector<512x16xbf16>,
    return
  }
  func.func @transform_0(%arg0: i32) -> (i32, i32) {
    %c0_i32 = arith.constant 0 : i32
    %c0_i32_0 = arith.constant 0 : i32
    return %arg0, %c0_i32 : i32, i32
  }
  func.func @transform_1(%arg0: i32) -> (i32, i32) {
    %c0_i32 = arith.constant 0 : i32
    %c0_i32_0 = arith.constant 0 : i32
    %c0_i32_1 = arith.constant 0 : i32
    return %c0_i32, %c0_i32_0 : i32, i32
  }
  func.func @transform_2(%arg0: i32) -> (i32, i32) {
    %c0_i32 = arith.constant 0 : i32
    %c0_i32_0 = arith.constant 0 : i32
    %c0_i32_1 = arith.constant 0 : i32
    return %c0_i32, %c0_i32_0 : i32, i32
  }
  func.func @transform_3(%arg0: i32) -> (i32, i32) {
    %c0_i32 = arith.constant 0 : i32
    %c0_i32_0 = arith.constant 0 : i32
    %c0_i32_1 = arith.constant 0 : i32
    return %c0_i32, %c0_i32_0 : i32, i32
  }
  func.func @transform_4(%arg0: i32) -> (i32, i32) {
    %c0_i32 = arith.constant 0 : i32
    %c0_i32_0 = arith.constant 0 : i32
    return %arg0, %c0_i32 : i32, i32
  }
}

module attributes {stable_mosaic.version = 11 : i64} {
  func.func @_mm_scale_bias_act_kernel(%arg0: i32, %arg1: memref<512x144xbf16, #tpu.memory_space<vmem>>, %arg2: memref<144x32xbf16, #tpu.memory_space<vmem>>, %arg3: memref<1x32xf32, #tpu.memory_space<vmem>>, %arg4: memref<1x32xf32, #tpu.memory_space<vmem>>, %arg5: memref<512x32xbf16, #tpu.memory_space<vmem>>) attributes {dimension_semantics = [#tpu.dimension_semantics<parallel>], iteration_bounds = array<i64: 1>, scalar_prefetch = 0 : i64, scratch_operands = 0 : i64, tpu.core_type = #tpu.core_type<tc>, window_params = [{transform_indices = @transform_0, window_bounds = array<i64: 512, 144>}, {pipeline_mode = #tpu.pipeline_mode<synchronous>, transform_indices = @transform_1, window_bounds = array<i64: 144, 32>}, {pipeline_mode = #tpu.pipeline_mode<synchronous>, transform_indices = @transform_2, window_bounds = array<i64: 1, 32>}, {pipeline_mode = #tpu.pipeline_mode<synchronous>, transform_indices = @transform_3, window_bounds = array<i64: 1, 32>}, {transform_indices = @transform_4, window_bounds = array<i64: 512, 32>}]} {
    %c0 = arith.constant 0 : index
    %c0_0 = arith.constant 0 : index
    %0 = vector.load %arg1[%c0, %c0_0] : memref<512x144xbf16, #tpu.memory_space<vmem>>, vector<512x144xbf16>
    %c0_1 = arith.constant 0 : index
    %c0_2 = arith.constant 0 : index
    %1 = vector.load %arg2[%c0_1, %c0_2] : memref<144x32xbf16, #tpu.memory_space<vmem>>, vector<144x32xbf16>
    %cst = arith.constant dense<0.000000e+00> : vector<512x32xf32>
    %2 = tpu.matmul %0, %1, %cst {dimension_numbers = #tpu.dot_dimension_numbers<[1], [0], [0], [1], [0, 0, 1, 1], [], []>} : vector<512x144xbf16>, vector<144x32xbf16>, vector<512x32xf32> -> vector<512x32xf32>
    %c0_3 = arith.constant 0 : index
    %c0_4 = arith.constant 0 : index
    %3 = vector.load %arg3[%c0_3, %c0_4] : memref<1x32xf32, #tpu.memory_space<vmem>>, vector<1x32xf32>
    %4 = vector.broadcast %3 : vector<1x32xf32> to vector<512x32xf32>
    %5 = arith.mulf %2, %4 : vector<512x32xf32>
    %c0_5 = arith.constant 0 : index
    %c0_6 = arith.constant 0 : index
    %6 = vector.load %arg4[%c0_5, %c0_6] : memref<1x32xf32, #tpu.memory_space<vmem>>, vector<1x32xf32>
    %7 = vector.broadcast %6 : vector<1x32xf32> to vector<512x32xf32>
    %8 = arith.addf %5, %7 : vector<512x32xf32>
    %cst_7 = arith.constant 0.000000e+00 : f32
    %9 = vector.broadcast %cst_7 : f32 to vector<512x32xf32>
    %10 = arith.maximumf %8, %9 : vector<512x32xf32>
    %11 = arith.truncf %10 : vector<512x32xf32> to vector<512x32xbf16>
    %c0_8 = arith.constant 0 : index
    %c0_9 = arith.constant 0 : index
    %12 = vector.load %arg5[%c0_8, %c0_9] : memref<512x32xbf16, #tpu.memory_space<vmem>>, vector<512x32xbf16>
    tpu.vector_store %arg5[%c0_8, %c0_9], %11 {strides = array<i32>} : memref<512x32xbf16, #tpu.memory_space<vmem>>, vector<512x32xbf16>,
    return
  }
  func.func @transform_0(%arg0: i32) -> (i32, i32) {
    %c0_i32 = arith.constant 0 : i32
    %c0_i32_0 = arith.constant 0 : i32
    return %arg0, %c0_i32 : i32, i32
  }
  func.func @transform_1(%arg0: i32) -> (i32, i32) {
    %c0_i32 = arith.constant 0 : i32
    %c0_i32_0 = arith.constant 0 : i32
    %c0_i32_1 = arith.constant 0 : i32
    return %c0_i32, %c0_i32_0 : i32, i32
  }
  func.func @transform_2(%arg0: i32) -> (i32, i32) {
    %c0_i32 = arith.constant 0 : i32
    %c0_i32_0 = arith.constant 0 : i32
    %c0_i32_1 = arith.constant 0 : i32
    return %c0_i32, %c0_i32_0 : i32, i32
  }
  func.func @transform_3(%arg0: i32) -> (i32, i32) {
    %c0_i32 = arith.constant 0 : i32
    %c0_i32_0 = arith.constant 0 : i32
    %c0_i32_1 = arith.constant 0 : i32
    return %c0_i32, %c0_i32_0 : i32, i32
  }
  func.func @transform_4(%arg0: i32) -> (i32, i32) {
    %c0_i32 = arith.constant 0 : i32
    %c0_i32_0 = arith.constant 0 : i32
    return %arg0, %c0_i32 : i32, i32
  }
}

module attributes {stable_mosaic.version = 11 : i64} {
  func.func @_mm_scale_bias_act_kernel(%arg0: i32, %arg1: memref<64x128xbf16, #tpu.memory_space<vmem>>, %arg2: memref<128x256xbf16, #tpu.memory_space<vmem>>, %arg3: memref<1x256xf32, #tpu.memory_space<vmem>>, %arg4: memref<1x256xf32, #tpu.memory_space<vmem>>, %arg5: memref<64x256xbf16, #tpu.memory_space<vmem>>) attributes {dimension_semantics = [#tpu.dimension_semantics<parallel>], iteration_bounds = array<i64: 1>, scalar_prefetch = 0 : i64, scratch_operands = 0 : i64, tpu.core_type = #tpu.core_type<tc>, window_params = [{transform_indices = @transform_0, window_bounds = array<i64: 64, 128>}, {pipeline_mode = #tpu.pipeline_mode<synchronous>, transform_indices = @transform_1, window_bounds = array<i64: 128, 256>}, {pipeline_mode = #tpu.pipeline_mode<synchronous>, transform_indices = @transform_2, window_bounds = array<i64: 1, 256>}, {pipeline_mode = #tpu.pipeline_mode<synchronous>, transform_indices = @transform_3, window_bounds = array<i64: 1, 256>}, {transform_indices = @transform_4, window_bounds = array<i64: 64, 256>}]} {
    %c0 = arith.constant 0 : index
    %c0_0 = arith.constant 0 : index
    %0 = vector.load %arg1[%c0, %c0_0] : memref<64x128xbf16, #tpu.memory_space<vmem>>, vector<64x128xbf16>
    %c0_1 = arith.constant 0 : index
    %c0_2 = arith.constant 0 : index
    %1 = vector.load %arg2[%c0_1, %c0_2] : memref<128x256xbf16, #tpu.memory_space<vmem>>, vector<128x256xbf16>
    %cst = arith.constant dense<0.000000e+00> : vector<64x256xf32>
    %2 = tpu.matmul %0, %1, %cst {dimension_numbers = #tpu.dot_dimension_numbers<[1], [0], [0], [1], [0, 0, 1, 1], [], []>} : vector<64x128xbf16>, vector<128x256xbf16>, vector<64x256xf32> -> vector<64x256xf32>
    %c0_3 = arith.constant 0 : index
    %c0_4 = arith.constant 0 : index
    %3 = vector.load %arg3[%c0_3, %c0_4] : memref<1x256xf32, #tpu.memory_space<vmem>>, vector<1x256xf32>
    %4 = vector.broadcast %3 : vector<1x256xf32> to vector<64x256xf32>
    %5 = arith.mulf %2, %4 : vector<64x256xf32>
    %c0_5 = arith.constant 0 : index
    %c0_6 = arith.constant 0 : index
    %6 = vector.load %arg4[%c0_5, %c0_6] : memref<1x256xf32, #tpu.memory_space<vmem>>, vector<1x256xf32>
    %7 = vector.broadcast %6 : vector<1x256xf32> to vector<64x256xf32>
    %8 = arith.addf %5, %7 : vector<64x256xf32>
    %9 = arith.truncf %8 : vector<64x256xf32> to vector<64x256xbf16>
    %c0_7 = arith.constant 0 : index
    %c0_8 = arith.constant 0 : index
    %10 = vector.load %arg5[%c0_7, %c0_8] : memref<64x256xbf16, #tpu.memory_space<vmem>>, vector<64x256xbf16>
    tpu.vector_store %arg5[%c0_7, %c0_8], %9 {strides = array<i32>} : memref<64x256xbf16, #tpu.memory_space<vmem>>, vector<64x256xbf16>,
    return
  }
  func.func @transform_0(%arg0: i32) -> (i32, i32) {
    %c0_i32 = arith.constant 0 : i32
    %c0_i32_0 = arith.constant 0 : i32
    return %arg0, %c0_i32 : i32, i32
  }
  func.func @transform_1(%arg0: i32) -> (i32, i32) {
    %c0_i32 = arith.constant 0 : i32
    %c0_i32_0 = arith.constant 0 : i32
    %c0_i32_1 = arith.constant 0 : i32
    return %c0_i32, %c0_i32_0 : i32, i32
  }
  func.func @transform_2(%arg0: i32) -> (i32, i32) {
    %c0_i32 = arith.constant 0 : i32
    %c0_i32_0 = arith.constant 0 : i32
    %c0_i32_1 = arith.constant 0 : i32
    return %c0_i32, %c0_i32_0 : i32, i32
  }
  func.func @transform_3(%arg0: i32) -> (i32, i32) {
    %c0_i32 = arith.constant 0 : i32
    %c0_i32_0 = arith.constant 0 : i32
    %c0_i32_1 = arith.constant 0 : i32
    return %c0_i32, %c0_i32_0 : i32, i32
  }
  func.func @transform_4(%arg0: i32) -> (i32, i32) {
    %c0_i32 = arith.constant 0 : i32
    %c0_i32_0 = arith.constant 0 : i32
    return %arg0, %c0_i32 : i32, i32
  }
}

module attributes {stable_mosaic.version = 11 : i64} {
  func.func @_mm_scale_bias_act_kernel(%arg0: i32, %arg1: memref<64x256xbf16, #tpu.memory_space<vmem>>, %arg2: memref<256x128xbf16, #tpu.memory_space<vmem>>, %arg3: memref<1x128xf32, #tpu.memory_space<vmem>>, %arg4: memref<1x128xf32, #tpu.memory_space<vmem>>, %arg5: memref<64x128xf32, #tpu.memory_space<vmem>>) attributes {dimension_semantics = [#tpu.dimension_semantics<parallel>], iteration_bounds = array<i64: 1>, scalar_prefetch = 0 : i64, scratch_operands = 0 : i64, tpu.core_type = #tpu.core_type<tc>, window_params = [{transform_indices = @transform_0, window_bounds = array<i64: 64, 256>}, {pipeline_mode = #tpu.pipeline_mode<synchronous>, transform_indices = @transform_1, window_bounds = array<i64: 256, 128>}, {pipeline_mode = #tpu.pipeline_mode<synchronous>, transform_indices = @transform_2, window_bounds = array<i64: 1, 128>}, {pipeline_mode = #tpu.pipeline_mode<synchronous>, transform_indices = @transform_3, window_bounds = array<i64: 1, 128>}, {transform_indices = @transform_4, window_bounds = array<i64: 64, 128>}]} {
    %c0 = arith.constant 0 : index
    %c0_0 = arith.constant 0 : index
    %0 = vector.load %arg1[%c0, %c0_0] : memref<64x256xbf16, #tpu.memory_space<vmem>>, vector<64x256xbf16>
    %c0_1 = arith.constant 0 : index
    %c0_2 = arith.constant 0 : index
    %1 = vector.load %arg2[%c0_1, %c0_2] : memref<256x128xbf16, #tpu.memory_space<vmem>>, vector<256x128xbf16>
    %cst = arith.constant dense<0.000000e+00> : vector<64x128xf32>
    %2 = tpu.matmul %0, %1, %cst {dimension_numbers = #tpu.dot_dimension_numbers<[1], [0], [0], [1], [0, 0, 1, 1], [], []>} : vector<64x256xbf16>, vector<256x128xbf16>, vector<64x128xf32> -> vector<64x128xf32>
    %c0_3 = arith.constant 0 : index
    %c0_4 = arith.constant 0 : index
    %3 = vector.load %arg3[%c0_3, %c0_4] : memref<1x128xf32, #tpu.memory_space<vmem>>, vector<1x128xf32>
    %4 = vector.broadcast %3 : vector<1x128xf32> to vector<64x128xf32>
    %5 = arith.mulf %2, %4 : vector<64x128xf32>
    %c0_5 = arith.constant 0 : index
    %c0_6 = arith.constant 0 : index
    %6 = vector.load %arg4[%c0_5, %c0_6] : memref<1x128xf32, #tpu.memory_space<vmem>>, vector<1x128xf32>
    %7 = vector.broadcast %6 : vector<1x128xf32> to vector<64x128xf32>
    %8 = arith.addf %5, %7 : vector<64x128xf32>
    %cst_7 = arith.constant 0.000000e+00 : f32
    %9 = vector.broadcast %cst_7 : f32 to vector<64x128xf32>
    %10 = arith.subf %9, %8 : vector<64x128xf32>
    %11 = math.exp %10 : vector<64x128xf32>
    %cst_8 = arith.constant 1.000000e+00 : f32
    %12 = vector.broadcast %cst_8 : f32 to vector<64x128xf32>
    %13 = arith.addf %12, %11 : vector<64x128xf32>
    %cst_9 = arith.constant 1.000000e+00 : f32
    %14 = vector.broadcast %cst_9 : f32 to vector<64x128xf32>
    %15 = arith.divf %14, %13 : vector<64x128xf32>
    %c0_10 = arith.constant 0 : index
    %c0_11 = arith.constant 0 : index
    %16 = vector.load %arg5[%c0_10, %c0_11] : memref<64x128xf32, #tpu.memory_space<vmem>>, vector<64x128xf32>
    tpu.vector_store %arg5[%c0_10, %c0_11], %15 {strides = array<i32>} : memref<64x128xf32, #tpu.memory_space<vmem>>, vector<64x128xf32>,
    return
  }
  func.func @transform_0(%arg0: i32) -> (i32, i32) {
    %c0_i32 = arith.constant 0 : i32
    %c0_i32_0 = arith.constant 0 : i32
    return %arg0, %c0_i32 : i32, i32
  }
  func.func @transform_1(%arg0: i32) -> (i32, i32) {
    %c0_i32 = arith.constant 0 : i32
    %c0_i32_0 = arith.constant 0 : i32
    %c0_i32_1 = arith.constant 0 : i32
    return %c0_i32, %c0_i32_0 : i32, i32
  }
  func.func @transform_2(%arg0: i32) -> (i32, i32) {
    %c0_i32 = arith.constant 0 : i32
    %c0_i32_0 = arith.constant 0 : i32
    %c0_i32_1 = arith.constant 0 : i32
    return %c0_i32, %c0_i32_0 : i32, i32
  }
  func.func @transform_3(%arg0: i32) -> (i32, i32) {
    %c0_i32 = arith.constant 0 : i32
    %c0_i32_0 = arith.constant 0 : i32
    %c0_i32_1 = arith.constant 0 : i32
    return %c0_i32, %c0_i32_0 : i32, i32
  }
  func.func @transform_4(%arg0: i32) -> (i32, i32) {
    %c0_i32 = arith.constant 0 : i32
    %c0_i32_0 = arith.constant 0 : i32
    return %arg0, %c0_i32 : i32, i32
  }
}

</mosaic_0001>

<llo_original>
// kernel: _lambda_.12
$region0: #{_lambda_.12}
  #allocation0 [shape = 'u32[]', space=smem, size = 0x4, offset = 0x4, fixed_abs, tag = 'smem constant byte address 0x4 - core index']
  #allocation1 [shape = 'u32[72,128]{1,0:T(1,128)}', space=vmem, size = 0x9000, scoped, tag = 'internal scratch']
  %s0 = inlined_call_operand.vmem [shape: bf16[1024,9], index: 0, kind: input, shape index: {}]
  %s1 = inlined_call_operand.vmem [shape: bf16[9,4], index: 1, kind: input, shape index: {}]
  %s2 = inlined_call_operand.vmem [shape: f32[1,4], index: 2, kind: input, shape index: {}]
  %s3 = inlined_call_operand.vmem [shape: f32[1,4], index: 3, kind: input, shape index: {}]
  %s4 = inlined_call_operand.vmem [shape: bf16[1024,4], index: 4, kind: output, shape index: {}]
  %s5 = sld [smem:[#allocation0]]
  $region49: #{_lambda_.12} parent=0
    _
  %s7 = ssub.s32 1, %s5
  %s8 = scalar_select 0, %s7, %s5
  loop: start=0, step=1, limit=4
  $region2: #{_lambda_.12} parent=0 // loop_pre_header
    _
  $region3: #{_lambda_.12} parent=0 // loop_header
    %s10 = sphi 0, %s14
    %p11 = scmp.ge.s32.totalorder %s10, 4
    %s20 = sphi 0, %s22
    %s23 = sphi 0, %s20
    %s24 = sphi 0, %s23
    %s40 = sphi 0, %s24
    %s44 = sphi 0, %s44
    %s46 = sphi 0, %s44
    %s47 = sphi 0, %s46
    %s61 = sphi 0, %s47
    %s65 = sphi 0, %s65
    %s67 = sphi 0, %s65
    %s68 = sphi 0, %s67
    %s82 = sphi 0, %s68
    %s86 = sphi 0, %s86
    %s88 = sphi 0, %s86
    %s89 = sphi 0, %s88
    %s103 = sphi 0, %s89
    %s109 = sphi 0, %s111
    %s112 = sphi 0, %s109
    %s113 = sphi 0, %s112
    %s129 = sphi 0, %s113
  $region4: #{_lambda_.12} parent=0 // loop_header_branch
    %13 = sbr.rel (%p11) target = $region8
  $region5: #{_lambda_.12} parent=0 // loop_body
    %s15 = ssub.s32 %s10, 1
    %s16 = ssub.s32 %s10, 2
    %s17 = sadd.s32 %s10, 1
    %s18 = ssub.s32 %s10, %s17
    %p19 = scmp.eq.s32.totalorder %s18, 0
    %s21 = sadd.s32 %s20, 1
    %s22 = scalar_select %p19, %s20, %s21
    %p25 = pneg %p19
    %p26 = scmp.eq.s32.totalorder %s10, 1
    %p27 = por %p25, %p26
    %p28 = scmp.ne.s32.totalorder %s20, %s23
    %p29 = scmp.eq.s32.totalorder %s10, 0
    %p30 = por %p28, %p29
    %p31 = scmp.ne.s32.totalorder %s20, %s23
    %p32 = scmp.eq.s32.totalorder %s15, 1
    %p33 = por %p31, %p32
    %p34 = scmp.ne.s32.totalorder %s23, %s24
    %p35 = scmp.eq.s32.totalorder %s15, 0
    %p36 = por %p34, %p35
    %p37 = scmp.ne.s32.totalorder %s23, %s24
    %p38 = scmp.eq.s32.totalorder %s16, 1
    %p39 = por %p37, %p38
    %p41 = scmp.ne.s32.totalorder %s24, %s40
    %p42 = scmp.eq.s32.totalorder %s16, 0
    %p43 = por %p41, %p42
    %s45 = sadd.s32 %s44, 1
    %p48 = scmp.eq.s32.totalorder %s10, 1
    %p49 = scmp.ne.s32.totalorder %s44, %s46
    %p50 = scmp.eq.s32.totalorder %s10, 0
    %p51 = por %p49, %p50
    %p52 = scmp.ne.s32.totalorder %s44, %s46
    %p53 = scmp.eq.s32.totalorder %s15, 1
    %p54 = por %p52, %p53
    %p55 = scmp.ne.s32.totalorder %s46, %s47
    %p56 = scmp.eq.s32.totalorder %s15, 0
    %p57 = por %p55, %p56
    %p58 = scmp.ne.s32.totalorder %s46, %s47
    %p59 = scmp.eq.s32.totalorder %s16, 1
    %p60 = por %p58, %p59
    %p62 = scmp.ne.s32.totalorder %s47, %s61
    %p63 = scmp.eq.s32.totalorder %s16, 0
    %p64 = por %p62, %p63
    %s66 = sadd.s32 %s65, 1
    %p69 = scmp.eq.s32.totalorder %s10, 1
    %p70 = scmp.ne.s32.totalorder %s65, %s67
    %p71 = scmp.eq.s32.totalorder %s10, 0
    %p72 = por %p70, %p71
    %p73 = scmp.ne.s32.totalorder %s65, %s67
    %p74 = scmp.eq.s32.totalorder %s15, 1
    %p75 = por %p73, %p74
    %p76 = scmp.ne.s32.totalorder %s67, %s68
    %p77 = scmp.eq.s32.totalorder %s15, 0
    %p78 = por %p76, %p77
    %p79 = scmp.ne.s32.totalorder %s67, %s68
    %p80 = scmp.eq.s32.totalorder %s16, 1
    %p81 = por %p79, %p80
    %p83 = scmp.ne.s32.totalorder %s68, %s82
    %p84 = scmp.eq.s32.totalorder %s16, 0
    %p85 = por %p83, %p84
    %s87 = sadd.s32 %s86, 1
    %p90 = scmp.eq.s32.totalorder %s10, 1
    %p91 = scmp.ne.s32.totalorder %s86, %s88
    %p92 = scmp.eq.s32.totalorder %s10, 0
    %p93 = por %p91, %p92
    %p94 = scmp.ne.s32.totalorder %s86, %s88
    %p95 = scmp.eq.s32.totalorder %s15, 1
    %p96 = por %p94, %p95
    %p97 = scmp.ne.s32.totalorder %s88, %s89
    %p98 = scmp.eq.s32.totalorder %s15, 0
    %p99 = por %p97, %p98
    %p100 = scmp.ne.s32.totalorder %s88, %s89
    %p101 = scmp.eq.s32.totalorder %s16, 1
    %p102 = por %p100, %p101
    %p104 = scmp.ne.s32.totalorder %s89, %s103
    %p105 = scmp.eq.s32.totalorder %s16, 0
    %p106 = por %p104, %p105
    %s107 = ssub.s32 %s10, %s17
    %p108 = scmp.eq.s32.totalorder %s107, 0
    %s110 = sadd.s32 %s109, 1
    %s111 = scalar_select %p108, %s109, %s110
    %p114 = pneg %p108
    %p115 = scmp.eq.s32.totalorder %s10, 1
    %p116 = por %p114, %p115
    %p117 = scmp.ne.s32.totalorder %s109, %s112
    %p118 = scmp.eq.s32.totalorder %s10, 0
    %p119 = por %p117, %p118
    %p120 = scmp.ne.s32.totalorder %s109, %s112
    %p121 = scmp.eq.s32.totalorder %s15, 1
    %p122 = por %p120, %p121
    %p123 = scmp.ne.s32.totalorder %s112, %s113
    %p124 = scmp.eq.s32.totalorder %s15, 0
    %p125 = por %p123, %p124
    %p126 = scmp.ne.s32.totalorder %s112, %s113
    %p127 = scmp.eq.s32.totalorder %s16, 1
    %p128 = por %p126, %p127
    %p130 = scmp.ne.s32.totalorder %s113, %s129
    %p131 = scmp.eq.s32.totalorder %s16, 0
    %p132 = por %p130, %p131
    %p133 = scmp.le.s32.totalorder 1, %s10
    %p134 = scmp.lt.s32.totalorder %s10, 3
    %p135 = pnand %p133, %p134
    %p136 = pneg %p135
    // Predicated region
    $region9: #{_lambda_.12} parent=5 // pred_check
      _
    $region10: #{_lambda_.12} parent=5 // pred_check_branch
      %138 = sbr.rel (%p135) target = $region12
    $region11: #{_lambda_.12} parent=5 // pred_region
      %s139 = ssub.s32 %s10, 1
      // Predicated region
      $region13: #{_lambda_.12} parent=11 // pred_check
        %p140 = pneg %p57
      $region14: #{_lambda_.12} parent=11 // pred_check_branch
        %142 = sbr.rel (%p140) target = $region16
      $region15: #{_lambda_.12} parent=11 // pred_region
        _
      $region16: #{_lambda_.12} parent=11 // pred_fallthru
        _
      // Predicated region
      $region17: #{_lambda_.12} parent=11 // pred_check
        %p143 = pneg %p78
      $region18: #{_lambda_.12} parent=11 // pred_check_branch
        %145 = sbr.rel (%p143) target = $region20
      $region19: #{_lambda_.12} parent=11 // pred_region
        _
      $region20: #{_lambda_.12} parent=11 // pred_fallthru
        _
      // Predicated region
      $region21: #{_lambda_.12} parent=11 // pred_check
        %p146 = pneg %p99
      $region22: #{_lambda_.12} parent=11 // pred_check_branch
        %148 = sbr.rel (%p146) target = $region24
      $region23: #{_lambda_.12} parent=11 // pred_region
        _
      $region24: #{_lambda_.12} parent=11 // pred_fallthru
        _
    $region12: #{_lambda_.12} parent=5 // pred_fallthru
      _
    %p149 = scmp.lt.s32.totalorder %s10, 2
    // Predicated region
    $region25: #{_lambda_.12} parent=5 // pred_check
      %p150 = pneg %p149
    $region26: #{_lambda_.12} parent=5 // pred_check_branch
      %152 = sbr.rel (%p150) target = $region28
    $region27: #{_lambda_.12} parent=5 // pred_region
      // Predicated region
      $region29: #{_lambda_.12} parent=27 // pred_check
        %p153 = pneg %p30
      $region30: #{_lambda_.12} parent=27 // pred_check_branch
        %155 = sbr.rel (%p153) target = $region32
      $region31: #{_lambda_.12} parent=27 // pred_region
        %s156 = smul.u32 64, %s10
        %p157 = scmp.lt.s32.totalorder %s156, 127
        %s158 = scalar_select %p157, %s156, 127
        %s159 = smul.addr %s158, 4
        %s160 = scalar_lea.vmem %s0, %s159
        %s161 = smul.u32 64, %s10
      $region32: #{_lambda_.12} parent=27 // pred_fallthru
        _
    $region28: #{_lambda_.12} parent=5 // pred_fallthru
      _
    %p162 = scmp.le.s32.totalorder 1, %s10
    %p163 = scmp.lt.s32.totalorder %s10, 3
    %p164 = pnand %p162, %p163
    %p165 = pneg %p164
    // Predicated region
    $region33: #{_lambda_.12} parent=5 // pred_check
      _
    $region34: #{_lambda_.12} parent=5 // pred_check_branch
      %167 = sbr.rel (%p164) target = $region36
    $region35: #{_lambda_.12} parent=5 // pred_region
      %s168 = ssub.s32 %s10, 1
      %s169 = smul.u32 64, %s15
      %p170 = scmp.lt.s32.totalorder %s169, 127
      %s171 = scalar_select %p170, %s169, 127
      %s172 = smul.addr %s171, 4
      %s173 = scalar_lea.vmem %s0, %s172
      %p174 = pneg %p36
      %p175 = pneg %p33
      %p176 = pneg %p57
      %p177 = pneg %p54
      %p178 = pneg %p78
      %p179 = pneg %p75
      %p180 = pneg %p99
      %p181 = pneg %p96
      %p182 = pneg %p125
      %p183 = pneg %p122
      %s184 = smul.u32 64, %s15
      %p185 = scmp.lt.s32.totalorder %s184, 127
      %s186 = scalar_select %p185, %s184, 127
      %s187 = smul.addr %s186, 4
      %s188 = scalar_lea.vmem %s4, %s187
      %s189 = smul.u32 64, %s15
      %p190 = scmp.lt.s32.totalorder %s189, 127
      %s191 = scalar_select %p190, %s189, 127
      %s192 = smul.addr %s191, 4
      %s193 = scalar_lea.vmem %s0, %s192
      %s194 = smul.u32 64, %s15
      %s195 = smul.u32 64, %s15
      %p196 = scmp.lt.s32.totalorder %s195, 127
      %s197 = scalar_select %p196, %s195, 127
      %s198 = smul.addr %s197, 4
      %s199 = scalar_lea.vmem %s4, %s198
      %s200 = smul.u32 64, %s15
      %v202 = vld [vmem:[%s193] sm:$0xf]
      %v203 = vld [vmem:[%s193 + $0x4] sm:$0xf]
      %v204 = vld [vmem:[%s193 + $0x8] sm:$0xf]
      %v205 = vld [vmem:[%s193 + $0xc] sm:$0xf]
      %v206 = vld [vmem:[%s193 + $0x10] sm:$0xf]
      %v207 = vld [vmem:[%s193 + $0x14] sm:$0xf]
      %v208 = vld [vmem:[%s193 + $0x18] sm:$0xf]
      %v209 = vld [vmem:[%s193 + $0x1c] sm:$0xf]
      %v210 = vld [vmem:[%s193 + $0x20] sm:$0xf]
      %v211 = vld [vmem:[%s193 + $0x24] sm:$0xf]
      %v212 = vld [vmem:[%s193 + $0x28] sm:$0xf]
      %v213 = vld [vmem:[%s193 + $0x2c] sm:$0xf]
      %v214 = vld [vmem:[%s193 + $0x30] sm:$0xf]
      %v215 = vld [vmem:[%s193 + $0x34] sm:$0xf]
      %v216 = vld [vmem:[%s193 + $0x38] sm:$0xf]
      %v217 = vld [vmem:[%s193 + $0x3c] sm:$0xf]
      %v218 = vld [vmem:[%s193 + $0x40] sm:$0xf]
      %v219 = vld [vmem:[%s193 + $0x44] sm:$0xf]
      %v220 = vld [vmem:[%s193 + $0x48] sm:$0xf]
      %v221 = vld [vmem:[%s193 + $0x4c] sm:$0xf]
      %v222 = vld [vmem:[%s193 + $0x50] sm:$0xf]
      %v223 = vld [vmem:[%s193 + $0x54] sm:$0xf]
      %v224 = vld [vmem:[%s193 + $0x58] sm:$0xf]
      %v225 = vld [vmem:[%s193 + $0x5c] sm:$0xf]
      %v226 = vld [vmem:[%s193 + $0x60] sm:$0xf]
      %v227 = vld [vmem:[%s193 + $0x64] sm:$0xf]
      %v228 = vld [vmem:[%s193 + $0x68] sm:$0xf]
      %v229 = vld [vmem:[%s193 + $0x6c] sm:$0xf]
      %v230 = vld [vmem:[%s193 + $0x70] sm:$0xf]
      %v231 = vld [vmem:[%s193 + $0x74] sm:$0xf]
      %v232 = vld [vmem:[%s193 + $0x78] sm:$0xf]
      %v233 = vld [vmem:[%s193 + $0x7c] sm:$0xf]
      %v234 = vld [vmem:[%s193 + $0x80] sm:$0xf]
      %v235 = vld [vmem:[%s193 + $0x84] sm:$0xf]
      %v236 = vld [vmem:[%s193 + $0x88] sm:$0xf]
      %v237 = vld [vmem:[%s193 + $0x8c] sm:$0xf]
      %v238 = vld [vmem:[%s193 + $0x90] sm:$0xf]
      %v239 = vld [vmem:[%s193 + $0x94] sm:$0xf]
      %v240 = vld [vmem:[%s193 + $0x98] sm:$0xf]
      %v241 = vld [vmem:[%s193 + $0x9c] sm:$0xf]
      %v242 = vld [vmem:[%s193 + $0xa0] sm:$0xf]
      %v243 = vld [vmem:[%s193 + $0xa4] sm:$0xf]
      %v244 = vld [vmem:[%s193 + $0xa8] sm:$0xf]
      %v245 = vld [vmem:[%s193 + $0xac] sm:$0xf]
      %v246 = vld [vmem:[%s193 + $0xb0] sm:$0xf]
      %v247 = vld [vmem:[%s193 + $0xb4] sm:$0xf]
      %v248 = vld [vmem:[%s193 + $0xb8] sm:$0xf]
      %v249 = vld [vmem:[%s193 + $0xbc] sm:$0xf]
      %v250 = vld [vmem:[%s193 + $0xc0] sm:$0xf]
      %v251 = vld [vmem:[%s193 + $0xc4] sm:$0xf]
      %v252 = vld [vmem:[%s193 + $0xc8] sm:$0xf]
      %v253 = vld [vmem:[%s193 + $0xcc] sm:$0xf]
      %v254 = vld [vmem:[%s193 + $0xd0] sm:$0xf]
      %v255 = vld [vmem:[%s193 + $0xd4] sm:$0xf]
      %v256 = vld [vmem:[%s193 + $0xd8] sm:$0xf]
      %v257 = vld [vmem:[%s193 + $0xdc] sm:$0xf]
      %v258 = vld [vmem:[%s193 + $0xe0] sm:$0xf]
      %v259 = vld [vmem:[%s193 + $0xe4] sm:$0xf]
      %v260 = vld [vmem:[%s193 + $0xe8] sm:$0xf]
      %v261 = vld [vmem:[%s193 + $0xec] sm:$0xf]
      %v262 = vld [vmem:[%s193 + $0xf0] sm:$0xf]
      %v263 = vld [vmem:[%s193 + $0xf4] sm:$0xf]
      %v264 = vld [vmem:[%s193 + $0xf8] sm:$0xf]
      %v265 = vld [vmem:[%s193 + $0xfc] sm:$0xf]
      %v266 = vld [vmem:[%s1] sm:$0xf]
      %v267 = vld [vmem:[%s1 + $0x4] sm:$0x1]
      %v332 = vunpack.c.l.b16 %v202
      %v333 = vunpack.c.l.b16 %v203
      %v334 = vunpack.c.l.b16 %v204
      %v335 = vunpack.c.l.b16 %v205
      %v336 = vunpack.c.l.b16 %v206
      %v337 = vunpack.c.l.b16 %v207
      %v338 = vunpack.c.l.b16 %v208
      %v339 = vunpack.c.l.b16 %v209
      %v340 = vunpack.c.l.b16 %v210
      %v341 = vunpack.c.l.b16 %v211
      %v342 = vunpack.c.l.b16 %v212
      %v343 = vunpack.c.l.b16 %v213
      %v344 = vunpack.c.l.b16 %v214
      %v345 = vunpack.c.l.b16 %v215
      %v346 = vunpack.c.l.b16 %v216
      %v347 = vunpack.c.l.b16 %v217
      %v348 = vunpack.c.l.b16 %v218
      %v349 = vunpack.c.l.b16 %v219
      %v350 = vunpack.c.l.b16 %v220
      %v351 = vunpack.c.l.b16 %v221
      %v352 = vunpack.c.l.b16 %v222
      %v353 = vunpack.c.l.b16 %v223
      %v354 = vunpack.c.l.b16 %v224
      %v355 = vunpack.c.l.b16 %v225
      %v356 = vunpack.c.l.b16 %v226
      %v357 = vunpack.c.l.b16 %v227
      %v358 = vunpack.c.l.b16 %v228
      %v359 = vunpack.c.l.b16 %v229
      %v360 = vunpack.c.l.b16 %v230
      %v361 = vunpack.c.l.b16 %v231
      %v362 = vunpack.c.l.b16 %v232
      %v363 = vunpack.c.l.b16 %v233
      %v364 = vunpack.c.l.b16 %v234
      %v365 = vunpack.c.l.b16 %v235
      %v366 = vunpack.c.l.b16 %v236
      %v367 = vunpack.c.l.b16 %v237
      %v368 = vunpack.c.l.b16 %v238
      %v369 = vunpack.c.l.b16 %v239
      %v370 = vunpack.c.l.b16 %v240
      %v371 = vunpack.c.l.b16 %v241
      %v372 = vunpack.c.l.b16 %v242
      %v373 = vunpack.c.l.b16 %v243
      %v374 = vunpack.c.l.b16 %v244
      %v375 = vunpack.c.l.b16 %v245
      %v376 = vunpack.c.l.b16 %v246
      %v377 = vunpack.c.l.b16 %v247
      %v378 = vunpack.c.l.b16 %v248
      %v379 = vunpack.c.l.b16 %v249
      %v380 = vunpack.c.l.b16 %v250
      %v381 = vunpack.c.l.b16 %v251
      %v382 = vunpack.c.l.b16 %v252
      %v383 = vunpack.c.l.b16 %v253
      %v384 = vunpack.c.l.b16 %v254
      %v385 = vunpack.c.l.b16 %v255
      %v386 = vunpack.c.l.b16 %v256
      %v387 = vunpack.c.l.b16 %v257
      %v388 = vunpack.c.l.b16 %v258
      %v389 = vunpack.c.l.b16 %v259
      %v390 = vunpack.c.l.b16 %v260
      %v391 = vunpack.c.l.b16 %v261
      %v392 = vunpack.c.l.b16 %v262
      %v393 = vunpack.c.l.b16 %v263
      %v394 = vunpack.c.l.b16 %v264
      %v395 = vunpack.c.l.b16 %v265
      %v396 = vpack.c.b16 %v333, %v332
      %v397 = vpack.c.b16 %v335, %v334
      %v398 = vpack.c.b16 %v337, %v336
      %v399 = vpack.c.b16 %v339, %v338
      %v400 = vpack.c.b16 %v341, %v340
      %v401 = vpack.c.b16 %v343, %v342
      %v402 = vpack.c.b16 %v345, %v344
      %v403 = vpack.c.b16 %v347, %v346
      %v404 = vpack.c.b16 %v349, %v348
      %v405 = vpack.c.b16 %v351, %v350
      %v406 = vpack.c.b16 %v353, %v352
      %v407 = vpack.c.b16 %v355, %v354
      %v408 = vpack.c.b16 %v357, %v356
      %v409 = vpack.c.b16 %v359, %v358
      %v410 = vpack.c.b16 %v361, %v360
      %v411 = vpack.c.b16 %v363, %v362
      %v412 = vpack.c.b16 %v365, %v364
      %v413 = vpack.c.b16 %v367, %v366
      %v414 = vpack.c.b16 %v369, %v368
      %v415 = vpack.c.b16 %v371, %v370
      %v416 = vpack.c.b16 %v373, %v372
      %v417 = vpack.c.b16 %v375, %v374
      %v418 = vpack.c.b16 %v377, %v376
      %v419 = vpack.c.b16 %v379, %v378
      %v420 = vpack.c.b16 %v381, %v380
      %v421 = vpack.c.b16 %v383, %v382
      %v422 = vpack.c.b16 %v385, %v384
      %v423 = vpack.c.b16 %v387, %v386
      %v424 = vpack.c.b16 %v389, %v388
      %v425 = vpack.c.b16 %v391, %v390
      %v426 = vpack.c.b16 %v393, %v392
      %v427 = vpack.c.b16 %v395, %v394
      %v430 = vunpack.c.l.b16 %v266
      %v431 = vunpack.c.l.b16 %v267
      %v432 = vpack.c.b16 %v431, %v430
      %vm433 = vcmask 72704
      %v435 = vsel %vm433, %v396, 0
      %v438 = vsel %vm433, %v397, 0
      %v441 = vsel %vm433, %v398, 0
      %v444 = vsel %vm433, %v399, 0
      %v447 = vsel %vm433, %v400, 0
      %v450 = vsel %vm433, %v401, 0
      %v453 = vsel %vm433, %v402, 0
      %v456 = vsel %vm433, %v403, 0
      %v459 = vsel %vm433, %v404, 0
      %v462 = vsel %vm433, %v405, 0
      %v465 = vsel %vm433, %v406, 0
      %v468 = vsel %vm433, %v407, 0
      %v471 = vsel %vm433, %v408, 0
      %v474 = vsel %vm433, %v409, 0
      %v477 = vsel %vm433, %v410, 0
      %v480 = vsel %vm433, %v411, 0
      %v483 = vsel %vm433, %v412, 0
      %v486 = vsel %vm433, %v413, 0
      %v489 = vsel %vm433, %v414, 0
      %v492 = vsel %vm433, %v415, 0
      %v495 = vsel %vm433, %v416, 0
      %v498 = vsel %vm433, %v417, 0
      %v501 = vsel %vm433, %v418, 0
      %v504 = vsel %vm433, %v419, 0
      %v507 = vsel %vm433, %v420, 0
      %v510 = vsel %vm433, %v421, 0
      %v513 = vsel %vm433, %v422, 0
      %v516 = vsel %vm433, %v423, 0
      %v519 = vsel %vm433, %v424, 0
      %v522 = vsel %vm433, %v425, 0
      %v525 = vsel %vm433, %v426, 0
      %v528 = vsel %vm433, %v427, 0
      %vm530 = vcmask 1043456
      %vm531 = vcmask 1044480
      %v532 = vsel %vm530, 4294967295, 65535
      %v533 = vsel %vm531, %v532, 0
      %v535 = vand.u32 %v432, %v533
      %537 = vmatpush.bf16.msra.mxu0 0
      %538 = vmatpush.bf16.msra.mxu0 0
      %539 = vmatpush.bf16.msra.mxu0 0
      %540 = vmatpush.bf16.msra.mxu0 0
      %541 = vmatpush.bf16.msra.mxu0 0
      %542 = vmatpush.bf16.msra.mxu0 0
      %543 = vmatpush.bf16.msra.mxu0 0
      %544 = vmatpush.bf16.msra.mxu0 %v535
      %545 = vmatmul.bf16.gmra.mxu0 %v435
      %v546 = vpop.f32.mrf.mxu0
      %v547 = vadd.f32 0.0, %v546
      %v548 = vpop.f32.mrf.mxu0
      %v549 = vadd.f32 0.0, %v548
      %550 = vmatmul.bf16.gmra.mxu0 %v438
      %v551 = vpop.f32.mrf.mxu0
      %v552 = vadd.f32 0.0, %v551
      %v553 = vpop.f32.mrf.mxu0
      %v554 = vadd.f32 0.0, %v553
      %555 = vmatmul.bf16.gmra.mxu0 %v441
      %v556 = vpop.f32.mrf.mxu0
      %v557 = vadd.f32 0.0, %v556
      %v558 = vpop.f32.mrf.mxu0
      %v559 = vadd.f32 0.0, %v558
      %560 = vmatmul.bf16.gmra.mxu0 %v444
      %v561 = vpop.f32.mrf.mxu0
      %v562 = vadd.f32 0.0, %v561
      %v563 = vpop.f32.mrf.mxu0
      %v564 = vadd.f32 0.0, %v563
      %565 = vmatmul.bf16.gmra.mxu0 %v447
      %v566 = vpop.f32.mrf.mxu0
      %v567 = vadd.f32 0.0, %v566
      %v568 = vpop.f32.mrf.mxu0
      %v569 = vadd.f32 0.0, %v568
      %570 = vmatmul.bf16.gmra.mxu0 %v450
      %v571 = vpop.f32.mrf.mxu0
      %v572 = vadd.f32 0.0, %v571
      %v573 = vpop.f32.mrf.mxu0
      %v574 = vadd.f32 0.0, %v573
      %575 = vmatmul.bf16.gmra.mxu0 %v453
      %v576 = vpop.f32.mrf.mxu0
      %v577 = vadd.f32 0.0, %v576
      %v578 = vpop.f32.mrf.mxu0
      %v579 = vadd.f32 0.0, %v578
      %580 = vmatmul.bf16.gmra.mxu0 %v456
      %v581 = vpop.f32.mrf.mxu0
      %v582 = vadd.f32 0.0, %v581
      %v583 = vpop.f32.mrf.mxu0
      %v584 = vadd.f32 0.0, %v583
      %585 = vmatmul.bf16.gmra.mxu0 %v459
      %v586 = vpop.f32.mrf.mxu0
      %v587 = vadd.f32 0.0, %v586
      %v588 = vpop.f32.mrf.mxu0
      %v589 = vadd.f32 0.0, %v588
      %590 = vmatmul.bf16.gmra.mxu0 %v462
      %v591 = vpop.f32.mrf.mxu0
      %v592 = vadd.f32 0.0, %v591
      %v593 = vpop.f32.mrf.mxu0
      %v594 = vadd.f32 0.0, %v593
      %595 = vmatmul.bf16.gmra.mxu0 %v465
      %v596 = vpop.f32.mrf.mxu0
      %v597 = vadd.f32 0.0, %v596
      %v598 = vpop.f32.mrf.mxu0
      %v599 = vadd.f32 0.0, %v598
      %600 = vmatmul.bf16.gmra.mxu0 %v468
      %v601 = vpop.f32.mrf.mxu0
      %v602 = vadd.f32 0.0, %v601
      %v603 = vpop.f32.mrf.mxu0
      %v604 = vadd.f32 0.0, %v603
      %605 = vmatmul.bf16.gmra.mxu0 %v471
      %v606 = vpop.f32.mrf.mxu0
      %v607 = vadd.f32 0.0, %v606
      %v608 = vpop.f32.mrf.mxu0
      %v609 = vadd.f32 0.0, %v608
      %610 = vmatmul.bf16.gmra.mxu0 %v474
      %v611 = vpop.f32.mrf.mxu0
      %v612 = vadd.f32 0.0, %v611
      %v613 = vpop.f32.mrf.mxu0
      %v614 = vadd.f32 0.0, %v613
      %615 = vmatmul.bf16.gmra.mxu0 %v477
      %v616 = vpop.f32.mrf.mxu0
      %v617 = vadd.f32 0.0, %v616
      %v618 = vpop.f32.mrf.mxu0
      %v619 = vadd.f32 0.0, %v618
      %620 = vmatmul.bf16.gmra.mxu0 %v480
      %v621 = vpop.f32.mrf.mxu0
      %v622 = vadd.f32 0.0, %v621
      %v623 = vpop.f32.mrf.mxu0
      %v624 = vadd.f32 0.0, %v623
      %625 = vmatmul.bf16.gmra.mxu0 %v483
      %v626 = vpop.f32.mrf.mxu0
      %v627 = vadd.f32 0.0, %v626
      %v628 = vpop.f32.mrf.mxu0
      %v629 = vadd.f32 0.0, %v628
      %630 = vmatmul.bf16.gmra.mxu0 %v486
      %v631 = vpop.f32.mrf.mxu0
      %v632 = vadd.f32 0.0, %v631
      %v633 = vpop.f32.mrf.mxu0
      %v634 = vadd.f32 0.0, %v633
      %635 = vmatmul.bf16.gmra.mxu0 %v489
      %v636 = vpop.f32.mrf.mxu0
      %v637 = vadd.f32 0.0, %v636
      %v638 = vpop.f32.mrf.mxu0
      %v639 = vadd.f32 0.0, %v638
      %640 = vmatmul.bf16.gmra.mxu0 %v492
      %v641 = vpop.f32.mrf.mxu0
      %v642 = vadd.f32 0.0, %v641
      %v643 = vpop.f32.mrf.mxu0
      %v644 = vadd.f32 0.0, %v643
      %645 = vmatmul.bf16.gmra.mxu0 %v495
      %v646 = vpop.f32.mrf.mxu0
      %v647 = vadd.f32 0.0, %v646
      %v648 = vpop.f32.mrf.mxu0
      %v649 = vadd.f32 0.0, %v648
      %650 = vmatmul.bf16.gmra.mxu0 %v498
      %v651 = vpop.f32.mrf.mxu0
      %v652 = vadd.f32 0.0, %v651
      %v653 = vpop.f32.mrf.mxu0
      %v654 = vadd.f32 0.0, %v653
      %655 = vmatmul.bf16.gmra.mxu0 %v501
      %v656 = vpop.f32.mrf.mxu0
      %v657 = vadd.f32 0.0, %v656
      %v658 = vpop.f32.mrf.mxu0
      %v659 = vadd.f32 0.0, %v658
      %660 = vmatmul.bf16.gmra.mxu0 %v504
      %v661 = vpop.f32.mrf.mxu0
      %v662 = vadd.f32 0.0, %v661
      %v663 = vpop.f32.mrf.mxu0
      %v664 = vadd.f32 0.0, %v663
      %665 = vmatmul.bf16.gmra.mxu0 %v507
      %v666 = vpop.f32.mrf.mxu0
      %v667 = vadd.f32 0.0, %v666
      %v668 = vpop.f32.mrf.mxu0
      %v669 = vadd.f32 0.0, %v668
      %670 = vmatmul.bf16.gmra.mxu0 %v510
      %v671 = vpop.f32.mrf.mxu0
      %v672 = vadd.f32 0.0, %v671
      %v673 = vpop.f32.mrf.mxu0
      %v674 = vadd.f32 0.0, %v673
      %675 = vmatmul.bf16.gmra.mxu0 %v513
      %v676 = vpop.f32.mrf.mxu0
      %v677 = vadd.f32 0.0, %v676
      %v678 = vpop.f32.mrf.mxu0
      %v679 = vadd.f32 0.0, %v678
      %680 = vmatmul.bf16.gmra.mxu0 %v516
      %v681 = vpop.f32.mrf.mxu0
      %v682 = vadd.f32 0.0, %v681
      %v683 = vpop.f32.mrf.mxu0
      %v684 = vadd.f32 0.0, %v683
      %685 = vmatmul.bf16.gmra.mxu0 %v519
      %v686 = vpop.f32.mrf.mxu0
      %v687 = vadd.f32 0.0, %v686
      %v688 = vpop.f32.mrf.mxu0
      %v689 = vadd.f32 0.0, %v688
      %690 = vmatmul.bf16.gmra.mxu0 %v522
      %v691 = vpop.f32.mrf.mxu0
      %v692 = vadd.f32 0.0, %v691
      %v693 = vpop.f32.mrf.mxu0
      %v694 = vadd.f32 0.0, %v693
      %695 = vmatmul.bf16.gmra.mxu0 %v525
      %v696 = vpop.f32.mrf.mxu0
      %v697 = vadd.f32 0.0, %v696
      %v698 = vpop.f32.mrf.mxu0
      %v699 = vadd.f32 0.0, %v698
      %700 = vmatmul.bf16.gmra.mxu0 %v528
      %v701 = vpop.f32.mrf.mxu0
      %v702 = vadd.f32 0.0, %v701
      %v703 = vpop.f32.mrf.mxu0
      %v704 = vadd.f32 0.0, %v703
      %705 = vdwg.mxu0
      %v706 = vld [vmem:[%s2] sm:$0x1]
      %v708 = vperm.slane %v706, 0
      %v710 = vmul.f32 %v547, %v708
      %v711 = vmul.f32 %v549, %v708
      %v712 = vmul.f32 %v552, %v708
      %v713 = vmul.f32 %v554, %v708
      %v714 = vmul.f32 %v557, %v708
      %v715 = vmul.f32 %v559, %v708
      %v716 = vmul.f32 %v562, %v708
      %v717 = vmul.f32 %v564, %v708
      %v718 = vmul.f32 %v567, %v708
      %v719 = vmul.f32 %v569, %v708
      %v720 = vmul.f32 %v572, %v708
      %v721 = vmul.f32 %v574, %v708
      %v722 = vmul.f32 %v577, %v708
      %v723 = vmul.f32 %v579, %v708
      %v724 = vmul.f32 %v582, %v708
      %v725 = vmul.f32 %v584, %v708
      %v726 = vmul.f32 %v587, %v708
      %v727 = vmul.f32 %v589, %v708
      %v728 = vmul.f32 %v592, %v708
      %v729 = vmul.f32 %v594, %v708
      %v730 = vmul.f32 %v597, %v708
      %v731 = vmul.f32 %v599, %v708
      %v732 = vmul.f32 %v602, %v708
      %v733 = vmul.f32 %v604, %v708
      %v734 = vmul.f32 %v607, %v708
      %v735 = vmul.f32 %v609, %v708
      %v736 = vmul.f32 %v612, %v708
      %v737 = vmul.f32 %v614, %v708
      %v738 = vmul.f32 %v617, %v708
      %v739 = vmul.f32 %v619, %v708
      %v740 = vmul.f32 %v622, %v708
      %v741 = vmul.f32 %v624, %v708
      %v742 = vmul.f32 %v627, %v708
      %v743 = vmul.f32 %v629, %v708
      %v744 = vmul.f32 %v632, %v708
      %v745 = vmul.f32 %v634, %v708
      %v746 = vmul.f32 %v637, %v708
      %v747 = vmul.f32 %v639, %v708
      %v748 = vmul.f32 %v642, %v708
      %v749 = vmul.f32 %v644, %v708
      %v750 = vmul.f32 %v647, %v708
      %v751 = vmul.f32 %v649, %v708
      %v752 = vmul.f32 %v652, %v708
      %v753 = vmul.f32 %v654, %v708
      %v754 = vmul.f32 %v657, %v708
      %v755 = vmul.f32 %v659, %v708
      %v756 = vmul.f32 %v662, %v708
      %v757 = vmul.f32 %v664, %v708
      %v758 = vmul.f32 %v667, %v708
      %v759 = vmul.f32 %v669, %v708
      %v760 = vmul.f32 %v672, %v708
      %v761 = vmul.f32 %v674, %v708
      %v762 = vmul.f32 %v677, %v708
      %v763 = vmul.f32 %v679, %v708
      %v764 = vmul.f32 %v682, %v708
      %v765 = vmul.f32 %v684, %v708
      %v766 = vmul.f32 %v687, %v708
      %v767 = vmul.f32 %v689, %v708
      %v768 = vmul.f32 %v692, %v708
      %v769 = vmul.f32 %v694, %v708
      %v770 = vmul.f32 %v697, %v708
      %v771 = vmul.f32 %v699, %v708
      %v772 = vmul.f32 %v702, %v708
      %v773 = vmul.f32 %v704, %v708
      %v774 = vld [vmem:[%s3] sm:$0x1]
      %v776 = vperm.slane %v774, 0
      %v778 = vadd.f32 %v710, %v776
      %v779 = vadd.f32 %v711, %v776
      %v780 = vadd.f32 %v712, %v776
      %v781 = vadd.f32 %v713, %v776
      %v782 = vadd.f32 %v714, %v776
      %v783 = vadd.f32 %v715, %v776
      %v784 = vadd.f32 %v716, %v776
      %v785 = vadd.f32 %v717, %v776
      %v786 = vadd.f32 %v718, %v776
      %v787 = vadd.f32 %v719, %v776
      %v788 = vadd.f32 %v720, %v776
      %v789 = vadd.f32 %v721, %v776
      %v790 = vadd.f32 %v722, %v776
      %v791 = vadd.f32 %v723, %v776
      %v792 = vadd.f32 %v724, %v776
      %v793 = vadd.f32 %v725, %v776
      %v794 = vadd.f32 %v726, %v776
      %v795 = vadd.f32 %v727, %v776
      %v796 = vadd.f32 %v728, %v776
      %v797 = vadd.f32 %v729, %v776
      %v798 = vadd.f32 %v730, %v776
      %v799 = vadd.f32 %v731, %v776
      %v800 = vadd.f32 %v732, %v776
      %v801 = vadd.f32 %v733, %v776
      %v802 = vadd.f32 %v734, %v776
      %v803 = vadd.f32 %v735, %v776
      %v804 = vadd.f32 %v736, %v776
      %v805 = vadd.f32 %v737, %v776
      %v806 = vadd.f32 %v738, %v776
      %v807 = vadd.f32 %v739, %v776
      %v808 = vadd.f32 %v740, %v776
      %v809 = vadd.f32 %v741, %v776
      %v810 = vadd.f32 %v742, %v776
      %v811 = vadd.f32 %v743, %v776
      %v812 = vadd.f32 %v744, %v776
      %v813 = vadd.f32 %v745, %v776
      %v814 = vadd.f32 %v746, %v776
      %v815 = vadd.f32 %v747, %v776
      %v816 = vadd.f32 %v748, %v776
      %v817 = vadd.f32 %v749, %v776
      %v818 = vadd.f32 %v750, %v776
      %v819 = vadd.f32 %v751, %v776
      %v820 = vadd.f32 %v752, %v776
      %v821 = vadd.f32 %v753, %v776
      %v822 = vadd.f32 %v754, %v776
      %v823 = vadd.f32 %v755, %v776
      %v824 = vadd.f32 %v756, %v776
      %v825 = vadd.f32 %v757, %v776
      %v826 = vadd.f32 %v758, %v776
      %v827 = vadd.f32 %v759, %v776
      %v828 = vadd.f32 %v760, %v776
      %v829 = vadd.f32 %v761, %v776
      %v830 = vadd.f32 %v762, %v776
      %v831 = vadd.f32 %v763, %v776
      %v832 = vadd.f32 %v764, %v776
      %v833 = vadd.f32 %v765, %v776
      %v834 = vadd.f32 %v766, %v776
      %v835 = vadd.f32 %v767, %v776
      %v836 = vadd.f32 %v768, %v776
      %v837 = vadd.f32 %v769, %v776
      %v838 = vadd.f32 %v770, %v776
      %v839 = vadd.f32 %v771, %v776
      %v840 = vadd.f32 %v772, %v776
      %v841 = vadd.f32 %v773, %v776
      %v842 = vmax.f32 %v778, 0.0
      %v843 = vmax.f32 %v779, 0.0
      %v844 = vmax.f32 %v780, 0.0
      %v845 = vmax.f32 %v781, 0.0
      %v846 = vmax.f32 %v782, 0.0
      %v847 = vmax.f32 %v783, 0.0
      %v848 = vmax.f32 %v784, 0.0
      %v849 = vmax.f32 %v785, 0.0
      %v850 = vmax.f32 %v786, 0.0
      %v851 = vmax.f32 %v787, 0.0
      %v852 = vmax.f32 %v788, 0.0
      %v853 = vmax.f32 %v789, 0.0
      %v854 = vmax.f32 %v790, 0.0
      %v855 = vmax.f32 %v791, 0.0
      %v856 = vmax.f32 %v792, 0.0
      %v857 = vmax.f32 %v793, 0.0
      %v858 = vmax.f32 %v794, 0.0
      %v859 = vmax.f32 %v795, 0.0
      %v860 = vmax.f32 %v796, 0.0
      %v861 = vmax.f32 %v797, 0.0
      %v862 = vmax.f32 %v798, 0.0
      %v863 = vmax.f32 %v799, 0.0
      %v864 = vmax.f32 %v800, 0.0
      %v865 = vmax.f32 %v801, 0.0
      %v866 = vmax.f32 %v802, 0.0
      %v867 = vmax.f32 %v803, 0.0
      %v868 = vmax.f32 %v804, 0.0
      %v869 = vmax.f32 %v805, 0.0
      %v870 = vmax.f32 %v806, 0.0
      %v871 = vmax.f32 %v807, 0.0
      %v872 = vmax.f32 %v808, 0.0
      %v873 = vmax.f32 %v809, 0.0
      %v874 = vmax.f32 %v810, 0.0
      %v875 = vmax.f32 %v811, 0.0
      %v876 = vmax.f32 %v812, 0.0
      %v877 = vmax.f32 %v813, 0.0
      %v878 = vmax.f32 %v814, 0.0
      %v879 = vmax.f32 %v815, 0.0
      %v880 = vmax.f32 %v816, 0.0
      %v881 = vmax.f32 %v817, 0.0
      %v882 = vmax.f32 %v818, 0.0
      %v883 = vmax.f32 %v819, 0.0
      %v884 = vmax.f32 %v820, 0.0
      %v885 = vmax.f32 %v821, 0.0
      %v886 = vmax.f32 %v822, 0.0
      %v887 = vmax.f32 %v823, 0.0
      %v888 = vmax.f32 %v824, 0.0
      %v889 = vmax.f32 %v825, 0.0
      %v890 = vmax.f32 %v826, 0.0
      %v891 = vmax.f32 %v827, 0.0
      %v892 = vmax.f32 %v828, 0.0
      %v893 = vmax.f32 %v829, 0.0
      %v894 = vmax.f32 %v830, 0.0
      %v895 = vmax.f32 %v831, 0.0
      %v896 = vmax.f32 %v832, 0.0
      %v897 = vmax.f32 %v833, 0.0
      %v898 = vmax.f32 %v834, 0.0
      %v899 = vmax.f32 %v835, 0.0
      %v900 = vmax.f32 %v836, 0.0
      %v901 = vmax.f32 %v837, 0.0
      %v902 = vmax.f32 %v838, 0.0
      %v903 = vmax.f32 %v839, 0.0
      %v904 = vmax.f32 %v840, 0.0
      %v905 = vmax.f32 %v841, 0.0
      %v906 = vpack.c.bf16 %v842, %v842
      %v907 = vpack.c.bf16 %v843, %v843
      %v908 = vpack.c.bf16 %v844, %v844
      %v909 = vpack.c.bf16 %v845, %v845
      %v910 = vpack.c.bf16 %v846, %v846
      %v911 = vpack.c.bf16 %v847, %v847
      %v912 = vpack.c.bf16 %v848, %v848
      %v913 = vpack.c.bf16 %v849, %v849
      %v914 = vpack.c.bf16 %v850, %v850
      %v915 = vpack.c.bf16 %v851, %v851
      %v916 = vpack.c.bf16 %v852, %v852
      %v917 = vpack.c.bf16 %v853, %v853
      %v918 = vpack.c.bf16 %v854, %v854
      %v919 = vpack.c.bf16 %v855, %v855
      %v920 = vpack.c.bf16 %v856, %v856
      %v921 = vpack.c.bf16 %v857, %v857
      %v922 = vpack.c.bf16 %v858, %v858
      %v923 = vpack.c.bf16 %v859, %v859
      %v924 = vpack.c.bf16 %v860, %v860
      %v925 = vpack.c.bf16 %v861, %v861
      %v926 = vpack.c.bf16 %v862, %v862
      %v927 = vpack.c.bf16 %v863, %v863
      %v928 = vpack.c.bf16 %v864, %v864
      %v929 = vpack.c.bf16 %v865, %v865
      %v930 = vpack.c.bf16 %v866, %v866
      %v931 = vpack.c.bf16 %v867, %v867
      %v932 = vpack.c.bf16 %v868, %v868
      %v933 = vpack.c.bf16 %v869, %v869
      %v934 = vpack.c.bf16 %v870, %v870
      %v935 = vpack.c.bf16 %v871, %v871
      %v936 = vpack.c.bf16 %v872, %v872
      %v937 = vpack.c.bf16 %v873, %v873
      %v938 = vpack.c.bf16 %v874, %v874
      %v939 = vpack.c.bf16 %v875, %v875
      %v940 = vpack.c.bf16 %v876, %v876
      %v941 = vpack.c.bf16 %v877, %v877
      %v942 = vpack.c.bf16 %v878, %v878
      %v943 = vpack.c.bf16 %v879, %v879
      %v944 = vpack.c.bf16 %v880, %v880
      %v945 = vpack.c.bf16 %v881, %v881
      %v946 = vpack.c.bf16 %v882, %v882
      %v947 = vpack.c.bf16 %v883, %v883
      %v948 = vpack.c.bf16 %v884, %v884
      %v949 = vpack.c.bf16 %v885, %v885
      %v950 = vpack.c.bf16 %v886, %v886
      %v951 = vpack.c.bf16 %v887, %v887
      %v952 = vpack.c.bf16 %v888, %v888
      %v953 = vpack.c.bf16 %v889, %v889
      %v954 = vpack.c.bf16 %v890, %v890
      %v955 = vpack.c.bf16 %v891, %v891
      %v956 = vpack.c.bf16 %v892, %v892
      %v957 = vpack.c.bf16 %v893, %v893
      %v958 = vpack.c.bf16 %v894, %v894
      %v959 = vpack.c.bf16 %v895, %v895
      %v960 = vpack.c.bf16 %v896, %v896
      %v961 = vpack.c.bf16 %v897, %v897
      %v962 = vpack.c.bf16 %v898, %v898
      %v963 = vpack.c.bf16 %v899, %v899
      %v964 = vpack.c.bf16 %v900, %v900
      %v965 = vpack.c.bf16 %v901, %v901
      %v966 = vpack.c.bf16 %v902, %v902
      %v967 = vpack.c.bf16 %v903, %v903
      %v968 = vpack.c.bf16 %v904, %v904
      %v969 = vpack.c.bf16 %v905, %v905
      %vm970 = vcmask 27648
      %971 = vst.msk [vmem:[%s199] sm:$0xf] %vm970, %v906
      %972 = vst.msk [vmem:[%s199 + $0x4] sm:$0xf] %vm970, %v907
      %973 = vst.msk [vmem:[%s199 + $0x8] sm:$0xf] %vm970, %v908
      %974 = vst.msk [vmem:[%s199 + $0xc] sm:$0xf] %vm970, %v909
      %975 = vst.msk [vmem:[%s199 + $0x10] sm:$0xf] %vm970, %v910
      %976 = vst.msk [vmem:[%s199 + $0x14] sm:$0xf] %vm970, %v911
      %977 = vst.msk [vmem:[%s199 + $0x18] sm:$0xf] %vm970, %v912
      %978 = vst.msk [vmem:[%s199 + $0x1c] sm:$0xf] %vm970, %v913
      %979 = vst.msk [vmem:[%s199 + $0x20] sm:$0xf] %vm970, %v914
      %980 = vst.msk [vmem:[%s199 + $0x24] sm:$0xf] %vm970, %v915
      %981 = vst.msk [vmem:[%s199 + $0x28] sm:$0xf] %vm970, %v916
      %982 = vst.msk [vmem:[%s199 + $0x2c] sm:$0xf] %vm970, %v917
      %983 = vst.msk [vmem:[%s199 + $0x30] sm:$0xf] %vm970, %v918
      %984 = vst.msk [vmem:[%s199 + $0x34] sm:$0xf] %vm970, %v919
      %985 = vst.msk [vmem:[%s199 + $0x38] sm:$0xf] %vm970, %v920
      %986 = vst.msk [vmem:[%s199 + $0x3c] sm:$0xf] %vm970, %v921
      %987 = vst.msk [vmem:[%s199 + $0x40] sm:$0xf] %vm970, %v922
      %988 = vst.msk [vmem:[%s199 + $0x44] sm:$0xf] %vm970, %v923
      %989 = vst.msk [vmem:[%s199 + $0x48] sm:$0xf] %vm970, %v924
      %990 = vst.msk [vmem:[%s199 + $0x4c] sm:$0xf] %vm970, %v925
      %991 = vst.msk [vmem:[%s199 + $0x50] sm:$0xf] %vm970, %v926
      %992 = vst.msk [vmem:[%s199 + $0x54] sm:$0xf] %vm970, %v927
      %993 = vst.msk [vmem:[%s199 + $0x58] sm:$0xf] %vm970, %v928
      %994 = vst.msk [vmem:[%s199 + $0x5c] sm:$0xf] %vm970, %v929
      %995 = vst.msk [vmem:[%s199 + $0x60] sm:$0xf] %vm970, %v930
      %996 = vst.msk [vmem:[%s199 + $0x64] sm:$0xf] %vm970, %v931
      %997 = vst.msk [vmem:[%s199 + $0x68] sm:$0xf] %vm970, %v932
      %998 = vst.msk [vmem:[%s199 + $0x6c] sm:$0xf] %vm970, %v933
      %999 = vst.msk [vmem:[%s199 + $0x70] sm:$0xf] %vm970, %v934
      %1000 = vst.msk [vmem:[%s199 + $0x74] sm:$0xf] %vm970, %v935
      %1001 = vst.msk [vmem:[%s199 + $0x78] sm:$0xf] %vm970, %v936
      %1002 = vst.msk [vmem:[%s199 + $0x7c] sm:$0xf] %vm970, %v937
      %1003 = vst.msk [vmem:[%s199 + $0x80] sm:$0xf] %vm970, %v938
      %1004 = vst.msk [vmem:[%s199 + $0x84] sm:$0xf] %vm970, %v939
      %1005 = vst.msk [vmem:[%s199 + $0x88] sm:$0xf] %vm970, %v940
      %1006 = vst.msk [vmem:[%s199 + $0x8c] sm:$0xf] %vm970, %v941
      %1007 = vst.msk [vmem:[%s199 + $0x90] sm:$0xf] %vm970, %v942
      %1008 = vst.msk [vmem:[%s199 + $0x94] sm:$0xf] %vm970, %v943
      %1009 = vst.msk [vmem:[%s199 + $0x98] sm:$0xf] %vm970, %v944
      %1010 = vst.msk [vmem:[%s199 + $0x9c] sm:$0xf] %vm970, %v945
      %1011 = vst.msk [vmem:[%s199 + $0xa0] sm:$0xf] %vm970, %v946
      %1012 = vst.msk [vmem:[%s199 + $0xa4] sm:$0xf] %vm970, %v947
      %1013 = vst.msk [vmem:[%s199 + $0xa8] sm:$0xf] %vm970, %v948
      %1014 = vst.msk [vmem:[%s199 + $0xac] sm:$0xf] %vm970, %v949
      %1015 = vst.msk [vmem:[%s199 + $0xb0] sm:$0xf] %vm970, %v950
      %1016 = vst.msk [vmem:[%s199 + $0xb4] sm:$0xf] %vm970, %v951
      %1017 = vst.msk [vmem:[%s199 + $0xb8] sm:$0xf] %vm970, %v952
      %1018 = vst.msk [vmem:[%s199 + $0xbc] sm:$0xf] %vm970, %v953
      %1019 = vst.msk [vmem:[%s199 + $0xc0] sm:$0xf] %vm970, %v954
      %1020 = vst.msk [vmem:[%s199 + $0xc4] sm:$0xf] %vm970, %v955
      %1021 = vst.msk [vmem:[%s199 + $0xc8] sm:$0xf] %vm970, %v956
      %1022 = vst.msk [vmem:[%s199 + $0xcc] sm:$0xf] %vm970, %v957
      %1023 = vst.msk [vmem:[%s199 + $0xd0] sm:$0xf] %vm970, %v958
      %1024 = vst.msk [vmem:[%s199 + $0xd4] sm:$0xf] %vm970, %v959
      %1025 = vst.msk [vmem:[%s199 + $0xd8] sm:$0xf] %vm970, %v960
      %1026 = vst.msk [vmem:[%s199 + $0xdc] sm:$0xf] %vm970, %v961
      %1027 = vst.msk [vmem:[%s199 + $0xe0] sm:$0xf] %vm970, %v962
      %1028 = vst.msk [vmem:[%s199 + $0xe4] sm:$0xf] %vm970, %v963
      %1029 = vst.msk [vmem:[%s199 + $0xe8] sm:$0xf] %vm970, %v964
      %1030 = vst.msk [vmem:[%s199 + $0xec] sm:$0xf] %vm970, %v965
      %1031 = vst.msk [vmem:[%s199 + $0xf0] sm:$0xf] %vm970, %v966
      %1032 = vst.msk [vmem:[%s199 + $0xf4] sm:$0xf] %vm970, %v967
      %1033 = vst.msk [vmem:[%s199 + $0xf8] sm:$0xf] %vm970, %v968
      %1034 = vst.msk [vmem:[%s199 + $0xfc] sm:$0xf] %vm970, %v969
      %s1035 = smul.u32 64, %s15
      %p1036 = scmp.lt.s32.totalorder %s1035, 127
      %s1037 = scalar_select %p1036, %s1035, 127
      %s1038 = smul.addr %s1037, 4
      %s1039 = scalar_lea.vmem %s4, %s1038
      // Predicated region
      $region37: #{_lambda_.12} parent=35 // pred_check
        %p1040 = pneg %p122
      $region38: #{_lambda_.12} parent=35 // pred_check_branch
        %1042 = sbr.rel (%p1040) target = $region40
      $region39: #{_lambda_.12} parent=35 // pred_region
        %s1043 = smul.u32 64, %s15
      $region40: #{_lambda_.12} parent=35 // pred_fallthru
        _
    $region36: #{_lambda_.12} parent=5 // pred_fallthru
      _
    %p1044 = scmp.le.s32.totalorder 2, %s10
    // Predicated region
    $region41: #{_lambda_.12} parent=5 // pred_check
      %p1045 = pneg %p1044
    $region42: #{_lambda_.12} parent=5 // pred_check_branch
      %1047 = sbr.rel (%p1045) target = $region44
    $region43: #{_lambda_.12} parent=5 // pred_region
      %s1048 = ssub.s32 %s10, 2
      // Predicated region
      $region45: #{_lambda_.12} parent=43 // pred_check
        %p1049 = pneg %p128
      $region46: #{_lambda_.12} parent=43 // pred_check_branch
        %1051 = sbr.rel (%p1049) target = $region48
      $region47: #{_lambda_.12} parent=43 // pred_region
        %s1052 = smul.u32 64, %s16
        %p1053 = scmp.lt.s32.totalorder %s1052, 127
        %s1054 = scalar_select %p1053, %s1052, 127
        %s1055 = smul.addr %s1054, 4
        %s1056 = scalar_lea.vmem %s4, %s1055
      $region48: #{_lambda_.12} parent=43 // pred_fallthru
        _
    $region44: #{_lambda_.12} parent=5 // pred_fallthru
      _
  $region6: #{_lambda_.12} parent=0 // loop_footer
    %s14 = sadd.s32 1, %s10
  $region7: #{_lambda_.12} parent=0 // loop_footer_branch
    %9 = sbr.rel target = $region3
  $region8: #{_lambda_.12} parent=0 // loop_exit
    _

// kernel: _lambda_.13
$region0: #{_lambda_.13}
  #allocation0 [shape = 'u32[]', space=smem, size = 0x4, offset = 0x4, fixed_abs, tag = 'smem constant byte address 0x4 - core index']
  #allocation1 [shape = 'u32[72,128]{1,0:T(1,128)}', space=vmem, size = 0x9000, scoped, tag = 'internal scratch']
  %s0 = inlined_call_operand.vmem [shape: bf16[1024,36], index: 0, kind: input, shape index: {}]
  %s1 = inlined_call_operand.vmem [shape: bf16[36,4], index: 1, kind: input, shape index: {}]
  %s2 = inlined_call_operand.vmem [shape: f32[1,4], index: 2, kind: input, shape index: {}]
  %s3 = inlined_call_operand.vmem [shape: f32[1,4], index: 3, kind: input, shape index: {}]
  %s4 = inlined_call_operand.vmem [shape: bf16[1024,4], index: 4, kind: output, shape index: {}]
  %s5 = sld [smem:[#allocation0]]
  $region49: #{_lambda_.13} parent=0
    _
  %s7 = ssub.s32 1, %s5
  %s8 = scalar_select 0, %s7, %s5
  loop: start=0, step=1, limit=4
  $region2: #{_lambda_.13} parent=0 // loop_pre_header
    _
  $region3: #{_lambda_.13} parent=0 // loop_header
    %s10 = sphi 0, %s14
    %p11 = scmp.ge.s32.totalorder %s10, 4
    %s20 = sphi 0, %s22
    %s23 = sphi 0, %s20
    %s24 = sphi 0, %s23
    %s40 = sphi 0, %s24
    %s44 = sphi 0, %s44
    %s46 = sphi 0, %s44
    %s47 = sphi 0, %s46
    %s61 = sphi 0, %s47
    %s65 = sphi 0, %s65
    %s67 = sphi 0, %s65
    %s68 = sphi 0, %s67
    %s82 = sphi 0, %s68
    %s86 = sphi 0, %s86
    %s88 = sphi 0, %s86
    %s89 = sphi 0, %s88
    %s103 = sphi 0, %s89
    %s109 = sphi 0, %s111
    %s112 = sphi 0, %s109
    %s113 = sphi 0, %s112
    %s129 = sphi 0, %s113
  $region4: #{_lambda_.13} parent=0 // loop_header_branch
    %13 = sbr.rel (%p11) target = $region8
  $region5: #{_lambda_.13} parent=0 // loop_body
    %s15 = ssub.s32 %s10, 1
    %s16 = ssub.s32 %s10, 2
    %s17 = sadd.s32 %s10, 1
    %s18 = ssub.s32 %s10, %s17
    %p19 = scmp.eq.s32.totalorder %s18, 0
    %s21 = sadd.s32 %s20, 1
    %s22 = scalar_select %p19, %s20, %s21
    %p25 = pneg %p19
    %p26 = scmp.eq.s32.totalorder %s10, 1
    %p27 = por %p25, %p26
    %p28 = scmp.ne.s32.totalorder %s20, %s23
    %p29 = scmp.eq.s32.totalorder %s10, 0
    %p30 = por %p28, %p29
    %p31 = scmp.ne.s32.totalorder %s20, %s23
    %p32 = scmp.eq.s32.totalorder %s15, 1
    %p33 = por %p31, %p32
    %p34 = scmp.ne.s32.totalorder %s23, %s24
    %p35 = scmp.eq.s32.totalorder %s15, 0
    %p36 = por %p34, %p35
    %p37 = scmp.ne.s32.totalorder %s23, %s24
    %p38 = scmp.eq.s32.totalorder %s16, 1
    %p39 = por %p37, %p38
    %p41 = scmp.ne.s32.totalorder %s24, %s40
    %p42 = scmp.eq.s32.totalorder %s16, 0
    %p43 = por %p41, %p42
    %s45 = sadd.s32 %s44, 1
    %p48 = scmp.eq.s32.totalorder %s10, 1
    %p49 = scmp.ne.s32.totalorder %s44, %s46
    %p50 = scmp.eq.s32.totalorder %s10, 0
    %p51 = por %p49, %p50
    %p52 = scmp.ne.s32.totalorder %s44, %s46
    %p53 = scmp.eq.s32.totalorder %s15, 1
    %p54 = por %p52, %p53
    %p55 = scmp.ne.s32.totalorder %s46, %s47
    %p56 = scmp.eq.s32.totalorder %s15, 0
    %p57 = por %p55, %p56
    %p58 = scmp.ne.s32.totalorder %s46, %s47
    %p59 = scmp.eq.s32.totalorder %s16, 1
    %p60 = por %p58, %p59
    %p62 = scmp.ne.s32.totalorder %s47, %s61
    %p63 = scmp.eq.s32.totalorder %s16, 0
    %p64 = por %p62, %p63
    %s66 = sadd.s32 %s65, 1
    %p69 = scmp.eq.s32.totalorder %s10, 1
    %p70 = scmp.ne.s32.totalorder %s65, %s67
    %p71 = scmp.eq.s32.totalorder %s10, 0
    %p72 = por %p70, %p71
    %p73 = scmp.ne.s32.totalorder %s65, %s67
    %p74 = scmp.eq.s32.totalorder %s15, 1
    %p75 = por %p73, %p74
    %p76 = scmp.ne.s32.totalorder %s67, %s68
    %p77 = scmp.eq.s32.totalorder %s15, 0
    %p78 = por %p76, %p77
    %p79 = scmp.ne.s32.totalorder %s67, %s68
    %p80 = scmp.eq.s32.totalorder %s16, 1
    %p81 = por %p79, %p80
    %p83 = scmp.ne.s32.totalorder %s68, %s82
    %p84 = scmp.eq.s32.totalorder %s16, 0
    %p85 = por %p83, %p84
    %s87 = sadd.s32 %s86, 1
    %p90 = scmp.eq.s32.totalorder %s10, 1
    %p91 = scmp.ne.s32.totalorder %s86, %s88
    %p92 = scmp.eq.s32.totalorder %s10, 0
    %p93 = por %p91, %p92
    %p94 = scmp.ne.s32.totalorder %s86, %s88
    %p95 = scmp.eq.s32.totalorder %s15, 1
    %p96 = por %p94, %p95
    %p97 = scmp.ne.s32.totalorder %s88, %s89
    %p98 = scmp.eq.s32.totalorder %s15, 0
    %p99 = por %p97, %p98
    %p100 = scmp.ne.s32.totalorder %s88, %s89
    %p101 = scmp.eq.s32.totalorder %s16, 1
    %p102 = por %p100, %p101
    %p104 = scmp.ne.s32.totalorder %s89, %s103
    %p105 = scmp.eq.s32.totalorder %s16, 0
    %p106 = por %p104, %p105
    %s107 = ssub.s32 %s10, %s17
    %p108 = scmp.eq.s32.totalorder %s107, 0
    %s110 = sadd.s32 %s109, 1
    %s111 = scalar_select %p108, %s109, %s110
    %p114 = pneg %p108
    %p115 = scmp.eq.s32.totalorder %s10, 1
    %p116 = por %p114, %p115
    %p117 = scmp.ne.s32.totalorder %s109, %s112
    %p118 = scmp.eq.s32.totalorder %s10, 0
    %p119 = por %p117, %p118
    %p120 = scmp.ne.s32.totalorder %s109, %s112
    %p121 = scmp.eq.s32.totalorder %s15, 1
    %p122 = por %p120, %p121
    %p123 = scmp.ne.s32.totalorder %s112, %s113
    %p124 = scmp.eq.s32.totalorder %s15, 0
    %p125 = por %p123, %p124
    %p126 = scmp.ne.s32.totalorder %s112, %s113
    %p127 = scmp.eq.s32.totalorder %s16, 1
    %p128 = por %p126, %p127
    %p130 = scmp.ne.s32.totalorder %s113, %s129
    %p131 = scmp.eq.s32.totalorder %s16, 0
    %p132 = por %p130, %p131
    %p133 = scmp.le.s32.totalorder 1, %s10
    %p134 = scmp.lt.s32.totalorder %s10, 3
    %p135 = pnand %p133, %p134
    %p136 = pneg %p135
    // Predicated region
    $region9: #{_lambda_.13} parent=5 // pred_check
      _
    $region10: #{_lambda_.13} parent=5 // pred_check_branch
      %138 = sbr.rel (%p135) target = $region12
    $region11: #{_lambda_.13} parent=5 // pred_region
      %s139 = ssub.s32 %s10, 1
      // Predicated region
      $region13: #{_lambda_.13} parent=11 // pred_check
        %p140 = pneg %p57
      $region14: #{_lambda_.13} parent=11 // pred_check_branch
        %142 = sbr.rel (%p140) target = $region16
      $region15: #{_lambda_.13} parent=11 // pred_region
        _
      $region16: #{_lambda_.13} parent=11 // pred_fallthru
        _
      // Predicated region
      $region17: #{_lambda_.13} parent=11 // pred_check
        %p143 = pneg %p78
      $region18: #{_lambda_.13} parent=11 // pred_check_branch
        %145 = sbr.rel (%p143) target = $region20
      $region19: #{_lambda_.13} parent=11 // pred_region
        _
      $region20: #{_lambda_.13} parent=11 // pred_fallthru
        _
      // Predicated region
      $region21: #{_lambda_.13} parent=11 // pred_check
        %p146 = pneg %p99
      $region22: #{_lambda_.13} parent=11 // pred_check_branch
        %148 = sbr.rel (%p146) target = $region24
      $region23: #{_lambda_.13} parent=11 // pred_region
        _
      $region24: #{_lambda_.13} parent=11 // pred_fallthru
        _
    $region12: #{_lambda_.13} parent=5 // pred_fallthru
      _
    %p149 = scmp.lt.s32.totalorder %s10, 2
    // Predicated region
    $region25: #{_lambda_.13} parent=5 // pred_check
      %p150 = pneg %p149
    $region26: #{_lambda_.13} parent=5 // pred_check_branch
      %152 = sbr.rel (%p150) target = $region28
    $region27: #{_lambda_.13} parent=5 // pred_region
      // Predicated region
      $region29: #{_lambda_.13} parent=27 // pred_check
        %p153 = pneg %p30
      $region30: #{_lambda_.13} parent=27 // pred_check_branch
        %155 = sbr.rel (%p153) target = $region32
      $region31: #{_lambda_.13} parent=27 // pred_region
        %s156 = smul.u32 64, %s10
        %p157 = scmp.lt.s32.totalorder %s156, 127
        %s158 = scalar_select %p157, %s156, 127
        %s159 = smul.addr %s158, 4
        %s160 = scalar_lea.vmem %s0, %s159
        %s161 = smul.u32 64, %s10
      $region32: #{_lambda_.13} parent=27 // pred_fallthru
        _
    $region28: #{_lambda_.13} parent=5 // pred_fallthru
      _
    %p162 = scmp.le.s32.totalorder 1, %s10
    %p163 = scmp.lt.s32.totalorder %s10, 3
    %p164 = pnand %p162, %p163
    %p165 = pneg %p164
    // Predicated region
    $region33: #{_lambda_.13} parent=5 // pred_check
      _
    $region34: #{_lambda_.13} parent=5 // pred_check_branch
      %167 = sbr.rel (%p164) target = $region36
    $region35: #{_lambda_.13} parent=5 // pred_region
      %s168 = ssub.s32 %s10, 1
      %s169 = smul.u32 64, %s15
      %p170 = scmp.lt.s32.totalorder %s169, 127
      %s171 = scalar_select %p170, %s169, 127
      %s172 = smul.addr %s171, 4
      %s173 = scalar_lea.vmem %s0, %s172
      %p174 = pneg %p36
      %p175 = pneg %p33
      %p176 = pneg %p57
      %p177 = pneg %p54
      %p178 = pneg %p78
      %p179 = pneg %p75
      %p180 = pneg %p99
      %p181 = pneg %p96
      %p182 = pneg %p125
      %p183 = pneg %p122
      %s184 = smul.u32 64, %s15
      %p185 = scmp.lt.s32.totalorder %s184, 127
      %s186 = scalar_select %p185, %s184, 127
      %s187 = smul.addr %s186, 4
      %s188 = scalar_lea.vmem %s4, %s187
      %s189 = smul.u32 64, %s15
      %p190 = scmp.lt.s32.totalorder %s189, 127
      %s191 = scalar_select %p190, %s189, 127
      %s192 = smul.addr %s191, 4
      %s193 = scalar_lea.vmem %s0, %s192
      %s194 = smul.u32 64, %s15
      %s195 = smul.u32 64, %s15
      %p196 = scmp.lt.s32.totalorder %s195, 127
      %s197 = scalar_select %p196, %s195, 127
      %s198 = smul.addr %s197, 4
      %s199 = scalar_lea.vmem %s4, %s198
      %s200 = smul.u32 64, %s15
      %v202 = vld [vmem:[%s193] sm:$0xf]
      %v203 = vld [vmem:[%s193 + $0x4] sm:$0xf]
      %v204 = vld [vmem:[%s193 + $0x8] sm:$0xf]
      %v205 = vld [vmem:[%s193 + $0xc] sm:$0xf]
      %v206 = vld [vmem:[%s193 + $0x10] sm:$0xf]
      %v207 = vld [vmem:[%s193 + $0x14] sm:$0xf]
      %v208 = vld [vmem:[%s193 + $0x18] sm:$0xf]
      %v209 = vld [vmem:[%s193 + $0x1c] sm:$0xf]
      %v210 = vld [vmem:[%s193 + $0x20] sm:$0xf]
      %v211 = vld [vmem:[%s193 + $0x24] sm:$0xf]
      %v212 = vld [vmem:[%s193 + $0x28] sm:$0xf]
      %v213 = vld [vmem:[%s193 + $0x2c] sm:$0xf]
      %v214 = vld [vmem:[%s193 + $0x30] sm:$0xf]
      %v215 = vld [vmem:[%s193 + $0x34] sm:$0xf]
      %v216 = vld [vmem:[%s193 + $0x38] sm:$0xf]
      %v217 = vld [vmem:[%s193 + $0x3c] sm:$0xf]
      %v218 = vld [vmem:[%s193 + $0x40] sm:$0xf]
      %v219 = vld [vmem:[%s193 + $0x44] sm:$0xf]
      %v220 = vld [vmem:[%s193 + $0x48] sm:$0xf]
      %v221 = vld [vmem:[%s193 + $0x4c] sm:$0xf]
      %v222 = vld [vmem:[%s193 + $0x50] sm:$0xf]
      %v223 = vld [vmem:[%s193 + $0x54] sm:$0xf]
      %v224 = vld [vmem:[%s193 + $0x58] sm:$0xf]
      %v225 = vld [vmem:[%s193 + $0x5c] sm:$0xf]
      %v226 = vld [vmem:[%s193 + $0x60] sm:$0xf]
      %v227 = vld [vmem:[%s193 + $0x64] sm:$0xf]
      %v228 = vld [vmem:[%s193 + $0x68] sm:$0xf]
      %v229 = vld [vmem:[%s193 + $0x6c] sm:$0xf]
      %v230 = vld [vmem:[%s193 + $0x70] sm:$0xf]
      %v231 = vld [vmem:[%s193 + $0x74] sm:$0xf]
      %v232 = vld [vmem:[%s193 + $0x78] sm:$0xf]
      %v233 = vld [vmem:[%s193 + $0x7c] sm:$0xf]
      %v234 = vld [vmem:[%s193 + $0x80] sm:$0xf]
      %v235 = vld [vmem:[%s193 + $0x84] sm:$0xf]
      %v236 = vld [vmem:[%s193 + $0x88] sm:$0xf]
      %v237 = vld [vmem:[%s193 + $0x8c] sm:$0xf]
      %v238 = vld [vmem:[%s193 + $0x90] sm:$0xf]
      %v239 = vld [vmem:[%s193 + $0x94] sm:$0xf]
      %v240 = vld [vmem:[%s193 + $0x98] sm:$0xf]
      %v241 = vld [vmem:[%s193 + $0x9c] sm:$0xf]
      %v242 = vld [vmem:[%s193 + $0xa0] sm:$0xf]
      %v243 = vld [vmem:[%s193 + $0xa4] sm:$0xf]
      %v244 = vld [vmem:[%s193 + $0xa8] sm:$0xf]
      %v245 = vld [vmem:[%s193 + $0xac] sm:$0xf]
      %v246 = vld [vmem:[%s193 + $0xb0] sm:$0xf]
      %v247 = vld [vmem:[%s193 + $0xb4] sm:$0xf]
      %v248 = vld [vmem:[%s193 + $0xb8] sm:$0xf]
      %v249 = vld [vmem:[%s193 + $0xbc] sm:$0xf]
      %v250 = vld [vmem:[%s193 + $0xc0] sm:$0xf]
      %v251 = vld [vmem:[%s193 + $0xc4] sm:$0xf]
      %v252 = vld [vmem:[%s193 + $0xc8] sm:$0xf]
      %v253 = vld [vmem:[%s193 + $0xcc] sm:$0xf]
      %v254 = vld [vmem:[%s193 + $0xd0] sm:$0xf]
      %v255 = vld [vmem:[%s193 + $0xd4] sm:$0xf]
      %v256 = vld [vmem:[%s193 + $0xd8] sm:$0xf]
      %v257 = vld [vmem:[%s193 + $0xdc] sm:$0xf]
      %v258 = vld [vmem:[%s193 + $0xe0] sm:$0xf]
      %v259 = vld [vmem:[%s193 + $0xe4] sm:$0xf]
      %v260 = vld [vmem:[%s193 + $0xe8] sm:$0xf]
      %v261 = vld [vmem:[%s193 + $0xec] sm:$0xf]
      %v262 = vld [vmem:[%s193 + $0xf0] sm:$0xf]
      %v263 = vld [vmem:[%s193 + $0xf4] sm:$0xf]
      %v264 = vld [vmem:[%s193 + $0xf8] sm:$0xf]
      %v265 = vld [vmem:[%s193 + $0xfc] sm:$0xf]
      %v266 = vld [vmem:[%s1] sm:$0xf]
      %v267 = vld [vmem:[%s1 + $0x4] sm:$0xf]
      %v268 = vld [vmem:[%s1 + $0x8] sm:$0xf]
      %v269 = vld [vmem:[%s1 + $0xc] sm:$0xf]
      %v270 = vld [vmem:[%s1 + $0x10] sm:$0x3]
      %v335 = vunpack.c.l.b16 %v202
      %v336 = vunpack.c.l.b16 %v203
      %v337 = vunpack.c.l.b16 %v204
      %v338 = vunpack.c.l.b16 %v205
      %v339 = vunpack.c.l.b16 %v206
      %v340 = vunpack.c.l.b16 %v207
      %v341 = vunpack.c.l.b16 %v208
      %v342 = vunpack.c.l.b16 %v209
      %v343 = vunpack.c.l.b16 %v210
      %v344 = vunpack.c.l.b16 %v211
      %v345 = vunpack.c.l.b16 %v212
      %v346 = vunpack.c.l.b16 %v213
      %v347 = vunpack.c.l.b16 %v214
      %v348 = vunpack.c.l.b16 %v215
      %v349 = vunpack.c.l.b16 %v216
      %v350 = vunpack.c.l.b16 %v217
      %v351 = vunpack.c.l.b16 %v218
      %v352 = vunpack.c.l.b16 %v219
      %v353 = vunpack.c.l.b16 %v220
      %v354 = vunpack.c.l.b16 %v221
      %v355 = vunpack.c.l.b16 %v222
      %v356 = vunpack.c.l.b16 %v223
      %v357 = vunpack.c.l.b16 %v224
      %v358 = vunpack.c.l.b16 %v225
      %v359 = vunpack.c.l.b16 %v226
      %v360 = vunpack.c.l.b16 %v227
      %v361 = vunpack.c.l.b16 %v228
      %v362 = vunpack.c.l.b16 %v229
      %v363 = vunpack.c.l.b16 %v230
      %v364 = vunpack.c.l.b16 %v231
      %v365 = vunpack.c.l.b16 %v232
      %v366 = vunpack.c.l.b16 %v233
      %v367 = vunpack.c.l.b16 %v234
      %v368 = vunpack.c.l.b16 %v235
      %v369 = vunpack.c.l.b16 %v236
      %v370 = vunpack.c.l.b16 %v237
      %v371 = vunpack.c.l.b16 %v238
      %v372 = vunpack.c.l.b16 %v239
      %v373 = vunpack.c.l.b16 %v240
      %v374 = vunpack.c.l.b16 %v241
      %v375 = vunpack.c.l.b16 %v242
      %v376 = vunpack.c.l.b16 %v243
      %v377 = vunpack.c.l.b16 %v244
      %v378 = vunpack.c.l.b16 %v245
      %v379 = vunpack.c.l.b16 %v246
      %v380 = vunpack.c.l.b16 %v247
      %v381 = vunpack.c.l.b16 %v248
      %v382 = vunpack.c.l.b16 %v249
      %v383 = vunpack.c.l.b16 %v250
      %v384 = vunpack.c.l.b16 %v251
      %v385 = vunpack.c.l.b16 %v252
      %v386 = vunpack.c.l.b16 %v253
      %v387 = vunpack.c.l.b16 %v254
      %v388 = vunpack.c.l.b16 %v255
      %v389 = vunpack.c.l.b16 %v256
      %v390 = vunpack.c.l.b16 %v257
      %v391 = vunpack.c.l.b16 %v258
      %v392 = vunpack.c.l.b16 %v259
      %v393 = vunpack.c.l.b16 %v260
      %v394 = vunpack.c.l.b16 %v261
      %v395 = vunpack.c.l.b16 %v262
      %v396 = vunpack.c.l.b16 %v263
      %v397 = vunpack.c.l.b16 %v264
      %v398 = vunpack.c.l.b16 %v265
      %v399 = vpack.c.b16 %v336, %v335
      %v400 = vpack.c.b16 %v338, %v337
      %v401 = vpack.c.b16 %v340, %v339
      %v402 = vpack.c.b16 %v342, %v341
      %v403 = vpack.c.b16 %v344, %v343
      %v404 = vpack.c.b16 %v346, %v345
      %v405 = vpack.c.b16 %v348, %v347
      %v406 = vpack.c.b16 %v350, %v349
      %v407 = vpack.c.b16 %v352, %v351
      %v408 = vpack.c.b16 %v354, %v353
      %v409 = vpack.c.b16 %v356, %v355
      %v410 = vpack.c.b16 %v358, %v357
      %v411 = vpack.c.b16 %v360, %v359
      %v412 = vpack.c.b16 %v362, %v361
      %v413 = vpack.c.b16 %v364, %v363
      %v414 = vpack.c.b16 %v366, %v365
      %v415 = vpack.c.b16 %v368, %v367
      %v416 = vpack.c.b16 %v370, %v369
      %v417 = vpack.c.b16 %v372, %v371
      %v418 = vpack.c.b16 %v374, %v373
      %v419 = vpack.c.b16 %v376, %v375
      %v420 = vpack.c.b16 %v378, %v377
      %v421 = vpack.c.b16 %v380, %v379
      %v422 = vpack.c.b16 %v382, %v381
      %v423 = vpack.c.b16 %v384, %v383
      %v424 = vpack.c.b16 %v386, %v385
      %v425 = vpack.c.b16 %v388, %v387
      %v426 = vpack.c.b16 %v390, %v389
      %v427 = vpack.c.b16 %v392, %v391
      %v428 = vpack.c.b16 %v394, %v393
      %v429 = vpack.c.b16 %v396, %v395
      %v430 = vpack.c.b16 %v398, %v397
      %v436 = vunpack.c.l.b16 %v266
      %v437 = vunpack.c.l.b16 %v267
      %v438 = vunpack.c.l.b16 %v268
      %v439 = vunpack.c.l.b16 %v269
      %v440 = vunpack.c.l.b16 %v270
      %v441 = vpack.c.b16 %v437, %v436
      %v442 = vpack.c.b16 %v439, %v438
      %v443 = vpack.c.b16 %v440, %v440
      %vm446 = vcmask 293888
      %v448 = vsel %vm446, %v399, 0
      %v451 = vsel %vm446, %v400, 0
      %v454 = vsel %vm446, %v401, 0
      %v457 = vsel %vm446, %v402, 0
      %v460 = vsel %vm446, %v403, 0
      %v463 = vsel %vm446, %v404, 0
      %v466 = vsel %vm446, %v405, 0
      %v469 = vsel %vm446, %v406, 0
      %v472 = vsel %vm446, %v407, 0
      %v475 = vsel %vm446, %v408, 0
      %v478 = vsel %vm446, %v409, 0
      %v481 = vsel %vm446, %v410, 0
      %v484 = vsel %vm446, %v411, 0
      %v487 = vsel %vm446, %v412, 0
      %v490 = vsel %vm446, %v413, 0
      %v493 = vsel %vm446, %v414, 0
      %v496 = vsel %vm446, %v415, 0
      %v499 = vsel %vm446, %v416, 0
      %v502 = vsel %vm446, %v417, 0
      %v505 = vsel %vm446, %v418, 0
      %v508 = vsel %vm446, %v419, 0
      %v511 = vsel %vm446, %v420, 0
      %v514 = vsel %vm446, %v421, 0
      %v517 = vsel %vm446, %v422, 0
      %v520 = vsel %vm446, %v423, 0
      %v523 = vsel %vm446, %v424, 0
      %v526 = vsel %vm446, %v425, 0
      %v529 = vsel %vm446, %v426, 0
      %v532 = vsel %vm446, %v427, 0
      %v535 = vsel %vm446, %v428, 0
      %v538 = vsel %vm446, %v429, 0
      %v541 = vsel %vm446, %v430, 0
      %vm543 = vcmask 1041408
      %v545 = vsel %vm543, %v443, 0
      %547 = vmatpush.bf16.msra.mxu0 0
      %548 = vmatpush.bf16.msra.mxu0 0
      %549 = vmatpush.bf16.msra.mxu0 0
      %550 = vmatpush.bf16.msra.mxu0 0
      %551 = vmatpush.bf16.msra.mxu0 0
      %552 = vmatpush.bf16.msra.mxu0 %v545
      %553 = vmatpush.bf16.msra.mxu0 %v442
      %554 = vmatpush.bf16.msra.mxu0 %v441
      %555 = vmatmul.bf16.gmra.mxu0 %v448
      %v556 = vpop.f32.mrf.mxu0
      %v557 = vadd.f32 0.0, %v556
      %v558 = vpop.f32.mrf.mxu0
      %v559 = vadd.f32 0.0, %v558
      %560 = vmatmul.bf16.gmra.mxu0 %v451
      %v561 = vpop.f32.mrf.mxu0
      %v562 = vadd.f32 0.0, %v561
      %v563 = vpop.f32.mrf.mxu0
      %v564 = vadd.f32 0.0, %v563
      %565 = vmatmul.bf16.gmra.mxu0 %v454
      %v566 = vpop.f32.mrf.mxu0
      %v567 = vadd.f32 0.0, %v566
      %v568 = vpop.f32.mrf.mxu0
      %v569 = vadd.f32 0.0, %v568
      %570 = vmatmul.bf16.gmra.mxu0 %v457
      %v571 = vpop.f32.mrf.mxu0
      %v572 = vadd.f32 0.0, %v571
      %v573 = vpop.f32.mrf.mxu0
      %v574 = vadd.f32 0.0, %v573
      %575 = vmatmul.bf16.gmra.mxu0 %v460
      %v576 = vpop.f32.mrf.mxu0
      %v577 = vadd.f32 0.0, %v576
      %v578 = vpop.f32.mrf.mxu0
      %v579 = vadd.f32 0.0, %v578
      %580 = vmatmul.bf16.gmra.mxu0 %v463
      %v581 = vpop.f32.mrf.mxu0
      %v582 = vadd.f32 0.0, %v581
      %v583 = vpop.f32.mrf.mxu0
      %v584 = vadd.f32 0.0, %v583
      %585 = vmatmul.bf16.gmra.mxu0 %v466
      %v586 = vpop.f32.mrf.mxu0
      %v587 = vadd.f32 0.0, %v586
      %v588 = vpop.f32.mrf.mxu0
      %v589 = vadd.f32 0.0, %v588
      %590 = vmatmul.bf16.gmra.mxu0 %v469
      %v591 = vpop.f32.mrf.mxu0
      %v592 = vadd.f32 0.0, %v591
      %v593 = vpop.f32.mrf.mxu0
      %v594 = vadd.f32 0.0, %v593
      %595 = vmatmul.bf16.gmra.mxu0 %v472
      %v596 = vpop.f32.mrf.mxu0
      %v597 = vadd.f32 0.0, %v596
      %v598 = vpop.f32.mrf.mxu0
      %v599 = vadd.f32 0.0, %v598
      %600 = vmatmul.bf16.gmra.mxu0 %v475
      %v601 = vpop.f32.mrf.mxu0
      %v602 = vadd.f32 0.0, %v601
      %v603 = vpop.f32.mrf.mxu0
      %v604 = vadd.f32 0.0, %v603
      %605 = vmatmul.bf16.gmra.mxu0 %v478
      %v606 = vpop.f32.mrf.mxu0
      %v607 = vadd.f32 0.0, %v606
      %v608 = vpop.f32.mrf.mxu0
      %v609 = vadd.f32 0.0, %v608
      %610 = vmatmul.bf16.gmra.mxu0 %v481
      %v611 = vpop.f32.mrf.mxu0
      %v612 = vadd.f32 0.0, %v611
      %v613 = vpop.f32.mrf.mxu0
      %v614 = vadd.f32 0.0, %v613
      %615 = vmatmul.bf16.gmra.mxu0 %v484
      %v616 = vpop.f32.mrf.mxu0
      %v617 = vadd.f32 0.0, %v616
      %v618 = vpop.f32.mrf.mxu0
      %v619 = vadd.f32 0.0, %v618
      %620 = vmatmul.bf16.gmra.mxu0 %v487
      %v621 = vpop.f32.mrf.mxu0
      %v622 = vadd.f32 0.0, %v621
      %v623 = vpop.f32.mrf.mxu0
      %v624 = vadd.f32 0.0, %v623
      %625 = vmatmul.bf16.gmra.mxu0 %v490
      %v626 = vpop.f32.mrf.mxu0
      %v627 = vadd.f32 0.0, %v626
      %v628 = vpop.f32.mrf.mxu0
      %v629 = vadd.f32 0.0, %v628
      %630 = vmatmul.bf16.gmra.mxu0 %v493
      %v631 = vpop.f32.mrf.mxu0
      %v632 = vadd.f32 0.0, %v631
      %v633 = vpop.f32.mrf.mxu0
      %v634 = vadd.f32 0.0, %v633
      %635 = vmatmul.bf16.gmra.mxu0 %v496
      %v636 = vpop.f32.mrf.mxu0
      %v637 = vadd.f32 0.0, %v636
      %v638 = vpop.f32.mrf.mxu0
      %v639 = vadd.f32 0.0, %v638
      %640 = vmatmul.bf16.gmra.mxu0 %v499
      %v641 = vpop.f32.mrf.mxu0
      %v642 = vadd.f32 0.0, %v641
      %v643 = vpop.f32.mrf.mxu0
      %v644 = vadd.f32 0.0, %v643
      %645 = vmatmul.bf16.gmra.mxu0 %v502
      %v646 = vpop.f32.mrf.mxu0
      %v647 = vadd.f32 0.0, %v646
      %v648 = vpop.f32.mrf.mxu0
      %v649 = vadd.f32 0.0, %v648
      %650 = vmatmul.bf16.gmra.mxu0 %v505
      %v651 = vpop.f32.mrf.mxu0
      %v652 = vadd.f32 0.0, %v651
      %v653 = vpop.f32.mrf.mxu0
      %v654 = vadd.f32 0.0, %v653
      %655 = vmatmul.bf16.gmra.mxu0 %v508
      %v656 = vpop.f32.mrf.mxu0
      %v657 = vadd.f32 0.0, %v656
      %v658 = vpop.f32.mrf.mxu0
      %v659 = vadd.f32 0.0, %v658
      %660 = vmatmul.bf16.gmra.mxu0 %v511
      %v661 = vpop.f32.mrf.mxu0
      %v662 = vadd.f32 0.0, %v661
      %v663 = vpop.f32.mrf.mxu0
      %v664 = vadd.f32 0.0, %v663
      %665 = vmatmul.bf16.gmra.mxu0 %v514
      %v666 = vpop.f32.mrf.mxu0
      %v667 = vadd.f32 0.0, %v666
      %v668 = vpop.f32.mrf.mxu0
      %v669 = vadd.f32 0.0, %v668
      %670 = vmatmul.bf16.gmra.mxu0 %v517
      %v671 = vpop.f32.mrf.mxu0
      %v672 = vadd.f32 0.0, %v671
      %v673 = vpop.f32.mrf.mxu0
      %v674 = vadd.f32 0.0, %v673
      %675 = vmatmul.bf16.gmra.mxu0 %v520
      %v676 = vpop.f32.mrf.mxu0
      %v677 = vadd.f32 0.0, %v676
      %v678 = vpop.f32.mrf.mxu0
      %v679 = vadd.f32 0.0, %v678
      %680 = vmatmul.bf16.gmra.mxu0 %v523
      %v681 = vpop.f32.mrf.mxu0
      %v682 = vadd.f32 0.0, %v681
      %v683 = vpop.f32.mrf.mxu0
      %v684 = vadd.f32 0.0, %v683
      %685 = vmatmul.bf16.gmra.mxu0 %v526
      %v686 = vpop.f32.mrf.mxu0
      %v687 = vadd.f32 0.0, %v686
      %v688 = vpop.f32.mrf.mxu0
      %v689 = vadd.f32 0.0, %v688
      %690 = vmatmul.bf16.gmra.mxu0 %v529
      %v691 = vpop.f32.mrf.mxu0
      %v692 = vadd.f32 0.0, %v691
      %v693 = vpop.f32.mrf.mxu0
      %v694 = vadd.f32 0.0, %v693
      %695 = vmatmul.bf16.gmra.mxu0 %v532
      %v696 = vpop.f32.mrf.mxu0
      %v697 = vadd.f32 0.0, %v696
      %v698 = vpop.f32.mrf.mxu0
      %v699 = vadd.f32 0.0, %v698
      %700 = vmatmul.bf16.gmra.mxu0 %v535
      %v701 = vpop.f32.mrf.mxu0
      %v702 = vadd.f32 0.0, %v701
      %v703 = vpop.f32.mrf.mxu0
      %v704 = vadd.f32 0.0, %v703
      %705 = vmatmul.bf16.gmra.mxu0 %v538
      %v706 = vpop.f32.mrf.mxu0
      %v707 = vadd.f32 0.0, %v706
      %v708 = vpop.f32.mrf.mxu0
      %v709 = vadd.f32 0.0, %v708
      %710 = vmatmul.bf16.gmra.mxu0 %v541
      %v711 = vpop.f32.mrf.mxu0
      %v712 = vadd.f32 0.0, %v711
      %v713 = vpop.f32.mrf.mxu0
      %v714 = vadd.f32 0.0, %v713
      %715 = vdwg.mxu0
      %v716 = vld [vmem:[%s2] sm:$0x1]
      %v718 = vperm.slane %v716, 0
      %v720 = vmul.f32 %v557, %v718
      %v721 = vmul.f32 %v559, %v718
      %v722 = vmul.f32 %v562, %v718
      %v723 = vmul.f32 %v564, %v718
      %v724 = vmul.f32 %v567, %v718
      %v725 = vmul.f32 %v569, %v718
      %v726 = vmul.f32 %v572, %v718
      %v727 = vmul.f32 %v574, %v718
      %v728 = vmul.f32 %v577, %v718
      %v729 = vmul.f32 %v579, %v718
      %v730 = vmul.f32 %v582, %v718
      %v731 = vmul.f32 %v584, %v718
      %v732 = vmul.f32 %v587, %v718
      %v733 = vmul.f32 %v589, %v718
      %v734 = vmul.f32 %v592, %v718
      %v735 = vmul.f32 %v594, %v718
      %v736 = vmul.f32 %v597, %v718
      %v737 = vmul.f32 %v599, %v718
      %v738 = vmul.f32 %v602, %v718
      %v739 = vmul.f32 %v604, %v718
      %v740 = vmul.f32 %v607, %v718
      %v741 = vmul.f32 %v609, %v718
      %v742 = vmul.f32 %v612, %v718
      %v743 = vmul.f32 %v614, %v718
      %v744 = vmul.f32 %v617, %v718
      %v745 = vmul.f32 %v619, %v718
      %v746 = vmul.f32 %v622, %v718
      %v747 = vmul.f32 %v624, %v718
      %v748 = vmul.f32 %v627, %v718
      %v749 = vmul.f32 %v629, %v718
      %v750 = vmul.f32 %v632, %v718
      %v751 = vmul.f32 %v634, %v718
      %v752 = vmul.f32 %v637, %v718
      %v753 = vmul.f32 %v639, %v718
      %v754 = vmul.f32 %v642, %v718
      %v755 = vmul.f32 %v644, %v718
      %v756 = vmul.f32 %v647, %v718
      %v757 = vmul.f32 %v649, %v718
      %v758 = vmul.f32 %v652, %v718
      %v759 = vmul.f32 %v654, %v718
      %v760 = vmul.f32 %v657, %v718
      %v761 = vmul.f32 %v659, %v718
      %v762 = vmul.f32 %v662, %v718
      %v763 = vmul.f32 %v664, %v718
      %v764 = vmul.f32 %v667, %v718
      %v765 = vmul.f32 %v669, %v718
      %v766 = vmul.f32 %v672, %v718
      %v767 = vmul.f32 %v674, %v718
      %v768 = vmul.f32 %v677, %v718
      %v769 = vmul.f32 %v679, %v718
      %v770 = vmul.f32 %v682, %v718
      %v771 = vmul.f32 %v684, %v718
      %v772 = vmul.f32 %v687, %v718
      %v773 = vmul.f32 %v689, %v718
      %v774 = vmul.f32 %v692, %v718
      %v775 = vmul.f32 %v694, %v718
      %v776 = vmul.f32 %v697, %v718
      %v777 = vmul.f32 %v699, %v718
      %v778 = vmul.f32 %v702, %v718
      %v779 = vmul.f32 %v704, %v718
      %v780 = vmul.f32 %v707, %v718
      %v781 = vmul.f32 %v709, %v718
      %v782 = vmul.f32 %v712, %v718
      %v783 = vmul.f32 %v714, %v718
      %v784 = vld [vmem:[%s3] sm:$0x1]
      %v786 = vperm.slane %v784, 0
      %v788 = vadd.f32 %v720, %v786
      %v789 = vadd.f32 %v721, %v786
      %v790 = vadd.f32 %v722, %v786
      %v791 = vadd.f32 %v723, %v786
      %v792 = vadd.f32 %v724, %v786
      %v793 = vadd.f32 %v725, %v786
      %v794 = vadd.f32 %v726, %v786
      %v795 = vadd.f32 %v727, %v786
      %v796 = vadd.f32 %v728, %v786
      %v797 = vadd.f32 %v729, %v786
      %v798 = vadd.f32 %v730, %v786
      %v799 = vadd.f32 %v731, %v786
      %v800 = vadd.f32 %v732, %v786
      %v801 = vadd.f32 %v733, %v786
      %v802 = vadd.f32 %v734, %v786
      %v803 = vadd.f32 %v735, %v786
      %v804 = vadd.f32 %v736, %v786
      %v805 = vadd.f32 %v737, %v786
      %v806 = vadd.f32 %v738, %v786
      %v807 = vadd.f32 %v739, %v786
      %v808 = vadd.f32 %v740, %v786
      %v809 = vadd.f32 %v741, %v786
      %v810 = vadd.f32 %v742, %v786
      %v811 = vadd.f32 %v743, %v786
      %v812 = vadd.f32 %v744, %v786
      %v813 = vadd.f32 %v745, %v786
      %v814 = vadd.f32 %v746, %v786
      %v815 = vadd.f32 %v747, %v786
      %v816 = vadd.f32 %v748, %v786
      %v817 = vadd.f32 %v749, %v786
      %v818 = vadd.f32 %v750, %v786
      %v819 = vadd.f32 %v751, %v786
      %v820 = vadd.f32 %v752, %v786
      %v821 = vadd.f32 %v753, %v786
      %v822 = vadd.f32 %v754, %v786
      %v823 = vadd.f32 %v755, %v786
      %v824 = vadd.f32 %v756, %v786
      %v825 = vadd.f32 %v757, %v786
      %v826 = vadd.f32 %v758, %v786
      %v827 = vadd.f32 %v759, %v786
      %v828 = vadd.f32 %v760, %v786
      %v829 = vadd.f32 %v761, %v786
      %v830 = vadd.f32 %v762, %v786
      %v831 = vadd.f32 %v763, %v786
      %v832 = vadd.f32 %v764, %v786
      %v833 = vadd.f32 %v765, %v786
      %v834 = vadd.f32 %v766, %v786
      %v835 = vadd.f32 %v767, %v786
      %v836 = vadd.f32 %v768, %v786
      %v837 = vadd.f32 %v769, %v786
      %v838 = vadd.f32 %v770, %v786
      %v839 = vadd.f32 %v771, %v786
      %v840 = vadd.f32 %v772, %v786
      %v841 = vadd.f32 %v773, %v786
      %v842 = vadd.f32 %v774, %v786
      %v843 = vadd.f32 %v775, %v786
      %v844 = vadd.f32 %v776, %v786
      %v845 = vadd.f32 %v777, %v786
      %v846 = vadd.f32 %v778, %v786
      %v847 = vadd.f32 %v779, %v786
      %v848 = vadd.f32 %v780, %v786
      %v849 = vadd.f32 %v781, %v786
      %v850 = vadd.f32 %v782, %v786
      %v851 = vadd.f32 %v783, %v786
      %v852 = vmax.f32 %v788, 0.0
      %v853 = vmax.f32 %v789, 0.0
      %v854 = vmax.f32 %v790, 0.0
      %v855 = vmax.f32 %v791, 0.0
      %v856 = vmax.f32 %v792, 0.0
      %v857 = vmax.f32 %v793, 0.0
      %v858 = vmax.f32 %v794, 0.0
      %v859 = vmax.f32 %v795, 0.0
      %v860 = vmax.f32 %v796, 0.0
      %v861 = vmax.f32 %v797, 0.0
      %v862 = vmax.f32 %v798, 0.0
      %v863 = vmax.f32 %v799, 0.0
      %v864 = vmax.f32 %v800, 0.0
      %v865 = vmax.f32 %v801, 0.0
      %v866 = vmax.f32 %v802, 0.0
      %v867 = vmax.f32 %v803, 0.0
      %v868 = vmax.f32 %v804, 0.0
      %v869 = vmax.f32 %v805, 0.0
      %v870 = vmax.f32 %v806, 0.0
      %v871 = vmax.f32 %v807, 0.0
      %v872 = vmax.f32 %v808, 0.0
      %v873 = vmax.f32 %v809, 0.0
      %v874 = vmax.f32 %v810, 0.0
      %v875 = vmax.f32 %v811, 0.0
      %v876 = vmax.f32 %v812, 0.0
      %v877 = vmax.f32 %v813, 0.0
      %v878 = vmax.f32 %v814, 0.0
      %v879 = vmax.f32 %v815, 0.0
      %v880 = vmax.f32 %v816, 0.0
      %v881 = vmax.f32 %v817, 0.0
      %v882 = vmax.f32 %v818, 0.0
      %v883 = vmax.f32 %v819, 0.0
      %v884 = vmax.f32 %v820, 0.0
      %v885 = vmax.f32 %v821, 0.0
      %v886 = vmax.f32 %v822, 0.0
      %v887 = vmax.f32 %v823, 0.0
      %v888 = vmax.f32 %v824, 0.0
      %v889 = vmax.f32 %v825, 0.0
      %v890 = vmax.f32 %v826, 0.0
      %v891 = vmax.f32 %v827, 0.0
      %v892 = vmax.f32 %v828, 0.0
      %v893 = vmax.f32 %v829, 0.0
      %v894 = vmax.f32 %v830, 0.0
      %v895 = vmax.f32 %v831, 0.0
      %v896 = vmax.f32 %v832, 0.0
      %v897 = vmax.f32 %v833, 0.0
      %v898 = vmax.f32 %v834, 0.0
      %v899 = vmax.f32 %v835, 0.0
      %v900 = vmax.f32 %v836, 0.0
      %v901 = vmax.f32 %v837, 0.0
      %v902 = vmax.f32 %v838, 0.0
      %v903 = vmax.f32 %v839, 0.0
      %v904 = vmax.f32 %v840, 0.0
      %v905 = vmax.f32 %v841, 0.0
      %v906 = vmax.f32 %v842, 0.0
      %v907 = vmax.f32 %v843, 0.0
      %v908 = vmax.f32 %v844, 0.0
      %v909 = vmax.f32 %v845, 0.0
      %v910 = vmax.f32 %v846, 0.0
      %v911 = vmax.f32 %v847, 0.0
      %v912 = vmax.f32 %v848, 0.0
      %v913 = vmax.f32 %v849, 0.0
      %v914 = vmax.f32 %v850, 0.0
      %v915 = vmax.f32 %v851, 0.0
      %v916 = vpack.c.bf16 %v852, %v852
      %v917 = vpack.c.bf16 %v853, %v853
      %v918 = vpack.c.bf16 %v854, %v854
      %v919 = vpack.c.bf16 %v855, %v855
      %v920 = vpack.c.bf16 %v856, %v856
      %v921 = vpack.c.bf16 %v857, %v857
      %v922 = vpack.c.bf16 %v858, %v858
      %v923 = vpack.c.bf16 %v859, %v859
      %v924 = vpack.c.bf16 %v860, %v860
      %v925 = vpack.c.bf16 %v861, %v861
      %v926 = vpack.c.bf16 %v862, %v862
      %v927 = vpack.c.bf16 %v863, %v863
      %v928 = vpack.c.bf16 %v864, %v864
      %v929 = vpack.c.bf16 %v865, %v865
      %v930 = vpack.c.bf16 %v866, %v866
      %v931 = vpack.c.bf16 %v867, %v867
      %v932 = vpack.c.bf16 %v868, %v868
      %v933 = vpack.c.bf16 %v869, %v869
      %v934 = vpack.c.bf16 %v870, %v870
      %v935 = vpack.c.bf16 %v871, %v871
      %v936 = vpack.c.bf16 %v872, %v872
      %v937 = vpack.c.bf16 %v873, %v873
      %v938 = vpack.c.bf16 %v874, %v874
      %v939 = vpack.c.bf16 %v875, %v875
      %v940 = vpack.c.bf16 %v876, %v876
      %v941 = vpack.c.bf16 %v877, %v877
      %v942 = vpack.c.bf16 %v878, %v878
      %v943 = vpack.c.bf16 %v879, %v879
      %v944 = vpack.c.bf16 %v880, %v880
      %v945 = vpack.c.bf16 %v881, %v881
      %v946 = vpack.c.bf16 %v882, %v882
      %v947 = vpack.c.bf16 %v883, %v883
      %v948 = vpack.c.bf16 %v884, %v884
      %v949 = vpack.c.bf16 %v885, %v885
      %v950 = vpack.c.bf16 %v886, %v886
      %v951 = vpack.c.bf16 %v887, %v887
      %v952 = vpack.c.bf16 %v888, %v888
      %v953 = vpack.c.bf16 %v889, %v889
      %v954 = vpack.c.bf16 %v890, %v890
      %v955 = vpack.c.bf16 %v891, %v891
      %v956 = vpack.c.bf16 %v892, %v892
      %v957 = vpack.c.bf16 %v893, %v893
      %v958 = vpack.c.bf16 %v894, %v894
      %v959 = vpack.c.bf16 %v895, %v895
      %v960 = vpack.c.bf16 %v896, %v896
      %v961 = vpack.c.bf16 %v897, %v897
      %v962 = vpack.c.bf16 %v898, %v898
      %v963 = vpack.c.bf16 %v899, %v899
      %v964 = vpack.c.bf16 %v900, %v900
      %v965 = vpack.c.bf16 %v901, %v901
      %v966 = vpack.c.bf16 %v902, %v902
      %v967 = vpack.c.bf16 %v903, %v903
      %v968 = vpack.c.bf16 %v904, %v904
      %v969 = vpack.c.bf16 %v905, %v905
      %v970 = vpack.c.bf16 %v906, %v906
      %v971 = vpack.c.bf16 %v907, %v907
      %v972 = vpack.c.bf16 %v908, %v908
      %v973 = vpack.c.bf16 %v909, %v909
      %v974 = vpack.c.bf16 %v910, %v910
      %v975 = vpack.c.bf16 %v911, %v911
      %v976 = vpack.c.bf16 %v912, %v912
      %v977 = vpack.c.bf16 %v913, %v913
      %v978 = vpack.c.bf16 %v914, %v914
      %v979 = vpack.c.bf16 %v915, %v915
      %vm980 = vcmask 27648
      %981 = vst.msk [vmem:[%s199] sm:$0xf] %vm980, %v916
      %982 = vst.msk [vmem:[%s199 + $0x4] sm:$0xf] %vm980, %v917
      %983 = vst.msk [vmem:[%s199 + $0x8] sm:$0xf] %vm980, %v918
      %984 = vst.msk [vmem:[%s199 + $0xc] sm:$0xf] %vm980, %v919
      %985 = vst.msk [vmem:[%s199 + $0x10] sm:$0xf] %vm980, %v920
      %986 = vst.msk [vmem:[%s199 + $0x14] sm:$0xf] %vm980, %v921
      %987 = vst.msk [vmem:[%s199 + $0x18] sm:$0xf] %vm980, %v922
      %988 = vst.msk [vmem:[%s199 + $0x1c] sm:$0xf] %vm980, %v923
      %989 = vst.msk [vmem:[%s199 + $0x20] sm:$0xf] %vm980, %v924
      %990 = vst.msk [vmem:[%s199 + $0x24] sm:$0xf] %vm980, %v925
      %991 = vst.msk [vmem:[%s199 + $0x28] sm:$0xf] %vm980, %v926
      %992 = vst.msk [vmem:[%s199 + $0x2c] sm:$0xf] %vm980, %v927
      %993 = vst.msk [vmem:[%s199 + $0x30] sm:$0xf] %vm980, %v928
      %994 = vst.msk [vmem:[%s199 + $0x34] sm:$0xf] %vm980, %v929
      %995 = vst.msk [vmem:[%s199 + $0x38] sm:$0xf] %vm980, %v930
      %996 = vst.msk [vmem:[%s199 + $0x3c] sm:$0xf] %vm980, %v931
      %997 = vst.msk [vmem:[%s199 + $0x40] sm:$0xf] %vm980, %v932
      %998 = vst.msk [vmem:[%s199 + $0x44] sm:$0xf] %vm980, %v933
      %999 = vst.msk [vmem:[%s199 + $0x48] sm:$0xf] %vm980, %v934
      %1000 = vst.msk [vmem:[%s199 + $0x4c] sm:$0xf] %vm980, %v935
      %1001 = vst.msk [vmem:[%s199 + $0x50] sm:$0xf] %vm980, %v936
      %1002 = vst.msk [vmem:[%s199 + $0x54] sm:$0xf] %vm980, %v937
      %1003 = vst.msk [vmem:[%s199 + $0x58] sm:$0xf] %vm980, %v938
      %1004 = vst.msk [vmem:[%s199 + $0x5c] sm:$0xf] %vm980, %v939
      %1005 = vst.msk [vmem:[%s199 + $0x60] sm:$0xf] %vm980, %v940
      %1006 = vst.msk [vmem:[%s199 + $0x64] sm:$0xf] %vm980, %v941
      %1007 = vst.msk [vmem:[%s199 + $0x68] sm:$0xf] %vm980, %v942
      %1008 = vst.msk [vmem:[%s199 + $0x6c] sm:$0xf] %vm980, %v943
      %1009 = vst.msk [vmem:[%s199 + $0x70] sm:$0xf] %vm980, %v944
      %1010 = vst.msk [vmem:[%s199 + $0x74] sm:$0xf] %vm980, %v945
      %1011 = vst.msk [vmem:[%s199 + $0x78] sm:$0xf] %vm980, %v946
      %1012 = vst.msk [vmem:[%s199 + $0x7c] sm:$0xf] %vm980, %v947
      %1013 = vst.msk [vmem:[%s199 + $0x80] sm:$0xf] %vm980, %v948
      %1014 = vst.msk [vmem:[%s199 + $0x84] sm:$0xf] %vm980, %v949
      %1015 = vst.msk [vmem:[%s199 + $0x88] sm:$0xf] %vm980, %v950
      %1016 = vst.msk [vmem:[%s199 + $0x8c] sm:$0xf] %vm980, %v951
      %1017 = vst.msk [vmem:[%s199 + $0x90] sm:$0xf] %vm980, %v952
      %1018 = vst.msk [vmem:[%s199 + $0x94] sm:$0xf] %vm980, %v953
      %1019 = vst.msk [vmem:[%s199 + $0x98] sm:$0xf] %vm980, %v954
      %1020 = vst.msk [vmem:[%s199 + $0x9c] sm:$0xf] %vm980, %v955
      %1021 = vst.msk [vmem:[%s199 + $0xa0] sm:$0xf] %vm980, %v956
      %1022 = vst.msk [vmem:[%s199 + $0xa4] sm:$0xf] %vm980, %v957
      %1023 = vst.msk [vmem:[%s199 + $0xa8] sm:$0xf] %vm980, %v958
      %1024 = vst.msk [vmem:[%s199 + $0xac] sm:$0xf] %vm980, %v959
      %1025 = vst.msk [vmem:[%s199 + $0xb0] sm:$0xf] %vm980, %v960
      %1026 = vst.msk [vmem:[%s199 + $0xb4] sm:$0xf] %vm980, %v961
      %1027 = vst.msk [vmem:[%s199 + $0xb8] sm:$0xf] %vm980, %v962
      %1028 = vst.msk [vmem:[%s199 + $0xbc] sm:$0xf] %vm980, %v963
      %1029 = vst.msk [vmem:[%s199 + $0xc0] sm:$0xf] %vm980, %v964
      %1030 = vst.msk [vmem:[%s199 + $0xc4] sm:$0xf] %vm980, %v965
      %1031 = vst.msk [vmem:[%s199 + $0xc8] sm:$0xf] %vm980, %v966
      %1032 = vst.msk [vmem:[%s199 + $0xcc] sm:$0xf] %vm980, %v967
      %1033 = vst.msk [vmem:[%s199 + $0xd0] sm:$0xf] %vm980, %v968
      %1034 = vst.msk [vmem:[%s199 + $0xd4] sm:$0xf] %vm980, %v969
      %1035 = vst.msk [vmem:[%s199 + $0xd8] sm:$0xf] %vm980, %v970
      %1036 = vst.msk [vmem:[%s199 + $0xdc] sm:$0xf] %vm980, %v971
      %1037 = vst.msk [vmem:[%s199 + $0xe0] sm:$0xf] %vm980, %v972
      %1038 = vst.msk [vmem:[%s199 + $0xe4] sm:$0xf] %vm980, %v973
      %1039 = vst.msk [vmem:[%s199 + $0xe8] sm:$0xf] %vm980, %v974
      %1040 = vst.msk [vmem:[%s199 + $0xec] sm:$0xf] %vm980, %v975
      %1041 = vst.msk [vmem:[%s199 + $0xf0] sm:$0xf] %vm980, %v976
      %1042 = vst.msk [vmem:[%s199 + $0xf4] sm:$0xf] %vm980, %v977
      %1043 = vst.msk [vmem:[%s199 + $0xf8] sm:$0xf] %vm980, %v978
      %1044 = vst.msk [vmem:[%s199 + $0xfc] sm:$0xf] %vm980, %v979
      %s1045 = smul.u32 64, %s15
      %p1046 = scmp.lt.s32.totalorder %s1045, 127
      %s1047 = scalar_select %p1046, %s1045, 127
      %s1048 = smul.addr %s1047, 4
      %s1049 = scalar_lea.vmem %s4, %s1048
      // Predicated region
      $region37: #{_lambda_.13} parent=35 // pred_check
        %p1050 = pneg %p122
      $region38: #{_lambda_.13} parent=35 // pred_check_branch
        %1052 = sbr.rel (%p1050) target = $region40
      $region39: #{_lambda_.13} parent=35 // pred_region
        %s1053 = smul.u32 64, %s15
      $region40: #{_lambda_.13} parent=35 // pred_fallthru
        _
    $region36: #{_lambda_.13} parent=5 // pred_fallthru
      _
    %p1054 = scmp.le.s32.totalorder 2, %s10
    // Predicated region
    $region41: #{_lambda_.13} parent=5 // pred_check
      %p1055 = pneg %p1054
    $region42: #{_lambda_.13} parent=5 // pred_check_branch
      %1057 = sbr.rel (%p1055) target = $region44
    $region43: #{_lambda_.13} parent=5 // pred_region
      %s1058 = ssub.s32 %s10, 2
      // Predicated region
      $region45: #{_lambda_.13} parent=43 // pred_check
        %p1059 = pneg %p128
      $region46: #{_lambda_.13} parent=43 // pred_check_branch
        %1061 = sbr.rel (%p1059) target = $region48
      $region47: #{_lambda_.13} parent=43 // pred_region
        %s1062 = smul.u32 64, %s16
        %p1063 = scmp.lt.s32.totalorder %s1062, 127
        %s1064 = scalar_select %p1063, %s1062, 127
        %s1065 = smul.addr %s1064, 4
        %s1066 = scalar_lea.vmem %s4, %s1065
      $region48: #{_lambda_.13} parent=43 // pred_fallthru
        _
    $region44: #{_lambda_.13} parent=5 // pred_fallthru
      _
  $region6: #{_lambda_.13} parent=0 // loop_footer
    %s14 = sadd.s32 1, %s10
  $region7: #{_lambda_.13} parent=0 // loop_footer_branch
    %9 = sbr.rel target = $region3
  $region8: #{_lambda_.13} parent=0 // loop_exit
    _

// kernel: _lambda_.14
$region0: #{_lambda_.14}
  #allocation0 [shape = 'u32[]', space=smem, size = 0x4, offset = 0x4, fixed_abs, tag = 'smem constant byte address 0x4 - core index']
  #allocation1 [shape = 'u32[72,128]{1,0:T(1,128)}', space=vmem, size = 0x9000, scoped, tag = 'internal scratch']
  %s0 = inlined_call_operand.vmem [shape: bf16[512,36], index: 0, kind: input, shape index: {}]
  %s1 = inlined_call_operand.vmem [shape: bf16[36,8], index: 1, kind: input, shape index: {}]
  %s2 = inlined_call_operand.vmem [shape: f32[1,8], index: 2, kind: input, shape index: {}]
  %s3 = inlined_call_operand.vmem [shape: f32[1,8], index: 3, kind: input, shape index: {}]
  %s4 = inlined_call_operand.vmem [shape: bf16[512,8], index: 4, kind: output, shape index: {}]
  %s5 = sld [smem:[#allocation0]]
  $region26: #{_lambda_.14} parent=0
    _
  %s7 = ssub.s32 1, %s5
  %s8 = scalar_select 0, %s7, %s5
  // Predicated region
  $region2: #{_lambda_.14} parent=0 // pred_check
    _
  $region3: #{_lambda_.14} parent=0 // pred_check_branch
    %10 = sbr.rel (0) target = $region5
  $region4: #{_lambda_.14} parent=0 // pred_region
    _
  $region5: #{_lambda_.14} parent=0 // pred_fallthru
    _
  // Predicated region
  $region6: #{_lambda_.14} parent=0 // pred_check
    _
  $region7: #{_lambda_.14} parent=0 // pred_check_branch
    %12 = sbr.rel (0) target = $region9
  $region8: #{_lambda_.14} parent=0 // pred_region
    _
  $region9: #{_lambda_.14} parent=0 // pred_fallthru
    _
  // Predicated region
  $region10: #{_lambda_.14} parent=0 // pred_check
    _
  $region11: #{_lambda_.14} parent=0 // pred_check_branch
    %14 = sbr.rel (0) target = $region13
  $region12: #{_lambda_.14} parent=0 // pred_region
    _
  $region13: #{_lambda_.14} parent=0 // pred_fallthru
    _
  // Predicated region
  $region14: #{_lambda_.14} parent=0 // pred_check
    _
  $region15: #{_lambda_.14} parent=0 // pred_check_branch
    %16 = sbr.rel (0) target = $region17
  $region16: #{_lambda_.14} parent=0 // pred_region
    _
  $region17: #{_lambda_.14} parent=0 // pred_fallthru
    _
  %v18 = vld [vmem:[%s0] sm:$0xf]
  %v19 = vld [vmem:[%s0 + $0x4] sm:$0xf]
  %v20 = vld [vmem:[%s0 + $0x8] sm:$0xf]
  %v21 = vld [vmem:[%s0 + $0xc] sm:$0xf]
  %v22 = vld [vmem:[%s0 + $0x10] sm:$0xf]
  %v23 = vld [vmem:[%s0 + $0x14] sm:$0xf]
  %v24 = vld [vmem:[%s0 + $0x18] sm:$0xf]
  %v25 = vld [vmem:[%s0 + $0x1c] sm:$0xf]
  %v26 = vld [vmem:[%s0 + $0x20] sm:$0xf]
  %v27 = vld [vmem:[%s0 + $0x24] sm:$0xf]
  %v28 = vld [vmem:[%s0 + $0x28] sm:$0xf]
  %v29 = vld [vmem:[%s0 + $0x2c] sm:$0xf]
  %v30 = vld [vmem:[%s0 + $0x30] sm:$0xf]
  %v31 = vld [vmem:[%s0 + $0x34] sm:$0xf]
  %v32 = vld [vmem:[%s0 + $0x38] sm:$0xf]
  %v33 = vld [vmem:[%s0 + $0x3c] sm:$0xf]
  %v34 = vld [vmem:[%s0 + $0x40] sm:$0xf]
  %v35 = vld [vmem:[%s0 + $0x44] sm:$0xf]
  %v36 = vld [vmem:[%s0 + $0x48] sm:$0xf]
  %v37 = vld [vmem:[%s0 + $0x4c] sm:$0xf]
  %v38 = vld [vmem:[%s0 + $0x50] sm:$0xf]
  %v39 = vld [vmem:[%s0 + $0x54] sm:$0xf]
  %v40 = vld [vmem:[%s0 + $0x58] sm:$0xf]
  %v41 = vld [vmem:[%s0 + $0x5c] sm:$0xf]
  %v42 = vld [vmem:[%s0 + $0x60] sm:$0xf]
  %v43 = vld [vmem:[%s0 + $0x64] sm:$0xf]
  %v44 = vld [vmem:[%s0 + $0x68] sm:$0xf]
  %v45 = vld [vmem:[%s0 + $0x6c] sm:$0xf]
  %v46 = vld [vmem:[%s0 + $0x70] sm:$0xf]
  %v47 = vld [vmem:[%s0 + $0x74] sm:$0xf]
  %v48 = vld [vmem:[%s0 + $0x78] sm:$0xf]
  %v49 = vld [vmem:[%s0 + $0x7c] sm:$0xf]
  %v50 = vld [vmem:[%s0 + $0x80] sm:$0xf]
  %v51 = vld [vmem:[%s0 + $0x84] sm:$0xf]
  %v52 = vld [vmem:[%s0 + $0x88] sm:$0xf]
  %v53 = vld [vmem:[%s0 + $0x8c] sm:$0xf]
  %v54 = vld [vmem:[%s0 + $0x90] sm:$0xf]
  %v55 = vld [vmem:[%s0 + $0x94] sm:$0xf]
  %v56 = vld [vmem:[%s0 + $0x98] sm:$0xf]
  %v57 = vld [vmem:[%s0 + $0x9c] sm:$0xf]
  %v58 = vld [vmem:[%s0 + $0xa0] sm:$0xf]
  %v59 = vld [vmem:[%s0 + $0xa4] sm:$0xf]
  %v60 = vld [vmem:[%s0 + $0xa8] sm:$0xf]
  %v61 = vld [vmem:[%s0 + $0xac] sm:$0xf]
  %v62 = vld [vmem:[%s0 + $0xb0] sm:$0xf]
  %v63 = vld [vmem:[%s0 + $0xb4] sm:$0xf]
  %v64 = vld [vmem:[%s0 + $0xb8] sm:$0xf]
  %v65 = vld [vmem:[%s0 + $0xbc] sm:$0xf]
  %v66 = vld [vmem:[%s0 + $0xc0] sm:$0xf]
  %v67 = vld [vmem:[%s0 + $0xc4] sm:$0xf]
  %v68 = vld [vmem:[%s0 + $0xc8] sm:$0xf]
  %v69 = vld [vmem:[%s0 + $0xcc] sm:$0xf]
  %v70 = vld [vmem:[%s0 + $0xd0] sm:$0xf]
  %v71 = vld [vmem:[%s0 + $0xd4] sm:$0xf]
  %v72 = vld [vmem:[%s0 + $0xd8] sm:$0xf]
  %v73 = vld [vmem:[%s0 + $0xdc] sm:$0xf]
  %v74 = vld [vmem:[%s0 + $0xe0] sm:$0xf]
  %v75 = vld [vmem:[%s0 + $0xe4] sm:$0xf]
  %v76 = vld [vmem:[%s0 + $0xe8] sm:$0xf]
  %v77 = vld [vmem:[%s0 + $0xec] sm:$0xf]
  %v78 = vld [vmem:[%s0 + $0xf0] sm:$0xf]
  %v79 = vld [vmem:[%s0 + $0xf4] sm:$0xf]
  %v80 = vld [vmem:[%s0 + $0xf8] sm:$0xf]
  %v81 = vld [vmem:[%s0 + $0xfc] sm:$0xf]
  %v82 = vld [vmem:[%s1] sm:$0xf]
  %v83 = vld [vmem:[%s1 + $0x4] sm:$0xf]
  %v84 = vld [vmem:[%s1 + $0x8] sm:$0xf]
  %v85 = vld [vmem:[%s1 + $0xc] sm:$0xf]
  %v86 = vld [vmem:[%s1 + $0x10] sm:$0x3]
  %v151 = vunpack.c.l.b16 %v18
  %v152 = vunpack.c.l.b16 %v19
  %v153 = vunpack.c.l.b16 %v20
  %v154 = vunpack.c.l.b16 %v21
  %v155 = vunpack.c.l.b16 %v22
  %v156 = vunpack.c.l.b16 %v23
  %v157 = vunpack.c.l.b16 %v24
  %v158 = vunpack.c.l.b16 %v25
  %v159 = vunpack.c.l.b16 %v26
  %v160 = vunpack.c.l.b16 %v27
  %v161 = vunpack.c.l.b16 %v28
  %v162 = vunpack.c.l.b16 %v29
  %v163 = vunpack.c.l.b16 %v30
  %v164 = vunpack.c.l.b16 %v31
  %v165 = vunpack.c.l.b16 %v32
  %v166 = vunpack.c.l.b16 %v33
  %v167 = vunpack.c.l.b16 %v34
  %v168 = vunpack.c.l.b16 %v35
  %v169 = vunpack.c.l.b16 %v36
  %v170 = vunpack.c.l.b16 %v37
  %v171 = vunpack.c.l.b16 %v38
  %v172 = vunpack.c.l.b16 %v39
  %v173 = vunpack.c.l.b16 %v40
  %v174 = vunpack.c.l.b16 %v41
  %v175 = vunpack.c.l.b16 %v42
  %v176 = vunpack.c.l.b16 %v43
  %v177 = vunpack.c.l.b16 %v44
  %v178 = vunpack.c.l.b16 %v45
  %v179 = vunpack.c.l.b16 %v46
  %v180 = vunpack.c.l.b16 %v47
  %v181 = vunpack.c.l.b16 %v48
  %v182 = vunpack.c.l.b16 %v49
  %v183 = vunpack.c.l.b16 %v50
  %v184 = vunpack.c.l.b16 %v51
  %v185 = vunpack.c.l.b16 %v52
  %v186 = vunpack.c.l.b16 %v53
  %v187 = vunpack.c.l.b16 %v54
  %v188 = vunpack.c.l.b16 %v55
  %v189 = vunpack.c.l.b16 %v56
  %v190 = vunpack.c.l.b16 %v57
  %v191 = vunpack.c.l.b16 %v58
  %v192 = vunpack.c.l.b16 %v59
  %v193 = vunpack.c.l.b16 %v60
  %v194 = vunpack.c.l.b16 %v61
  %v195 = vunpack.c.l.b16 %v62
  %v196 = vunpack.c.l.b16 %v63
  %v197 = vunpack.c.l.b16 %v64
  %v198 = vunpack.c.l.b16 %v65
  %v199 = vunpack.c.l.b16 %v66
  %v200 = vunpack.c.l.b16 %v67
  %v201 = vunpack.c.l.b16 %v68
  %v202 = vunpack.c.l.b16 %v69
  %v203 = vunpack.c.l.b16 %v70
  %v204 = vunpack.c.l.b16 %v71
  %v205 = vunpack.c.l.b16 %v72
  %v206 = vunpack.c.l.b16 %v73
  %v207 = vunpack.c.l.b16 %v74
  %v208 = vunpack.c.l.b16 %v75
  %v209 = vunpack.c.l.b16 %v76
  %v210 = vunpack.c.l.b16 %v77
  %v211 = vunpack.c.l.b16 %v78
  %v212 = vunpack.c.l.b16 %v79
  %v213 = vunpack.c.l.b16 %v80
  %v214 = vunpack.c.l.b16 %v81
  %v215 = vpack.c.b16 %v152, %v151
  %v216 = vpack.c.b16 %v154, %v153
  %v217 = vpack.c.b16 %v156, %v155
  %v218 = vpack.c.b16 %v158, %v157
  %v219 = vpack.c.b16 %v160, %v159
  %v220 = vpack.c.b16 %v162, %v161
  %v221 = vpack.c.b16 %v164, %v163
  %v222 = vpack.c.b16 %v166, %v165
  %v223 = vpack.c.b16 %v168, %v167
  %v224 = vpack.c.b16 %v170, %v169
  %v225 = vpack.c.b16 %v172, %v171
  %v226 = vpack.c.b16 %v174, %v173
  %v227 = vpack.c.b16 %v176, %v175
  %v228 = vpack.c.b16 %v178, %v177
  %v229 = vpack.c.b16 %v180, %v179
  %v230 = vpack.c.b16 %v182, %v181
  %v231 = vpack.c.b16 %v184, %v183
  %v232 = vpack.c.b16 %v186, %v185
  %v233 = vpack.c.b16 %v188, %v187
  %v234 = vpack.c.b16 %v190, %v189
  %v235 = vpack.c.b16 %v192, %v191
  %v236 = vpack.c.b16 %v194, %v193
  %v237 = vpack.c.b16 %v196, %v195
  %v238 = vpack.c.b16 %v198, %v197
  %v239 = vpack.c.b16 %v200, %v199
  %v240 = vpack.c.b16 %v202, %v201
  %v241 = vpack.c.b16 %v204, %v203
  %v242 = vpack.c.b16 %v206, %v205
  %v243 = vpack.c.b16 %v208, %v207
  %v244 = vpack.c.b16 %v210, %v209
  %v245 = vpack.c.b16 %v212, %v211
  %v246 = vpack.c.b16 %v214, %v213
  %v252 = vunpack.c.l.b16 %v82
  %v253 = vunpack.c.l.b16 %v83
  %v254 = vunpack.c.l.b16 %v84
  %v255 = vunpack.c.l.b16 %v85
  %v256 = vunpack.c.l.b16 %v86
  %v257 = vpack.c.b16 %v253, %v252
  %v258 = vpack.c.b16 %v255, %v254
  %v259 = vpack.c.b16 %v256, %v256
  %vm262 = vcmask 293888
  %v264 = vsel %vm262, %v215, 0
  %v267 = vsel %vm262, %v216, 0
  %v270 = vsel %vm262, %v217, 0
  %v273 = vsel %vm262, %v218, 0
  %v276 = vsel %vm262, %v219, 0
  %v279 = vsel %vm262, %v220, 0
  %v282 = vsel %vm262, %v221, 0
  %v285 = vsel %vm262, %v222, 0
  %v288 = vsel %vm262, %v223, 0
  %v291 = vsel %vm262, %v224, 0
  %v294 = vsel %vm262, %v225, 0
  %v297 = vsel %vm262, %v226, 0
  %v300 = vsel %vm262, %v227, 0
  %v303 = vsel %vm262, %v228, 0
  %v306 = vsel %vm262, %v229, 0
  %v309 = vsel %vm262, %v230, 0
  %v312 = vsel %vm262, %v231, 0
  %v315 = vsel %vm262, %v232, 0
  %v318 = vsel %vm262, %v233, 0
  %v321 = vsel %vm262, %v234, 0
  %v324 = vsel %vm262, %v235, 0
  %v327 = vsel %vm262, %v236, 0
  %v330 = vsel %vm262, %v237, 0
  %v333 = vsel %vm262, %v238, 0
  %v336 = vsel %vm262, %v239, 0
  %v339 = vsel %vm262, %v240, 0
  %v342 = vsel %vm262, %v241, 0
  %v345 = vsel %vm262, %v242, 0
  %v348 = vsel %vm262, %v243, 0
  %v351 = vsel %vm262, %v244, 0
  %v354 = vsel %vm262, %v245, 0
  %v357 = vsel %vm262, %v246, 0
  %vm359 = vcmask 1041408
  %v361 = vsel %vm359, %v259, 0
  %363 = vmatpush.bf16.msra.mxu0 0
  %364 = vmatpush.bf16.msra.mxu0 0
  %365 = vmatpush.bf16.msra.mxu0 0
  %366 = vmatpush.bf16.msra.mxu0 0
  %367 = vmatpush.bf16.msra.mxu0 0
  %368 = vmatpush.bf16.msra.mxu0 %v361
  %369 = vmatpush.bf16.msra.mxu0 %v258
  %370 = vmatpush.bf16.msra.mxu0 %v257
  %371 = vmatmul.bf16.gmra.mxu0 %v264
  %v372 = vpop.f32.mrf.mxu0
  %v373 = vadd.f32 0.0, %v372
  %v374 = vpop.f32.mrf.mxu0
  %v375 = vadd.f32 0.0, %v374
  %376 = vmatmul.bf16.gmra.mxu0 %v267
  %v377 = vpop.f32.mrf.mxu0
  %v378 = vadd.f32 0.0, %v377
  %v379 = vpop.f32.mrf.mxu0
  %v380 = vadd.f32 0.0, %v379
  %381 = vmatmul.bf16.gmra.mxu0 %v270
  %v382 = vpop.f32.mrf.mxu0
  %v383 = vadd.f32 0.0, %v382
  %v384 = vpop.f32.mrf.mxu0
  %v385 = vadd.f32 0.0, %v384
  %386 = vmatmul.bf16.gmra.mxu0 %v273
  %v387 = vpop.f32.mrf.mxu0
  %v388 = vadd.f32 0.0, %v387
  %v389 = vpop.f32.mrf.mxu0
  %v390 = vadd.f32 0.0, %v389
  %391 = vmatmul.bf16.gmra.mxu0 %v276
  %v392 = vpop.f32.mrf.mxu0
  %v393 = vadd.f32 0.0, %v392
  %v394 = vpop.f32.mrf.mxu0
  %v395 = vadd.f32 0.0, %v394
  %396 = vmatmul.bf16.gmra.mxu0 %v279
  %v397 = vpop.f32.mrf.mxu0
  %v398 = vadd.f32 0.0, %v397
  %v399 = vpop.f32.mrf.mxu0
  %v400 = vadd.f32 0.0, %v399
  %401 = vmatmul.bf16.gmra.mxu0 %v282
  %v402 = vpop.f32.mrf.mxu0
  %v403 = vadd.f32 0.0, %v402
  %v404 = vpop.f32.mrf.mxu0
  %v405 = vadd.f32 0.0, %v404
  %406 = vmatmul.bf16.gmra.mxu0 %v285
  %v407 = vpop.f32.mrf.mxu0
  %v408 = vadd.f32 0.0, %v407
  %v409 = vpop.f32.mrf.mxu0
  %v410 = vadd.f32 0.0, %v409
  %411 = vmatmul.bf16.gmra.mxu0 %v288
  %v412 = vpop.f32.mrf.mxu0
  %v413 = vadd.f32 0.0, %v412
  %v414 = vpop.f32.mrf.mxu0
  %v415 = vadd.f32 0.0, %v414
  %416 = vmatmul.bf16.gmra.mxu0 %v291
  %v417 = vpop.f32.mrf.mxu0
  %v418 = vadd.f32 0.0, %v417
  %v419 = vpop.f32.mrf.mxu0
  %v420 = vadd.f32 0.0, %v419
  %421 = vmatmul.bf16.gmra.mxu0 %v294
  %v422 = vpop.f32.mrf.mxu0
  %v423 = vadd.f32 0.0, %v422
  %v424 = vpop.f32.mrf.mxu0
  %v425 = vadd.f32 0.0, %v424
  %426 = vmatmul.bf16.gmra.mxu0 %v297
  %v427 = vpop.f32.mrf.mxu0
  %v428 = vadd.f32 0.0, %v427
  %v429 = vpop.f32.mrf.mxu0
  %v430 = vadd.f32 0.0, %v429
  %431 = vmatmul.bf16.gmra.mxu0 %v300
  %v432 = vpop.f32.mrf.mxu0
  %v433 = vadd.f32 0.0, %v432
  %v434 = vpop.f32.mrf.mxu0
  %v435 = vadd.f32 0.0, %v434
  %436 = vmatmul.bf16.gmra.mxu0 %v303
  %v437 = vpop.f32.mrf.mxu0
  %v438 = vadd.f32 0.0, %v437
  %v439 = vpop.f32.mrf.mxu0
  %v440 = vadd.f32 0.0, %v439
  %441 = vmatmul.bf16.gmra.mxu0 %v306
  %v442 = vpop.f32.mrf.mxu0
  %v443 = vadd.f32 0.0, %v442
  %v444 = vpop.f32.mrf.mxu0
  %v445 = vadd.f32 0.0, %v444
  %446 = vmatmul.bf16.gmra.mxu0 %v309
  %v447 = vpop.f32.mrf.mxu0
  %v448 = vadd.f32 0.0, %v447
  %v449 = vpop.f32.mrf.mxu0
  %v450 = vadd.f32 0.0, %v449
  %451 = vmatmul.bf16.gmra.mxu0 %v312
  %v452 = vpop.f32.mrf.mxu0
  %v453 = vadd.f32 0.0, %v452
  %v454 = vpop.f32.mrf.mxu0
  %v455 = vadd.f32 0.0, %v454
  %456 = vmatmul.bf16.gmra.mxu0 %v315
  %v457 = vpop.f32.mrf.mxu0
  %v458 = vadd.f32 0.0, %v457
  %v459 = vpop.f32.mrf.mxu0
  %v460 = vadd.f32 0.0, %v459
  %461 = vmatmul.bf16.gmra.mxu0 %v318
  %v462 = vpop.f32.mrf.mxu0
  %v463 = vadd.f32 0.0, %v462
  %v464 = vpop.f32.mrf.mxu0
  %v465 = vadd.f32 0.0, %v464
  %466 = vmatmul.bf16.gmra.mxu0 %v321
  %v467 = vpop.f32.mrf.mxu0
  %v468 = vadd.f32 0.0, %v467
  %v469 = vpop.f32.mrf.mxu0
  %v470 = vadd.f32 0.0, %v469
  %471 = vmatmul.bf16.gmra.mxu0 %v324
  %v472 = vpop.f32.mrf.mxu0
  %v473 = vadd.f32 0.0, %v472
  %v474 = vpop.f32.mrf.mxu0
  %v475 = vadd.f32 0.0, %v474
  %476 = vmatmul.bf16.gmra.mxu0 %v327
  %v477 = vpop.f32.mrf.mxu0
  %v478 = vadd.f32 0.0, %v477
  %v479 = vpop.f32.mrf.mxu0
  %v480 = vadd.f32 0.0, %v479
  %481 = vmatmul.bf16.gmra.mxu0 %v330
  %v482 = vpop.f32.mrf.mxu0
  %v483 = vadd.f32 0.0, %v482
  %v484 = vpop.f32.mrf.mxu0
  %v485 = vadd.f32 0.0, %v484
  %486 = vmatmul.bf16.gmra.mxu0 %v333
  %v487 = vpop.f32.mrf.mxu0
  %v488 = vadd.f32 0.0, %v487
  %v489 = vpop.f32.mrf.mxu0
  %v490 = vadd.f32 0.0, %v489
  %491 = vmatmul.bf16.gmra.mxu0 %v336
  %v492 = vpop.f32.mrf.mxu0
  %v493 = vadd.f32 0.0, %v492
  %v494 = vpop.f32.mrf.mxu0
  %v495 = vadd.f32 0.0, %v494
  %496 = vmatmul.bf16.gmra.mxu0 %v339
  %v497 = vpop.f32.mrf.mxu0
  %v498 = vadd.f32 0.0, %v497
  %v499 = vpop.f32.mrf.mxu0
  %v500 = vadd.f32 0.0, %v499
  %501 = vmatmul.bf16.gmra.mxu0 %v342
  %v502 = vpop.f32.mrf.mxu0
  %v503 = vadd.f32 0.0, %v502
  %v504 = vpop.f32.mrf.mxu0
  %v505 = vadd.f32 0.0, %v504
  %506 = vmatmul.bf16.gmra.mxu0 %v345
  %v507 = vpop.f32.mrf.mxu0
  %v508 = vadd.f32 0.0, %v507
  %v509 = vpop.f32.mrf.mxu0
  %v510 = vadd.f32 0.0, %v509
  %511 = vmatmul.bf16.gmra.mxu0 %v348
  %v512 = vpop.f32.mrf.mxu0
  %v513 = vadd.f32 0.0, %v512
  %v514 = vpop.f32.mrf.mxu0
  %v515 = vadd.f32 0.0, %v514
  %516 = vmatmul.bf16.gmra.mxu0 %v351
  %v517 = vpop.f32.mrf.mxu0
  %v518 = vadd.f32 0.0, %v517
  %v519 = vpop.f32.mrf.mxu0
  %v520 = vadd.f32 0.0, %v519
  %521 = vmatmul.bf16.gmra.mxu0 %v354
  %v522 = vpop.f32.mrf.mxu0
  %v523 = vadd.f32 0.0, %v522
  %v524 = vpop.f32.mrf.mxu0
  %v525 = vadd.f32 0.0, %v524
  %526 = vmatmul.bf16.gmra.mxu0 %v357
  %v527 = vpop.f32.mrf.mxu0
  %v528 = vadd.f32 0.0, %v527
  %v529 = vpop.f32.mrf.mxu0
  %v530 = vadd.f32 0.0, %v529
  %531 = vdwg.mxu0
  %v532 = vld [vmem:[%s2] sm:$0x1]
  %v534 = vperm.slane %v532, 0
  %v536 = vmul.f32 %v373, %v534
  %v537 = vmul.f32 %v375, %v534
  %v538 = vmul.f32 %v378, %v534
  %v539 = vmul.f32 %v380, %v534
  %v540 = vmul.f32 %v383, %v534
  %v541 = vmul.f32 %v385, %v534
  %v542 = vmul.f32 %v388, %v534
  %v543 = vmul.f32 %v390, %v534
  %v544 = vmul.f32 %v393, %v534
  %v545 = vmul.f32 %v395, %v534
  %v546 = vmul.f32 %v398, %v534
  %v547 = vmul.f32 %v400, %v534
  %v548 = vmul.f32 %v403, %v534
  %v549 = vmul.f32 %v405, %v534
  %v550 = vmul.f32 %v408, %v534
  %v551 = vmul.f32 %v410, %v534
  %v552 = vmul.f32 %v413, %v534
  %v553 = vmul.f32 %v415, %v534
  %v554 = vmul.f32 %v418, %v534
  %v555 = vmul.f32 %v420, %v534
  %v556 = vmul.f32 %v423, %v534
  %v557 = vmul.f32 %v425, %v534
  %v558 = vmul.f32 %v428, %v534
  %v559 = vmul.f32 %v430, %v534
  %v560 = vmul.f32 %v433, %v534
  %v561 = vmul.f32 %v435, %v534
  %v562 = vmul.f32 %v438, %v534
  %v563 = vmul.f32 %v440, %v534
  %v564 = vmul.f32 %v443, %v534
  %v565 = vmul.f32 %v445, %v534
  %v566 = vmul.f32 %v448, %v534
  %v567 = vmul.f32 %v450, %v534
  %v568 = vmul.f32 %v453, %v534
  %v569 = vmul.f32 %v455, %v534
  %v570 = vmul.f32 %v458, %v534
  %v571 = vmul.f32 %v460, %v534
  %v572 = vmul.f32 %v463, %v534
  %v573 = vmul.f32 %v465, %v534
  %v574 = vmul.f32 %v468, %v534
  %v575 = vmul.f32 %v470, %v534
  %v576 = vmul.f32 %v473, %v534
  %v577 = vmul.f32 %v475, %v534
  %v578 = vmul.f32 %v478, %v534
  %v579 = vmul.f32 %v480, %v534
  %v580 = vmul.f32 %v483, %v534
  %v581 = vmul.f32 %v485, %v534
  %v582 = vmul.f32 %v488, %v534
  %v583 = vmul.f32 %v490, %v534
  %v584 = vmul.f32 %v493, %v534
  %v585 = vmul.f32 %v495, %v534
  %v586 = vmul.f32 %v498, %v534
  %v587 = vmul.f32 %v500, %v534
  %v588 = vmul.f32 %v503, %v534
  %v589 = vmul.f32 %v505, %v534
  %v590 = vmul.f32 %v508, %v534
  %v591 = vmul.f32 %v510, %v534
  %v592 = vmul.f32 %v513, %v534
  %v593 = vmul.f32 %v515, %v534
  %v594 = vmul.f32 %v518, %v534
  %v595 = vmul.f32 %v520, %v534
  %v596 = vmul.f32 %v523, %v534
  %v597 = vmul.f32 %v525, %v534
  %v598 = vmul.f32 %v528, %v534
  %v599 = vmul.f32 %v530, %v534
  %v600 = vld [vmem:[%s3] sm:$0x1]
  %v602 = vperm.slane %v600, 0
  %v604 = vadd.f32 %v536, %v602
  %v605 = vadd.f32 %v537, %v602
  %v606 = vadd.f32 %v538, %v602
  %v607 = vadd.f32 %v539, %v602
  %v608 = vadd.f32 %v540, %v602
  %v609 = vadd.f32 %v541, %v602
  %v610 = vadd.f32 %v542, %v602
  %v611 = vadd.f32 %v543, %v602
  %v612 = vadd.f32 %v544, %v602
  %v613 = vadd.f32 %v545, %v602
  %v614 = vadd.f32 %v546, %v602
  %v615 = vadd.f32 %v547, %v602
  %v616 = vadd.f32 %v548, %v602
  %v617 = vadd.f32 %v549, %v602
  %v618 = vadd.f32 %v550, %v602
  %v619 = vadd.f32 %v551, %v602
  %v620 = vadd.f32 %v552, %v602
  %v621 = vadd.f32 %v553, %v602
  %v622 = vadd.f32 %v554, %v602
  %v623 = vadd.f32 %v555, %v602
  %v624 = vadd.f32 %v556, %v602
  %v625 = vadd.f32 %v557, %v602
  %v626 = vadd.f32 %v558, %v602
  %v627 = vadd.f32 %v559, %v602
  %v628 = vadd.f32 %v560, %v602
  %v629 = vadd.f32 %v561, %v602
  %v630 = vadd.f32 %v562, %v602
  %v631 = vadd.f32 %v563, %v602
  %v632 = vadd.f32 %v564, %v602
  %v633 = vadd.f32 %v565, %v602
  %v634 = vadd.f32 %v566, %v602
  %v635 = vadd.f32 %v567, %v602
  %v636 = vadd.f32 %v568, %v602
  %v637 = vadd.f32 %v569, %v602
  %v638 = vadd.f32 %v570, %v602
  %v639 = vadd.f32 %v571, %v602
  %v640 = vadd.f32 %v572, %v602
  %v641 = vadd.f32 %v573, %v602
  %v642 = vadd.f32 %v574, %v602
  %v643 = vadd.f32 %v575, %v602
  %v644 = vadd.f32 %v576, %v602
  %v645 = vadd.f32 %v577, %v602
  %v646 = vadd.f32 %v578, %v602
  %v647 = vadd.f32 %v579, %v602
  %v648 = vadd.f32 %v580, %v602
  %v649 = vadd.f32 %v581, %v602
  %v650 = vadd.f32 %v582, %v602
  %v651 = vadd.f32 %v583, %v602
  %v652 = vadd.f32 %v584, %v602
  %v653 = vadd.f32 %v585, %v602
  %v654 = vadd.f32 %v586, %v602
  %v655 = vadd.f32 %v587, %v602
  %v656 = vadd.f32 %v588, %v602
  %v657 = vadd.f32 %v589, %v602
  %v658 = vadd.f32 %v590, %v602
  %v659 = vadd.f32 %v591, %v602
  %v660 = vadd.f32 %v592, %v602
  %v661 = vadd.f32 %v593, %v602
  %v662 = vadd.f32 %v594, %v602
  %v663 = vadd.f32 %v595, %v602
  %v664 = vadd.f32 %v596, %v602
  %v665 = vadd.f32 %v597, %v602
  %v666 = vadd.f32 %v598, %v602
  %v667 = vadd.f32 %v599, %v602
  %v668 = vmax.f32 %v604, 0.0
  %v669 = vmax.f32 %v605, 0.0
  %v670 = vmax.f32 %v606, 0.0
  %v671 = vmax.f32 %v607, 0.0
  %v672 = vmax.f32 %v608, 0.0
  %v673 = vmax.f32 %v609, 0.0
  %v674 = vmax.f32 %v610, 0.0
  %v675 = vmax.f32 %v611, 0.0
  %v676 = vmax.f32 %v612, 0.0
  %v677 = vmax.f32 %v613, 0.0
  %v678 = vmax.f32 %v614, 0.0
  %v679 = vmax.f32 %v615, 0.0
  %v680 = vmax.f32 %v616, 0.0
  %v681 = vmax.f32 %v617, 0.0
  %v682 = vmax.f32 %v618, 0.0
  %v683 = vmax.f32 %v619, 0.0
  %v684 = vmax.f32 %v620, 0.0
  %v685 = vmax.f32 %v621, 0.0
  %v686 = vmax.f32 %v622, 0.0
  %v687 = vmax.f32 %v623, 0.0
  %v688 = vmax.f32 %v624, 0.0
  %v689 = vmax.f32 %v625, 0.0
  %v690 = vmax.f32 %v626, 0.0
  %v691 = vmax.f32 %v627, 0.0
  %v692 = vmax.f32 %v628, 0.0
  %v693 = vmax.f32 %v629, 0.0
  %v694 = vmax.f32 %v630, 0.0
  %v695 = vmax.f32 %v631, 0.0
  %v696 = vmax.f32 %v632, 0.0
  %v697 = vmax.f32 %v633, 0.0
  %v698 = vmax.f32 %v634, 0.0
  %v699 = vmax.f32 %v635, 0.0
  %v700 = vmax.f32 %v636, 0.0
  %v701 = vmax.f32 %v637, 0.0
  %v702 = vmax.f32 %v638, 0.0
  %v703 = vmax.f32 %v639, 0.0
  %v704 = vmax.f32 %v640, 0.0
  %v705 = vmax.f32 %v641, 0.0
  %v706 = vmax.f32 %v642, 0.0
  %v707 = vmax.f32 %v643, 0.0
  %v708 = vmax.f32 %v644, 0.0
  %v709 = vmax.f32 %v645, 0.0
  %v710 = vmax.f32 %v646, 0.0
  %v711 = vmax.f32 %v647, 0.0
  %v712 = vmax.f32 %v648, 0.0
  %v713 = vmax.f32 %v649, 0.0
  %v714 = vmax.f32 %v650, 0.0
  %v715 = vmax.f32 %v651, 0.0
  %v716 = vmax.f32 %v652, 0.0
  %v717 = vmax.f32 %v653, 0.0
  %v718 = vmax.f32 %v654, 0.0
  %v719 = vmax.f32 %v655, 0.0
  %v720 = vmax.f32 %v656, 0.0
  %v721 = vmax.f32 %v657, 0.0
  %v722 = vmax.f32 %v658, 0.0
  %v723 = vmax.f32 %v659, 0.0
  %v724 = vmax.f32 %v660, 0.0
  %v725 = vmax.f32 %v661, 0.0
  %v726 = vmax.f32 %v662, 0.0
  %v727 = vmax.f32 %v663, 0.0
  %v728 = vmax.f32 %v664, 0.0
  %v729 = vmax.f32 %v665, 0.0
  %v730 = vmax.f32 %v666, 0.0
  %v731 = vmax.f32 %v667, 0.0
  %v732 = vpack.c.bf16 %v668, %v668
  %v733 = vpack.c.bf16 %v669, %v669
  %v734 = vpack.c.bf16 %v670, %v670
  %v735 = vpack.c.bf16 %v671, %v671
  %v736 = vpack.c.bf16 %v672, %v672
  %v737 = vpack.c.bf16 %v673, %v673
  %v738 = vpack.c.bf16 %v674, %v674
  %v739 = vpack.c.bf16 %v675, %v675
  %v740 = vpack.c.bf16 %v676, %v676
  %v741 = vpack.c.bf16 %v677, %v677
  %v742 = vpack.c.bf16 %v678, %v678
  %v743 = vpack.c.bf16 %v679, %v679
  %v744 = vpack.c.bf16 %v680, %v680
  %v745 = vpack.c.bf16 %v681, %v681
  %v746 = vpack.c.bf16 %v682, %v682
  %v747 = vpack.c.bf16 %v683, %v683
  %v748 = vpack.c.bf16 %v684, %v684
  %v749 = vpack.c.bf16 %v685, %v685
  %v750 = vpack.c.bf16 %v686, %v686
  %v751 = vpack.c.bf16 %v687, %v687
  %v752 = vpack.c.bf16 %v688, %v688
  %v753 = vpack.c.bf16 %v689, %v689
  %v754 = vpack.c.bf16 %v690, %v690
  %v755 = vpack.c.bf16 %v691, %v691
  %v756 = vpack.c.bf16 %v692, %v692
  %v757 = vpack.c.bf16 %v693, %v693
  %v758 = vpack.c.bf16 %v694, %v694
  %v759 = vpack.c.bf16 %v695, %v695
  %v760 = vpack.c.bf16 %v696, %v696
  %v761 = vpack.c.bf16 %v697, %v697
  %v762 = vpack.c.bf16 %v698, %v698
  %v763 = vpack.c.bf16 %v699, %v699
  %v764 = vpack.c.bf16 %v700, %v700
  %v765 = vpack.c.bf16 %v701, %v701
  %v766 = vpack.c.bf16 %v702, %v702
  %v767 = vpack.c.bf16 %v703, %v703
  %v768 = vpack.c.bf16 %v704, %v704
  %v769 = vpack.c.bf16 %v705, %v705
  %v770 = vpack.c.bf16 %v706, %v706
  %v771 = vpack.c.bf16 %v707, %v707
  %v772 = vpack.c.bf16 %v708, %v708
  %v773 = vpack.c.bf16 %v709, %v709
  %v774 = vpack.c.bf16 %v710, %v710
  %v775 = vpack.c.bf16 %v711, %v711
  %v776 = vpack.c.bf16 %v712, %v712
  %v777 = vpack.c.bf16 %v713, %v713
  %v778 = vpack.c.bf16 %v714, %v714
  %v779 = vpack.c.bf16 %v715, %v715
  %v780 = vpack.c.bf16 %v716, %v716
  %v781 = vpack.c.bf16 %v717, %v717
  %v782 = vpack.c.bf16 %v718, %v718
  %v783 = vpack.c.bf16 %v719, %v719
  %v784 = vpack.c.bf16 %v720, %v720
  %v785 = vpack.c.bf16 %v721, %v721
  %v786 = vpack.c.bf16 %v722, %v722
  %v787 = vpack.c.bf16 %v723, %v723
  %v788 = vpack.c.bf16 %v724, %v724
  %v789 = vpack.c.bf16 %v725, %v725
  %v790 = vpack.c.bf16 %v726, %v726
  %v791 = vpack.c.bf16 %v727, %v727
  %v792 = vpack.c.bf16 %v728, %v728
  %v793 = vpack.c.bf16 %v729, %v729
  %v794 = vpack.c.bf16 %v730, %v730
  %v795 = vpack.c.bf16 %v731, %v731
  %vm796 = vcmask 60416
  %797 = vst.msk [vmem:[%s4] sm:$0xf] %vm796, %v732
  %798 = vst.msk [vmem:[%s4 + $0x4] sm:$0xf] %vm796, %v733
  %799 = vst.msk [vmem:[%s4 + $0x8] sm:$0xf] %vm796, %v734
  %800 = vst.msk [vmem:[%s4 + $0xc] sm:$0xf] %vm796, %v735
  %801 = vst.msk [vmem:[%s4 + $0x10] sm:$0xf] %vm796, %v736
  %802 = vst.msk [vmem:[%s4 + $0x14] sm:$0xf] %vm796, %v737
  %803 = vst.msk [vmem:[%s4 + $0x18] sm:$0xf] %vm796, %v738
  %804 = vst.msk [vmem:[%s4 + $0x1c] sm:$0xf] %vm796, %v739
  %805 = vst.msk [vmem:[%s4 + $0x20] sm:$0xf] %vm796, %v740
  %806 = vst.msk [vmem:[%s4 + $0x24] sm:$0xf] %vm796, %v741
  %807 = vst.msk [vmem:[%s4 + $0x28] sm:$0xf] %vm796, %v742
  %808 = vst.msk [vmem:[%s4 + $0x2c] sm:$0xf] %vm796, %v743
  %809 = vst.msk [vmem:[%s4 + $0x30] sm:$0xf] %vm796, %v744
  %810 = vst.msk [vmem:[%s4 + $0x34] sm:$0xf] %vm796, %v745
  %811 = vst.msk [vmem:[%s4 + $0x38] sm:$0xf] %vm796, %v746
  %812 = vst.msk [vmem:[%s4 + $0x3c] sm:$0xf] %vm796, %v747
  %813 = vst.msk [vmem:[%s4 + $0x40] sm:$0xf] %vm796, %v748
  %814 = vst.msk [vmem:[%s4 + $0x44] sm:$0xf] %vm796, %v749
  %815 = vst.msk [vmem:[%s4 + $0x48] sm:$0xf] %vm796, %v750
  %816 = vst.msk [vmem:[%s4 + $0x4c] sm:$0xf] %vm796, %v751
  %817 = vst.msk [vmem:[%s4 + $0x50] sm:$0xf] %vm796, %v752
  %818 = vst.msk [vmem:[%s4 + $0x54] sm:$0xf] %vm796, %v753
  %819 = vst.msk [vmem:[%s4 + $0x58] sm:$0xf] %vm796, %v754
  %820 = vst.msk [vmem:[%s4 + $0x5c] sm:$0xf] %vm796, %v755
  %821 = vst.msk [vmem:[%s4 + $0x60] sm:$0xf] %vm796, %v756
  %822 = vst.msk [vmem:[%s4 + $0x64] sm:$0xf] %vm796, %v757
  %823 = vst.msk [vmem:[%s4 + $0x68] sm:$0xf] %vm796, %v758
  %824 = vst.msk [vmem:[%s4 + $0x6c] sm:$0xf] %vm796, %v759
  %825 = vst.msk [vmem:[%s4 + $0x70] sm:$0xf] %vm796, %v760
  %826 = vst.msk [vmem:[%s4 + $0x74] sm:$0xf] %vm796, %v761
  %827 = vst.msk [vmem:[%s4 + $0x78] sm:$0xf] %vm796, %v762
  %828 = vst.msk [vmem:[%s4 + $0x7c] sm:$0xf] %vm796, %v763
  %829 = vst.msk [vmem:[%s4 + $0x80] sm:$0xf] %vm796, %v764
  %830 = vst.msk [vmem:[%s4 + $0x84] sm:$0xf] %vm796, %v765
  %831 = vst.msk [vmem:[%s4 + $0x88] sm:$0xf] %vm796, %v766
  %832 = vst.msk [vmem:[%s4 + $0x8c] sm:$0xf] %vm796, %v767
  %833 = vst.msk [vmem:[%s4 + $0x90] sm:$0xf] %vm796, %v768
  %834 = vst.msk [vmem:[%s4 + $0x94] sm:$0xf] %vm796, %v769
  %835 = vst.msk [vmem:[%s4 + $0x98] sm:$0xf] %vm796, %v770
  %836 = vst.msk [vmem:[%s4 + $0x9c] sm:$0xf] %vm796, %v771
  %837 = vst.msk [vmem:[%s4 + $0xa0] sm:$0xf] %vm796, %v772
  %838 = vst.msk [vmem:[%s4 + $0xa4] sm:$0xf] %vm796, %v773
  %839 = vst.msk [vmem:[%s4 + $0xa8] sm:$0xf] %vm796, %v774
  %840 = vst.msk [vmem:[%s4 + $0xac] sm:$0xf] %vm796, %v775
  %841 = vst.msk [vmem:[%s4 + $0xb0] sm:$0xf] %vm796, %v776
  %842 = vst.msk [vmem:[%s4 + $0xb4] sm:$0xf] %vm796, %v777
  %843 = vst.msk [vmem:[%s4 + $0xb8] sm:$0xf] %vm796, %v778
  %844 = vst.msk [vmem:[%s4 + $0xbc] sm:$0xf] %vm796, %v779
  %845 = vst.msk [vmem:[%s4 + $0xc0] sm:$0xf] %vm796, %v780
  %846 = vst.msk [vmem:[%s4 + $0xc4] sm:$0xf] %vm796, %v781
  %847 = vst.msk [vmem:[%s4 + $0xc8] sm:$0xf] %vm796, %v782
  %848 = vst.msk [vmem:[%s4 + $0xcc] sm:$0xf] %vm796, %v783
  %849 = vst.msk [vmem:[%s4 + $0xd0] sm:$0xf] %vm796, %v784
  %850 = vst.msk [vmem:[%s4 + $0xd4] sm:$0xf] %vm796, %v785
  %851 = vst.msk [vmem:[%s4 + $0xd8] sm:$0xf] %vm796, %v786
  %852 = vst.msk [vmem:[%s4 + $0xdc] sm:$0xf] %vm796, %v787
  %853 = vst.msk [vmem:[%s4 + $0xe0] sm:$0xf] %vm796, %v788
  %854 = vst.msk [vmem:[%s4 + $0xe4] sm:$0xf] %vm796, %v789
  %855 = vst.msk [vmem:[%s4 + $0xe8] sm:$0xf] %vm796, %v790
  %856 = vst.msk [vmem:[%s4 + $0xec] sm:$0xf] %vm796, %v791
  %857 = vst.msk [vmem:[%s4 + $0xf0] sm:$0xf] %vm796, %v792
  %858 = vst.msk [vmem:[%s4 + $0xf4] sm:$0xf] %vm796, %v793
  %859 = vst.msk [vmem:[%s4 + $0xf8] sm:$0xf] %vm796, %v794
  %860 = vst.msk [vmem:[%s4 + $0xfc] sm:$0xf] %vm796, %v795
  // Predicated region
  $region18: #{_lambda_.14} parent=0 // pred_check
    _
  $region19: #{_lambda_.14} parent=0 // pred_check_branch
    %862 = sbr.rel (0) target = $region21
  $region20: #{_lambda_.14} parent=0 // pred_region
    _
  $region21: #{_lambda_.14} parent=0 // pred_fallthru
    _
  // Predicated region
  $region22: #{_lambda_.14} parent=0 // pred_check
    _
  $region23: #{_lambda_.14} parent=0 // pred_check_branch
    %864 = sbr.rel (0) target = $region25
  $region24: #{_lambda_.14} parent=0 // pred_region
    _
  $region25: #{_lambda_.14} parent=0 // pred_fallthru
    _

// kernel: _lambda_.15
$region0: #{_lambda_.15}
  #allocation0 [shape = 'u32[]', space=smem, size = 0x4, offset = 0x4, fixed_abs, tag = 'smem constant byte address 0x4 - core index']
  #allocation1 [shape = 'u32[72,128]{1,0:T(1,128)}', space=vmem, size = 0x9000, scoped, tag = 'internal scratch']
  %s0 = inlined_call_operand.vmem [shape: bf16[64,32], index: 0, kind: input, shape index: {}]
  %s1 = inlined_call_operand.vmem [shape: bf16[32,128], index: 1, kind: input, shape index: {}]
  %s2 = inlined_call_operand.vmem [shape: f32[1,128], index: 2, kind: input, shape index: {}]
  %s3 = inlined_call_operand.vmem [shape: f32[1,128], index: 3, kind: input, shape index: {}]
  %s4 = inlined_call_operand.vmem [shape: bf16[64,128], index: 4, kind: output, shape index: {}]
  %s5 = sld [smem:[#allocation0]]
  $region26: #{_lambda_.15} parent=0
    _
  %s7 = ssub.s32 1, %s5
  %s8 = scalar_select 0, %s7, %s5
  // Predicated region
  $region2: #{_lambda_.15} parent=0 // pred_check
    _
  $region3: #{_lambda_.15} parent=0 // pred_check_branch
    %10 = sbr.rel (0) target = $region5
  $region4: #{_lambda_.15} parent=0 // pred_region
    _
  $region5: #{_lambda_.15} parent=0 // pred_fallthru
    _
  // Predicated region
  $region6: #{_lambda_.15} parent=0 // pred_check
    _
  $region7: #{_lambda_.15} parent=0 // pred_check_branch
    %12 = sbr.rel (0) target = $region9
  $region8: #{_lambda_.15} parent=0 // pred_region
    _
  $region9: #{_lambda_.15} parent=0 // pred_fallthru
    _
  // Predicated region
  $region10: #{_lambda_.15} parent=0 // pred_check
    _
  $region11: #{_lambda_.15} parent=0 // pred_check_branch
    %14 = sbr.rel (0) target = $region13
  $region12: #{_lambda_.15} parent=0 // pred_region
    _
  $region13: #{_lambda_.15} parent=0 // pred_fallthru
    _
  // Predicated region
  $region14: #{_lambda_.15} parent=0 // pred_check
    _
  $region15: #{_lambda_.15} parent=0 // pred_check_branch
    %16 = sbr.rel (0) target = $region17
  $region16: #{_lambda_.15} parent=0 // pred_region
    _
  $region17: #{_lambda_.15} parent=0 // pred_fallthru
    _
  %v18 = vld [vmem:[%s0] sm:$0xf]
  %v19 = vld [vmem:[%s0 + $0x4] sm:$0xf]
  %v20 = vld [vmem:[%s0 + $0x8] sm:$0xf]
  %v21 = vld [vmem:[%s0 + $0xc] sm:$0xf]
  %v22 = vld [vmem:[%s0 + $0x10] sm:$0xf]
  %v23 = vld [vmem:[%s0 + $0x14] sm:$0xf]
  %v24 = vld [vmem:[%s0 + $0x18] sm:$0xf]
  %v25 = vld [vmem:[%s0 + $0x1c] sm:$0xf]
  %v26 = vld [vmem:[%s1] sm:$0xf]
  %v27 = vld [vmem:[%s1 + $0x4] sm:$0xf]
  %v28 = vld [vmem:[%s1 + $0x8] sm:$0xf]
  %v29 = vld [vmem:[%s1 + $0xc] sm:$0xf]
  %v38 = vunpack.c.l.b16 %v18
  %v39 = vunpack.c.l.b16 %v19
  %v40 = vunpack.c.l.b16 %v20
  %v41 = vunpack.c.l.b16 %v21
  %v42 = vunpack.c.l.b16 %v22
  %v43 = vunpack.c.l.b16 %v23
  %v44 = vunpack.c.l.b16 %v24
  %v45 = vunpack.c.l.b16 %v25
  %v46 = vpack.c.b16 %v39, %v38
  %v47 = vpack.c.b16 %v41, %v40
  %v48 = vpack.c.b16 %v43, %v42
  %v49 = vpack.c.b16 %v45, %v44
  %v54 = vunpack.c.l.b16 %v26
  %v55 = vunpack.c.l.b16 %v27
  %v56 = vunpack.c.l.b16 %v28
  %v57 = vunpack.c.l.b16 %v29
  %v58 = vpack.c.b16 %v55, %v54
  %v59 = vpack.c.b16 %v57, %v56
  %vm62 = vcmask 261120
  %v64 = vsel %vm62, %v46, 0
  %v67 = vsel %vm62, %v47, 0
  %v70 = vsel %vm62, %v48, 0
  %v73 = vsel %vm62, %v49, 0
  %75 = vmatpush.bf16.msra.mxu0 0
  %76 = vmatpush.bf16.msra.mxu0 0
  %77 = vmatpush.bf16.msra.mxu0 0
  %78 = vmatpush.bf16.msra.mxu0 0
  %79 = vmatpush.bf16.msra.mxu0 0
  %80 = vmatpush.bf16.msra.mxu0 0
  %81 = vmatpush.bf16.msra.mxu0 %v59
  %82 = vmatpush.bf16.msra.mxu0 %v58
  %83 = vmatmul.bf16.gmra.mxu0 %v64
  %v84 = vpop.f32.mrf.mxu0
  %v85 = vadd.f32 0.0, %v84
  %v86 = vpop.f32.mrf.mxu0
  %v87 = vadd.f32 0.0, %v86
  %88 = vmatmul.bf16.gmra.mxu0 %v67
  %v89 = vpop.f32.mrf.mxu0
  %v90 = vadd.f32 0.0, %v89
  %v91 = vpop.f32.mrf.mxu0
  %v92 = vadd.f32 0.0, %v91
  %93 = vmatmul.bf16.gmra.mxu0 %v70
  %v94 = vpop.f32.mrf.mxu0
  %v95 = vadd.f32 0.0, %v94
  %v96 = vpop.f32.mrf.mxu0
  %v97 = vadd.f32 0.0, %v96
  %98 = vmatmul.bf16.gmra.mxu0 %v73
  %v99 = vpop.f32.mrf.mxu0
  %v100 = vadd.f32 0.0, %v99
  %v101 = vpop.f32.mrf.mxu0
  %v102 = vadd.f32 0.0, %v101
  %103 = vdwg.mxu0
  %v104 = vld [vmem:[%s2] sm:$0x1]
  %v106 = vperm.slane %v104, 0
  %v108 = vmul.f32 %v85, %v106
  %v109 = vmul.f32 %v87, %v106
  %v110 = vmul.f32 %v90, %v106
  %v111 = vmul.f32 %v92, %v106
  %v112 = vmul.f32 %v95, %v106
  %v113 = vmul.f32 %v97, %v106
  %v114 = vmul.f32 %v100, %v106
  %v115 = vmul.f32 %v102, %v106
  %v116 = vld [vmem:[%s3] sm:$0x1]
  %v118 = vperm.slane %v116, 0
  %v120 = vadd.f32 %v108, %v118
  %v121 = vadd.f32 %v109, %v118
  %v122 = vadd.f32 %v110, %v118
  %v123 = vadd.f32 %v111, %v118
  %v124 = vadd.f32 %v112, %v118
  %v125 = vadd.f32 %v113, %v118
  %v126 = vadd.f32 %v114, %v118
  %v127 = vadd.f32 %v115, %v118
  %v128 = vpack.c.bf16 %v120, %v120
  %v129 = vpack.c.bf16 %v121, %v121
  %v130 = vpack.c.bf16 %v122, %v122
  %v131 = vpack.c.bf16 %v123, %v123
  %v132 = vpack.c.bf16 %v124, %v124
  %v133 = vpack.c.bf16 %v125, %v125
  %v134 = vpack.c.bf16 %v126, %v126
  %v135 = vpack.c.bf16 %v127, %v127
  %136 = vst [vmem:[%s4] sm:$0xf] %v128
  %137 = vst [vmem:[%s4 + $0x4] sm:$0xf] %v129
  %138 = vst [vmem:[%s4 + $0x8] sm:$0xf] %v130
  %139 = vst [vmem:[%s4 + $0xc] sm:$0xf] %v131
  %140 = vst [vmem:[%s4 + $0x10] sm:$0xf] %v132
  %141 = vst [vmem:[%s4 + $0x14] sm:$0xf] %v133
  %142 = vst [vmem:[%s4 + $0x18] sm:$0xf] %v134
  %143 = vst [vmem:[%s4 + $0x1c] sm:$0xf] %v135
  // Predicated region
  $region18: #{_lambda_.15} parent=0 // pred_check
    _
  $region19: #{_lambda_.15} parent=0 // pred_check_branch
    %145 = sbr.rel (0) target = $region21
  $region20: #{_lambda_.15} parent=0 // pred_region
    _
  $region21: #{_lambda_.15} parent=0 // pred_fallthru
    _
  // Predicated region
  $region22: #{_lambda_.15} parent=0 // pred_check
    _
  $region23: #{_lambda_.15} parent=0 // pred_check_branch
    %147 = sbr.rel (0) target = $region25
  $region24: #{_lambda_.15} parent=0 // pred_region
    _
  $region25: #{_lambda_.15} parent=0 // pred_fallthru
    _

// kernel: _lambda_.16
$region0: #{_lambda_.16}
  #allocation0 [shape = 'u32[]', space=smem, size = 0x4, offset = 0x4, fixed_abs, tag = 'smem constant byte address 0x4 - core index']
  #allocation1 [shape = 'u32[72,128]{1,0:T(1,128)}', space=vmem, size = 0x9000, scoped, tag = 'internal scratch']
  %s0 = inlined_call_operand.vmem [shape: bf16[64,64], index: 0, kind: input, shape index: {}]
  %s1 = inlined_call_operand.vmem [shape: bf16[64,512], index: 1, kind: input, shape index: {}]
  %s2 = inlined_call_operand.vmem [shape: f32[1,512], index: 2, kind: input, shape index: {}]
  %s3 = inlined_call_operand.vmem [shape: f32[1,512], index: 3, kind: input, shape index: {}]
  %s4 = inlined_call_operand.vmem [shape: f32[64,512], index: 4, kind: output, shape index: {}]
  %s5 = sld [smem:[#allocation0]]
  $region26: #{_lambda_.16} parent=0
    _
  %s7 = ssub.s32 1, %s5
  %s8 = scalar_select 0, %s7, %s5
  // Predicated region
  $region2: #{_lambda_.16} parent=0 // pred_check
    _
  $region3: #{_lambda_.16} parent=0 // pred_check_branch
    %10 = sbr.rel (0) target = $region5
  $region4: #{_lambda_.16} parent=0 // pred_region
    _
  $region5: #{_lambda_.16} parent=0 // pred_fallthru
    _
  // Predicated region
  $region6: #{_lambda_.16} parent=0 // pred_check
    _
  $region7: #{_lambda_.16} parent=0 // pred_check_branch
    %12 = sbr.rel (0) target = $region9
  $region8: #{_lambda_.16} parent=0 // pred_region
    _
  $region9: #{_lambda_.16} parent=0 // pred_fallthru
    _
  // Predicated region
  $region10: #{_lambda_.16} parent=0 // pred_check
    _
  $region11: #{_lambda_.16} parent=0 // pred_check_branch
    %14 = sbr.rel (0) target = $region13
  $region12: #{_lambda_.16} parent=0 // pred_region
    _
  $region13: #{_lambda_.16} parent=0 // pred_fallthru
    _
  // Predicated region
  $region14: #{_lambda_.16} parent=0 // pred_check
    _
  $region15: #{_lambda_.16} parent=0 // pred_check_branch
    %16 = sbr.rel (0) target = $region17
  $region16: #{_lambda_.16} parent=0 // pred_region
    _
  $region17: #{_lambda_.16} parent=0 // pred_fallthru
    _
  %v18 = vld [vmem:[%s0] sm:$0xf]
  %v19 = vld [vmem:[%s0 + $0x4] sm:$0xf]
  %v20 = vld [vmem:[%s0 + $0x8] sm:$0xf]
  %v21 = vld [vmem:[%s0 + $0xc] sm:$0xf]
  %v22 = vld [vmem:[%s0 + $0x10] sm:$0xf]
  %v23 = vld [vmem:[%s0 + $0x14] sm:$0xf]
  %v24 = vld [vmem:[%s0 + $0x18] sm:$0xf]
  %v25 = vld [vmem:[%s0 + $0x1c] sm:$0xf]
  %v26 = vld [vmem:[%s1] sm:$0xff]
  %v27 = vld [vmem:[%s1 + $0x8] sm:$0xff]
  %v28 = vld [vmem:[%s1 + $0x10] sm:$0xff]
  %v29 = vld [vmem:[%s1 + $0x18] sm:$0xff]
  %v30 = vld [vmem:[%s1 + $0x20] sm:$0xff]
  %v31 = vld [vmem:[%s1 + $0x28] sm:$0xff]
  %v32 = vld [vmem:[%s1 + $0x30] sm:$0xff]
  %v33 = vld [vmem:[%s1 + $0x38] sm:$0xff]
  %v34 = vld [vmem:[%s1 + $0x40] sm:$0xff]
  %v35 = vld [vmem:[%s1 + $0x48] sm:$0xff]
  %v36 = vld [vmem:[%s1 + $0x50] sm:$0xff]
  %v37 = vld [vmem:[%s1 + $0x58] sm:$0xff]
  %v38 = vld [vmem:[%s1 + $0x60] sm:$0xff]
  %v39 = vld [vmem:[%s1 + $0x68] sm:$0xff]
  %v40 = vld [vmem:[%s1 + $0x70] sm:$0xff]
  %v41 = vld [vmem:[%s1 + $0x78] sm:$0xff]
  %v50 = vunpack.c.l.b16 %v18
  %v51 = vunpack.c.l.b16 %v19
  %v52 = vunpack.c.l.b16 %v20
  %v53 = vunpack.c.l.b16 %v21
  %v54 = vunpack.c.l.b16 %v22
  %v55 = vunpack.c.l.b16 %v23
  %v56 = vunpack.c.l.b16 %v24
  %v57 = vunpack.c.l.b16 %v25
  %v58 = vpack.c.b16 %v51, %v50
  %v59 = vpack.c.b16 %v53, %v52
  %v60 = vpack.c.b16 %v55, %v54
  %v61 = vpack.c.b16 %v57, %v56
  %v78 = vunpack.c.l.b16 %v26
  %v79 = vunpack.c.h.b16 %v26
  %v80 = vunpack.c.l.b16 %v27
  %v81 = vunpack.c.h.b16 %v27
  %v82 = vunpack.c.l.b16 %v28
  %v83 = vunpack.c.h.b16 %v28
  %v84 = vunpack.c.l.b16 %v29
  %v85 = vunpack.c.h.b16 %v29
  %v86 = vunpack.c.l.b16 %v30
  %v87 = vunpack.c.h.b16 %v30
  %v88 = vunpack.c.l.b16 %v31
  %v89 = vunpack.c.h.b16 %v31
  %v90 = vunpack.c.l.b16 %v32
  %v91 = vunpack.c.h.b16 %v32
  %v92 = vunpack.c.l.b16 %v33
  %v93 = vunpack.c.h.b16 %v33
  %v94 = vunpack.c.l.b16 %v34
  %v95 = vunpack.c.h.b16 %v34
  %v96 = vunpack.c.l.b16 %v35
  %v97 = vunpack.c.h.b16 %v35
  %v98 = vunpack.c.l.b16 %v36
  %v99 = vunpack.c.h.b16 %v36
  %v100 = vunpack.c.l.b16 %v37
  %v101 = vunpack.c.h.b16 %v37
  %v102 = vunpack.c.l.b16 %v38
  %v103 = vunpack.c.h.b16 %v38
  %v104 = vunpack.c.l.b16 %v39
  %v105 = vunpack.c.h.b16 %v39
  %v106 = vunpack.c.l.b16 %v40
  %v107 = vunpack.c.h.b16 %v40
  %v108 = vunpack.c.l.b16 %v41
  %v109 = vunpack.c.h.b16 %v41
  %v110 = vpack.c.b16 %v82, %v78
  %v111 = vpack.c.b16 %v83, %v79
  %v112 = vpack.c.b16 %v84, %v80
  %v113 = vpack.c.b16 %v85, %v81
  %v114 = vpack.c.b16 %v90, %v86
  %v115 = vpack.c.b16 %v91, %v87
  %v116 = vpack.c.b16 %v92, %v88
  %v117 = vpack.c.b16 %v93, %v89
  %v118 = vpack.c.b16 %v98, %v94
  %v119 = vpack.c.b16 %v99, %v95
  %v120 = vpack.c.b16 %v100, %v96
  %v121 = vpack.c.b16 %v101, %v97
  %v122 = vpack.c.b16 %v106, %v102
  %v123 = vpack.c.b16 %v107, %v103
  %v124 = vpack.c.b16 %v108, %v104
  %v125 = vpack.c.b16 %v109, %v105
  %vm142 = vcmask 523264
  %v144 = vsel %vm142, %v58, 0
  %v147 = vsel %vm142, %v59, 0
  %v150 = vsel %vm142, %v60, 0
  %v153 = vsel %vm142, %v61, 0
  %155 = vmatpush.bf16.msra.mxu0 0
  %156 = vmatpush.bf16.msra.mxu0 0
  %157 = vmatpush.bf16.msra.mxu0 0
  %158 = vmatpush.bf16.msra.mxu0 0
  %159 = vmatpush.bf16.msra.mxu0 %v122
  %160 = vmatpush.bf16.msra.mxu0 %v118
  %161 = vmatpush.bf16.msra.mxu0 %v114
  %162 = vmatpush.bf16.msra.mxu0 %v110
  %163 = vmatmul.bf16.gmra.mxu0 %v144
  %v164 = vpop.f32.mrf.mxu0
  %v165 = vadd.f32 0.0, %v164
  %v166 = vpop.f32.mrf.mxu0
  %v167 = vadd.f32 0.0, %v166
  %168 = vmatmul.bf16.gmra.mxu0 %v147
  %v169 = vpop.f32.mrf.mxu0
  %v170 = vadd.f32 0.0, %v169
  %v171 = vpop.f32.mrf.mxu0
  %v172 = vadd.f32 0.0, %v171
  %173 = vmatmul.bf16.gmra.mxu0 %v150
  %v174 = vpop.f32.mrf.mxu0
  %v175 = vadd.f32 0.0, %v174
  %v176 = vpop.f32.mrf.mxu0
  %v177 = vadd.f32 0.0, %v176
  %178 = vmatmul.bf16.gmra.mxu0 %v153
  %v179 = vpop.f32.mrf.mxu0
  %v180 = vadd.f32 0.0, %v179
  %v181 = vpop.f32.mrf.mxu0
  %v182 = vadd.f32 0.0, %v181
  %183 = vdwg.mxu0
  %184 = vmatpush.bf16.msra.mxu0 0
  %185 = vmatpush.bf16.msra.mxu0 0
  %186 = vmatpush.bf16.msra.mxu0 0
  %187 = vmatpush.bf16.msra.mxu0 0
  %188 = vmatpush.bf16.msra.mxu0 %v123
  %189 = vmatpush.bf16.msra.mxu0 %v119
  %190 = vmatpush.bf16.msra.mxu0 %v115
  %191 = vmatpush.bf16.msra.mxu0 %v111
  %192 = vmatmul.bf16.gmra.mxu0 %v144
  %v193 = vpop.f32.mrf.mxu0
  %v194 = vadd.f32 0.0, %v193
  %v195 = vpop.f32.mrf.mxu0
  %v196 = vadd.f32 0.0, %v195
  %197 = vmatmul.bf16.gmra.mxu0 %v147
  %v198 = vpop.f32.mrf.mxu0
  %v199 = vadd.f32 0.0, %v198
  %v200 = vpop.f32.mrf.mxu0
  %v201 = vadd.f32 0.0, %v200
  %202 = vmatmul.bf16.gmra.mxu0 %v150
  %v203 = vpop.f32.mrf.mxu0
  %v204 = vadd.f32 0.0, %v203
  %v205 = vpop.f32.mrf.mxu0
  %v206 = vadd.f32 0.0, %v205
  %207 = vmatmul.bf16.gmra.mxu0 %v153
  %v208 = vpop.f32.mrf.mxu0
  %v209 = vadd.f32 0.0, %v208
  %v210 = vpop.f32.mrf.mxu0
  %v211 = vadd.f32 0.0, %v210
  %212 = vdwg.mxu0
  %213 = vmatpush.bf16.msra.mxu0 0
  %214 = vmatpush.bf16.msra.mxu0 0
  %215 = vmatpush.bf16.msra.mxu0 0
  %216 = vmatpush.bf16.msra.mxu0 0
  %217 = vmatpush.bf16.msra.mxu0 %v124
  %218 = vmatpush.bf16.msra.mxu0 %v120
  %219 = vmatpush.bf16.msra.mxu0 %v116
  %220 = vmatpush.bf16.msra.mxu0 %v112
  %221 = vmatmul.bf16.gmra.mxu0 %v144
  %v222 = vpop.f32.mrf.mxu0
  %v223 = vadd.f32 0.0, %v222
  %v224 = vpop.f32.mrf.mxu0
  %v225 = vadd.f32 0.0, %v224
  %226 = vmatmul.bf16.gmra.mxu0 %v147
  %v227 = vpop.f32.mrf.mxu0
  %v228 = vadd.f32 0.0, %v227
  %v229 = vpop.f32.mrf.mxu0
  %v230 = vadd.f32 0.0, %v229
  %231 = vmatmul.bf16.gmra.mxu0 %v150
  %v232 = vpop.f32.mrf.mxu0
  %v233 = vadd.f32 0.0, %v232
  %v234 = vpop.f32.mrf.mxu0
  %v235 = vadd.f32 0.0, %v234
  %236 = vmatmul.bf16.gmra.mxu0 %v153
  %v237 = vpop.f32.mrf.mxu0
  %v238 = vadd.f32 0.0, %v237
  %v239 = vpop.f32.mrf.mxu0
  %v240 = vadd.f32 0.0, %v239
  %241 = vdwg.mxu0
  %242 = vmatpush.bf16.msra.mxu0 0
  %243 = vmatpush.bf16.msra.mxu0 0
  %244 = vmatpush.bf16.msra.mxu0 0
  %245 = vmatpush.bf16.msra.mxu0 0
  %246 = vmatpush.bf16.msra.mxu0 %v125
  %247 = vmatpush.bf16.msra.mxu0 %v121
  %248 = vmatpush.bf16.msra.mxu0 %v117
  %249 = vmatpush.bf16.msra.mxu0 %v113
  %250 = vmatmul.bf16.gmra.mxu0 %v144
  %v251 = vpop.f32.mrf.mxu0
  %v252 = vadd.f32 0.0, %v251
  %v253 = vpop.f32.mrf.mxu0
  %v254 = vadd.f32 0.0, %v253
  %255 = vmatmul.bf16.gmra.mxu0 %v147
  %v256 = vpop.f32.mrf.mxu0
  %v257 = vadd.f32 0.0, %v256
  %v258 = vpop.f32.mrf.mxu0
  %v259 = vadd.f32 0.0, %v258
  %260 = vmatmul.bf16.gmra.mxu0 %v150
  %v261 = vpop.f32.mrf.mxu0
  %v262 = vadd.f32 0.0, %v261
  %v263 = vpop.f32.mrf.mxu0
  %v264 = vadd.f32 0.0, %v263
  %265 = vmatmul.bf16.gmra.mxu0 %v153
  %v266 = vpop.f32.mrf.mxu0
  %v267 = vadd.f32 0.0, %v266
  %v268 = vpop.f32.mrf.mxu0
  %v269 = vadd.f32 0.0, %v268
  %270 = vdwg.mxu0
  %v271 = vld [vmem:[%s2] sm:$0xf]
  %v273 = vperm.slane %v271, 0
  %v274 = vperm.slane %v271, 1
  %v275 = vperm.slane %v271, 2
  %v276 = vperm.slane %v271, 3
  %v281 = vmul.f32 %v165, %v273
  %v282 = vmul.f32 %v194, %v274
  %v283 = vmul.f32 %v223, %v275
  %v284 = vmul.f32 %v252, %v276
  %v285 = vmul.f32 %v167, %v273
  %v286 = vmul.f32 %v196, %v274
  %v287 = vmul.f32 %v225, %v275
  %v288 = vmul.f32 %v254, %v276
  %v289 = vmul.f32 %v170, %v273
  %v290 = vmul.f32 %v199, %v274
  %v291 = vmul.f32 %v228, %v275
  %v292 = vmul.f32 %v257, %v276
  %v293 = vmul.f32 %v172, %v273
  %v294 = vmul.f32 %v201, %v274
  %v295 = vmul.f32 %v230, %v275
  %v296 = vmul.f32 %v259, %v276
  %v297 = vmul.f32 %v175, %v273
  %v298 = vmul.f32 %v204, %v274
  %v299 = vmul.f32 %v233, %v275
  %v300 = vmul.f32 %v262, %v276
  %v301 = vmul.f32 %v177, %v273
  %v302 = vmul.f32 %v206, %v274
  %v303 = vmul.f32 %v235, %v275
  %v304 = vmul.f32 %v264, %v276
  %v305 = vmul.f32 %v180, %v273
  %v306 = vmul.f32 %v209, %v274
  %v307 = vmul.f32 %v238, %v275
  %v308 = vmul.f32 %v267, %v276
  %v309 = vmul.f32 %v182, %v273
  %v310 = vmul.f32 %v211, %v274
  %v311 = vmul.f32 %v240, %v275
  %v312 = vmul.f32 %v269, %v276
  %v313 = vld [vmem:[%s3] sm:$0xf]
  %v315 = vperm.slane %v313, 0
  %v316 = vperm.slane %v313, 1
  %v317 = vperm.slane %v313, 2
  %v318 = vperm.slane %v313, 3
  %v323 = vadd.f32 %v281, %v315
  %v324 = vadd.f32 %v282, %v316
  %v325 = vadd.f32 %v283, %v317
  %v326 = vadd.f32 %v284, %v318
  %v327 = vadd.f32 %v285, %v315
  %v328 = vadd.f32 %v286, %v316
  %v329 = vadd.f32 %v287, %v317
  %v330 = vadd.f32 %v288, %v318
  %v331 = vadd.f32 %v289, %v315
  %v332 = vadd.f32 %v290, %v316
  %v333 = vadd.f32 %v291, %v317
  %v334 = vadd.f32 %v292, %v318
  %v335 = vadd.f32 %v293, %v315
  %v336 = vadd.f32 %v294, %v316
  %v337 = vadd.f32 %v295, %v317
  %v338 = vadd.f32 %v296, %v318
  %v339 = vadd.f32 %v297, %v315
  %v340 = vadd.f32 %v298, %v316
  %v341 = vadd.f32 %v299, %v317
  %v342 = vadd.f32 %v300, %v318
  %v343 = vadd.f32 %v301, %v315
  %v344 = vadd.f32 %v302, %v316
  %v345 = vadd.f32 %v303, %v317
  %v346 = vadd.f32 %v304, %v318
  %v347 = vadd.f32 %v305, %v315
  %v348 = vadd.f32 %v306, %v316
  %v349 = vadd.f32 %v307, %v317
  %v350 = vadd.f32 %v308, %v318
  %v351 = vadd.f32 %v309, %v315
  %v352 = vadd.f32 %v310, %v316
  %v353 = vadd.f32 %v311, %v317
  %v354 = vadd.f32 %v312, %v318
  %355 = vst [vmem:[%s4] sm:$0xff] %v323
  %356 = vst [vmem:[%s4 + $0x8] sm:$0xff] %v324
  %357 = vst [vmem:[%s4 + $0x10] sm:$0xff] %v325
  %358 = vst [vmem:[%s4 + $0x18] sm:$0xff] %v326
  %359 = vst [vmem:[%s4 + $0x20] sm:$0xff] %v327
  %360 = vst [vmem:[%s4 + $0x28] sm:$0xff] %v328
  %361 = vst [vmem:[%s4 + $0x30] sm:$0xff] %v329
  %362 = vst [vmem:[%s4 + $0x38] sm:$0xff] %v330
  %363 = vst [vmem:[%s4 + $0x40] sm:$0xff] %v331
  %364 = vst [vmem:[%s4 + $0x48] sm:$0xff] %v332
  %365 = vst [vmem:[%s4 + $0x50] sm:$0xff] %v333
  %366 = vst [vmem:[%s4 + $0x58] sm:$0xff] %v334
  %367 = vst [vmem:[%s4 + $0x60] sm:$0xff] %v335
  %368 = vst [vmem:[%s4 + $0x68] sm:$0xff] %v336
  %369 = vst [vmem:[%s4 + $0x70] sm:$0xff] %v337
  %370 = vst [vmem:[%s4 + $0x78] sm:$0xff] %v338
  %371 = vst [vmem:[%s4 + $0x80] sm:$0xff] %v339
  %372 = vst [vmem:[%s4 + $0x88] sm:$0xff] %v340
  %373 = vst [vmem:[%s4 + $0x90] sm:$0xff] %v341
  %374 = vst [vmem:[%s4 + $0x98] sm:$0xff] %v342
  %375 = vst [vmem:[%s4 + $0xa0] sm:$0xff] %v343
  %376 = vst [vmem:[%s4 + $0xa8] sm:$0xff] %v344
  %377 = vst [vmem:[%s4 + $0xb0] sm:$0xff] %v345
  %378 = vst [vmem:[%s4 + $0xb8] sm:$0xff] %v346
  %379 = vst [vmem:[%s4 + $0xc0] sm:$0xff] %v347
  %380 = vst [vmem:[%s4 + $0xc8] sm:$0xff] %v348
  %381 = vst [vmem:[%s4 + $0xd0] sm:$0xff] %v349
  %382 = vst [vmem:[%s4 + $0xd8] sm:$0xff] %v350
  %383 = vst [vmem:[%s4 + $0xe0] sm:$0xff] %v351
  %384 = vst [vmem:[%s4 + $0xe8] sm:$0xff] %v352
  %385 = vst [vmem:[%s4 + $0xf0] sm:$0xff] %v353
  %386 = vst [vmem:[%s4 + $0xf8] sm:$0xff] %v354
  // Predicated region
  $region18: #{_lambda_.16} parent=0 // pred_check
    _
  $region19: #{_lambda_.16} parent=0 // pred_check_branch
    %388 = sbr.rel (0) target = $region21
  $region20: #{_lambda_.16} parent=0 // pred_region
    _
  $region21: #{_lambda_.16} parent=0 // pred_fallthru
    _
  // Predicated region
  $region22: #{_lambda_.16} parent=0 // pred_check
    _
  $region23: #{_lambda_.16} parent=0 // pred_check_branch
    %390 = sbr.rel (0) target = $region25
  $region24: #{_lambda_.16} parent=0 // pred_region
    _
  $region25: #{_lambda_.16} parent=0 // pred_fallthru
    _

// kernel: _lambda_.17
$region0: #{_lambda_.17}
  #allocation0 [shape = 'u32[]', space=smem, size = 0x4, offset = 0x4, fixed_abs, tag = 'smem constant byte address 0x4 - core index']
  #allocation1 [shape = 'u32[72,128]{1,0:T(1,128)}', space=vmem, size = 0x9000, scoped, tag = 'internal scratch']
  %s0 = inlined_call_operand.vmem [shape: f32[2,32,2,256], index: 0, kind: input, shape index: {}]
  %s1 = inlined_call_operand.vmem [shape: bf16[2,64,256], index: 1, kind: input, shape index: {}]
  %s2 = inlined_call_operand.vmem [shape: f32[2,32,2,64], index: 2, kind: output, shape index: {}]
  %s3 = sld [smem:[#allocation0]]
  $region48: #{_lambda_.17} parent=0
    _
  %s5 = ssub.s32 1, %s3
  %s6 = scalar_select 0, %s5, %s3
  loop: start=0, step=1, limit=4
  $region2: #{_lambda_.17} parent=0 // loop_pre_header
    _
  $region3: #{_lambda_.17} parent=0 // loop_header
    %s8 = sphi 0, %s12
    %p9 = scmp.ge.s32.totalorder %s8, 4
    %s18 = sphi 0, %s20
    %s21 = sphi 0, %s18
    %s22 = sphi 0, %s21
    %s38 = sphi 0, %s22
    %s44 = sphi 0, %s46
    %s47 = sphi 0, %s44
    %s48 = sphi 0, %s47
    %s64 = sphi 0, %s48
    %s70 = sphi 0, %s72
    %s73 = sphi 0, %s70
    %s74 = sphi 0, %s73
    %s90 = sphi 0, %s74
  $region4: #{_lambda_.17} parent=0 // loop_header_branch
    %11 = sbr.rel (%p9) target = $region8
  $region5: #{_lambda_.17} parent=0 // loop_body
    %s13 = ssub.s32 %s8, 1
    %s14 = ssub.s32 %s8, 2
    %s15 = sadd.s32 %s8, 1
    %s16 = ssub.s32 %s8, %s15
    %p17 = scmp.eq.s32.totalorder %s16, 0
    %s19 = sadd.s32 %s18, 1
    %s20 = scalar_select %p17, %s18, %s19
    %p23 = pneg %p17
    %p24 = scmp.eq.s32.totalorder %s8, 1
    %p25 = por %p23, %p24
    %p26 = scmp.ne.s32.totalorder %s18, %s21
    %p27 = scmp.eq.s32.totalorder %s8, 0
    %p28 = por %p26, %p27
    %p29 = scmp.ne.s32.totalorder %s18, %s21
    %p30 = scmp.eq.s32.totalorder %s13, 1
    %p31 = por %p29, %p30
    %p32 = scmp.ne.s32.totalorder %s21, %s22
    %p33 = scmp.eq.s32.totalorder %s13, 0
    %p34 = por %p32, %p33
    %p35 = scmp.ne.s32.totalorder %s21, %s22
    %p36 = scmp.eq.s32.totalorder %s14, 1
    %p37 = por %p35, %p36
    %p39 = scmp.ne.s32.totalorder %s22, %s38
    %p40 = scmp.eq.s32.totalorder %s14, 0
    %p41 = por %p39, %p40
    %s42 = ssub.s32 %s8, %s15
    %p43 = scmp.eq.s32.totalorder %s42, 0
    %s45 = sadd.s32 %s44, 1
    %s46 = scalar_select %p43, %s44, %s45
    %p49 = pneg %p43
    %p50 = scmp.eq.s32.totalorder %s8, 1
    %p51 = por %p49, %p50
    %p52 = scmp.ne.s32.totalorder %s44, %s47
    %p53 = scmp.eq.s32.totalorder %s8, 0
    %p54 = por %p52, %p53
    %p55 = scmp.ne.s32.totalorder %s44, %s47
    %p56 = scmp.eq.s32.totalorder %s13, 1
    %p57 = por %p55, %p56
    %p58 = scmp.ne.s32.totalorder %s47, %s48
    %p59 = scmp.eq.s32.totalorder %s13, 0
    %p60 = por %p58, %p59
    %p61 = scmp.ne.s32.totalorder %s47, %s48
    %p62 = scmp.eq.s32.totalorder %s14, 1
    %p63 = por %p61, %p62
    %p65 = scmp.ne.s32.totalorder %s48, %s64
    %p66 = scmp.eq.s32.totalorder %s14, 0
    %p67 = por %p65, %p66
    %s68 = ssub.s32 %s8, %s15
    %p69 = scmp.eq.s32.totalorder %s68, 0
    %s71 = sadd.s32 %s70, 1
    %s72 = scalar_select %p69, %s70, %s71
    %p75 = pneg %p69
    %p76 = scmp.eq.s32.totalorder %s8, 1
    %p77 = por %p75, %p76
    %p78 = scmp.ne.s32.totalorder %s70, %s73
    %p79 = scmp.eq.s32.totalorder %s8, 0
    %p80 = por %p78, %p79
    %p81 = scmp.ne.s32.totalorder %s70, %s73
    %p82 = scmp.eq.s32.totalorder %s13, 1
    %p83 = por %p81, %p82
    %p84 = scmp.ne.s32.totalorder %s73, %s74
    %p85 = scmp.eq.s32.totalorder %s13, 0
    %p86 = por %p84, %p85
    %p87 = scmp.ne.s32.totalorder %s73, %s74
    %p88 = scmp.eq.s32.totalorder %s14, 1
    %p89 = por %p87, %p88
    %p91 = scmp.ne.s32.totalorder %s74, %s90
    %p92 = scmp.eq.s32.totalorder %s14, 0
    %p93 = por %p91, %p92
    %p94 = scmp.le.s32.totalorder 1, %s8
    %p95 = scmp.lt.s32.totalorder %s8, 3
    %p96 = pnand %p94, %p95
    %p97 = pneg %p96
    // Predicated region
    $region9: #{_lambda_.17} parent=5 // pred_check
      _
    $region10: #{_lambda_.17} parent=5 // pred_check_branch
      %99 = sbr.rel (%p96) target = $region12
    $region11: #{_lambda_.17} parent=5 // pred_region
      %s100 = ssub.s32 %s8, 1
    $region12: #{_lambda_.17} parent=5 // pred_fallthru
      _
    %p101 = scmp.lt.s32.totalorder %s8, 2
    // Predicated region
    $region13: #{_lambda_.17} parent=5 // pred_check
      %p102 = pneg %p101
    $region14: #{_lambda_.17} parent=5 // pred_check_branch
      %104 = sbr.rel (%p102) target = $region16
    $region15: #{_lambda_.17} parent=5 // pred_region
      // Predicated region
      $region17: #{_lambda_.17} parent=15 // pred_check
        %p105 = pneg %p28
      $region18: #{_lambda_.17} parent=15 // pred_check_branch
        %107 = sbr.rel (%p105) target = $region20
      $region19: #{_lambda_.17} parent=15 // pred_region
        %p108 = scmp.lt.s32.totalorder %s8, 1
        %s109 = scalar_select %p108, %s8, 1
        %s110 = smul.addr %s109, 64
        %s111 = smul.addr %s110, 2
        %s112 = scalar_lea.vmem %s0, %s111
      $region20: #{_lambda_.17} parent=15 // pred_fallthru
        _
      // Predicated region
      $region21: #{_lambda_.17} parent=15 // pred_check
        %p113 = pneg %p54
      $region22: #{_lambda_.17} parent=15 // pred_check_branch
        %115 = sbr.rel (%p113) target = $region24
      $region23: #{_lambda_.17} parent=15 // pred_region
        %p116 = scmp.lt.s32.totalorder %s8, 1
        %s117 = scalar_select %p116, %s8, 1
        %s118 = smul.addr %s117, 16
        %s119 = smul.addr %s118, 4
        %s120 = scalar_lea.vmem %s1, %s119
      $region24: #{_lambda_.17} parent=15 // pred_fallthru
        _
    $region16: #{_lambda_.17} parent=5 // pred_fallthru
      _
    %p121 = scmp.le.s32.totalorder 1, %s8
    %p122 = scmp.lt.s32.totalorder %s8, 3
    %p123 = pnand %p121, %p122
    %p124 = pneg %p123
    // Predicated region
    $region25: #{_lambda_.17} parent=5 // pred_check
      _
    $region26: #{_lambda_.17} parent=5 // pred_check_branch
      %126 = sbr.rel (%p123) target = $region28
    $region27: #{_lambda_.17} parent=5 // pred_region
      %s127 = ssub.s32 %s8, 1
      %p128 = scmp.lt.s32.totalorder %s13, 1
      %s129 = scalar_select %p128, %s13, 1
      %s130 = smul.addr %s129, 64
      %s131 = smul.addr %s130, 2
      %s132 = scalar_lea.vmem %s0, %s131
      %p133 = pneg %p34
      %p134 = pneg %p31
      %p135 = scmp.lt.s32.totalorder %s13, 1
      %s136 = scalar_select %p135, %s13, 1
      %s137 = smul.addr %s136, 16
      %s138 = smul.addr %s137, 4
      %s139 = scalar_lea.vmem %s1, %s138
      %p140 = pneg %p60
      %p141 = pneg %p57
      %p142 = pneg %p86
      %p143 = pneg %p83
      %p144 = scmp.lt.s32.totalorder %s13, 1
      %s145 = scalar_select %p144, %s13, 1
      %s146 = smul.addr %s145, 32
      %s147 = smul.addr %s146, 2
      %s148 = scalar_lea.vmem %s2, %s147
      %p149 = scmp.lt.s32.totalorder %s13, 1
      %s150 = scalar_select %p149, %s13, 1
      %s151 = smul.addr %s150, 64
      %s152 = smul.addr %s151, 2
      %s153 = scalar_lea.vmem %s0, %s152
      %p154 = scmp.lt.s32.totalorder %s13, 1
      %s155 = scalar_select %p154, %s13, 1
      %s156 = smul.addr %s155, 16
      %s157 = smul.addr %s156, 4
      %s158 = scalar_lea.vmem %s1, %s157
      %p159 = scmp.lt.s32.totalorder %s13, 1
      %s160 = scalar_select %p159, %s13, 1
      %s161 = smul.addr %s160, 32
      %s162 = smul.addr %s161, 2
      %s163 = scalar_lea.vmem %s2, %s162
      %v165 = vld [vmem:[%s158] sm:$0xff]
      %v166 = vld [vmem:[%s158 + $0x8] sm:$0xff]
      %v167 = vld [vmem:[%s158 + $0x10] sm:$0xff]
      %v168 = vld [vmem:[%s158 + $0x18] sm:$0xff]
      %v169 = vld [vmem:[%s158 + $0x20] sm:$0xff]
      %v170 = vld [vmem:[%s158 + $0x28] sm:$0xff]
      %v171 = vld [vmem:[%s158 + $0x30] sm:$0xff]
      %v172 = vld [vmem:[%s158 + $0x38] sm:$0xff]
      loop: start=0, step=1, limit=32
      $region29: #{_lambda_.17} parent=27 // loop_pre_header
        _
      $region30: #{_lambda_.17} parent=27 // loop_header
        %s174 = sphi 0, %s178
        %p175 = scmp.ge.s32.totalorder %s174, 32
        %v179 = vphi 0.0, %v296
        %v180 = vphi 0.0, %v290
      $region31: #{_lambda_.17} parent=27 // loop_header_branch
        %177 = sbr.rel (%p175) target = $region35
      $region32: #{_lambda_.17} parent=27 // loop_body
        %p181 = scmp.eq.s32.totalorder %s13, 0
        %s182 = ssub.s32 31, %s174
        %s183 = scalar_select %p181, %s174, %s182
        %s184 = smul.u32 %s183, 2
        %s185 = smul.addr %s184, 2
        %s186 = scalar_lea.vmem %s153, %s185
        %v187 = vld [vmem:[%s186] sm:$0xf]
        %v188 = vpack.c.bf16 %v179, %v179
        %v197 = vunpack.c.l.b16 %v165
        %v198 = vunpack.c.h.b16 %v165
        %v199 = vunpack.c.l.b16 %v166
        %v200 = vunpack.c.h.b16 %v166
        %v201 = vunpack.c.l.b16 %v167
        %v202 = vunpack.c.h.b16 %v167
        %v203 = vunpack.c.l.b16 %v168
        %v204 = vunpack.c.h.b16 %v168
        %v205 = vunpack.c.l.b16 %v169
        %v206 = vunpack.c.h.b16 %v169
        %v207 = vunpack.c.l.b16 %v170
        %v208 = vunpack.c.h.b16 %v170
        %v209 = vunpack.c.l.b16 %v171
        %v210 = vunpack.c.h.b16 %v171
        %v211 = vunpack.c.l.b16 %v172
        %v212 = vunpack.c.h.b16 %v172
        %v213 = vpack.c.b16 %v199, %v197
        %v214 = vpack.c.b16 %v200, %v198
        %v215 = vpack.c.b16 %v203, %v201
        %v216 = vpack.c.b16 %v204, %v202
        %v217 = vpack.c.b16 %v207, %v205
        %v218 = vpack.c.b16 %v208, %v206
        %v219 = vpack.c.b16 %v211, %v209
        %v220 = vpack.c.b16 %v212, %v210
        %vm229 = vcmask 523264
        %v231 = vsel %vm229, %v188, 0
        %233 = vmatpush.bf16.msra.mxu0 0
        %234 = vmatpush.bf16.msra.mxu0 0
        %235 = vmatpush.bf16.msra.mxu0 0
        %236 = vmatpush.bf16.msra.mxu0 0
        %237 = vmatpush.bf16.msra.mxu0 %v219
        %238 = vmatpush.bf16.msra.mxu0 %v217
        %239 = vmatpush.bf16.msra.mxu0 %v215
        %240 = vmatpush.bf16.msra.mxu0 %v213
        %241 = vmatmul.bf16.gmra.mxu0 %v231
        %v242 = vpop.f32.mrf.mxu0
        %v243 = vadd.f32 0.0, %v242
        %v244 = vpop.f32.mrf.mxu0
        %245 = vdwg.mxu0
        %246 = vmatpush.bf16.msra.mxu0 0
        %247 = vmatpush.bf16.msra.mxu0 0
        %248 = vmatpush.bf16.msra.mxu0 0
        %249 = vmatpush.bf16.msra.mxu0 0
        %250 = vmatpush.bf16.msra.mxu0 %v220
        %251 = vmatpush.bf16.msra.mxu0 %v218
        %252 = vmatpush.bf16.msra.mxu0 %v216
        %253 = vmatpush.bf16.msra.mxu0 %v214
        %254 = vmatmul.bf16.gmra.mxu0 %v231
        %v255 = vpop.f32.mrf.mxu0
        %v256 = vadd.f32 0.0, %v255
        %v257 = vpop.f32.mrf.mxu0
        %258 = vdwg.mxu0
        %v261 = vrot.slane %v256, 6
        %vm262 = vcmask 1041408
        %v263 = vsel %vm262, %v243, %v261
        %v265 = vadd.f32 %v187, %v263
        %v266 = vsub.f32 0.0, %v265
        %v267 = vmul.f32 %v266, 1.442695
        %v268 = vpow.pop %v267
        %v269 = vadd.f32 %v268, 1.0
        %v270 = vrcp.pop %v269
        %v272 = vrot.slane %v265, 2
        %v274 = vtanh.pop %v272
        %275 = vrot.lane.b32.xlu0 %v265, 64
        %v276 = vpop.permute.xlu0 %275
        %v277 = vrot.slane %v276, 2
        %v279 = vsub.f32 0.0, %v277
        %v280 = vmul.f32 %v279, 1.442695
        %v281 = vpow.pop %v280
        %v282 = vadd.f32 %v281, 1.0
        %v283 = vrcp.pop %v282
        %v284 = vmul.f32 %v270, %v180
        %v285 = vmul.f32 %v270, %v274
        %287 = vrot.lane.b32.xlu0 %v285, 64
        %v288 = vpop.permute.xlu0 %287
        %v290 = vadd.f32 %v284, %v288
        %v291 = vtanh.pop %v290
        %293 = vrot.lane.b32.xlu0 %v291, 64
        %v294 = vpop.permute.xlu0 %293
        %v296 = vmul.f32 %v283, %v294
        %s297 = scalar_lea.vmem %s163, %s184
        %vm298 = vcmask 517120
        %299 = vst.msk [vmem:[%s297] sm:$0x3] %vm298, %v296
      $region33: #{_lambda_.17} parent=27 // loop_footer
        %s178 = sadd.s32 1, %s174
      $region34: #{_lambda_.17} parent=27 // loop_footer_branch
        %173 = sbr.rel target = $region30
      $region35: #{_lambda_.17} parent=27 // loop_exit
        _
      %p300 = scmp.lt.s32.totalorder %s13, 1
      %s301 = scalar_select %p300, %s13, 1
      %s302 = smul.addr %s301, 32
      %s303 = smul.addr %s302, 2
      %s304 = scalar_lea.vmem %s2, %s303
      // Predicated region
      $region36: #{_lambda_.17} parent=27 // pred_check
        %p305 = pneg %p83
      $region37: #{_lambda_.17} parent=27 // pred_check_branch
        %307 = sbr.rel (%p305) target = $region39
      $region38: #{_lambda_.17} parent=27 // pred_region
        _
      $region39: #{_lambda_.17} parent=27 // pred_fallthru
        _
    $region28: #{_lambda_.17} parent=5 // pred_fallthru
      _
    %p308 = scmp.le.s32.totalorder 2, %s8
    // Predicated region
    $region40: #{_lambda_.17} parent=5 // pred_check
      %p309 = pneg %p308
    $region41: #{_lambda_.17} parent=5 // pred_check_branch
      %311 = sbr.rel (%p309) target = $region43
    $region42: #{_lambda_.17} parent=5 // pred_region
      %s312 = ssub.s32 %s8, 2
      // Predicated region
      $region44: #{_lambda_.17} parent=42 // pred_check
        %p313 = pneg %p89
      $region45: #{_lambda_.17} parent=42 // pred_check_branch
        %315 = sbr.rel (%p313) target = $region47
      $region46: #{_lambda_.17} parent=42 // pred_region
        %p316 = scmp.lt.s32.totalorder %s14, 1
        %s317 = scalar_select %p316, %s14, 1
        %s318 = smul.addr %s317, 32
        %s319 = smul.addr %s318, 2
        %s320 = scalar_lea.vmem %s2, %s319
      $region47: #{_lambda_.17} parent=42 // pred_fallthru
        _
    $region43: #{_lambda_.17} parent=5 // pred_fallthru
      _
  $region6: #{_lambda_.17} parent=0 // loop_footer
    %s12 = sadd.s32 1, %s8
  $region7: #{_lambda_.17} parent=0 // loop_footer_branch
    %7 = sbr.rel target = $region3
  $region8: #{_lambda_.17} parent=0 // loop_exit
    _

// kernel: _lambda_.18
$region0: #{_lambda_.18}
  #allocation0 [shape = 'u32[]', space=smem, size = 0x4, offset = 0x4, fixed_abs, tag = 'smem constant byte address 0x4 - core index']
  #allocation1 [shape = 'u32[72,128]{1,0:T(1,128)}', space=vmem, size = 0x9000, scoped, tag = 'internal scratch']
  %s0 = inlined_call_operand.vmem [shape: bf16[64,128], index: 0, kind: input, shape index: {}]
  %s1 = inlined_call_operand.vmem [shape: bf16[128,128], index: 1, kind: input, shape index: {}]
  %s2 = inlined_call_operand.vmem [shape: f32[1,128], index: 2, kind: input, shape index: {}]
  %s3 = inlined_call_operand.vmem [shape: f32[1,128], index: 3, kind: input, shape index: {}]
  %s4 = inlined_call_operand.vmem [shape: f32[64,128], index: 4, kind: output, shape index: {}]
  %s5 = sld [smem:[#allocation0]]
  $region26: #{_lambda_.18} parent=0
    _
  %s7 = ssub.s32 1, %s5
  %s8 = scalar_select 0, %s7, %s5
  // Predicated region
  $region2: #{_lambda_.18} parent=0 // pred_check
    _
  $region3: #{_lambda_.18} parent=0 // pred_check_branch
    %10 = sbr.rel (0) target = $region5
  $region4: #{_lambda_.18} parent=0 // pred_region
    _
  $region5: #{_lambda_.18} parent=0 // pred_fallthru
    _
  // Predicated region
  $region6: #{_lambda_.18} parent=0 // pred_check
    _
  $region7: #{_lambda_.18} parent=0 // pred_check_branch
    %12 = sbr.rel (0) target = $region9
  $region8: #{_lambda_.18} parent=0 // pred_region
    _
  $region9: #{_lambda_.18} parent=0 // pred_fallthru
    _
  // Predicated region
  $region10: #{_lambda_.18} parent=0 // pred_check
    _
  $region11: #{_lambda_.18} parent=0 // pred_check_branch
    %14 = sbr.rel (0) target = $region13
  $region12: #{_lambda_.18} parent=0 // pred_region
    _
  $region13: #{_lambda_.18} parent=0 // pred_fallthru
    _
  // Predicated region
  $region14: #{_lambda_.18} parent=0 // pred_check
    _
  $region15: #{_lambda_.18} parent=0 // pred_check_branch
    %16 = sbr.rel (0) target = $region17
  $region16: #{_lambda_.18} parent=0 // pred_region
    _
  $region17: #{_lambda_.18} parent=0 // pred_fallthru
    _
  %v17 = vld [vmem:[%s0] sm:$0xf]
  %v18 = vld [vmem:[%s0 + $0x4] sm:$0xf]
  %v19 = vld [vmem:[%s0 + $0x8] sm:$0xf]
  %v20 = vld [vmem:[%s0 + $0xc] sm:$0xf]
  %v21 = vld [vmem:[%s0 + $0x10] sm:$0xf]
  %v22 = vld [vmem:[%s0 + $0x14] sm:$0xf]
  %v23 = vld [vmem:[%s0 + $0x18] sm:$0xf]
  %v24 = vld [vmem:[%s0 + $0x1c] sm:$0xf]
  %v25 = vld [vmem:[%s1] sm:$0xf]
  %v26 = vld [vmem:[%s1 + $0x4] sm:$0xf]
  %v27 = vld [vmem:[%s1 + $0x8] sm:$0xf]
  %v28 = vld [vmem:[%s1 + $0xc] sm:$0xf]
  %v29 = vld [vmem:[%s1 + $0x10] sm:$0xf]
  %v30 = vld [vmem:[%s1 + $0x14] sm:$0xf]
  %v31 = vld [vmem:[%s1 + $0x18] sm:$0xf]
  %v32 = vld [vmem:[%s1 + $0x1c] sm:$0xf]
  %v33 = vld [vmem:[%s1 + $0x20] sm:$0xf]
  %v34 = vld [vmem:[%s1 + $0x24] sm:$0xf]
  %v35 = vld [vmem:[%s1 + $0x28] sm:$0xf]
  %v36 = vld [vmem:[%s1 + $0x2c] sm:$0xf]
  %v37 = vld [vmem:[%s1 + $0x30] sm:$0xf]
  %v38 = vld [vmem:[%s1 + $0x34] sm:$0xf]
  %v39 = vld [vmem:[%s1 + $0x38] sm:$0xf]
  %v40 = vld [vmem:[%s1 + $0x3c] sm:$0xf]
  %v49 = vunpack.c.l.b16 %v17
  %v50 = vunpack.c.l.b16 %v18
  %v51 = vunpack.c.l.b16 %v19
  %v52 = vunpack.c.l.b16 %v20
  %v53 = vunpack.c.l.b16 %v21
  %v54 = vunpack.c.l.b16 %v22
  %v55 = vunpack.c.l.b16 %v23
  %v56 = vunpack.c.l.b16 %v24
  %v57 = vpack.c.b16 %v50, %v49
  %v58 = vpack.c.b16 %v52, %v51
  %v59 = vpack.c.b16 %v54, %v53
  %v60 = vpack.c.b16 %v56, %v55
  %v81 = vunpack.c.l.b16 %v25
  %v82 = vunpack.c.l.b16 %v26
  %v83 = vunpack.c.l.b16 %v27
  %v84 = vunpack.c.l.b16 %v28
  %v85 = vunpack.c.l.b16 %v29
  %v86 = vunpack.c.l.b16 %v30
  %v87 = vunpack.c.l.b16 %v31
  %v88 = vunpack.c.l.b16 %v32
  %v89 = vunpack.c.l.b16 %v33
  %v90 = vunpack.c.l.b16 %v34
  %v91 = vunpack.c.l.b16 %v35
  %v92 = vunpack.c.l.b16 %v36
  %v93 = vunpack.c.l.b16 %v37
  %v94 = vunpack.c.l.b16 %v38
  %v95 = vunpack.c.l.b16 %v39
  %v96 = vunpack.c.l.b16 %v40
  %v97 = vpack.c.b16 %v82, %v81
  %v98 = vpack.c.b16 %v84, %v83
  %v99 = vpack.c.b16 %v86, %v85
  %v100 = vpack.c.b16 %v88, %v87
  %v101 = vpack.c.b16 %v90, %v89
  %v102 = vpack.c.b16 %v92, %v91
  %v103 = vpack.c.b16 %v94, %v93
  %v104 = vpack.c.b16 %v96, %v95
  %113 = vmatpush.bf16.msra.mxu0 %v104
  %114 = vmatpush.bf16.msra.mxu0 %v103
  %115 = vmatpush.bf16.msra.mxu0 %v102
  %116 = vmatpush.bf16.msra.mxu0 %v101
  %117 = vmatpush.bf16.msra.mxu0 %v100
  %118 = vmatpush.bf16.msra.mxu0 %v99
  %119 = vmatpush.bf16.msra.mxu0 %v98
  %120 = vmatpush.bf16.msra.mxu0 %v97
  %121 = vmatmul.bf16.gmra.mxu0 %v57
  %v122 = vpop.f32.mrf.mxu0
  %v123 = vadd.f32 0.0, %v122
  %v124 = vpop.f32.mrf.mxu0
  %v125 = vadd.f32 0.0, %v124
  %126 = vmatmul.bf16.gmra.mxu0 %v58
  %v127 = vpop.f32.mrf.mxu0
  %v128 = vadd.f32 0.0, %v127
  %v129 = vpop.f32.mrf.mxu0
  %v130 = vadd.f32 0.0, %v129
  %131 = vmatmul.bf16.gmra.mxu0 %v59
  %v132 = vpop.f32.mrf.mxu0
  %v133 = vadd.f32 0.0, %v132
  %v134 = vpop.f32.mrf.mxu0
  %v135 = vadd.f32 0.0, %v134
  %136 = vmatmul.bf16.gmra.mxu0 %v60
  %v137 = vpop.f32.mrf.mxu0
  %v138 = vadd.f32 0.0, %v137
  %v139 = vpop.f32.mrf.mxu0
  %v140 = vadd.f32 0.0, %v139
  %141 = vdwg.mxu0
  %v142 = vld [vmem:[%s2] sm:$0x1]
  %v144 = vperm.slane %v142, 0
  %v146 = vmul.f32 %v123, %v144
  %v147 = vmul.f32 %v125, %v144
  %v148 = vmul.f32 %v128, %v144
  %v149 = vmul.f32 %v130, %v144
  %v150 = vmul.f32 %v133, %v144
  %v151 = vmul.f32 %v135, %v144
  %v152 = vmul.f32 %v138, %v144
  %v153 = vmul.f32 %v140, %v144
  %v154 = vld [vmem:[%s3] sm:$0x1]
  %v156 = vperm.slane %v154, 0
  %v158 = vadd.f32 %v146, %v156
  %v159 = vadd.f32 %v147, %v156
  %v160 = vadd.f32 %v148, %v156
  %v161 = vadd.f32 %v149, %v156
  %v162 = vadd.f32 %v150, %v156
  %v163 = vadd.f32 %v151, %v156
  %v164 = vadd.f32 %v152, %v156
  %v165 = vadd.f32 %v153, %v156
  %v166 = vsub.f32 0.0, %v158
  %v167 = vsub.f32 0.0, %v159
  %v168 = vsub.f32 0.0, %v160
  %v169 = vsub.f32 0.0, %v161
  %v170 = vsub.f32 0.0, %v162
  %v171 = vsub.f32 0.0, %v163
  %v172 = vsub.f32 0.0, %v164
  %v173 = vsub.f32 0.0, %v165
  %v174 = vmul.f32 %v166, 1.442695
  %v175 = vpow.pop %v174
  %v176 = vmul.f32 %v167, 1.442695
  %v177 = vpow.pop %v176
  %v178 = vmul.f32 %v168, 1.442695
  %v179 = vpow.pop %v178
  %v180 = vmul.f32 %v169, 1.442695
  %v181 = vpow.pop %v180
  %v182 = vmul.f32 %v170, 1.442695
  %v183 = vpow.pop %v182
  %v184 = vmul.f32 %v171, 1.442695
  %v185 = vpow.pop %v184
  %v186 = vmul.f32 %v172, 1.442695
  %v187 = vpow.pop %v186
  %v188 = vmul.f32 %v173, 1.442695
  %v189 = vpow.pop %v188
  %v190 = vadd.f32 %v175, 1.0
  %v191 = vadd.f32 %v177, 1.0
  %v192 = vadd.f32 %v179, 1.0
  %v193 = vadd.f32 %v181, 1.0
  %v194 = vadd.f32 %v183, 1.0
  %v195 = vadd.f32 %v185, 1.0
  %v196 = vadd.f32 %v187, 1.0
  %v197 = vadd.f32 %v189, 1.0
  %v198 = vrcp.pop %v190
  %v199 = vmul.f32 %v190, %v198
  %v200 = vsub.f32 1.0, %v199
  %v201 = vmul.f32 %v198, %v200
  %v202 = vadd.f32 %v198, %v201
  %vm203 = vweird.f32 %v190
  %vm204 = vweird.f32 %v198
  %vm205 = vmor %vm203, %vm204
  %v206 = vsel %vm205, %v198, %v202
  %v207 = vand.u32 2147483647, %v190
  %vm208 = vcmp.eq.f32.partialorder %v207, 8.507059e+37
  %v209 = vand.u32 %v190, 2147483648
  %v210 = vor.u32 1.1754944e-38, %v209
  %v211 = vsel %vm208, %v210, %v206
  %v212 = vmul.f32 1.0, %v211
  %v213 = vrcp.pop %v191
  %v214 = vmul.f32 %v191, %v213
  %v215 = vsub.f32 1.0, %v214
  %v216 = vmul.f32 %v213, %v215
  %v217 = vadd.f32 %v213, %v216
  %vm218 = vweird.f32 %v191
  %vm219 = vweird.f32 %v213
  %vm220 = vmor %vm218, %vm219
  %v221 = vsel %vm220, %v213, %v217
  %v222 = vand.u32 2147483647, %v191
  %vm223 = vcmp.eq.f32.partialorder %v222, 8.507059e+37
  %v224 = vand.u32 %v191, 2147483648
  %v225 = vor.u32 1.1754944e-38, %v224
  %v226 = vsel %vm223, %v225, %v221
  %v227 = vmul.f32 1.0, %v226
  %v228 = vrcp.pop %v192
  %v229 = vmul.f32 %v192, %v228
  %v230 = vsub.f32 1.0, %v229
  %v231 = vmul.f32 %v228, %v230
  %v232 = vadd.f32 %v228, %v231
  %vm233 = vweird.f32 %v192
  %vm234 = vweird.f32 %v228
  %vm235 = vmor %vm233, %vm234
  %v236 = vsel %vm235, %v228, %v232
  %v237 = vand.u32 2147483647, %v192
  %vm238 = vcmp.eq.f32.partialorder %v237, 8.507059e+37
  %v239 = vand.u32 %v192, 2147483648
  %v240 = vor.u32 1.1754944e-38, %v239
  %v241 = vsel %vm238, %v240, %v236
  %v242 = vmul.f32 1.0, %v241
  %v243 = vrcp.pop %v193
  %v244 = vmul.f32 %v193, %v243
  %v245 = vsub.f32 1.0, %v244
  %v246 = vmul.f32 %v243, %v245
  %v247 = vadd.f32 %v243, %v246
  %vm248 = vweird.f32 %v193
  %vm249 = vweird.f32 %v243
  %vm250 = vmor %vm248, %vm249
  %v251 = vsel %vm250, %v243, %v247
  %v252 = vand.u32 2147483647, %v193
  %vm253 = vcmp.eq.f32.partialorder %v252, 8.507059e+37
  %v254 = vand.u32 %v193, 2147483648
  %v255 = vor.u32 1.1754944e-38, %v254
  %v256 = vsel %vm253, %v255, %v251
  %v257 = vmul.f32 1.0, %v256
  %v258 = vrcp.pop %v194
  %v259 = vmul.f32 %v194, %v258
  %v260 = vsub.f32 1.0, %v259
  %v261 = vmul.f32 %v258, %v260
  %v262 = vadd.f32 %v258, %v261
  %vm263 = vweird.f32 %v194
  %vm264 = vweird.f32 %v258
  %vm265 = vmor %vm263, %vm264
  %v266 = vsel %vm265, %v258, %v262
  %v267 = vand.u32 2147483647, %v194
  %vm268 = vcmp.eq.f32.partialorder %v267, 8.507059e+37
  %v269 = vand.u32 %v194, 2147483648
  %v270 = vor.u32 1.1754944e-38, %v269
  %v271 = vsel %vm268, %v270, %v266
  %v272 = vmul.f32 1.0, %v271
  %v273 = vrcp.pop %v195
  %v274 = vmul.f32 %v195, %v273
  %v275 = vsub.f32 1.0, %v274
  %v276 = vmul.f32 %v273, %v275
  %v277 = vadd.f32 %v273, %v276
  %vm278 = vweird.f32 %v195
  %vm279 = vweird.f32 %v273
  %vm280 = vmor %vm278, %vm279
  %v281 = vsel %vm280, %v273, %v277
  %v282 = vand.u32 2147483647, %v195
  %vm283 = vcmp.eq.f32.partialorder %v282, 8.507059e+37
  %v284 = vand.u32 %v195, 2147483648
  %v285 = vor.u32 1.1754944e-38, %v284
  %v286 = vsel %vm283, %v285, %v281
  %v287 = vmul.f32 1.0, %v286
  %v288 = vrcp.pop %v196
  %v289 = vmul.f32 %v196, %v288
  %v290 = vsub.f32 1.0, %v289
  %v291 = vmul.f32 %v288, %v290
  %v292 = vadd.f32 %v288, %v291
  %vm293 = vweird.f32 %v196
  %vm294 = vweird.f32 %v288
  %vm295 = vmor %vm293, %vm294
  %v296 = vsel %vm295, %v288, %v292
  %v297 = vand.u32 2147483647, %v196
  %vm298 = vcmp.eq.f32.partialorder %v297, 8.507059e+37
  %v299 = vand.u32 %v196, 2147483648
  %v300 = vor.u32 1.1754944e-38, %v299
  %v301 = vsel %vm298, %v300, %v296
  %v302 = vmul.f32 1.0, %v301
  %v303 = vrcp.pop %v197
  %v304 = vmul.f32 %v197, %v303
  %v305 = vsub.f32 1.0, %v304
  %v306 = vmul.f32 %v303, %v305
  %v307 = vadd.f32 %v303, %v306
  %vm308 = vweird.f32 %v197
  %vm309 = vweird.f32 %v303
  %vm310 = vmor %vm308, %vm309
  %v311 = vsel %vm310, %v303, %v307
  %v312 = vand.u32 2147483647, %v197
  %vm313 = vcmp.eq.f32.partialorder %v312, 8.507059e+37
  %v314 = vand.u32 %v197, 2147483648
  %v315 = vor.u32 1.1754944e-38, %v314
  %v316 = vsel %vm313, %v315, %v311
  %v317 = vmul.f32 1.0, %v316
  %318 = vst [vmem:[%s4] sm:$0xff] %v212
  %319 = vst [vmem:[%s4 + $0x8] sm:$0xff] %v227
  %320 = vst [vmem:[%s4 + $0x10] sm:$0xff] %v242
  %321 = vst [vmem:[%s4 + $0x18] sm:$0xff] %v257
  %322 = vst [vmem:[%s4 + $0x20] sm:$0xff] %v272
  %323 = vst [vmem:[%s4 + $0x28] sm:$0xff] %v287
  %324 = vst [vmem:[%s4 + $0x30] sm:$0xff] %v302
  %325 = vst [vmem:[%s4 + $0x38] sm:$0xff] %v317
  // Predicated region
  $region18: #{_lambda_.18} parent=0 // pred_check
    _
  $region19: #{_lambda_.18} parent=0 // pred_check_branch
    %327 = sbr.rel (0) target = $region21
  $region20: #{_lambda_.18} parent=0 // pred_region
    _
  $region21: #{_lambda_.18} parent=0 // pred_fallthru
    _
  // Predicated region
  $region22: #{_lambda_.18} parent=0 // pred_check
    _
  $region23: #{_lambda_.18} parent=0 // pred_check_branch
    %329 = sbr.rel (0) target = $region25
  $region24: #{_lambda_.18} parent=0 // pred_region
    _
  $region25: #{_lambda_.18} parent=0 // pred_fallthru
    _

// kernel: _lambda_.19
$region0: #{_lambda_.19}
  #allocation0 [shape = 'u32[]', space=smem, size = 0x4, offset = 0x4, fixed_abs, tag = 'smem constant byte address 0x4 - core index']
  #allocation1 [shape = 'u32[72,128]{1,0:T(1,128)}', space=vmem, size = 0x9000, scoped, tag = 'internal scratch']
  %s0 = inlined_call_operand.vmem [shape: bf16[1024,9], index: 0, kind: input, shape index: {}]
  %s1 = inlined_call_operand.vmem [shape: bf16[9,16], index: 1, kind: input, shape index: {}]
  %s2 = inlined_call_operand.vmem [shape: f32[1,16], index: 2, kind: input, shape index: {}]
  %s3 = inlined_call_operand.vmem [shape: f32[1,16], index: 3, kind: input, shape index: {}]
  %s4 = inlined_call_operand.vmem [shape: bf16[1024,16], index: 4, kind: output, shape index: {}]
  %s5 = sld [smem:[#allocation0]]
  $region49: #{_lambda_.19} parent=0
    _
  %s7 = ssub.s32 1, %s5
  %s8 = scalar_select 0, %s7, %s5
  loop: start=0, step=1, limit=4
  $region2: #{_lambda_.19} parent=0 // loop_pre_header
    _
  $region3: #{_lambda_.19} parent=0 // loop_header
    %s10 = sphi 0, %s14
    %p11 = scmp.ge.s32.totalorder %s10, 4
    %s20 = sphi 0, %s22
    %s23 = sphi 0, %s20
    %s24 = sphi 0, %s23
    %s40 = sphi 0, %s24
    %s44 = sphi 0, %s44
    %s46 = sphi 0, %s44
    %s47 = sphi 0, %s46
    %s61 = sphi 0, %s47
    %s65 = sphi 0, %s65
    %s67 = sphi 0, %s65
    %s68 = sphi 0, %s67
    %s82 = sphi 0, %s68
    %s86 = sphi 0, %s86
    %s88 = sphi 0, %s86
    %s89 = sphi 0, %s88
    %s103 = sphi 0, %s89
    %s109 = sphi 0, %s111
    %s112 = sphi 0, %s109
    %s113 = sphi 0, %s112
    %s129 = sphi 0, %s113
  $region4: #{_lambda_.19} parent=0 // loop_header_branch
    %13 = sbr.rel (%p11) target = $region8
  $region5: #{_lambda_.19} parent=0 // loop_body
    %s15 = ssub.s32 %s10, 1
    %s16 = ssub.s32 %s10, 2
    %s17 = sadd.s32 %s10, 1
    %s18 = ssub.s32 %s10, %s17
    %p19 = scmp.eq.s32.totalorder %s18, 0
    %s21 = sadd.s32 %s20, 1
    %s22 = scalar_select %p19, %s20, %s21
    %p25 = pneg %p19
    %p26 = scmp.eq.s32.totalorder %s10, 1
    %p27 = por %p25, %p26
    %p28 = scmp.ne.s32.totalorder %s20, %s23
    %p29 = scmp.eq.s32.totalorder %s10, 0
    %p30 = por %p28, %p29
    %p31 = scmp.ne.s32.totalorder %s20, %s23
    %p32 = scmp.eq.s32.totalorder %s15, 1
    %p33 = por %p31, %p32
    %p34 = scmp.ne.s32.totalorder %s23, %s24
    %p35 = scmp.eq.s32.totalorder %s15, 0
    %p36 = por %p34, %p35
    %p37 = scmp.ne.s32.totalorder %s23, %s24
    %p38 = scmp.eq.s32.totalorder %s16, 1
    %p39 = por %p37, %p38
    %p41 = scmp.ne.s32.totalorder %s24, %s40
    %p42 = scmp.eq.s32.totalorder %s16, 0
    %p43 = por %p41, %p42
    %s45 = sadd.s32 %s44, 1
    %p48 = scmp.eq.s32.totalorder %s10, 1
    %p49 = scmp.ne.s32.totalorder %s44, %s46
    %p50 = scmp.eq.s32.totalorder %s10, 0
    %p51 = por %p49, %p50
    %p52 = scmp.ne.s32.totalorder %s44, %s46
    %p53 = scmp.eq.s32.totalorder %s15, 1
    %p54 = por %p52, %p53
    %p55 = scmp.ne.s32.totalorder %s46, %s47
    %p56 = scmp.eq.s32.totalorder %s15, 0
    %p57 = por %p55, %p56
    %p58 = scmp.ne.s32.totalorder %s46, %s47
    %p59 = scmp.eq.s32.totalorder %s16, 1
    %p60 = por %p58, %p59
    %p62 = scmp.ne.s32.totalorder %s47, %s61
    %p63 = scmp.eq.s32.totalorder %s16, 0
    %p64 = por %p62, %p63
    %s66 = sadd.s32 %s65, 1
    %p69 = scmp.eq.s32.totalorder %s10, 1
    %p70 = scmp.ne.s32.totalorder %s65, %s67
    %p71 = scmp.eq.s32.totalorder %s10, 0
    %p72 = por %p70, %p71
    %p73 = scmp.ne.s32.totalorder %s65, %s67
    %p74 = scmp.eq.s32.totalorder %s15, 1
    %p75 = por %p73, %p74
    %p76 = scmp.ne.s32.totalorder %s67, %s68
    %p77 = scmp.eq.s32.totalorder %s15, 0
    %p78 = por %p76, %p77
    %p79 = scmp.ne.s32.totalorder %s67, %s68
    %p80 = scmp.eq.s32.totalorder %s16, 1
    %p81 = por %p79, %p80
    %p83 = scmp.ne.s32.totalorder %s68, %s82
    %p84 = scmp.eq.s32.totalorder %s16, 0
    %p85 = por %p83, %p84
    %s87 = sadd.s32 %s86, 1
    %p90 = scmp.eq.s32.totalorder %s10, 1
    %p91 = scmp.ne.s32.totalorder %s86, %s88
    %p92 = scmp.eq.s32.totalorder %s10, 0
    %p93 = por %p91, %p92
    %p94 = scmp.ne.s32.totalorder %s86, %s88
    %p95 = scmp.eq.s32.totalorder %s15, 1
    %p96 = por %p94, %p95
    %p97 = scmp.ne.s32.totalorder %s88, %s89
    %p98 = scmp.eq.s32.totalorder %s15, 0
    %p99 = por %p97, %p98
    %p100 = scmp.ne.s32.totalorder %s88, %s89
    %p101 = scmp.eq.s32.totalorder %s16, 1
    %p102 = por %p100, %p101
    %p104 = scmp.ne.s32.totalorder %s89, %s103
    %p105 = scmp.eq.s32.totalorder %s16, 0
    %p106 = por %p104, %p105
    %s107 = ssub.s32 %s10, %s17
    %p108 = scmp.eq.s32.totalorder %s107, 0
    %s110 = sadd.s32 %s109, 1
    %s111 = scalar_select %p108, %s109, %s110
    %p114 = pneg %p108
    %p115 = scmp.eq.s32.totalorder %s10, 1
    %p116 = por %p114, %p115
    %p117 = scmp.ne.s32.totalorder %s109, %s112
    %p118 = scmp.eq.s32.totalorder %s10, 0
    %p119 = por %p117, %p118
    %p120 = scmp.ne.s32.totalorder %s109, %s112
    %p121 = scmp.eq.s32.totalorder %s15, 1
    %p122 = por %p120, %p121
    %p123 = scmp.ne.s32.totalorder %s112, %s113
    %p124 = scmp.eq.s32.totalorder %s15, 0
    %p125 = por %p123, %p124
    %p126 = scmp.ne.s32.totalorder %s112, %s113
    %p127 = scmp.eq.s32.totalorder %s16, 1
    %p128 = por %p126, %p127
    %p130 = scmp.ne.s32.totalorder %s113, %s129
    %p131 = scmp.eq.s32.totalorder %s16, 0
    %p132 = por %p130, %p131
    %p133 = scmp.le.s32.totalorder 1, %s10
    %p134 = scmp.lt.s32.totalorder %s10, 3
    %p135 = pnand %p133, %p134
    %p136 = pneg %p135
    // Predicated region
    $region9: #{_lambda_.19} parent=5 // pred_check
      _
    $region10: #{_lambda_.19} parent=5 // pred_check_branch
      %138 = sbr.rel (%p135) target = $region12
    $region11: #{_lambda_.19} parent=5 // pred_region
      %s139 = ssub.s32 %s10, 1
      // Predicated region
      $region13: #{_lambda_.19} parent=11 // pred_check
        %p140 = pneg %p57
      $region14: #{_lambda_.19} parent=11 // pred_check_branch
        %142 = sbr.rel (%p140) target = $region16
      $region15: #{_lambda_.19} parent=11 // pred_region
        _
      $region16: #{_lambda_.19} parent=11 // pred_fallthru
        _
      // Predicated region
      $region17: #{_lambda_.19} parent=11 // pred_check
        %p143 = pneg %p78
      $region18: #{_lambda_.19} parent=11 // pred_check_branch
        %145 = sbr.rel (%p143) target = $region20
      $region19: #{_lambda_.19} parent=11 // pred_region
        _
      $region20: #{_lambda_.19} parent=11 // pred_fallthru
        _
      // Predicated region
      $region21: #{_lambda_.19} parent=11 // pred_check
        %p146 = pneg %p99
      $region22: #{_lambda_.19} parent=11 // pred_check_branch
        %148 = sbr.rel (%p146) target = $region24
      $region23: #{_lambda_.19} parent=11 // pred_region
        _
      $region24: #{_lambda_.19} parent=11 // pred_fallthru
        _
    $region12: #{_lambda_.19} parent=5 // pred_fallthru
      _
    %p149 = scmp.lt.s32.totalorder %s10, 2
    // Predicated region
    $region25: #{_lambda_.19} parent=5 // pred_check
      %p150 = pneg %p149
    $region26: #{_lambda_.19} parent=5 // pred_check_branch
      %152 = sbr.rel (%p150) target = $region28
    $region27: #{_lambda_.19} parent=5 // pred_region
      // Predicated region
      $region29: #{_lambda_.19} parent=27 // pred_check
        %p153 = pneg %p30
      $region30: #{_lambda_.19} parent=27 // pred_check_branch
        %155 = sbr.rel (%p153) target = $region32
      $region31: #{_lambda_.19} parent=27 // pred_region
        %s156 = smul.u32 64, %s10
        %p157 = scmp.lt.s32.totalorder %s156, 127
        %s158 = scalar_select %p157, %s156, 127
        %s159 = smul.addr %s158, 4
        %s160 = scalar_lea.vmem %s0, %s159
        %s161 = smul.u32 64, %s10
      $region32: #{_lambda_.19} parent=27 // pred_fallthru
        _
    $region28: #{_lambda_.19} parent=5 // pred_fallthru
      _
    %p162 = scmp.le.s32.totalorder 1, %s10
    %p163 = scmp.lt.s32.totalorder %s10, 3
    %p164 = pnand %p162, %p163
    %p165 = pneg %p164
    // Predicated region
    $region33: #{_lambda_.19} parent=5 // pred_check
      _
    $region34: #{_lambda_.19} parent=5 // pred_check_branch
      %167 = sbr.rel (%p164) target = $region36
    $region35: #{_lambda_.19} parent=5 // pred_region
      %s168 = ssub.s32 %s10, 1
      %s169 = smul.u32 64, %s15
      %p170 = scmp.lt.s32.totalorder %s169, 127
      %s171 = scalar_select %p170, %s169, 127
      %s172 = smul.addr %s171, 4
      %s173 = scalar_lea.vmem %s0, %s172
      %p174 = pneg %p36
      %p175 = pneg %p33
      %p176 = pneg %p57
      %p177 = pneg %p54
      %p178 = pneg %p78
      %p179 = pneg %p75
      %p180 = pneg %p99
      %p181 = pneg %p96
      %p182 = pneg %p125
      %p183 = pneg %p122
      %s184 = smul.u32 64, %s15
      %p185 = scmp.lt.s32.totalorder %s184, 127
      %s186 = scalar_select %p185, %s184, 127
      %s187 = smul.addr %s186, 4
      %s188 = scalar_lea.vmem %s4, %s187
      %s189 = smul.u32 64, %s15
      %p190 = scmp.lt.s32.totalorder %s189, 127
      %s191 = scalar_select %p190, %s189, 127
      %s192 = smul.addr %s191, 4
      %s193 = scalar_lea.vmem %s0, %s192
      %s194 = smul.u32 64, %s15
      %s195 = smul.u32 64, %s15
      %p196 = scmp.lt.s32.totalorder %s195, 127
      %s197 = scalar_select %p196, %s195, 127
      %s198 = smul.addr %s197, 4
      %s199 = scalar_lea.vmem %s4, %s198
      %s200 = smul.u32 64, %s15
      %v202 = vld [vmem:[%s193] sm:$0xf]
      %v203 = vld [vmem:[%s193 + $0x4] sm:$0xf]
      %v204 = vld [vmem:[%s193 + $0x8] sm:$0xf]
      %v205 = vld [vmem:[%s193 + $0xc] sm:$0xf]
      %v206 = vld [vmem:[%s193 + $0x10] sm:$0xf]
      %v207 = vld [vmem:[%s193 + $0x14] sm:$0xf]
      %v208 = vld [vmem:[%s193 + $0x18] sm:$0xf]
      %v209 = vld [vmem:[%s193 + $0x1c] sm:$0xf]
      %v210 = vld [vmem:[%s193 + $0x20] sm:$0xf]
      %v211 = vld [vmem:[%s193 + $0x24] sm:$0xf]
      %v212 = vld [vmem:[%s193 + $0x28] sm:$0xf]
      %v213 = vld [vmem:[%s193 + $0x2c] sm:$0xf]
      %v214 = vld [vmem:[%s193 + $0x30] sm:$0xf]
      %v215 = vld [vmem:[%s193 + $0x34] sm:$0xf]
      %v216 = vld [vmem:[%s193 + $0x38] sm:$0xf]
      %v217 = vld [vmem:[%s193 + $0x3c] sm:$0xf]
      %v218 = vld [vmem:[%s193 + $0x40] sm:$0xf]
      %v219 = vld [vmem:[%s193 + $0x44] sm:$0xf]
      %v220 = vld [vmem:[%s193 + $0x48] sm:$0xf]
      %v221 = vld [vmem:[%s193 + $0x4c] sm:$0xf]
      %v222 = vld [vmem:[%s193 + $0x50] sm:$0xf]
      %v223 = vld [vmem:[%s193 + $0x54] sm:$0xf]
      %v224 = vld [vmem:[%s193 + $0x58] sm:$0xf]
      %v225 = vld [vmem:[%s193 + $0x5c] sm:$0xf]
      %v226 = vld [vmem:[%s193 + $0x60] sm:$0xf]
      %v227 = vld [vmem:[%s193 + $0x64] sm:$0xf]
      %v228 = vld [vmem:[%s193 + $0x68] sm:$0xf]
      %v229 = vld [vmem:[%s193 + $0x6c] sm:$0xf]
      %v230 = vld [vmem:[%s193 + $0x70] sm:$0xf]
      %v231 = vld [vmem:[%s193 + $0x74] sm:$0xf]
      %v232 = vld [vmem:[%s193 + $0x78] sm:$0xf]
      %v233 = vld [vmem:[%s193 + $0x7c] sm:$0xf]
      %v234 = vld [vmem:[%s193 + $0x80] sm:$0xf]
      %v235 = vld [vmem:[%s193 + $0x84] sm:$0xf]
      %v236 = vld [vmem:[%s193 + $0x88] sm:$0xf]
      %v237 = vld [vmem:[%s193 + $0x8c] sm:$0xf]
      %v238 = vld [vmem:[%s193 + $0x90] sm:$0xf]
      %v239 = vld [vmem:[%s193 + $0x94] sm:$0xf]
      %v240 = vld [vmem:[%s193 + $0x98] sm:$0xf]
      %v241 = vld [vmem:[%s193 + $0x9c] sm:$0xf]
      %v242 = vld [vmem:[%s193 + $0xa0] sm:$0xf]
      %v243 = vld [vmem:[%s193 + $0xa4] sm:$0xf]
      %v244 = vld [vmem:[%s193 + $0xa8] sm:$0xf]
      %v245 = vld [vmem:[%s193 + $0xac] sm:$0xf]
      %v246 = vld [vmem:[%s193 + $0xb0] sm:$0xf]
      %v247 = vld [vmem:[%s193 + $0xb4] sm:$0xf]
      %v248 = vld [vmem:[%s193 + $0xb8] sm:$0xf]
      %v249 = vld [vmem:[%s193 + $0xbc] sm:$0xf]
      %v250 = vld [vmem:[%s193 + $0xc0] sm:$0xf]
      %v251 = vld [vmem:[%s193 + $0xc4] sm:$0xf]
      %v252 = vld [vmem:[%s193 + $0xc8] sm:$0xf]
      %v253 = vld [vmem:[%s193 + $0xcc] sm:$0xf]
      %v254 = vld [vmem:[%s193 + $0xd0] sm:$0xf]
      %v255 = vld [vmem:[%s193 + $0xd4] sm:$0xf]
      %v256 = vld [vmem:[%s193 + $0xd8] sm:$0xf]
      %v257 = vld [vmem:[%s193 + $0xdc] sm:$0xf]
      %v258 = vld [vmem:[%s193 + $0xe0] sm:$0xf]
      %v259 = vld [vmem:[%s193 + $0xe4] sm:$0xf]
      %v260 = vld [vmem:[%s193 + $0xe8] sm:$0xf]
      %v261 = vld [vmem:[%s193 + $0xec] sm:$0xf]
      %v262 = vld [vmem:[%s193 + $0xf0] sm:$0xf]
      %v263 = vld [vmem:[%s193 + $0xf4] sm:$0xf]
      %v264 = vld [vmem:[%s193 + $0xf8] sm:$0xf]
      %v265 = vld [vmem:[%s193 + $0xfc] sm:$0xf]
      %v266 = vld [vmem:[%s1] sm:$0xf]
      %v267 = vld [vmem:[%s1 + $0x4] sm:$0x1]
      %v332 = vunpack.c.l.b16 %v202
      %v333 = vunpack.c.l.b16 %v203
      %v334 = vunpack.c.l.b16 %v204
      %v335 = vunpack.c.l.b16 %v205
      %v336 = vunpack.c.l.b16 %v206
      %v337 = vunpack.c.l.b16 %v207
      %v338 = vunpack.c.l.b16 %v208
      %v339 = vunpack.c.l.b16 %v209
      %v340 = vunpack.c.l.b16 %v210
      %v341 = vunpack.c.l.b16 %v211
      %v342 = vunpack.c.l.b16 %v212
      %v343 = vunpack.c.l.b16 %v213
      %v344 = vunpack.c.l.b16 %v214
      %v345 = vunpack.c.l.b16 %v215
      %v346 = vunpack.c.l.b16 %v216
      %v347 = vunpack.c.l.b16 %v217
      %v348 = vunpack.c.l.b16 %v218
      %v349 = vunpack.c.l.b16 %v219
      %v350 = vunpack.c.l.b16 %v220
      %v351 = vunpack.c.l.b16 %v221
      %v352 = vunpack.c.l.b16 %v222
      %v353 = vunpack.c.l.b16 %v223
      %v354 = vunpack.c.l.b16 %v224
      %v355 = vunpack.c.l.b16 %v225
      %v356 = vunpack.c.l.b16 %v226
      %v357 = vunpack.c.l.b16 %v227
      %v358 = vunpack.c.l.b16 %v228
      %v359 = vunpack.c.l.b16 %v229
      %v360 = vunpack.c.l.b16 %v230
      %v361 = vunpack.c.l.b16 %v231
      %v362 = vunpack.c.l.b16 %v232
      %v363 = vunpack.c.l.b16 %v233
      %v364 = vunpack.c.l.b16 %v234
      %v365 = vunpack.c.l.b16 %v235
      %v366 = vunpack.c.l.b16 %v236
      %v367 = vunpack.c.l.b16 %v237
      %v368 = vunpack.c.l.b16 %v238
      %v369 = vunpack.c.l.b16 %v239
      %v370 = vunpack.c.l.b16 %v240
      %v371 = vunpack.c.l.b16 %v241
      %v372 = vunpack.c.l.b16 %v242
      %v373 = vunpack.c.l.b16 %v243
      %v374 = vunpack.c.l.b16 %v244
      %v375 = vunpack.c.l.b16 %v245
      %v376 = vunpack.c.l.b16 %v246
      %v377 = vunpack.c.l.b16 %v247
      %v378 = vunpack.c.l.b16 %v248
      %v379 = vunpack.c.l.b16 %v249
      %v380 = vunpack.c.l.b16 %v250
      %v381 = vunpack.c.l.b16 %v251
      %v382 = vunpack.c.l.b16 %v252
      %v383 = vunpack.c.l.b16 %v253
      %v384 = vunpack.c.l.b16 %v254
      %v385 = vunpack.c.l.b16 %v255
      %v386 = vunpack.c.l.b16 %v256
      %v387 = vunpack.c.l.b16 %v257
      %v388 = vunpack.c.l.b16 %v258
      %v389 = vunpack.c.l.b16 %v259
      %v390 = vunpack.c.l.b16 %v260
      %v391 = vunpack.c.l.b16 %v261
      %v392 = vunpack.c.l.b16 %v262
      %v393 = vunpack.c.l.b16 %v263
      %v394 = vunpack.c.l.b16 %v264
      %v395 = vunpack.c.l.b16 %v265
      %v396 = vpack.c.b16 %v333, %v332
      %v397 = vpack.c.b16 %v335, %v334
      %v398 = vpack.c.b16 %v337, %v336
      %v399 = vpack.c.b16 %v339, %v338
      %v400 = vpack.c.b16 %v341, %v340
      %v401 = vpack.c.b16 %v343, %v342
      %v402 = vpack.c.b16 %v345, %v344
      %v403 = vpack.c.b16 %v347, %v346
      %v404 = vpack.c.b16 %v349, %v348
      %v405 = vpack.c.b16 %v351, %v350
      %v406 = vpack.c.b16 %v353, %v352
      %v407 = vpack.c.b16 %v355, %v354
      %v408 = vpack.c.b16 %v357, %v356
      %v409 = vpack.c.b16 %v359, %v358
      %v410 = vpack.c.b16 %v361, %v360
      %v411 = vpack.c.b16 %v363, %v362
      %v412 = vpack.c.b16 %v365, %v364
      %v413 = vpack.c.b16 %v367, %v366
      %v414 = vpack.c.b16 %v369, %v368
      %v415 = vpack.c.b16 %v371, %v370
      %v416 = vpack.c.b16 %v373, %v372
      %v417 = vpack.c.b16 %v375, %v374
      %v418 = vpack.c.b16 %v377, %v376
      %v419 = vpack.c.b16 %v379, %v378
      %v420 = vpack.c.b16 %v381, %v380
      %v421 = vpack.c.b16 %v383, %v382
      %v422 = vpack.c.b16 %v385, %v384
      %v423 = vpack.c.b16 %v387, %v386
      %v424 = vpack.c.b16 %v389, %v388
      %v425 = vpack.c.b16 %v391, %v390
      %v426 = vpack.c.b16 %v393, %v392
      %v427 = vpack.c.b16 %v395, %v394
      %v430 = vunpack.c.l.b16 %v266
      %v431 = vunpack.c.l.b16 %v267
      %v432 = vpack.c.b16 %v431, %v430
      %vm433 = vcmask 72704
      %v435 = vsel %vm433, %v396, 0
      %v438 = vsel %vm433, %v397, 0
      %v441 = vsel %vm433, %v398, 0
      %v444 = vsel %vm433, %v399, 0
      %v447 = vsel %vm433, %v400, 0
      %v450 = vsel %vm433, %v401, 0
      %v453 = vsel %vm433, %v402, 0
      %v456 = vsel %vm433, %v403, 0
      %v459 = vsel %vm433, %v404, 0
      %v462 = vsel %vm433, %v405, 0
      %v465 = vsel %vm433, %v406, 0
      %v468 = vsel %vm433, %v407, 0
      %v471 = vsel %vm433, %v408, 0
      %v474 = vsel %vm433, %v409, 0
      %v477 = vsel %vm433, %v410, 0
      %v480 = vsel %vm433, %v411, 0
      %v483 = vsel %vm433, %v412, 0
      %v486 = vsel %vm433, %v413, 0
      %v489 = vsel %vm433, %v414, 0
      %v492 = vsel %vm433, %v415, 0
      %v495 = vsel %vm433, %v416, 0
      %v498 = vsel %vm433, %v417, 0
      %v501 = vsel %vm433, %v418, 0
      %v504 = vsel %vm433, %v419, 0
      %v507 = vsel %vm433, %v420, 0
      %v510 = vsel %vm433, %v421, 0
      %v513 = vsel %vm433, %v422, 0
      %v516 = vsel %vm433, %v423, 0
      %v519 = vsel %vm433, %v424, 0
      %v522 = vsel %vm433, %v425, 0
      %v525 = vsel %vm433, %v426, 0
      %v528 = vsel %vm433, %v427, 0
      %vm530 = vcmask 1043456
      %vm531 = vcmask 1044480
      %v532 = vsel %vm530, 4294967295, 65535
      %v533 = vsel %vm531, %v532, 0
      %v535 = vand.u32 %v432, %v533
      %537 = vmatpush.bf16.msra.mxu0 0
      %538 = vmatpush.bf16.msra.mxu0 0
      %539 = vmatpush.bf16.msra.mxu0 0
      %540 = vmatpush.bf16.msra.mxu0 0
      %541 = vmatpush.bf16.msra.mxu0 0
      %542 = vmatpush.bf16.msra.mxu0 0
      %543 = vmatpush.bf16.msra.mxu0 0
      %544 = vmatpush.bf16.msra.mxu0 %v535
      %545 = vmatmul.bf16.gmra.mxu0 %v435
      %v546 = vpop.f32.mrf.mxu0
      %v547 = vadd.f32 0.0, %v546
      %v548 = vpop.f32.mrf.mxu0
      %v549 = vadd.f32 0.0, %v548
      %550 = vmatmul.bf16.gmra.mxu0 %v438
      %v551 = vpop.f32.mrf.mxu0
      %v552 = vadd.f32 0.0, %v551
      %v553 = vpop.f32.mrf.mxu0
      %v554 = vadd.f32 0.0, %v553
      %555 = vmatmul.bf16.gmra.mxu0 %v441
      %v556 = vpop.f32.mrf.mxu0
      %v557 = vadd.f32 0.0, %v556
      %v558 = vpop.f32.mrf.mxu0
      %v559 = vadd.f32 0.0, %v558
      %560 = vmatmul.bf16.gmra.mxu0 %v444
      %v561 = vpop.f32.mrf.mxu0
      %v562 = vadd.f32 0.0, %v561
      %v563 = vpop.f32.mrf.mxu0
      %v564 = vadd.f32 0.0, %v563
      %565 = vmatmul.bf16.gmra.mxu0 %v447
      %v566 = vpop.f32.mrf.mxu0
      %v567 = vadd.f32 0.0, %v566
      %v568 = vpop.f32.mrf.mxu0
      %v569 = vadd.f32 0.0, %v568
      %570 = vmatmul.bf16.gmra.mxu0 %v450
      %v571 = vpop.f32.mrf.mxu0
      %v572 = vadd.f32 0.0, %v571
      %v573 = vpop.f32.mrf.mxu0
      %v574 = vadd.f32 0.0, %v573
      %575 = vmatmul.bf16.gmra.mxu0 %v453
      %v576 = vpop.f32.mrf.mxu0
      %v577 = vadd.f32 0.0, %v576
      %v578 = vpop.f32.mrf.mxu0
      %v579 = vadd.f32 0.0, %v578
      %580 = vmatmul.bf16.gmra.mxu0 %v456
      %v581 = vpop.f32.mrf.mxu0
      %v582 = vadd.f32 0.0, %v581
      %v583 = vpop.f32.mrf.mxu0
      %v584 = vadd.f32 0.0, %v583
      %585 = vmatmul.bf16.gmra.mxu0 %v459
      %v586 = vpop.f32.mrf.mxu0
      %v587 = vadd.f32 0.0, %v586
      %v588 = vpop.f32.mrf.mxu0
      %v589 = vadd.f32 0.0, %v588
      %590 = vmatmul.bf16.gmra.mxu0 %v462
      %v591 = vpop.f32.mrf.mxu0
      %v592 = vadd.f32 0.0, %v591
      %v593 = vpop.f32.mrf.mxu0
      %v594 = vadd.f32 0.0, %v593
      %595 = vmatmul.bf16.gmra.mxu0 %v465
      %v596 = vpop.f32.mrf.mxu0
      %v597 = vadd.f32 0.0, %v596
      %v598 = vpop.f32.mrf.mxu0
      %v599 = vadd.f32 0.0, %v598
      %600 = vmatmul.bf16.gmra.mxu0 %v468
      %v601 = vpop.f32.mrf.mxu0
      %v602 = vadd.f32 0.0, %v601
      %v603 = vpop.f32.mrf.mxu0
      %v604 = vadd.f32 0.0, %v603
      %605 = vmatmul.bf16.gmra.mxu0 %v471
      %v606 = vpop.f32.mrf.mxu0
      %v607 = vadd.f32 0.0, %v606
      %v608 = vpop.f32.mrf.mxu0
      %v609 = vadd.f32 0.0, %v608
      %610 = vmatmul.bf16.gmra.mxu0 %v474
      %v611 = vpop.f32.mrf.mxu0
      %v612 = vadd.f32 0.0, %v611
      %v613 = vpop.f32.mrf.mxu0
      %v614 = vadd.f32 0.0, %v613
      %615 = vmatmul.bf16.gmra.mxu0 %v477
      %v616 = vpop.f32.mrf.mxu0
      %v617 = vadd.f32 0.0, %v616
      %v618 = vpop.f32.mrf.mxu0
      %v619 = vadd.f32 0.0, %v618
      %620 = vmatmul.bf16.gmra.mxu0 %v480
      %v621 = vpop.f32.mrf.mxu0
      %v622 = vadd.f32 0.0, %v621
      %v623 = vpop.f32.mrf.mxu0
      %v624 = vadd.f32 0.0, %v623
      %625 = vmatmul.bf16.gmra.mxu0 %v483
      %v626 = vpop.f32.mrf.mxu0
      %v627 = vadd.f32 0.0, %v626
      %v628 = vpop.f32.mrf.mxu0
      %v629 = vadd.f32 0.0, %v628
      %630 = vmatmul.bf16.gmra.mxu0 %v486
      %v631 = vpop.f32.mrf.mxu0
      %v632 = vadd.f32 0.0, %v631
      %v633 = vpop.f32.mrf.mxu0
      %v634 = vadd.f32 0.0, %v633
      %635 = vmatmul.bf16.gmra.mxu0 %v489
      %v636 = vpop.f32.mrf.mxu0
      %v637 = vadd.f32 0.0, %v636
      %v638 = vpop.f32.mrf.mxu0
      %v639 = vadd.f32 0.0, %v638
      %640 = vmatmul.bf16.gmra.mxu0 %v492
      %v641 = vpop.f32.mrf.mxu0
      %v642 = vadd.f32 0.0, %v641
      %v643 = vpop.f32.mrf.mxu0
      %v644 = vadd.f32 0.0, %v643
      %645 = vmatmul.bf16.gmra.mxu0 %v495
      %v646 = vpop.f32.mrf.mxu0
      %v647 = vadd.f32 0.0, %v646
      %v648 = vpop.f32.mrf.mxu0
      %v649 = vadd.f32 0.0, %v648
      %650 = vmatmul.bf16.gmra.mxu0 %v498
      %v651 = vpop.f32.mrf.mxu0
      %v652 = vadd.f32 0.0, %v651
      %v653 = vpop.f32.mrf.mxu0
      %v654 = vadd.f32 0.0, %v653
      %655 = vmatmul.bf16.gmra.mxu0 %v501
      %v656 = vpop.f32.mrf.mxu0
      %v657 = vadd.f32 0.0, %v656
      %v658 = vpop.f32.mrf.mxu0
      %v659 = vadd.f32 0.0, %v658
      %660 = vmatmul.bf16.gmra.mxu0 %v504
      %v661 = vpop.f32.mrf.mxu0
      %v662 = vadd.f32 0.0, %v661
      %v663 = vpop.f32.mrf.mxu0
      %v664 = vadd.f32 0.0, %v663
      %665 = vmatmul.bf16.gmra.mxu0 %v507
      %v666 = vpop.f32.mrf.mxu0
      %v667 = vadd.f32 0.0, %v666
      %v668 = vpop.f32.mrf.mxu0
      %v669 = vadd.f32 0.0, %v668
      %670 = vmatmul.bf16.gmra.mxu0 %v510
      %v671 = vpop.f32.mrf.mxu0
      %v672 = vadd.f32 0.0, %v671
      %v673 = vpop.f32.mrf.mxu0
      %v674 = vadd.f32 0.0, %v673
      %675 = vmatmul.bf16.gmra.mxu0 %v513
      %v676 = vpop.f32.mrf.mxu0
      %v677 = vadd.f32 0.0, %v676
      %v678 = vpop.f32.mrf.mxu0
      %v679 = vadd.f32 0.0, %v678
      %680 = vmatmul.bf16.gmra.mxu0 %v516
      %v681 = vpop.f32.mrf.mxu0
      %v682 = vadd.f32 0.0, %v681
      %v683 = vpop.f32.mrf.mxu0
      %v684 = vadd.f32 0.0, %v683
      %685 = vmatmul.bf16.gmra.mxu0 %v519
      %v686 = vpop.f32.mrf.mxu0
      %v687 = vadd.f32 0.0, %v686
      %v688 = vpop.f32.mrf.mxu0
      %v689 = vadd.f32 0.0, %v688
      %690 = vmatmul.bf16.gmra.mxu0 %v522
      %v691 = vpop.f32.mrf.mxu0
      %v692 = vadd.f32 0.0, %v691
      %v693 = vpop.f32.mrf.mxu0
      %v694 = vadd.f32 0.0, %v693
      %695 = vmatmul.bf16.gmra.mxu0 %v525
      %v696 = vpop.f32.mrf.mxu0
      %v697 = vadd.f32 0.0, %v696
      %v698 = vpop.f32.mrf.mxu0
      %v699 = vadd.f32 0.0, %v698
      %700 = vmatmul.bf16.gmra.mxu0 %v528
      %v701 = vpop.f32.mrf.mxu0
      %v702 = vadd.f32 0.0, %v701
      %v703 = vpop.f32.mrf.mxu0
      %v704 = vadd.f32 0.0, %v703
      %705 = vdwg.mxu0
      %v706 = vld [vmem:[%s2] sm:$0x1]
      %v708 = vperm.slane %v706, 0
      %v710 = vmul.f32 %v547, %v708
      %v711 = vmul.f32 %v549, %v708
      %v712 = vmul.f32 %v552, %v708
      %v713 = vmul.f32 %v554, %v708
      %v714 = vmul.f32 %v557, %v708
      %v715 = vmul.f32 %v559, %v708
      %v716 = vmul.f32 %v562, %v708
      %v717 = vmul.f32 %v564, %v708
      %v718 = vmul.f32 %v567, %v708
      %v719 = vmul.f32 %v569, %v708
      %v720 = vmul.f32 %v572, %v708
      %v721 = vmul.f32 %v574, %v708
      %v722 = vmul.f32 %v577, %v708
      %v723 = vmul.f32 %v579, %v708
      %v724 = vmul.f32 %v582, %v708
      %v725 = vmul.f32 %v584, %v708
      %v726 = vmul.f32 %v587, %v708
      %v727 = vmul.f32 %v589, %v708
      %v728 = vmul.f32 %v592, %v708
      %v729 = vmul.f32 %v594, %v708
      %v730 = vmul.f32 %v597, %v708
      %v731 = vmul.f32 %v599, %v708
      %v732 = vmul.f32 %v602, %v708
      %v733 = vmul.f32 %v604, %v708
      %v734 = vmul.f32 %v607, %v708
      %v735 = vmul.f32 %v609, %v708
      %v736 = vmul.f32 %v612, %v708
      %v737 = vmul.f32 %v614, %v708
      %v738 = vmul.f32 %v617, %v708
      %v739 = vmul.f32 %v619, %v708
      %v740 = vmul.f32 %v622, %v708
      %v741 = vmul.f32 %v624, %v708
      %v742 = vmul.f32 %v627, %v708
      %v743 = vmul.f32 %v629, %v708
      %v744 = vmul.f32 %v632, %v708
      %v745 = vmul.f32 %v634, %v708
      %v746 = vmul.f32 %v637, %v708
      %v747 = vmul.f32 %v639, %v708
      %v748 = vmul.f32 %v642, %v708
      %v749 = vmul.f32 %v644, %v708
      %v750 = vmul.f32 %v647, %v708
      %v751 = vmul.f32 %v649, %v708
      %v752 = vmul.f32 %v652, %v708
      %v753 = vmul.f32 %v654, %v708
      %v754 = vmul.f32 %v657, %v708
      %v755 = vmul.f32 %v659, %v708
      %v756 = vmul.f32 %v662, %v708
      %v757 = vmul.f32 %v664, %v708
      %v758 = vmul.f32 %v667, %v708
      %v759 = vmul.f32 %v669, %v708
      %v760 = vmul.f32 %v672, %v708
      %v761 = vmul.f32 %v674, %v708
      %v762 = vmul.f32 %v677, %v708
      %v763 = vmul.f32 %v679, %v708
      %v764 = vmul.f32 %v682, %v708
      %v765 = vmul.f32 %v684, %v708
      %v766 = vmul.f32 %v687, %v708
      %v767 = vmul.f32 %v689, %v708
      %v768 = vmul.f32 %v692, %v708
      %v769 = vmul.f32 %v694, %v708
      %v770 = vmul.f32 %v697, %v708
      %v771 = vmul.f32 %v699, %v708
      %v772 = vmul.f32 %v702, %v708
      %v773 = vmul.f32 %v704, %v708
      %v774 = vld [vmem:[%s3] sm:$0x1]
      %v776 = vperm.slane %v774, 0
      %v778 = vadd.f32 %v710, %v776
      %v779 = vadd.f32 %v711, %v776
      %v780 = vadd.f32 %v712, %v776
      %v781 = vadd.f32 %v713, %v776
      %v782 = vadd.f32 %v714, %v776
      %v783 = vadd.f32 %v715, %v776
      %v784 = vadd.f32 %v716, %v776
      %v785 = vadd.f32 %v717, %v776
      %v786 = vadd.f32 %v718, %v776
      %v787 = vadd.f32 %v719, %v776
      %v788 = vadd.f32 %v720, %v776
      %v789 = vadd.f32 %v721, %v776
      %v790 = vadd.f32 %v722, %v776
      %v791 = vadd.f32 %v723, %v776
      %v792 = vadd.f32 %v724, %v776
      %v793 = vadd.f32 %v725, %v776
      %v794 = vadd.f32 %v726, %v776
      %v795 = vadd.f32 %v727, %v776
      %v796 = vadd.f32 %v728, %v776
      %v797 = vadd.f32 %v729, %v776
      %v798 = vadd.f32 %v730, %v776
      %v799 = vadd.f32 %v731, %v776
      %v800 = vadd.f32 %v732, %v776
      %v801 = vadd.f32 %v733, %v776
      %v802 = vadd.f32 %v734, %v776
      %v803 = vadd.f32 %v735, %v776
      %v804 = vadd.f32 %v736, %v776
      %v805 = vadd.f32 %v737, %v776
      %v806 = vadd.f32 %v738, %v776
      %v807 = vadd.f32 %v739, %v776
      %v808 = vadd.f32 %v740, %v776
      %v809 = vadd.f32 %v741, %v776
      %v810 = vadd.f32 %v742, %v776
      %v811 = vadd.f32 %v743, %v776
      %v812 = vadd.f32 %v744, %v776
      %v813 = vadd.f32 %v745, %v776
      %v814 = vadd.f32 %v746, %v776
      %v815 = vadd.f32 %v747, %v776
      %v816 = vadd.f32 %v748, %v776
      %v817 = vadd.f32 %v749, %v776
      %v818 = vadd.f32 %v750, %v776
      %v819 = vadd.f32 %v751, %v776
      %v820 = vadd.f32 %v752, %v776
      %v821 = vadd.f32 %v753, %v776
      %v822 = vadd.f32 %v754, %v776
      %v823 = vadd.f32 %v755, %v776
      %v824 = vadd.f32 %v756, %v776
      %v825 = vadd.f32 %v757, %v776
      %v826 = vadd.f32 %v758, %v776
      %v827 = vadd.f32 %v759, %v776
      %v828 = vadd.f32 %v760, %v776
      %v829 = vadd.f32 %v761, %v776
      %v830 = vadd.f32 %v762, %v776
      %v831 = vadd.f32 %v763, %v776
      %v832 = vadd.f32 %v764, %v776
      %v833 = vadd.f32 %v765, %v776
      %v834 = vadd.f32 %v766, %v776
      %v835 = vadd.f32 %v767, %v776
      %v836 = vadd.f32 %v768, %v776
      %v837 = vadd.f32 %v769, %v776
      %v838 = vadd.f32 %v770, %v776
      %v839 = vadd.f32 %v771, %v776
      %v840 = vadd.f32 %v772, %v776
      %v841 = vadd.f32 %v773, %v776
      %v842 = vmax.f32 %v778, 0.0
      %v843 = vmax.f32 %v779, 0.0
      %v844 = vmax.f32 %v780, 0.0
      %v845 = vmax.f32 %v781, 0.0
      %v846 = vmax.f32 %v782, 0.0
      %v847 = vmax.f32 %v783, 0.0
      %v848 = vmax.f32 %v784, 0.0
      %v849 = vmax.f32 %v785, 0.0
      %v850 = vmax.f32 %v786, 0.0
      %v851 = vmax.f32 %v787, 0.0
      %v852 = vmax.f32 %v788, 0.0
      %v853 = vmax.f32 %v789, 0.0
      %v854 = vmax.f32 %v790, 0.0
      %v855 = vmax.f32 %v791, 0.0
      %v856 = vmax.f32 %v792, 0.0
      %v857 = vmax.f32 %v793, 0.0
      %v858 = vmax.f32 %v794, 0.0
      %v859 = vmax.f32 %v795, 0.0
      %v860 = vmax.f32 %v796, 0.0
      %v861 = vmax.f32 %v797, 0.0
      %v862 = vmax.f32 %v798, 0.0
      %v863 = vmax.f32 %v799, 0.0
      %v864 = vmax.f32 %v800, 0.0
      %v865 = vmax.f32 %v801, 0.0
      %v866 = vmax.f32 %v802, 0.0
      %v867 = vmax.f32 %v803, 0.0
      %v868 = vmax.f32 %v804, 0.0
      %v869 = vmax.f32 %v805, 0.0
      %v870 = vmax.f32 %v806, 0.0
      %v871 = vmax.f32 %v807, 0.0
      %v872 = vmax.f32 %v808, 0.0
      %v873 = vmax.f32 %v809, 0.0
      %v874 = vmax.f32 %v810, 0.0
      %v875 = vmax.f32 %v811, 0.0
      %v876 = vmax.f32 %v812, 0.0
      %v877 = vmax.f32 %v813, 0.0
      %v878 = vmax.f32 %v814, 0.0
      %v879 = vmax.f32 %v815, 0.0
      %v880 = vmax.f32 %v816, 0.0
      %v881 = vmax.f32 %v817, 0.0
      %v882 = vmax.f32 %v818, 0.0
      %v883 = vmax.f32 %v819, 0.0
      %v884 = vmax.f32 %v820, 0.0
      %v885 = vmax.f32 %v821, 0.0
      %v886 = vmax.f32 %v822, 0.0
      %v887 = vmax.f32 %v823, 0.0
      %v888 = vmax.f32 %v824, 0.0
      %v889 = vmax.f32 %v825, 0.0
      %v890 = vmax.f32 %v826, 0.0
      %v891 = vmax.f32 %v827, 0.0
      %v892 = vmax.f32 %v828, 0.0
      %v893 = vmax.f32 %v829, 0.0
      %v894 = vmax.f32 %v830, 0.0
      %v895 = vmax.f32 %v831, 0.0
      %v896 = vmax.f32 %v832, 0.0
      %v897 = vmax.f32 %v833, 0.0
      %v898 = vmax.f32 %v834, 0.0
      %v899 = vmax.f32 %v835, 0.0
      %v900 = vmax.f32 %v836, 0.0
      %v901 = vmax.f32 %v837, 0.0
      %v902 = vmax.f32 %v838, 0.0
      %v903 = vmax.f32 %v839, 0.0
      %v904 = vmax.f32 %v840, 0.0
      %v905 = vmax.f32 %v841, 0.0
      %v906 = vpack.c.bf16 %v842, %v842
      %v907 = vpack.c.bf16 %v843, %v843
      %v908 = vpack.c.bf16 %v844, %v844
      %v909 = vpack.c.bf16 %v845, %v845
      %v910 = vpack.c.bf16 %v846, %v846
      %v911 = vpack.c.bf16 %v847, %v847
      %v912 = vpack.c.bf16 %v848, %v848
      %v913 = vpack.c.bf16 %v849, %v849
      %v914 = vpack.c.bf16 %v850, %v850
      %v915 = vpack.c.bf16 %v851, %v851
      %v916 = vpack.c.bf16 %v852, %v852
      %v917 = vpack.c.bf16 %v853, %v853
      %v918 = vpack.c.bf16 %v854, %v854
      %v919 = vpack.c.bf16 %v855, %v855
      %v920 = vpack.c.bf16 %v856, %v856
      %v921 = vpack.c.bf16 %v857, %v857
      %v922 = vpack.c.bf16 %v858, %v858
      %v923 = vpack.c.bf16 %v859, %v859
      %v924 = vpack.c.bf16 %v860, %v860
      %v925 = vpack.c.bf16 %v861, %v861
      %v926 = vpack.c.bf16 %v862, %v862
      %v927 = vpack.c.bf16 %v863, %v863
      %v928 = vpack.c.bf16 %v864, %v864
      %v929 = vpack.c.bf16 %v865, %v865
      %v930 = vpack.c.bf16 %v866, %v866
      %v931 = vpack.c.bf16 %v867, %v867
      %v932 = vpack.c.bf16 %v868, %v868
      %v933 = vpack.c.bf16 %v869, %v869
      %v934 = vpack.c.bf16 %v870, %v870
      %v935 = vpack.c.bf16 %v871, %v871
      %v936 = vpack.c.bf16 %v872, %v872
      %v937 = vpack.c.bf16 %v873, %v873
      %v938 = vpack.c.bf16 %v874, %v874
      %v939 = vpack.c.bf16 %v875, %v875
      %v940 = vpack.c.bf16 %v876, %v876
      %v941 = vpack.c.bf16 %v877, %v877
      %v942 = vpack.c.bf16 %v878, %v878
      %v943 = vpack.c.bf16 %v879, %v879
      %v944 = vpack.c.bf16 %v880, %v880
      %v945 = vpack.c.bf16 %v881, %v881
      %v946 = vpack.c.bf16 %v882, %v882
      %v947 = vpack.c.bf16 %v883, %v883
      %v948 = vpack.c.bf16 %v884, %v884
      %v949 = vpack.c.bf16 %v885, %v885
      %v950 = vpack.c.bf16 %v886, %v886
      %v951 = vpack.c.bf16 %v887, %v887
      %v952 = vpack.c.bf16 %v888, %v888
      %v953 = vpack.c.bf16 %v889, %v889
      %v954 = vpack.c.bf16 %v890, %v890
      %v955 = vpack.c.bf16 %v891, %v891
      %v956 = vpack.c.bf16 %v892, %v892
      %v957 = vpack.c.bf16 %v893, %v893
      %v958 = vpack.c.bf16 %v894, %v894
      %v959 = vpack.c.bf16 %v895, %v895
      %v960 = vpack.c.bf16 %v896, %v896
      %v961 = vpack.c.bf16 %v897, %v897
      %v962 = vpack.c.bf16 %v898, %v898
      %v963 = vpack.c.bf16 %v899, %v899
      %v964 = vpack.c.bf16 %v900, %v900
      %v965 = vpack.c.bf16 %v901, %v901
      %v966 = vpack.c.bf16 %v902, %v902
      %v967 = vpack.c.bf16 %v903, %v903
      %v968 = vpack.c.bf16 %v904, %v904
      %v969 = vpack.c.bf16 %v905, %v905
      %vm970 = vcmask 125952
      %971 = vst.msk [vmem:[%s199] sm:$0xf] %vm970, %v906
      %972 = vst.msk [vmem:[%s199 + $0x4] sm:$0xf] %vm970, %v907
      %973 = vst.msk [vmem:[%s199 + $0x8] sm:$0xf] %vm970, %v908
      %974 = vst.msk [vmem:[%s199 + $0xc] sm:$0xf] %vm970, %v909
      %975 = vst.msk [vmem:[%s199 + $0x10] sm:$0xf] %vm970, %v910
      %976 = vst.msk [vmem:[%s199 + $0x14] sm:$0xf] %vm970, %v911
      %977 = vst.msk [vmem:[%s199 + $0x18] sm:$0xf] %vm970, %v912
      %978 = vst.msk [vmem:[%s199 + $0x1c] sm:$0xf] %vm970, %v913
      %979 = vst.msk [vmem:[%s199 + $0x20] sm:$0xf] %vm970, %v914
      %980 = vst.msk [vmem:[%s199 + $0x24] sm:$0xf] %vm970, %v915
      %981 = vst.msk [vmem:[%s199 + $0x28] sm:$0xf] %vm970, %v916
      %982 = vst.msk [vmem:[%s199 + $0x2c] sm:$0xf] %vm970, %v917
      %983 = vst.msk [vmem:[%s199 + $0x30] sm:$0xf] %vm970, %v918
      %984 = vst.msk [vmem:[%s199 + $0x34] sm:$0xf] %vm970, %v919
      %985 = vst.msk [vmem:[%s199 + $0x38] sm:$0xf] %vm970, %v920
      %986 = vst.msk [vmem:[%s199 + $0x3c] sm:$0xf] %vm970, %v921
      %987 = vst.msk [vmem:[%s199 + $0x40] sm:$0xf] %vm970, %v922
      %988 = vst.msk [vmem:[%s199 + $0x44] sm:$0xf] %vm970, %v923
      %989 = vst.msk [vmem:[%s199 + $0x48] sm:$0xf] %vm970, %v924
      %990 = vst.msk [vmem:[%s199 + $0x4c] sm:$0xf] %vm970, %v925
      %991 = vst.msk [vmem:[%s199 + $0x50] sm:$0xf] %vm970, %v926
      %992 = vst.msk [vmem:[%s199 + $0x54] sm:$0xf] %vm970, %v927
      %993 = vst.msk [vmem:[%s199 + $0x58] sm:$0xf] %vm970, %v928
      %994 = vst.msk [vmem:[%s199 + $0x5c] sm:$0xf] %vm970, %v929
      %995 = vst.msk [vmem:[%s199 + $0x60] sm:$0xf] %vm970, %v930
      %996 = vst.msk [vmem:[%s199 + $0x64] sm:$0xf] %vm970, %v931
      %997 = vst.msk [vmem:[%s199 + $0x68] sm:$0xf] %vm970, %v932
      %998 = vst.msk [vmem:[%s199 + $0x6c] sm:$0xf] %vm970, %v933
      %999 = vst.msk [vmem:[%s199 + $0x70] sm:$0xf] %vm970, %v934
      %1000 = vst.msk [vmem:[%s199 + $0x74] sm:$0xf] %vm970, %v935
      %1001 = vst.msk [vmem:[%s199 + $0x78] sm:$0xf] %vm970, %v936
      %1002 = vst.msk [vmem:[%s199 + $0x7c] sm:$0xf] %vm970, %v937
      %1003 = vst.msk [vmem:[%s199 + $0x80] sm:$0xf] %vm970, %v938
      %1004 = vst.msk [vmem:[%s199 + $0x84] sm:$0xf] %vm970, %v939
      %1005 = vst.msk [vmem:[%s199 + $0x88] sm:$0xf] %vm970, %v940
      %1006 = vst.msk [vmem:[%s199 + $0x8c] sm:$0xf] %vm970, %v941
      %1007 = vst.msk [vmem:[%s199 + $0x90] sm:$0xf] %vm970, %v942
      %1008 = vst.msk [vmem:[%s199 + $0x94] sm:$0xf] %vm970, %v943
      %1009 = vst.msk [vmem:[%s199 + $0x98] sm:$0xf] %vm970, %v944
      %1010 = vst.msk [vmem:[%s199 + $0x9c] sm:$0xf] %vm970, %v945
      %1011 = vst.msk [vmem:[%s199 + $0xa0] sm:$0xf] %vm970, %v946
      %1012 = vst.msk [vmem:[%s199 + $0xa4] sm:$0xf] %vm970, %v947
      %1013 = vst.msk [vmem:[%s199 + $0xa8] sm:$0xf] %vm970, %v948
      %1014 = vst.msk [vmem:[%s199 + $0xac] sm:$0xf] %vm970, %v949
      %1015 = vst.msk [vmem:[%s199 + $0xb0] sm:$0xf] %vm970, %v950
      %1016 = vst.msk [vmem:[%s199 + $0xb4] sm:$0xf] %vm970, %v951
      %1017 = vst.msk [vmem:[%s199 + $0xb8] sm:$0xf] %vm970, %v952
      %1018 = vst.msk [vmem:[%s199 + $0xbc] sm:$0xf] %vm970, %v953
      %1019 = vst.msk [vmem:[%s199 + $0xc0] sm:$0xf] %vm970, %v954
      %1020 = vst.msk [vmem:[%s199 + $0xc4] sm:$0xf] %vm970, %v955
      %1021 = vst.msk [vmem:[%s199 + $0xc8] sm:$0xf] %vm970, %v956
      %1022 = vst.msk [vmem:[%s199 + $0xcc] sm:$0xf] %vm970, %v957
      %1023 = vst.msk [vmem:[%s199 + $0xd0] sm:$0xf] %vm970, %v958
      %1024 = vst.msk [vmem:[%s199 + $0xd4] sm:$0xf] %vm970, %v959
      %1025 = vst.msk [vmem:[%s199 + $0xd8] sm:$0xf] %vm970, %v960
      %1026 = vst.msk [vmem:[%s199 + $0xdc] sm:$0xf] %vm970, %v961
      %1027 = vst.msk [vmem:[%s199 + $0xe0] sm:$0xf] %vm970, %v962
      %1028 = vst.msk [vmem:[%s199 + $0xe4] sm:$0xf] %vm970, %v963
      %1029 = vst.msk [vmem:[%s199 + $0xe8] sm:$0xf] %vm970, %v964
      %1030 = vst.msk [vmem:[%s199 + $0xec] sm:$0xf] %vm970, %v965
      %1031 = vst.msk [vmem:[%s199 + $0xf0] sm:$0xf] %vm970, %v966
      %1032 = vst.msk [vmem:[%s199 + $0xf4] sm:$0xf] %vm970, %v967
      %1033 = vst.msk [vmem:[%s199 + $0xf8] sm:$0xf] %vm970, %v968
      %1034 = vst.msk [vmem:[%s199 + $0xfc] sm:$0xf] %vm970, %v969
      %s1035 = smul.u32 64, %s15
      %p1036 = scmp.lt.s32.totalorder %s1035, 127
      %s1037 = scalar_select %p1036, %s1035, 127
      %s1038 = smul.addr %s1037, 4
      %s1039 = scalar_lea.vmem %s4, %s1038
      // Predicated region
      $region37: #{_lambda_.19} parent=35 // pred_check
        %p1040 = pneg %p122
      $region38: #{_lambda_.19} parent=35 // pred_check_branch
        %1042 = sbr.rel (%p1040) target = $region40
      $region39: #{_lambda_.19} parent=35 // pred_region
        %s1043 = smul.u32 64, %s15
      $region40: #{_lambda_.19} parent=35 // pred_fallthru
        _
    $region36: #{_lambda_.19} parent=5 // pred_fallthru
      _
    %p1044 = scmp.le.s32.totalorder 2, %s10
    // Predicated region
    $region41: #{_lambda_.19} parent=5 // pred_check
      %p1045 = pneg %p1044
    $region42: #{_lambda_.19} parent=5 // pred_check_branch
      %1047 = sbr.rel (%p1045) target = $region44
    $region43: #{_lambda_.19} parent=5 // pred_region
      %s1048 = ssub.s32 %s10, 2
      // Predicated region
      $region45: #{_lambda_.19} parent=43 // pred_check
        %p1049 = pneg %p128
      $region46: #{_lambda_.19} parent=43 // pred_check_branch
        %1051 = sbr.rel (%p1049) target = $region48
      $region47: #{_lambda_.19} parent=43 // pred_region
        %s1052 = smul.u32 64, %s16
        %p1053 = scmp.lt.s32.totalorder %s1052, 127
        %s1054 = scalar_select %p1053, %s1052, 127
        %s1055 = smul.addr %s1054, 4
        %s1056 = scalar_lea.vmem %s4, %s1055
      $region48: #{_lambda_.19} parent=43 // pred_fallthru
        _
    $region44: #{_lambda_.19} parent=5 // pred_fallthru
      _
  $region6: #{_lambda_.19} parent=0 // loop_footer
    %s14 = sadd.s32 1, %s10
  $region7: #{_lambda_.19} parent=0 // loop_footer_branch
    %9 = sbr.rel target = $region3
  $region8: #{_lambda_.19} parent=0 // loop_exit
    _

// kernel: _lambda_.20
$region0: #{_lambda_.20}
  #allocation0 [shape = 'u32[]', space=smem, size = 0x4, offset = 0x4, fixed_abs, tag = 'smem constant byte address 0x4 - core index']
  #allocation1 [shape = 'u32[72,128]{1,0:T(1,128)}', space=vmem, size = 0x9000, scoped, tag = 'internal scratch']
  %s0 = inlined_call_operand.vmem [shape: bf16[1024,144], index: 0, kind: input, shape index: {}]
  %s1 = inlined_call_operand.vmem [shape: bf16[144,16], index: 1, kind: input, shape index: {}]
  %s2 = inlined_call_operand.vmem [shape: f32[1,16], index: 2, kind: input, shape index: {}]
  %s3 = inlined_call_operand.vmem [shape: f32[1,16], index: 3, kind: input, shape index: {}]
  %s4 = inlined_call_operand.vmem [shape: bf16[1024,16], index: 4, kind: output, shape index: {}]
  %s5 = sld [smem:[#allocation0]]
  $region49: #{_lambda_.20} parent=0
    _
  %s7 = ssub.s32 1, %s5
  %s8 = scalar_select 0, %s7, %s5
  loop: start=0, step=1, limit=4
  $region2: #{_lambda_.20} parent=0 // loop_pre_header
    _
  $region3: #{_lambda_.20} parent=0 // loop_header
    %s10 = sphi 0, %s14
    %p11 = scmp.ge.s32.totalorder %s10, 4
    %s20 = sphi 0, %s22
    %s23 = sphi 0, %s20
    %s24 = sphi 0, %s23
    %s40 = sphi 0, %s24
    %s44 = sphi 0, %s44
    %s46 = sphi 0, %s44
    %s47 = sphi 0, %s46
    %s61 = sphi 0, %s47
    %s65 = sphi 0, %s65
    %s67 = sphi 0, %s65
    %s68 = sphi 0, %s67
    %s82 = sphi 0, %s68
    %s86 = sphi 0, %s86
    %s88 = sphi 0, %s86
    %s89 = sphi 0, %s88
    %s103 = sphi 0, %s89
    %s109 = sphi 0, %s111
    %s112 = sphi 0, %s109
    %s113 = sphi 0, %s112
    %s129 = sphi 0, %s113
  $region4: #{_lambda_.20} parent=0 // loop_header_branch
    %13 = sbr.rel (%p11) target = $region8
  $region5: #{_lambda_.20} parent=0 // loop_body
    %s15 = ssub.s32 %s10, 1
    %s16 = ssub.s32 %s10, 2
    %s17 = sadd.s32 %s10, 1
    %s18 = ssub.s32 %s10, %s17
    %p19 = scmp.eq.s32.totalorder %s18, 0
    %s21 = sadd.s32 %s20, 1
    %s22 = scalar_select %p19, %s20, %s21
    %p25 = pneg %p19
    %p26 = scmp.eq.s32.totalorder %s10, 1
    %p27 = por %p25, %p26
    %p28 = scmp.ne.s32.totalorder %s20, %s23
    %p29 = scmp.eq.s32.totalorder %s10, 0
    %p30 = por %p28, %p29
    %p31 = scmp.ne.s32.totalorder %s20, %s23
    %p32 = scmp.eq.s32.totalorder %s15, 1
    %p33 = por %p31, %p32
    %p34 = scmp.ne.s32.totalorder %s23, %s24
    %p35 = scmp.eq.s32.totalorder %s15, 0
    %p36 = por %p34, %p35
    %p37 = scmp.ne.s32.totalorder %s23, %s24
    %p38 = scmp.eq.s32.totalorder %s16, 1
    %p39 = por %p37, %p38
    %p41 = scmp.ne.s32.totalorder %s24, %s40
    %p42 = scmp.eq.s32.totalorder %s16, 0
    %p43 = por %p41, %p42
    %s45 = sadd.s32 %s44, 1
    %p48 = scmp.eq.s32.totalorder %s10, 1
    %p49 = scmp.ne.s32.totalorder %s44, %s46
    %p50 = scmp.eq.s32.totalorder %s10, 0
    %p51 = por %p49, %p50
    %p52 = scmp.ne.s32.totalorder %s44, %s46
    %p53 = scmp.eq.s32.totalorder %s15, 1
    %p54 = por %p52, %p53
    %p55 = scmp.ne.s32.totalorder %s46, %s47
    %p56 = scmp.eq.s32.totalorder %s15, 0
    %p57 = por %p55, %p56
    %p58 = scmp.ne.s32.totalorder %s46, %s47
    %p59 = scmp.eq.s32.totalorder %s16, 1
    %p60 = por %p58, %p59
    %p62 = scmp.ne.s32.totalorder %s47, %s61
    %p63 = scmp.eq.s32.totalorder %s16, 0
    %p64 = por %p62, %p63
    %s66 = sadd.s32 %s65, 1
    %p69 = scmp.eq.s32.totalorder %s10, 1
    %p70 = scmp.ne.s32.totalorder %s65, %s67
    %p71 = scmp.eq.s32.totalorder %s10, 0
    %p72 = por %p70, %p71
    %p73 = scmp.ne.s32.totalorder %s65, %s67
    %p74 = scmp.eq.s32.totalorder %s15, 1
    %p75 = por %p73, %p74
    %p76 = scmp.ne.s32.totalorder %s67, %s68
    %p77 = scmp.eq.s32.totalorder %s15, 0
    %p78 = por %p76, %p77
    %p79 = scmp.ne.s32.totalorder %s67, %s68
    %p80 = scmp.eq.s32.totalorder %s16, 1
    %p81 = por %p79, %p80
    %p83 = scmp.ne.s32.totalorder %s68, %s82
    %p84 = scmp.eq.s32.totalorder %s16, 0
    %p85 = por %p83, %p84
    %s87 = sadd.s32 %s86, 1
    %p90 = scmp.eq.s32.totalorder %s10, 1
    %p91 = scmp.ne.s32.totalorder %s86, %s88
    %p92 = scmp.eq.s32.totalorder %s10, 0
    %p93 = por %p91, %p92
    %p94 = scmp.ne.s32.totalorder %s86, %s88
    %p95 = scmp.eq.s32.totalorder %s15, 1
    %p96 = por %p94, %p95
    %p97 = scmp.ne.s32.totalorder %s88, %s89
    %p98 = scmp.eq.s32.totalorder %s15, 0
    %p99 = por %p97, %p98
    %p100 = scmp.ne.s32.totalorder %s88, %s89
    %p101 = scmp.eq.s32.totalorder %s16, 1
    %p102 = por %p100, %p101
    %p104 = scmp.ne.s32.totalorder %s89, %s103
    %p105 = scmp.eq.s32.totalorder %s16, 0
    %p106 = por %p104, %p105
    %s107 = ssub.s32 %s10, %s17
    %p108 = scmp.eq.s32.totalorder %s107, 0
    %s110 = sadd.s32 %s109, 1
    %s111 = scalar_select %p108, %s109, %s110
    %p114 = pneg %p108
    %p115 = scmp.eq.s32.totalorder %s10, 1
    %p116 = por %p114, %p115
    %p117 = scmp.ne.s32.totalorder %s109, %s112
    %p118 = scmp.eq.s32.totalorder %s10, 0
    %p119 = por %p117, %p118
    %p120 = scmp.ne.s32.totalorder %s109, %s112
    %p121 = scmp.eq.s32.totalorder %s15, 1
    %p122 = por %p120, %p121
    %p123 = scmp.ne.s32.totalorder %s112, %s113
    %p124 = scmp.eq.s32.totalorder %s15, 0
    %p125 = por %p123, %p124
    %p126 = scmp.ne.s32.totalorder %s112, %s113
    %p127 = scmp.eq.s32.totalorder %s16, 1
    %p128 = por %p126, %p127
    %p130 = scmp.ne.s32.totalorder %s113, %s129
    %p131 = scmp.eq.s32.totalorder %s16, 0
    %p132 = por %p130, %p131
    %p133 = scmp.le.s32.totalorder 1, %s10
    %p134 = scmp.lt.s32.totalorder %s10, 3
    %p135 = pnand %p133, %p134
    %p136 = pneg %p135
    // Predicated region
    $region9: #{_lambda_.20} parent=5 // pred_check
      _
    $region10: #{_lambda_.20} parent=5 // pred_check_branch
      %138 = sbr.rel (%p135) target = $region12
    $region11: #{_lambda_.20} parent=5 // pred_region
      %s139 = ssub.s32 %s10, 1
      // Predicated region
      $region13: #{_lambda_.20} parent=11 // pred_check
        %p140 = pneg %p57
      $region14: #{_lambda_.20} parent=11 // pred_check_branch
        %142 = sbr.rel (%p140) target = $region16
      $region15: #{_lambda_.20} parent=11 // pred_region
        _
      $region16: #{_lambda_.20} parent=11 // pred_fallthru
        _
      // Predicated region
      $region17: #{_lambda_.20} parent=11 // pred_check
        %p143 = pneg %p78
      $region18: #{_lambda_.20} parent=11 // pred_check_branch
        %145 = sbr.rel (%p143) target = $region20
      $region19: #{_lambda_.20} parent=11 // pred_region
        _
      $region20: #{_lambda_.20} parent=11 // pred_fallthru
        _
      // Predicated region
      $region21: #{_lambda_.20} parent=11 // pred_check
        %p146 = pneg %p99
      $region22: #{_lambda_.20} parent=11 // pred_check_branch
        %148 = sbr.rel (%p146) target = $region24
      $region23: #{_lambda_.20} parent=11 // pred_region
        _
      $region24: #{_lambda_.20} parent=11 // pred_fallthru
        _
    $region12: #{_lambda_.20} parent=5 // pred_fallthru
      _
    %p149 = scmp.lt.s32.totalorder %s10, 2
    // Predicated region
    $region25: #{_lambda_.20} parent=5 // pred_check
      %p150 = pneg %p149
    $region26: #{_lambda_.20} parent=5 // pred_check_branch
      %152 = sbr.rel (%p150) target = $region28
    $region27: #{_lambda_.20} parent=5 // pred_region
      // Predicated region
      $region29: #{_lambda_.20} parent=27 // pred_check
        %p153 = pneg %p30
      $region30: #{_lambda_.20} parent=27 // pred_check_branch
        %155 = sbr.rel (%p153) target = $region32
      $region31: #{_lambda_.20} parent=27 // pred_region
        %s156 = smul.u32 64, %s10
        %p157 = scmp.lt.s32.totalorder %s156, 127
        %s158 = scalar_select %p157, %s156, 127
        %s159 = smul.addr %s158, 2
        %s160 = smul.addr %s159, 4
        %s161 = scalar_lea.vmem %s0, %s160
        %s162 = smul.u32 64, %s10
      $region32: #{_lambda_.20} parent=27 // pred_fallthru
        _
    $region28: #{_lambda_.20} parent=5 // pred_fallthru
      _
    %p163 = scmp.le.s32.totalorder 1, %s10
    %p164 = scmp.lt.s32.totalorder %s10, 3
    %p165 = pnand %p163, %p164
    %p166 = pneg %p165
    // Predicated region
    $region33: #{_lambda_.20} parent=5 // pred_check
      _
    $region34: #{_lambda_.20} parent=5 // pred_check_branch
      %168 = sbr.rel (%p165) target = $region36
    $region35: #{_lambda_.20} parent=5 // pred_region
      %s169 = ssub.s32 %s10, 1
      %s170 = smul.u32 64, %s15
      %p171 = scmp.lt.s32.totalorder %s170, 127
      %s172 = scalar_select %p171, %s170, 127
      %s173 = smul.addr %s172, 2
      %s174 = smul.addr %s173, 4
      %s175 = scalar_lea.vmem %s0, %s174
      %p176 = pneg %p36
      %p177 = pneg %p33
      %p178 = pneg %p57
      %p179 = pneg %p54
      %p180 = pneg %p78
      %p181 = pneg %p75
      %p182 = pneg %p99
      %p183 = pneg %p96
      %p184 = pneg %p125
      %p185 = pneg %p122
      %s186 = smul.u32 64, %s15
      %p187 = scmp.lt.s32.totalorder %s186, 127
      %s188 = scalar_select %p187, %s186, 127
      %s189 = smul.addr %s188, 4
      %s190 = scalar_lea.vmem %s4, %s189
      %s191 = smul.u32 64, %s15
      %p192 = scmp.lt.s32.totalorder %s191, 127
      %s193 = scalar_select %p192, %s191, 127
      %s194 = smul.addr %s193, 2
      %s195 = smul.addr %s194, 4
      %s196 = scalar_lea.vmem %s0, %s195
      %s197 = smul.u32 64, %s15
      %s198 = smul.u32 64, %s15
      %p199 = scmp.lt.s32.totalorder %s198, 127
      %s200 = scalar_select %p199, %s198, 127
      %s201 = smul.addr %s200, 4
      %s202 = scalar_lea.vmem %s4, %s201
      %s203 = smul.u32 64, %s15
      %v205 = vld [vmem:[%s196] sm:$0xff]
      %v206 = vld [vmem:[%s196 + $0x8] sm:$0xff]
      %v207 = vld [vmem:[%s196 + $0x10] sm:$0xff]
      %v208 = vld [vmem:[%s196 + $0x18] sm:$0xff]
      %v209 = vld [vmem:[%s196 + $0x20] sm:$0xff]
      %v210 = vld [vmem:[%s196 + $0x28] sm:$0xff]
      %v211 = vld [vmem:[%s196 + $0x30] sm:$0xff]
      %v212 = vld [vmem:[%s196 + $0x38] sm:$0xff]
      %v213 = vld [vmem:[%s196 + $0x40] sm:$0xff]
      %v214 = vld [vmem:[%s196 + $0x48] sm:$0xff]
      %v215 = vld [vmem:[%s196 + $0x50] sm:$0xff]
      %v216 = vld [vmem:[%s196 + $0x58] sm:$0xff]
      %v217 = vld [vmem:[%s196 + $0x60] sm:$0xff]
      %v218 = vld [vmem:[%s196 + $0x68] sm:$0xff]
      %v219 = vld [vmem:[%s196 + $0x70] sm:$0xff]
      %v220 = vld [vmem:[%s196 + $0x78] sm:$0xff]
      %v221 = vld [vmem:[%s196 + $0x80] sm:$0xff]
      %v222 = vld [vmem:[%s196 + $0x88] sm:$0xff]
      %v223 = vld [vmem:[%s196 + $0x90] sm:$0xff]
      %v224 = vld [vmem:[%s196 + $0x98] sm:$0xff]
      %v225 = vld [vmem:[%s196 + $0xa0] sm:$0xff]
      %v226 = vld [vmem:[%s196 + $0xa8] sm:$0xff]
      %v227 = vld [vmem:[%s196 + $0xb0] sm:$0xff]
      %v228 = vld [vmem:[%s196 + $0xb8] sm:$0xff]
      %v229 = vld [vmem:[%s196 + $0xc0] sm:$0xff]
      %v230 = vld [vmem:[%s196 + $0xc8] sm:$0xff]
      %v231 = vld [vmem:[%s196 + $0xd0] sm:$0xff]
      %v232 = vld [vmem:[%s196 + $0xd8] sm:$0xff]
      %v233 = vld [vmem:[%s196 + $0xe0] sm:$0xff]
      %v234 = vld [vmem:[%s196 + $0xe8] sm:$0xff]
      %v235 = vld [vmem:[%s196 + $0xf0] sm:$0xff]
      %v236 = vld [vmem:[%s196 + $0xf8] sm:$0xff]
      %v237 = vld [vmem:[%s196 + $0x100] sm:$0xff]
      %v238 = vld [vmem:[%s196 + $0x108] sm:$0xff]
      %v239 = vld [vmem:[%s196 + $0x110] sm:$0xff]
      %v240 = vld [vmem:[%s196 + $0x118] sm:$0xff]
      %v241 = vld [vmem:[%s196 + $0x120] sm:$0xff]
      %v242 = vld [vmem:[%s196 + $0x128] sm:$0xff]
      %v243 = vld [vmem:[%s196 + $0x130] sm:$0xff]
      %v244 = vld [vmem:[%s196 + $0x138] sm:$0xff]
      %v245 = vld [vmem:[%s196 + $0x140] sm:$0xff]
      %v246 = vld [vmem:[%s196 + $0x148] sm:$0xff]
      %v247 = vld [vmem:[%s196 + $0x150] sm:$0xff]
      %v248 = vld [vmem:[%s196 + $0x158] sm:$0xff]
      %v249 = vld [vmem:[%s196 + $0x160] sm:$0xff]
      %v250 = vld [vmem:[%s196 + $0x168] sm:$0xff]
      %v251 = vld [vmem:[%s196 + $0x170] sm:$0xff]
      %v252 = vld [vmem:[%s196 + $0x178] sm:$0xff]
      %v253 = vld [vmem:[%s196 + $0x180] sm:$0xff]
      %v254 = vld [vmem:[%s196 + $0x188] sm:$0xff]
      %v255 = vld [vmem:[%s196 + $0x190] sm:$0xff]
      %v256 = vld [vmem:[%s196 + $0x198] sm:$0xff]
      %v257 = vld [vmem:[%s196 + $0x1a0] sm:$0xff]
      %v258 = vld [vmem:[%s196 + $0x1a8] sm:$0xff]
      %v259 = vld [vmem:[%s196 + $0x1b0] sm:$0xff]
      %v260 = vld [vmem:[%s196 + $0x1b8] sm:$0xff]
      %v261 = vld [vmem:[%s196 + $0x1c0] sm:$0xff]
      %v262 = vld [vmem:[%s196 + $0x1c8] sm:$0xff]
      %v263 = vld [vmem:[%s196 + $0x1d0] sm:$0xff]
      %v264 = vld [vmem:[%s196 + $0x1d8] sm:$0xff]
      %v265 = vld [vmem:[%s196 + $0x1e0] sm:$0xff]
      %v266 = vld [vmem:[%s196 + $0x1e8] sm:$0xff]
      %v267 = vld [vmem:[%s196 + $0x1f0] sm:$0xff]
      %v268 = vld [vmem:[%s196 + $0x1f8] sm:$0xff]
      %v269 = vld [vmem:[%s1] sm:$0xf]
      %v270 = vld [vmem:[%s1 + $0x4] sm:$0xf]
      %v271 = vld [vmem:[%s1 + $0x8] sm:$0xf]
      %v272 = vld [vmem:[%s1 + $0xc] sm:$0xf]
      %v273 = vld [vmem:[%s1 + $0x10] sm:$0xf]
      %v274 = vld [vmem:[%s1 + $0x14] sm:$0xf]
      %v275 = vld [vmem:[%s1 + $0x18] sm:$0xf]
      %v276 = vld [vmem:[%s1 + $0x1c] sm:$0xf]
      %v277 = vld [vmem:[%s1 + $0x20] sm:$0xf]
      %v278 = vld [vmem:[%s1 + $0x24] sm:$0xf]
      %v279 = vld [vmem:[%s1 + $0x28] sm:$0xf]
      %v280 = vld [vmem:[%s1 + $0x2c] sm:$0xf]
      %v281 = vld [vmem:[%s1 + $0x30] sm:$0xf]
      %v282 = vld [vmem:[%s1 + $0x34] sm:$0xf]
      %v283 = vld [vmem:[%s1 + $0x38] sm:$0xf]
      %v284 = vld [vmem:[%s1 + $0x3c] sm:$0xf]
      %v285 = vld [vmem:[%s1 + $0x40] sm:$0xf]
      %v286 = vld [vmem:[%s1 + $0x44] sm:$0xf]
      %v351 = vunpack.c.l.b16 %v205
      %v352 = vunpack.c.h.b16 %v205
      %v353 = vunpack.c.l.b16 %v206
      %v354 = vunpack.c.h.b16 %v206
      %v355 = vunpack.c.l.b16 %v207
      %v356 = vunpack.c.h.b16 %v207
      %v357 = vunpack.c.l.b16 %v208
      %v358 = vunpack.c.h.b16 %v208
      %v359 = vunpack.c.l.b16 %v209
      %v360 = vunpack.c.h.b16 %v209
      %v361 = vunpack.c.l.b16 %v210
      %v362 = vunpack.c.h.b16 %v210
      %v363 = vunpack.c.l.b16 %v211
      %v364 = vunpack.c.h.b16 %v211
      %v365 = vunpack.c.l.b16 %v212
      %v366 = vunpack.c.h.b16 %v212
      %v367 = vunpack.c.l.b16 %v213
      %v368 = vunpack.c.h.b16 %v213
      %v369 = vunpack.c.l.b16 %v214
      %v370 = vunpack.c.h.b16 %v214
      %v371 = vunpack.c.l.b16 %v215
      %v372 = vunpack.c.h.b16 %v215
      %v373 = vunpack.c.l.b16 %v216
      %v374 = vunpack.c.h.b16 %v216
      %v375 = vunpack.c.l.b16 %v217
      %v376 = vunpack.c.h.b16 %v217
      %v377 = vunpack.c.l.b16 %v218
      %v378 = vunpack.c.h.b16 %v218
      %v379 = vunpack.c.l.b16 %v219
      %v380 = vunpack.c.h.b16 %v219
      %v381 = vunpack.c.l.b16 %v220
      %v382 = vunpack.c.h.b16 %v220
      %v383 = vunpack.c.l.b16 %v221
      %v384 = vunpack.c.h.b16 %v221
      %v385 = vunpack.c.l.b16 %v222
      %v386 = vunpack.c.h.b16 %v222
      %v387 = vunpack.c.l.b16 %v223
      %v388 = vunpack.c.h.b16 %v223
      %v389 = vunpack.c.l.b16 %v224
      %v390 = vunpack.c.h.b16 %v224
      %v391 = vunpack.c.l.b16 %v225
      %v392 = vunpack.c.h.b16 %v225
      %v393 = vunpack.c.l.b16 %v226
      %v394 = vunpack.c.h.b16 %v226
      %v395 = vunpack.c.l.b16 %v227
      %v396 = vunpack.c.h.b16 %v227
      %v397 = vunpack.c.l.b16 %v228
      %v398 = vunpack.c.h.b16 %v228
      %v399 = vunpack.c.l.b16 %v229
      %v400 = vunpack.c.h.b16 %v229
      %v401 = vunpack.c.l.b16 %v230
      %v402 = vunpack.c.h.b16 %v230
      %v403 = vunpack.c.l.b16 %v231
      %v404 = vunpack.c.h.b16 %v231
      %v405 = vunpack.c.l.b16 %v232
      %v406 = vunpack.c.h.b16 %v232
      %v407 = vunpack.c.l.b16 %v233
      %v408 = vunpack.c.h.b16 %v233
      %v409 = vunpack.c.l.b16 %v234
      %v410 = vunpack.c.h.b16 %v234
      %v411 = vunpack.c.l.b16 %v235
      %v412 = vunpack.c.h.b16 %v235
      %v413 = vunpack.c.l.b16 %v236
      %v414 = vunpack.c.h.b16 %v236
      %v415 = vunpack.c.l.b16 %v237
      %v416 = vunpack.c.h.b16 %v237
      %v417 = vunpack.c.l.b16 %v238
      %v418 = vunpack.c.h.b16 %v238
      %v419 = vunpack.c.l.b16 %v239
      %v420 = vunpack.c.h.b16 %v239
      %v421 = vunpack.c.l.b16 %v240
      %v422 = vunpack.c.h.b16 %v240
      %v423 = vunpack.c.l.b16 %v241
      %v424 = vunpack.c.h.b16 %v241
      %v425 = vunpack.c.l.b16 %v242
      %v426 = vunpack.c.h.b16 %v242
      %v427 = vunpack.c.l.b16 %v243
      %v428 = vunpack.c.h.b16 %v243
      %v429 = vunpack.c.l.b16 %v244
      %v430 = vunpack.c.h.b16 %v244
      %v431 = vunpack.c.l.b16 %v245
      %v432 = vunpack.c.h.b16 %v245
      %v433 = vunpack.c.l.b16 %v246
      %v434 = vunpack.c.h.b16 %v246
      %v435 = vunpack.c.l.b16 %v247
      %v436 = vunpack.c.h.b16 %v247
      %v437 = vunpack.c.l.b16 %v248
      %v438 = vunpack.c.h.b16 %v248
      %v439 = vunpack.c.l.b16 %v249
      %v440 = vunpack.c.h.b16 %v249
      %v441 = vunpack.c.l.b16 %v250
      %v442 = vunpack.c.h.b16 %v250
      %v443 = vunpack.c.l.b16 %v251
      %v444 = vunpack.c.h.b16 %v251
      %v445 = vunpack.c.l.b16 %v252
      %v446 = vunpack.c.h.b16 %v252
      %v447 = vunpack.c.l.b16 %v253
      %v448 = vunpack.c.h.b16 %v253
      %v449 = vunpack.c.l.b16 %v254
      %v450 = vunpack.c.h.b16 %v254
      %v451 = vunpack.c.l.b16 %v255
      %v452 = vunpack.c.h.b16 %v255
      %v453 = vunpack.c.l.b16 %v256
      %v454 = vunpack.c.h.b16 %v256
      %v455 = vunpack.c.l.b16 %v257
      %v456 = vunpack.c.h.b16 %v257
      %v457 = vunpack.c.l.b16 %v258
      %v458 = vunpack.c.h.b16 %v258
      %v459 = vunpack.c.l.b16 %v259
      %v460 = vunpack.c.h.b16 %v259
      %v461 = vunpack.c.l.b16 %v260
      %v462 = vunpack.c.h.b16 %v260
      %v463 = vunpack.c.l.b16 %v261
      %v464 = vunpack.c.h.b16 %v261
      %v465 = vunpack.c.l.b16 %v262
      %v466 = vunpack.c.h.b16 %v262
      %v467 = vunpack.c.l.b16 %v263
      %v468 = vunpack.c.h.b16 %v263
      %v469 = vunpack.c.l.b16 %v264
      %v470 = vunpack.c.h.b16 %v264
      %v471 = vunpack.c.l.b16 %v265
      %v472 = vunpack.c.h.b16 %v265
      %v473 = vunpack.c.l.b16 %v266
      %v474 = vunpack.c.h.b16 %v266
      %v475 = vunpack.c.l.b16 %v267
      %v476 = vunpack.c.h.b16 %v267
      %v477 = vunpack.c.l.b16 %v268
      %v478 = vunpack.c.h.b16 %v268
      %v479 = vpack.c.b16 %v353, %v351
      %v480 = vpack.c.b16 %v354, %v352
      %v481 = vpack.c.b16 %v357, %v355
      %v482 = vpack.c.b16 %v358, %v356
      %v483 = vpack.c.b16 %v361, %v359
      %v484 = vpack.c.b16 %v362, %v360
      %v485 = vpack.c.b16 %v365, %v363
      %v486 = vpack.c.b16 %v366, %v364
      %v487 = vpack.c.b16 %v369, %v367
      %v488 = vpack.c.b16 %v370, %v368
      %v489 = vpack.c.b16 %v373, %v371
      %v490 = vpack.c.b16 %v374, %v372
      %v491 = vpack.c.b16 %v377, %v375
      %v492 = vpack.c.b16 %v378, %v376
      %v493 = vpack.c.b16 %v381, %v379
      %v494 = vpack.c.b16 %v382, %v380
      %v495 = vpack.c.b16 %v385, %v383
      %v496 = vpack.c.b16 %v386, %v384
      %v497 = vpack.c.b16 %v389, %v387
      %v498 = vpack.c.b16 %v390, %v388
      %v499 = vpack.c.b16 %v393, %v391
      %v500 = vpack.c.b16 %v394, %v392
      %v501 = vpack.c.b16 %v397, %v395
      %v502 = vpack.c.b16 %v398, %v396
      %v503 = vpack.c.b16 %v401, %v399
      %v504 = vpack.c.b16 %v402, %v400
      %v505 = vpack.c.b16 %v405, %v403
      %v506 = vpack.c.b16 %v406, %v404
      %v507 = vpack.c.b16 %v409, %v407
      %v508 = vpack.c.b16 %v410, %v408
      %v509 = vpack.c.b16 %v413, %v411
      %v510 = vpack.c.b16 %v414, %v412
      %v511 = vpack.c.b16 %v417, %v415
      %v512 = vpack.c.b16 %v418, %v416
      %v513 = vpack.c.b16 %v421, %v419
      %v514 = vpack.c.b16 %v422, %v420
      %v515 = vpack.c.b16 %v425, %v423
      %v516 = vpack.c.b16 %v426, %v424
      %v517 = vpack.c.b16 %v429, %v427
      %v518 = vpack.c.b16 %v430, %v428
      %v519 = vpack.c.b16 %v433, %v431
      %v520 = vpack.c.b16 %v434, %v432
      %v521 = vpack.c.b16 %v437, %v435
      %v522 = vpack.c.b16 %v438, %v436
      %v523 = vpack.c.b16 %v441, %v439
      %v524 = vpack.c.b16 %v442, %v440
      %v525 = vpack.c.b16 %v445, %v443
      %v526 = vpack.c.b16 %v446, %v444
      %v527 = vpack.c.b16 %v449, %v447
      %v528 = vpack.c.b16 %v450, %v448
      %v529 = vpack.c.b16 %v453, %v451
      %v530 = vpack.c.b16 %v454, %v452
      %v531 = vpack.c.b16 %v457, %v455
      %v532 = vpack.c.b16 %v458, %v456
      %v533 = vpack.c.b16 %v461, %v459
      %v534 = vpack.c.b16 %v462, %v460
      %v535 = vpack.c.b16 %v465, %v463
      %v536 = vpack.c.b16 %v466, %v464
      %v537 = vpack.c.b16 %v469, %v467
      %v538 = vpack.c.b16 %v470, %v468
      %v539 = vpack.c.b16 %v473, %v471
      %v540 = vpack.c.b16 %v474, %v472
      %v541 = vpack.c.b16 %v477, %v475
      %v542 = vpack.c.b16 %v478, %v476
      %v593 = vunpack.c.l.b16 %v269
      %v594 = vunpack.c.l.b16 %v270
      %v595 = vunpack.c.l.b16 %v271
      %v596 = vunpack.c.l.b16 %v272
      %v597 = vunpack.c.l.b16 %v273
      %v598 = vunpack.c.l.b16 %v274
      %v599 = vunpack.c.l.b16 %v275
      %v600 = vunpack.c.l.b16 %v276
      %v601 = vunpack.c.l.b16 %v277
      %v602 = vunpack.c.l.b16 %v278
      %v603 = vunpack.c.l.b16 %v279
      %v604 = vunpack.c.l.b16 %v280
      %v605 = vunpack.c.l.b16 %v281
      %v606 = vunpack.c.l.b16 %v282
      %v607 = vunpack.c.l.b16 %v283
      %v608 = vunpack.c.l.b16 %v284
      %v609 = vunpack.c.l.b16 %v285
      %v610 = vunpack.c.l.b16 %v286
      %v611 = vpack.c.b16 %v594, %v593
      %v612 = vpack.c.b16 %v596, %v595
      %v613 = vpack.c.b16 %v598, %v597
      %v614 = vpack.c.b16 %v600, %v599
      %v615 = vpack.c.b16 %v602, %v601
      %v616 = vpack.c.b16 %v604, %v603
      %v617 = vpack.c.b16 %v606, %v605
      %v618 = vpack.c.b16 %v608, %v607
      %v619 = vpack.c.b16 %v610, %v609
      %vm629 = vcmask 130048
      %v631 = vsel %vm629, %v480, 0
      %v634 = vsel %vm629, %v482, 0
      %v637 = vsel %vm629, %v484, 0
      %v640 = vsel %vm629, %v486, 0
      %v643 = vsel %vm629, %v488, 0
      %v646 = vsel %vm629, %v490, 0
      %v649 = vsel %vm629, %v492, 0
      %v652 = vsel %vm629, %v494, 0
      %v655 = vsel %vm629, %v496, 0
      %v658 = vsel %vm629, %v498, 0
      %v661 = vsel %vm629, %v500, 0
      %v664 = vsel %vm629, %v502, 0
      %v667 = vsel %vm629, %v504, 0
      %v670 = vsel %vm629, %v506, 0
      %v673 = vsel %vm629, %v508, 0
      %v676 = vsel %vm629, %v510, 0
      %v679 = vsel %vm629, %v512, 0
      %v682 = vsel %vm629, %v514, 0
      %v685 = vsel %vm629, %v516, 0
      %v688 = vsel %vm629, %v518, 0
      %v691 = vsel %vm629, %v520, 0
      %v694 = vsel %vm629, %v522, 0
      %v697 = vsel %vm629, %v524, 0
      %v700 = vsel %vm629, %v526, 0
      %v703 = vsel %vm629, %v528, 0
      %v706 = vsel %vm629, %v530, 0
      %v709 = vsel %vm629, %v532, 0
      %v712 = vsel %vm629, %v534, 0
      %v715 = vsel %vm629, %v536, 0
      %v718 = vsel %vm629, %v538, 0
      %v721 = vsel %vm629, %v540, 0
      %v724 = vsel %vm629, %v542, 0
      %726 = vmatpush.bf16.msra.mxu0 %v618
      %727 = vmatpush.bf16.msra.mxu0 %v617
      %728 = vmatpush.bf16.msra.mxu0 %v616
      %729 = vmatpush.bf16.msra.mxu0 %v615
      %730 = vmatpush.bf16.msra.mxu0 %v614
      %731 = vmatpush.bf16.msra.mxu0 %v613
      %732 = vmatpush.bf16.msra.mxu0 %v612
      %733 = vmatpush.bf16.msra.mxu0 %v611
      %734 = vmatmul.bf16.gmra.mxu0 %v479
      %v735 = vpop.f32.mrf.mxu0
      %v736 = vadd.f32 0.0, %v735
      %v737 = vpop.f32.mrf.mxu0
      %v738 = vadd.f32 0.0, %v737
      %739 = vmatmul.bf16.gmra.mxu0 %v481
      %v740 = vpop.f32.mrf.mxu0
      %v741 = vadd.f32 0.0, %v740
      %v742 = vpop.f32.mrf.mxu0
      %v743 = vadd.f32 0.0, %v742
      %744 = vmatmul.bf16.gmra.mxu0 %v483
      %v745 = vpop.f32.mrf.mxu0
      %v746 = vadd.f32 0.0, %v745
      %v747 = vpop.f32.mrf.mxu0
      %v748 = vadd.f32 0.0, %v747
      %749 = vmatmul.bf16.gmra.mxu0 %v485
      %v750 = vpop.f32.mrf.mxu0
      %v751 = vadd.f32 0.0, %v750
      %v752 = vpop.f32.mrf.mxu0
      %v753 = vadd.f32 0.0, %v752
      %754 = vmatmul.bf16.gmra.mxu0 %v487
      %v755 = vpop.f32.mrf.mxu0
      %v756 = vadd.f32 0.0, %v755
      %v757 = vpop.f32.mrf.mxu0
      %v758 = vadd.f32 0.0, %v757
      %759 = vmatmul.bf16.gmra.mxu0 %v489
      %v760 = vpop.f32.mrf.mxu0
      %v761 = vadd.f32 0.0, %v760
      %v762 = vpop.f32.mrf.mxu0
      %v763 = vadd.f32 0.0, %v762
      %764 = vmatmul.bf16.gmra.mxu0 %v491
      %v765 = vpop.f32.mrf.mxu0
      %v766 = vadd.f32 0.0, %v765
      %v767 = vpop.f32.mrf.mxu0
      %v768 = vadd.f32 0.0, %v767
      %769 = vmatmul.bf16.gmra.mxu0 %v493
      %v770 = vpop.f32.mrf.mxu0
      %v771 = vadd.f32 0.0, %v770
      %v772 = vpop.f32.mrf.mxu0
      %v773 = vadd.f32 0.0, %v772
      %774 = vmatmul.bf16.gmra.mxu0 %v495
      %v775 = vpop.f32.mrf.mxu0
      %v776 = vadd.f32 0.0, %v775
      %v777 = vpop.f32.mrf.mxu0
      %v778 = vadd.f32 0.0, %v777
      %779 = vmatmul.bf16.gmra.mxu0 %v497
      %v780 = vpop.f32.mrf.mxu0
      %v781 = vadd.f32 0.0, %v780
      %v782 = vpop.f32.mrf.mxu0
      %v783 = vadd.f32 0.0, %v782
      %784 = vmatmul.bf16.gmra.mxu0 %v499
      %v785 = vpop.f32.mrf.mxu0
      %v786 = vadd.f32 0.0, %v785
      %v787 = vpop.f32.mrf.mxu0
      %v788 = vadd.f32 0.0, %v787
      %789 = vmatmul.bf16.gmra.mxu0 %v501
      %v790 = vpop.f32.mrf.mxu0
      %v791 = vadd.f32 0.0, %v790
      %v792 = vpop.f32.mrf.mxu0
      %v793 = vadd.f32 0.0, %v792
      %794 = vmatmul.bf16.gmra.mxu0 %v503
      %v795 = vpop.f32.mrf.mxu0
      %v796 = vadd.f32 0.0, %v795
      %v797 = vpop.f32.mrf.mxu0
      %v798 = vadd.f32 0.0, %v797
      %799 = vmatmul.bf16.gmra.mxu0 %v505
      %v800 = vpop.f32.mrf.mxu0
      %v801 = vadd.f32 0.0, %v800
      %v802 = vpop.f32.mrf.mxu0
      %v803 = vadd.f32 0.0, %v802
      %804 = vmatmul.bf16.gmra.mxu0 %v507
      %v805 = vpop.f32.mrf.mxu0
      %v806 = vadd.f32 0.0, %v805
      %v807 = vpop.f32.mrf.mxu0
      %v808 = vadd.f32 0.0, %v807
      %809 = vmatmul.bf16.gmra.mxu0 %v509
      %v810 = vpop.f32.mrf.mxu0
      %v811 = vadd.f32 0.0, %v810
      %v812 = vpop.f32.mrf.mxu0
      %v813 = vadd.f32 0.0, %v812
      %814 = vmatmul.bf16.gmra.mxu0 %v511
      %v815 = vpop.f32.mrf.mxu0
      %v816 = vadd.f32 0.0, %v815
      %v817 = vpop.f32.mrf.mxu0
      %v818 = vadd.f32 0.0, %v817
      %819 = vmatmul.bf16.gmra.mxu0 %v513
      %v820 = vpop.f32.mrf.mxu0
      %v821 = vadd.f32 0.0, %v820
      %v822 = vpop.f32.mrf.mxu0
      %v823 = vadd.f32 0.0, %v822
      %824 = vmatmul.bf16.gmra.mxu0 %v515
      %v825 = vpop.f32.mrf.mxu0
      %v826 = vadd.f32 0.0, %v825
      %v827 = vpop.f32.mrf.mxu0
      %v828 = vadd.f32 0.0, %v827
      %829 = vmatmul.bf16.gmra.mxu0 %v517
      %v830 = vpop.f32.mrf.mxu0
      %v831 = vadd.f32 0.0, %v830
      %v832 = vpop.f32.mrf.mxu0
      %v833 = vadd.f32 0.0, %v832
      %834 = vmatmul.bf16.gmra.mxu0 %v519
      %v835 = vpop.f32.mrf.mxu0
      %v836 = vadd.f32 0.0, %v835
      %v837 = vpop.f32.mrf.mxu0
      %v838 = vadd.f32 0.0, %v837
      %839 = vmatmul.bf16.gmra.mxu0 %v521
      %v840 = vpop.f32.mrf.mxu0
      %v841 = vadd.f32 0.0, %v840
      %v842 = vpop.f32.mrf.mxu0
      %v843 = vadd.f32 0.0, %v842
      %844 = vmatmul.bf16.gmra.mxu0 %v523
      %v845 = vpop.f32.mrf.mxu0
      %v846 = vadd.f32 0.0, %v845
      %v847 = vpop.f32.mrf.mxu0
      %v848 = vadd.f32 0.0, %v847
      %849 = vmatmul.bf16.gmra.mxu0 %v525
      %v850 = vpop.f32.mrf.mxu0
      %v851 = vadd.f32 0.0, %v850
      %v852 = vpop.f32.mrf.mxu0
      %v853 = vadd.f32 0.0, %v852
      %854 = vmatmul.bf16.gmra.mxu0 %v527
      %v855 = vpop.f32.mrf.mxu0
      %v856 = vadd.f32 0.0, %v855
      %v857 = vpop.f32.mrf.mxu0
      %v858 = vadd.f32 0.0, %v857
      %859 = vmatmul.bf16.gmra.mxu0 %v529
      %v860 = vpop.f32.mrf.mxu0
      %v861 = vadd.f32 0.0, %v860
      %v862 = vpop.f32.mrf.mxu0
      %v863 = vadd.f32 0.0, %v862
      %864 = vmatmul.bf16.gmra.mxu0 %v531
      %v865 = vpop.f32.mrf.mxu0
      %v866 = vadd.f32 0.0, %v865
      %v867 = vpop.f32.mrf.mxu0
      %v868 = vadd.f32 0.0, %v867
      %869 = vmatmul.bf16.gmra.mxu0 %v533
      %v870 = vpop.f32.mrf.mxu0
      %v871 = vadd.f32 0.0, %v870
      %v872 = vpop.f32.mrf.mxu0
      %v873 = vadd.f32 0.0, %v872
      %874 = vmatmul.bf16.gmra.mxu0 %v535
      %v875 = vpop.f32.mrf.mxu0
      %v876 = vadd.f32 0.0, %v875
      %v877 = vpop.f32.mrf.mxu0
      %v878 = vadd.f32 0.0, %v877
      %879 = vmatmul.bf16.gmra.mxu0 %v537
      %v880 = vpop.f32.mrf.mxu0
      %v881 = vadd.f32 0.0, %v880
      %v882 = vpop.f32.mrf.mxu0
      %v883 = vadd.f32 0.0, %v882
      %884 = vmatmul.bf16.gmra.mxu0 %v539
      %v885 = vpop.f32.mrf.mxu0
      %v886 = vadd.f32 0.0, %v885
      %v887 = vpop.f32.mrf.mxu0
      %v888 = vadd.f32 0.0, %v887
      %889 = vmatmul.bf16.gmra.mxu0 %v541
      %v890 = vpop.f32.mrf.mxu0
      %v891 = vadd.f32 0.0, %v890
      %v892 = vpop.f32.mrf.mxu0
      %v893 = vadd.f32 0.0, %v892
      %894 = vdwg.mxu0
      %895 = vmatpush.bf16.msra.mxu0 0
      %896 = vmatpush.bf16.msra.mxu0 0
      %897 = vmatpush.bf16.msra.mxu0 0
      %898 = vmatpush.bf16.msra.mxu0 0
      %899 = vmatpush.bf16.msra.mxu0 0
      %900 = vmatpush.bf16.msra.mxu0 0
      %901 = vmatpush.bf16.msra.mxu0 0
      %902 = vmatpush.bf16.msra.mxu0 %v619
      %903 = vmatmul.bf16.gmra.mxu0 %v631
      %v904 = vpop.f32.mrf.mxu0
      %v905 = vadd.f32 %v736, %v904
      %v906 = vpop.f32.mrf.mxu0
      %v907 = vadd.f32 %v738, %v906
      %908 = vmatmul.bf16.gmra.mxu0 %v634
      %v909 = vpop.f32.mrf.mxu0
      %v910 = vadd.f32 %v741, %v909
      %v911 = vpop.f32.mrf.mxu0
      %v912 = vadd.f32 %v743, %v911
      %913 = vmatmul.bf16.gmra.mxu0 %v637
      %v914 = vpop.f32.mrf.mxu0
      %v915 = vadd.f32 %v746, %v914
      %v916 = vpop.f32.mrf.mxu0
      %v917 = vadd.f32 %v748, %v916
      %918 = vmatmul.bf16.gmra.mxu0 %v640
      %v919 = vpop.f32.mrf.mxu0
      %v920 = vadd.f32 %v751, %v919
      %v921 = vpop.f32.mrf.mxu0
      %v922 = vadd.f32 %v753, %v921
      %923 = vmatmul.bf16.gmra.mxu0 %v643
      %v924 = vpop.f32.mrf.mxu0
      %v925 = vadd.f32 %v756, %v924
      %v926 = vpop.f32.mrf.mxu0
      %v927 = vadd.f32 %v758, %v926
      %928 = vmatmul.bf16.gmra.mxu0 %v646
      %v929 = vpop.f32.mrf.mxu0
      %v930 = vadd.f32 %v761, %v929
      %v931 = vpop.f32.mrf.mxu0
      %v932 = vadd.f32 %v763, %v931
      %933 = vmatmul.bf16.gmra.mxu0 %v649
      %v934 = vpop.f32.mrf.mxu0
      %v935 = vadd.f32 %v766, %v934
      %v936 = vpop.f32.mrf.mxu0
      %v937 = vadd.f32 %v768, %v936
      %938 = vmatmul.bf16.gmra.mxu0 %v652
      %v939 = vpop.f32.mrf.mxu0
      %v940 = vadd.f32 %v771, %v939
      %v941 = vpop.f32.mrf.mxu0
      %v942 = vadd.f32 %v773, %v941
      %943 = vmatmul.bf16.gmra.mxu0 %v655
      %v944 = vpop.f32.mrf.mxu0
      %v945 = vadd.f32 %v776, %v944
      %v946 = vpop.f32.mrf.mxu0
      %v947 = vadd.f32 %v778, %v946
      %948 = vmatmul.bf16.gmra.mxu0 %v658
      %v949 = vpop.f32.mrf.mxu0
      %v950 = vadd.f32 %v781, %v949
      %v951 = vpop.f32.mrf.mxu0
      %v952 = vadd.f32 %v783, %v951
      %953 = vmatmul.bf16.gmra.mxu0 %v661
      %v954 = vpop.f32.mrf.mxu0
      %v955 = vadd.f32 %v786, %v954
      %v956 = vpop.f32.mrf.mxu0
      %v957 = vadd.f32 %v788, %v956
      %958 = vmatmul.bf16.gmra.mxu0 %v664
      %v959 = vpop.f32.mrf.mxu0
      %v960 = vadd.f32 %v791, %v959
      %v961 = vpop.f32.mrf.mxu0
      %v962 = vadd.f32 %v793, %v961
      %963 = vmatmul.bf16.gmra.mxu0 %v667
      %v964 = vpop.f32.mrf.mxu0
      %v965 = vadd.f32 %v796, %v964
      %v966 = vpop.f32.mrf.mxu0
      %v967 = vadd.f32 %v798, %v966
      %968 = vmatmul.bf16.gmra.mxu0 %v670
      %v969 = vpop.f32.mrf.mxu0
      %v970 = vadd.f32 %v801, %v969
      %v971 = vpop.f32.mrf.mxu0
      %v972 = vadd.f32 %v803, %v971
      %973 = vmatmul.bf16.gmra.mxu0 %v673
      %v974 = vpop.f32.mrf.mxu0
      %v975 = vadd.f32 %v806, %v974
      %v976 = vpop.f32.mrf.mxu0
      %v977 = vadd.f32 %v808, %v976
      %978 = vmatmul.bf16.gmra.mxu0 %v676
      %v979 = vpop.f32.mrf.mxu0
      %v980 = vadd.f32 %v811, %v979
      %v981 = vpop.f32.mrf.mxu0
      %v982 = vadd.f32 %v813, %v981
      %983 = vmatmul.bf16.gmra.mxu0 %v679
      %v984 = vpop.f32.mrf.mxu0
      %v985 = vadd.f32 %v816, %v984
      %v986 = vpop.f32.mrf.mxu0
      %v987 = vadd.f32 %v818, %v986
      %988 = vmatmul.bf16.gmra.mxu0 %v682
      %v989 = vpop.f32.mrf.mxu0
      %v990 = vadd.f32 %v821, %v989
      %v991 = vpop.f32.mrf.mxu0
      %v992 = vadd.f32 %v823, %v991
      %993 = vmatmul.bf16.gmra.mxu0 %v685
      %v994 = vpop.f32.mrf.mxu0
      %v995 = vadd.f32 %v826, %v994
      %v996 = vpop.f32.mrf.mxu0
      %v997 = vadd.f32 %v828, %v996
      %998 = vmatmul.bf16.gmra.mxu0 %v688
      %v999 = vpop.f32.mrf.mxu0
      %v1000 = vadd.f32 %v831, %v999
      %v1001 = vpop.f32.mrf.mxu0
      %v1002 = vadd.f32 %v833, %v1001
      %1003 = vmatmul.bf16.gmra.mxu0 %v691
      %v1004 = vpop.f32.mrf.mxu0
      %v1005 = vadd.f32 %v836, %v1004
      %v1006 = vpop.f32.mrf.mxu0
      %v1007 = vadd.f32 %v838, %v1006
      %1008 = vmatmul.bf16.gmra.mxu0 %v694
      %v1009 = vpop.f32.mrf.mxu0
      %v1010 = vadd.f32 %v841, %v1009
      %v1011 = vpop.f32.mrf.mxu0
      %v1012 = vadd.f32 %v843, %v1011
      %1013 = vmatmul.bf16.gmra.mxu0 %v697
      %v1014 = vpop.f32.mrf.mxu0
      %v1015 = vadd.f32 %v846, %v1014
      %v1016 = vpop.f32.mrf.mxu0
      %v1017 = vadd.f32 %v848, %v1016
      %1018 = vmatmul.bf16.gmra.mxu0 %v700
      %v1019 = vpop.f32.mrf.mxu0
      %v1020 = vadd.f32 %v851, %v1019
      %v1021 = vpop.f32.mrf.mxu0
      %v1022 = vadd.f32 %v853, %v1021
      %1023 = vmatmul.bf16.gmra.mxu0 %v703
      %v1024 = vpop.f32.mrf.mxu0
      %v1025 = vadd.f32 %v856, %v1024
      %v1026 = vpop.f32.mrf.mxu0
      %v1027 = vadd.f32 %v858, %v1026
      %1028 = vmatmul.bf16.gmra.mxu0 %v706
      %v1029 = vpop.f32.mrf.mxu0
      %v1030 = vadd.f32 %v861, %v1029
      %v1031 = vpop.f32.mrf.mxu0
      %v1032 = vadd.f32 %v863, %v1031
      %1033 = vmatmul.bf16.gmra.mxu0 %v709
      %v1034 = vpop.f32.mrf.mxu0
      %v1035 = vadd.f32 %v866, %v1034
      %v1036 = vpop.f32.mrf.mxu0
      %v1037 = vadd.f32 %v868, %v1036
      %1038 = vmatmul.bf16.gmra.mxu0 %v712
      %v1039 = vpop.f32.mrf.mxu0
      %v1040 = vadd.f32 %v871, %v1039
      %v1041 = vpop.f32.mrf.mxu0
      %v1042 = vadd.f32 %v873, %v1041
      %1043 = vmatmul.bf16.gmra.mxu0 %v715
      %v1044 = vpop.f32.mrf.mxu0
      %v1045 = vadd.f32 %v876, %v1044
      %v1046 = vpop.f32.mrf.mxu0
      %v1047 = vadd.f32 %v878, %v1046
      %1048 = vmatmul.bf16.gmra.mxu0 %v718
      %v1049 = vpop.f32.mrf.mxu0
      %v1050 = vadd.f32 %v881, %v1049
      %v1051 = vpop.f32.mrf.mxu0
      %v1052 = vadd.f32 %v883, %v1051
      %1053 = vmatmul.bf16.gmra.mxu0 %v721
      %v1054 = vpop.f32.mrf.mxu0
      %v1055 = vadd.f32 %v886, %v1054
      %v1056 = vpop.f32.mrf.mxu0
      %v1057 = vadd.f32 %v888, %v1056
      %1058 = vmatmul.bf16.gmra.mxu0 %v724
      %v1059 = vpop.f32.mrf.mxu0
      %v1060 = vadd.f32 %v891, %v1059
      %v1061 = vpop.f32.mrf.mxu0
      %v1062 = vadd.f32 %v893, %v1061
      %1063 = vdwg.mxu0
      %v1064 = vld [vmem:[%s2] sm:$0x1]
      %v1066 = vperm.slane %v1064, 0
      %v1068 = vmul.f32 %v905, %v1066
      %v1069 = vmul.f32 %v907, %v1066
      %v1070 = vmul.f32 %v910, %v1066
      %v1071 = vmul.f32 %v912, %v1066
      %v1072 = vmul.f32 %v915, %v1066
      %v1073 = vmul.f32 %v917, %v1066
      %v1074 = vmul.f32 %v920, %v1066
      %v1075 = vmul.f32 %v922, %v1066
      %v1076 = vmul.f32 %v925, %v1066
      %v1077 = vmul.f32 %v927, %v1066
      %v1078 = vmul.f32 %v930, %v1066
      %v1079 = vmul.f32 %v932, %v1066
      %v1080 = vmul.f32 %v935, %v1066
      %v1081 = vmul.f32 %v937, %v1066
      %v1082 = vmul.f32 %v940, %v1066
      %v1083 = vmul.f32 %v942, %v1066
      %v1084 = vmul.f32 %v945, %v1066
      %v1085 = vmul.f32 %v947, %v1066
      %v1086 = vmul.f32 %v950, %v1066
      %v1087 = vmul.f32 %v952, %v1066
      %v1088 = vmul.f32 %v955, %v1066
      %v1089 = vmul.f32 %v957, %v1066
      %v1090 = vmul.f32 %v960, %v1066
      %v1091 = vmul.f32 %v962, %v1066
      %v1092 = vmul.f32 %v965, %v1066
      %v1093 = vmul.f32 %v967, %v1066
      %v1094 = vmul.f32 %v970, %v1066
      %v1095 = vmul.f32 %v972, %v1066
      %v1096 = vmul.f32 %v975, %v1066
      %v1097 = vmul.f32 %v977, %v1066
      %v1098 = vmul.f32 %v980, %v1066
      %v1099 = vmul.f32 %v982, %v1066
      %v1100 = vmul.f32 %v985, %v1066
      %v1101 = vmul.f32 %v987, %v1066
      %v1102 = vmul.f32 %v990, %v1066
      %v1103 = vmul.f32 %v992, %v1066
      %v1104 = vmul.f32 %v995, %v1066
      %v1105 = vmul.f32 %v997, %v1066
      %v1106 = vmul.f32 %v1000, %v1066
      %v1107 = vmul.f32 %v1002, %v1066
      %v1108 = vmul.f32 %v1005, %v1066
      %v1109 = vmul.f32 %v1007, %v1066
      %v1110 = vmul.f32 %v1010, %v1066
      %v1111 = vmul.f32 %v1012, %v1066
      %v1112 = vmul.f32 %v1015, %v1066
      %v1113 = vmul.f32 %v1017, %v1066
      %v1114 = vmul.f32 %v1020, %v1066
      %v1115 = vmul.f32 %v1022, %v1066
      %v1116 = vmul.f32 %v1025, %v1066
      %v1117 = vmul.f32 %v1027, %v1066
      %v1118 = vmul.f32 %v1030, %v1066
      %v1119 = vmul.f32 %v1032, %v1066
      %v1120 = vmul.f32 %v1035, %v1066
      %v1121 = vmul.f32 %v1037, %v1066
      %v1122 = vmul.f32 %v1040, %v1066
      %v1123 = vmul.f32 %v1042, %v1066
      %v1124 = vmul.f32 %v1045, %v1066
      %v1125 = vmul.f32 %v1047, %v1066
      %v1126 = vmul.f32 %v1050, %v1066
      %v1127 = vmul.f32 %v1052, %v1066
      %v1128 = vmul.f32 %v1055, %v1066
      %v1129 = vmul.f32 %v1057, %v1066
      %v1130 = vmul.f32 %v1060, %v1066
      %v1131 = vmul.f32 %v1062, %v1066
      %v1132 = vld [vmem:[%s3] sm:$0x1]
      %v1134 = vperm.slane %v1132, 0
      %v1136 = vadd.f32 %v1068, %v1134
      %v1137 = vadd.f32 %v1069, %v1134
      %v1138 = vadd.f32 %v1070, %v1134
      %v1139 = vadd.f32 %v1071, %v1134
      %v1140 = vadd.f32 %v1072, %v1134
      %v1141 = vadd.f32 %v1073, %v1134
      %v1142 = vadd.f32 %v1074, %v1134
      %v1143 = vadd.f32 %v1075, %v1134
      %v1144 = vadd.f32 %v1076, %v1134
      %v1145 = vadd.f32 %v1077, %v1134
      %v1146 = vadd.f32 %v1078, %v1134
      %v1147 = vadd.f32 %v1079, %v1134
      %v1148 = vadd.f32 %v1080, %v1134
      %v1149 = vadd.f32 %v1081, %v1134
      %v1150 = vadd.f32 %v1082, %v1134
      %v1151 = vadd.f32 %v1083, %v1134
      %v1152 = vadd.f32 %v1084, %v1134
      %v1153 = vadd.f32 %v1085, %v1134
      %v1154 = vadd.f32 %v1086, %v1134
      %v1155 = vadd.f32 %v1087, %v1134
      %v1156 = vadd.f32 %v1088, %v1134
      %v1157 = vadd.f32 %v1089, %v1134
      %v1158 = vadd.f32 %v1090, %v1134
      %v1159 = vadd.f32 %v1091, %v1134
      %v1160 = vadd.f32 %v1092, %v1134
      %v1161 = vadd.f32 %v1093, %v1134
      %v1162 = vadd.f32 %v1094, %v1134
      %v1163 = vadd.f32 %v1095, %v1134
      %v1164 = vadd.f32 %v1096, %v1134
      %v1165 = vadd.f32 %v1097, %v1134
      %v1166 = vadd.f32 %v1098, %v1134
      %v1167 = vadd.f32 %v1099, %v1134
      %v1168 = vadd.f32 %v1100, %v1134
      %v1169 = vadd.f32 %v1101, %v1134
      %v1170 = vadd.f32 %v1102, %v1134
      %v1171 = vadd.f32 %v1103, %v1134
      %v1172 = vadd.f32 %v1104, %v1134
      %v1173 = vadd.f32 %v1105, %v1134
      %v1174 = vadd.f32 %v1106, %v1134
      %v1175 = vadd.f32 %v1107, %v1134
      %v1176 = vadd.f32 %v1108, %v1134
      %v1177 = vadd.f32 %v1109, %v1134
      %v1178 = vadd.f32 %v1110, %v1134
      %v1179 = vadd.f32 %v1111, %v1134
      %v1180 = vadd.f32 %v1112, %v1134
      %v1181 = vadd.f32 %v1113, %v1134
      %v1182 = vadd.f32 %v1114, %v1134
      %v1183 = vadd.f32 %v1115, %v1134
      %v1184 = vadd.f32 %v1116, %v1134
      %v1185 = vadd.f32 %v1117, %v1134
      %v1186 = vadd.f32 %v1118, %v1134
      %v1187 = vadd.f32 %v1119, %v1134
      %v1188 = vadd.f32 %v1120, %v1134
      %v1189 = vadd.f32 %v1121, %v1134
      %v1190 = vadd.f32 %v1122, %v1134
      %v1191 = vadd.f32 %v1123, %v1134
      %v1192 = vadd.f32 %v1124, %v1134
      %v1193 = vadd.f32 %v1125, %v1134
      %v1194 = vadd.f32 %v1126, %v1134
      %v1195 = vadd.f32 %v1127, %v1134
      %v1196 = vadd.f32 %v1128, %v1134
      %v1197 = vadd.f32 %v1129, %v1134
      %v1198 = vadd.f32 %v1130, %v1134
      %v1199 = vadd.f32 %v1131, %v1134
      %v1200 = vmax.f32 %v1136, 0.0
      %v1201 = vmax.f32 %v1137, 0.0
      %v1202 = vmax.f32 %v1138, 0.0
      %v1203 = vmax.f32 %v1139, 0.0
      %v1204 = vmax.f32 %v1140, 0.0
      %v1205 = vmax.f32 %v1141, 0.0
      %v1206 = vmax.f32 %v1142, 0.0
      %v1207 = vmax.f32 %v1143, 0.0
      %v1208 = vmax.f32 %v1144, 0.0
      %v1209 = vmax.f32 %v1145, 0.0
      %v1210 = vmax.f32 %v1146, 0.0
      %v1211 = vmax.f32 %v1147, 0.0
      %v1212 = vmax.f32 %v1148, 0.0
      %v1213 = vmax.f32 %v1149, 0.0
      %v1214 = vmax.f32 %v1150, 0.0
      %v1215 = vmax.f32 %v1151, 0.0
      %v1216 = vmax.f32 %v1152, 0.0
      %v1217 = vmax.f32 %v1153, 0.0
      %v1218 = vmax.f32 %v1154, 0.0
      %v1219 = vmax.f32 %v1155, 0.0
      %v1220 = vmax.f32 %v1156, 0.0
      %v1221 = vmax.f32 %v1157, 0.0
      %v1222 = vmax.f32 %v1158, 0.0
      %v1223 = vmax.f32 %v1159, 0.0
      %v1224 = vmax.f32 %v1160, 0.0
      %v1225 = vmax.f32 %v1161, 0.0
      %v1226 = vmax.f32 %v1162, 0.0
      %v1227 = vmax.f32 %v1163, 0.0
      %v1228 = vmax.f32 %v1164, 0.0
      %v1229 = vmax.f32 %v1165, 0.0
      %v1230 = vmax.f32 %v1166, 0.0
      %v1231 = vmax.f32 %v1167, 0.0
      %v1232 = vmax.f32 %v1168, 0.0
      %v1233 = vmax.f32 %v1169, 0.0
      %v1234 = vmax.f32 %v1170, 0.0
      %v1235 = vmax.f32 %v1171, 0.0
      %v1236 = vmax.f32 %v1172, 0.0
      %v1237 = vmax.f32 %v1173, 0.0
      %v1238 = vmax.f32 %v1174, 0.0
      %v1239 = vmax.f32 %v1175, 0.0
      %v1240 = vmax.f32 %v1176, 0.0
      %v1241 = vmax.f32 %v1177, 0.0
      %v1242 = vmax.f32 %v1178, 0.0
      %v1243 = vmax.f32 %v1179, 0.0
      %v1244 = vmax.f32 %v1180, 0.0
      %v1245 = vmax.f32 %v1181, 0.0
      %v1246 = vmax.f32 %v1182, 0.0
      %v1247 = vmax.f32 %v1183, 0.0
      %v1248 = vmax.f32 %v1184, 0.0
      %v1249 = vmax.f32 %v1185, 0.0
      %v1250 = vmax.f32 %v1186, 0.0
      %v1251 = vmax.f32 %v1187, 0.0
      %v1252 = vmax.f32 %v1188, 0.0
      %v1253 = vmax.f32 %v1189, 0.0
      %v1254 = vmax.f32 %v1190, 0.0
      %v1255 = vmax.f32 %v1191, 0.0
      %v1256 = vmax.f32 %v1192, 0.0
      %v1257 = vmax.f32 %v1193, 0.0
      %v1258 = vmax.f32 %v1194, 0.0
      %v1259 = vmax.f32 %v1195, 0.0
      %v1260 = vmax.f32 %v1196, 0.0
      %v1261 = vmax.f32 %v1197, 0.0
      %v1262 = vmax.f32 %v1198, 0.0
      %v1263 = vmax.f32 %v1199, 0.0
      %v1264 = vpack.c.bf16 %v1200, %v1200
      %v1265 = vpack.c.bf16 %v1201, %v1201
      %v1266 = vpack.c.bf16 %v1202, %v1202
      %v1267 = vpack.c.bf16 %v1203, %v1203
      %v1268 = vpack.c.bf16 %v1204, %v1204
      %v1269 = vpack.c.bf16 %v1205, %v1205
      %v1270 = vpack.c.bf16 %v1206, %v1206
      %v1271 = vpack.c.bf16 %v1207, %v1207
      %v1272 = vpack.c.bf16 %v1208, %v1208
      %v1273 = vpack.c.bf16 %v1209, %v1209
      %v1274 = vpack.c.bf16 %v1210, %v1210
      %v1275 = vpack.c.bf16 %v1211, %v1211
      %v1276 = vpack.c.bf16 %v1212, %v1212
      %v1277 = vpack.c.bf16 %v1213, %v1213
      %v1278 = vpack.c.bf16 %v1214, %v1214
      %v1279 = vpack.c.bf16 %v1215, %v1215
      %v1280 = vpack.c.bf16 %v1216, %v1216
      %v1281 = vpack.c.bf16 %v1217, %v1217
      %v1282 = vpack.c.bf16 %v1218, %v1218
      %v1283 = vpack.c.bf16 %v1219, %v1219
      %v1284 = vpack.c.bf16 %v1220, %v1220
      %v1285 = vpack.c.bf16 %v1221, %v1221
      %v1286 = vpack.c.bf16 %v1222, %v1222
      %v1287 = vpack.c.bf16 %v1223, %v1223
      %v1288 = vpack.c.bf16 %v1224, %v1224
      %v1289 = vpack.c.bf16 %v1225, %v1225
      %v1290 = vpack.c.bf16 %v1226, %v1226
      %v1291 = vpack.c.bf16 %v1227, %v1227
      %v1292 = vpack.c.bf16 %v1228, %v1228
      %v1293 = vpack.c.bf16 %v1229, %v1229
      %v1294 = vpack.c.bf16 %v1230, %v1230
      %v1295 = vpack.c.bf16 %v1231, %v1231
      %v1296 = vpack.c.bf16 %v1232, %v1232
      %v1297 = vpack.c.bf16 %v1233, %v1233
      %v1298 = vpack.c.bf16 %v1234, %v1234
      %v1299 = vpack.c.bf16 %v1235, %v1235
      %v1300 = vpack.c.bf16 %v1236, %v1236
      %v1301 = vpack.c.bf16 %v1237, %v1237
      %v1302 = vpack.c.bf16 %v1238, %v1238
      %v1303 = vpack.c.bf16 %v1239, %v1239
      %v1304 = vpack.c.bf16 %v1240, %v1240
      %v1305 = vpack.c.bf16 %v1241, %v1241
      %v1306 = vpack.c.bf16 %v1242, %v1242
      %v1307 = vpack.c.bf16 %v1243, %v1243
      %v1308 = vpack.c.bf16 %v1244, %v1244
      %v1309 = vpack.c.bf16 %v1245, %v1245
      %v1310 = vpack.c.bf16 %v1246, %v1246
      %v1311 = vpack.c.bf16 %v1247, %v1247
      %v1312 = vpack.c.bf16 %v1248, %v1248
      %v1313 = vpack.c.bf16 %v1249, %v1249
      %v1314 = vpack.c.bf16 %v1250, %v1250
      %v1315 = vpack.c.bf16 %v1251, %v1251
      %v1316 = vpack.c.bf16 %v1252, %v1252
      %v1317 = vpack.c.bf16 %v1253, %v1253
      %v1318 = vpack.c.bf16 %v1254, %v1254
      %v1319 = vpack.c.bf16 %v1255, %v1255
      %v1320 = vpack.c.bf16 %v1256, %v1256
      %v1321 = vpack.c.bf16 %v1257, %v1257
      %v1322 = vpack.c.bf16 %v1258, %v1258
      %v1323 = vpack.c.bf16 %v1259, %v1259
      %v1324 = vpack.c.bf16 %v1260, %v1260
      %v1325 = vpack.c.bf16 %v1261, %v1261
      %v1326 = vpack.c.bf16 %v1262, %v1262
      %v1327 = vpack.c.bf16 %v1263, %v1263
      %vm1328 = vcmask 125952
      %1329 = vst.msk [vmem:[%s202] sm:$0xf] %vm1328, %v1264
      %1330 = vst.msk [vmem:[%s202 + $0x4] sm:$0xf] %vm1328, %v1265
      %1331 = vst.msk [vmem:[%s202 + $0x8] sm:$0xf] %vm1328, %v1266
      %1332 = vst.msk [vmem:[%s202 + $0xc] sm:$0xf] %vm1328, %v1267
      %1333 = vst.msk [vmem:[%s202 + $0x10] sm:$0xf] %vm1328, %v1268
      %1334 = vst.msk [vmem:[%s202 + $0x14] sm:$0xf] %vm1328, %v1269
      %1335 = vst.msk [vmem:[%s202 + $0x18] sm:$0xf] %vm1328, %v1270
      %1336 = vst.msk [vmem:[%s202 + $0x1c] sm:$0xf] %vm1328, %v1271
      %1337 = vst.msk [vmem:[%s202 + $0x20] sm:$0xf] %vm1328, %v1272
      %1338 = vst.msk [vmem:[%s202 + $0x24] sm:$0xf] %vm1328, %v1273
      %1339 = vst.msk [vmem:[%s202 + $0x28] sm:$0xf] %vm1328, %v1274
      %1340 = vst.msk [vmem:[%s202 + $0x2c] sm:$0xf] %vm1328, %v1275
      %1341 = vst.msk [vmem:[%s202 + $0x30] sm:$0xf] %vm1328, %v1276
      %1342 = vst.msk [vmem:[%s202 + $0x34] sm:$0xf] %vm1328, %v1277
      %1343 = vst.msk [vmem:[%s202 + $0x38] sm:$0xf] %vm1328, %v1278
      %1344 = vst.msk [vmem:[%s202 + $0x3c] sm:$0xf] %vm1328, %v1279
      %1345 = vst.msk [vmem:[%s202 + $0x40] sm:$0xf] %vm1328, %v1280
      %1346 = vst.msk [vmem:[%s202 + $0x44] sm:$0xf] %vm1328, %v1281
      %1347 = vst.msk [vmem:[%s202 + $0x48] sm:$0xf] %vm1328, %v1282
      %1348 = vst.msk [vmem:[%s202 + $0x4c] sm:$0xf] %vm1328, %v1283
      %1349 = vst.msk [vmem:[%s202 + $0x50] sm:$0xf] %vm1328, %v1284
      %1350 = vst.msk [vmem:[%s202 + $0x54] sm:$0xf] %vm1328, %v1285
      %1351 = vst.msk [vmem:[%s202 + $0x58] sm:$0xf] %vm1328, %v1286
      %1352 = vst.msk [vmem:[%s202 + $0x5c] sm:$0xf] %vm1328, %v1287
      %1353 = vst.msk [vmem:[%s202 + $0x60] sm:$0xf] %vm1328, %v1288
      %1354 = vst.msk [vmem:[%s202 + $0x64] sm:$0xf] %vm1328, %v1289
      %1355 = vst.msk [vmem:[%s202 + $0x68] sm:$0xf] %vm1328, %v1290
      %1356 = vst.msk [vmem:[%s202 + $0x6c] sm:$0xf] %vm1328, %v1291
      %1357 = vst.msk [vmem:[%s202 + $0x70] sm:$0xf] %vm1328, %v1292
      %1358 = vst.msk [vmem:[%s202 + $0x74] sm:$0xf] %vm1328, %v1293
      %1359 = vst.msk [vmem:[%s202 + $0x78] sm:$0xf] %vm1328, %v1294
      %1360 = vst.msk [vmem:[%s202 + $0x7c] sm:$0xf] %vm1328, %v1295
      %1361 = vst.msk [vmem:[%s202 + $0x80] sm:$0xf] %vm1328, %v1296
      %1362 = vst.msk [vmem:[%s202 + $0x84] sm:$0xf] %vm1328, %v1297
      %1363 = vst.msk [vmem:[%s202 + $0x88] sm:$0xf] %vm1328, %v1298
      %1364 = vst.msk [vmem:[%s202 + $0x8c] sm:$0xf] %vm1328, %v1299
      %1365 = vst.msk [vmem:[%s202 + $0x90] sm:$0xf] %vm1328, %v1300
      %1366 = vst.msk [vmem:[%s202 + $0x94] sm:$0xf] %vm1328, %v1301
      %1367 = vst.msk [vmem:[%s202 + $0x98] sm:$0xf] %vm1328, %v1302
      %1368 = vst.msk [vmem:[%s202 + $0x9c] sm:$0xf] %vm1328, %v1303
      %1369 = vst.msk [vmem:[%s202 + $0xa0] sm:$0xf] %vm1328, %v1304
      %1370 = vst.msk [vmem:[%s202 + $0xa4] sm:$0xf] %vm1328, %v1305
      %1371 = vst.msk [vmem:[%s202 + $0xa8] sm:$0xf] %vm1328, %v1306
      %1372 = vst.msk [vmem:[%s202 + $0xac] sm:$0xf] %vm1328, %v1307
      %1373 = vst.msk [vmem:[%s202 + $0xb0] sm:$0xf] %vm1328, %v1308
      %1374 = vst.msk [vmem:[%s202 + $0xb4] sm:$0xf] %vm1328, %v1309
      %1375 = vst.msk [vmem:[%s202 + $0xb8] sm:$0xf] %vm1328, %v1310
      %1376 = vst.msk [vmem:[%s202 + $0xbc] sm:$0xf] %vm1328, %v1311
      %1377 = vst.msk [vmem:[%s202 + $0xc0] sm:$0xf] %vm1328, %v1312
      %1378 = vst.msk [vmem:[%s202 + $0xc4] sm:$0xf] %vm1328, %v1313
      %1379 = vst.msk [vmem:[%s202 + $0xc8] sm:$0xf] %vm1328, %v1314
      %1380 = vst.msk [vmem:[%s202 + $0xcc] sm:$0xf] %vm1328, %v1315
      %1381 = vst.msk [vmem:[%s202 + $0xd0] sm:$0xf] %vm1328, %v1316
      %1382 = vst.msk [vmem:[%s202 + $0xd4] sm:$0xf] %vm1328, %v1317
      %1383 = vst.msk [vmem:[%s202 + $0xd8] sm:$0xf] %vm1328, %v1318
      %1384 = vst.msk [vmem:[%s202 + $0xdc] sm:$0xf] %vm1328, %v1319
      %1385 = vst.msk [vmem:[%s202 + $0xe0] sm:$0xf] %vm1328, %v1320
      %1386 = vst.msk [vmem:[%s202 + $0xe4] sm:$0xf] %vm1328, %v1321
      %1387 = vst.msk [vmem:[%s202 + $0xe8] sm:$0xf] %vm1328, %v1322
      %1388 = vst.msk [vmem:[%s202 + $0xec] sm:$0xf] %vm1328, %v1323
      %1389 = vst.msk [vmem:[%s202 + $0xf0] sm:$0xf] %vm1328, %v1324
      %1390 = vst.msk [vmem:[%s202 + $0xf4] sm:$0xf] %vm1328, %v1325
      %1391 = vst.msk [vmem:[%s202 + $0xf8] sm:$0xf] %vm1328, %v1326
      %1392 = vst.msk [vmem:[%s202 + $0xfc] sm:$0xf] %vm1328, %v1327
      %s1393 = smul.u32 64, %s15
      %p1394 = scmp.lt.s32.totalorder %s1393, 127
      %s1395 = scalar_select %p1394, %s1393, 127
      %s1396 = smul.addr %s1395, 4
      %s1397 = scalar_lea.vmem %s4, %s1396
      // Predicated region
      $region37: #{_lambda_.20} parent=35 // pred_check
        %p1398 = pneg %p122
      $region38: #{_lambda_.20} parent=35 // pred_check_branch
        %1400 = sbr.rel (%p1398) target = $region40
      $region39: #{_lambda_.20} parent=35 // pred_region
        %s1401 = smul.u32 64, %s15
      $region40: #{_lambda_.20} parent=35 // pred_fallthru
        _
    $region36: #{_lambda_.20} parent=5 // pred_fallthru
      _
    %p1402 = scmp.le.s32.totalorder 2, %s10
    // Predicated region
    $region41: #{_lambda_.20} parent=5 // pred_check
      %p1403 = pneg %p1402
    $region42: #{_lambda_.20} parent=5 // pred_check_branch
      %1405 = sbr.rel (%p1403) target = $region44
    $region43: #{_lambda_.20} parent=5 // pred_region
      %s1406 = ssub.s32 %s10, 2
      // Predicated region
      $region45: #{_lambda_.20} parent=43 // pred_check
        %p1407 = pneg %p128
      $region46: #{_lambda_.20} parent=43 // pred_check_branch
        %1409 = sbr.rel (%p1407) target = $region48
      $region47: #{_lambda_.20} parent=43 // pred_region
        %s1410 = smul.u32 64, %s16
        %p1411 = scmp.lt.s32.totalorder %s1410, 127
        %s1412 = scalar_select %p1411, %s1410, 127
        %s1413 = smul.addr %s1412, 4
        %s1414 = scalar_lea.vmem %s4, %s1413
      $region48: #{_lambda_.20} parent=43 // pred_fallthru
        _
    $region44: #{_lambda_.20} parent=5 // pred_fallthru
      _
  $region6: #{_lambda_.20} parent=0 // loop_footer
    %s14 = sadd.s32 1, %s10
  $region7: #{_lambda_.20} parent=0 // loop_footer_branch
    %9 = sbr.rel target = $region3
  $region8: #{_lambda_.20} parent=0 // loop_exit
    _

// kernel: _lambda_.21
$region0: #{_lambda_.21}
  #allocation0 [shape = 'u32[]', space=smem, size = 0x4, offset = 0x4, fixed_abs, tag = 'smem constant byte address 0x4 - core index']
  #allocation1 [shape = 'u32[72,128]{1,0:T(1,128)}', space=vmem, size = 0x9000, scoped, tag = 'internal scratch']
  %s0 = inlined_call_operand.vmem [shape: bf16[512,144], index: 0, kind: input, shape index: {}]
  %s1 = inlined_call_operand.vmem [shape: bf16[144,32], index: 1, kind: input, shape index: {}]
  %s2 = inlined_call_operand.vmem [shape: f32[1,32], index: 2, kind: input, shape index: {}]
  %s3 = inlined_call_operand.vmem [shape: f32[1,32], index: 3, kind: input, shape index: {}]
  %s4 = inlined_call_operand.vmem [shape: bf16[512,32], index: 4, kind: output, shape index: {}]
  %s5 = sld [smem:[#allocation0]]
  $region26: #{_lambda_.21} parent=0
    _
  %s7 = ssub.s32 1, %s5
  %s8 = scalar_select 0, %s7, %s5
  // Predicated region
  $region2: #{_lambda_.21} parent=0 // pred_check
    _
  $region3: #{_lambda_.21} parent=0 // pred_check_branch
    %10 = sbr.rel (0) target = $region5
  $region4: #{_lambda_.21} parent=0 // pred_region
    _
  $region5: #{_lambda_.21} parent=0 // pred_fallthru
    _
  // Predicated region
  $region6: #{_lambda_.21} parent=0 // pred_check
    _
  $region7: #{_lambda_.21} parent=0 // pred_check_branch
    %12 = sbr.rel (0) target = $region9
  $region8: #{_lambda_.21} parent=0 // pred_region
    _
  $region9: #{_lambda_.21} parent=0 // pred_fallthru
    _
  // Predicated region
  $region10: #{_lambda_.21} parent=0 // pred_check
    _
  $region11: #{_lambda_.21} parent=0 // pred_check_branch
    %14 = sbr.rel (0) target = $region13
  $region12: #{_lambda_.21} parent=0 // pred_region
    _
  $region13: #{_lambda_.21} parent=0 // pred_fallthru
    _
  // Predicated region
  $region14: #{_lambda_.21} parent=0 // pred_check
    _
  $region15: #{_lambda_.21} parent=0 // pred_check_branch
    %16 = sbr.rel (0) target = $region17
  $region16: #{_lambda_.21} parent=0 // pred_region
    _
  $region17: #{_lambda_.21} parent=0 // pred_fallthru
    _
  %v18 = vld [vmem:[%s0] sm:$0xff]
  %v19 = vld [vmem:[%s0 + $0x8] sm:$0xff]
  %v20 = vld [vmem:[%s0 + $0x10] sm:$0xff]
  %v21 = vld [vmem:[%s0 + $0x18] sm:$0xff]
  %v22 = vld [vmem:[%s0 + $0x20] sm:$0xff]
  %v23 = vld [vmem:[%s0 + $0x28] sm:$0xff]
  %v24 = vld [vmem:[%s0 + $0x30] sm:$0xff]
  %v25 = vld [vmem:[%s0 + $0x38] sm:$0xff]
  %v26 = vld [vmem:[%s0 + $0x40] sm:$0xff]
  %v27 = vld [vmem:[%s0 + $0x48] sm:$0xff]
  %v28 = vld [vmem:[%s0 + $0x50] sm:$0xff]
  %v29 = vld [vmem:[%s0 + $0x58] sm:$0xff]
  %v30 = vld [vmem:[%s0 + $0x60] sm:$0xff]
  %v31 = vld [vmem:[%s0 + $0x68] sm:$0xff]
  %v32 = vld [vmem:[%s0 + $0x70] sm:$0xff]
  %v33 = vld [vmem:[%s0 + $0x78] sm:$0xff]
  %v34 = vld [vmem:[%s0 + $0x80] sm:$0xff]
  %v35 = vld [vmem:[%s0 + $0x88] sm:$0xff]
  %v36 = vld [vmem:[%s0 + $0x90] sm:$0xff]
  %v37 = vld [vmem:[%s0 + $0x98] sm:$0xff]
  %v38 = vld [vmem:[%s0 + $0xa0] sm:$0xff]
  %v39 = vld [vmem:[%s0 + $0xa8] sm:$0xff]
  %v40 = vld [vmem:[%s0 + $0xb0] sm:$0xff]
  %v41 = vld [vmem:[%s0 + $0xb8] sm:$0xff]
  %v42 = vld [vmem:[%s0 + $0xc0] sm:$0xff]
  %v43 = vld [vmem:[%s0 + $0xc8] sm:$0xff]
  %v44 = vld [vmem:[%s0 + $0xd0] sm:$0xff]
  %v45 = vld [vmem:[%s0 + $0xd8] sm:$0xff]
  %v46 = vld [vmem:[%s0 + $0xe0] sm:$0xff]
  %v47 = vld [vmem:[%s0 + $0xe8] sm:$0xff]
  %v48 = vld [vmem:[%s0 + $0xf0] sm:$0xff]
  %v49 = vld [vmem:[%s0 + $0xf8] sm:$0xff]
  %v50 = vld [vmem:[%s0 + $0x100] sm:$0xff]
  %v51 = vld [vmem:[%s0 + $0x108] sm:$0xff]
  %v52 = vld [vmem:[%s0 + $0x110] sm:$0xff]
  %v53 = vld [vmem:[%s0 + $0x118] sm:$0xff]
  %v54 = vld [vmem:[%s0 + $0x120] sm:$0xff]
  %v55 = vld [vmem:[%s0 + $0x128] sm:$0xff]
  %v56 = vld [vmem:[%s0 + $0x130] sm:$0xff]
  %v57 = vld [vmem:[%s0 + $0x138] sm:$0xff]
  %v58 = vld [vmem:[%s0 + $0x140] sm:$0xff]
  %v59 = vld [vmem:[%s0 + $0x148] sm:$0xff]
  %v60 = vld [vmem:[%s0 + $0x150] sm:$0xff]
  %v61 = vld [vmem:[%s0 + $0x158] sm:$0xff]
  %v62 = vld [vmem:[%s0 + $0x160] sm:$0xff]
  %v63 = vld [vmem:[%s0 + $0x168] sm:$0xff]
  %v64 = vld [vmem:[%s0 + $0x170] sm:$0xff]
  %v65 = vld [vmem:[%s0 + $0x178] sm:$0xff]
  %v66 = vld [vmem:[%s0 + $0x180] sm:$0xff]
  %v67 = vld [vmem:[%s0 + $0x188] sm:$0xff]
  %v68 = vld [vmem:[%s0 + $0x190] sm:$0xff]
  %v69 = vld [vmem:[%s0 + $0x198] sm:$0xff]
  %v70 = vld [vmem:[%s0 + $0x1a0] sm:$0xff]
  %v71 = vld [vmem:[%s0 + $0x1a8] sm:$0xff]
  %v72 = vld [vmem:[%s0 + $0x1b0] sm:$0xff]
  %v73 = vld [vmem:[%s0 + $0x1b8] sm:$0xff]
  %v74 = vld [vmem:[%s0 + $0x1c0] sm:$0xff]
  %v75 = vld [vmem:[%s0 + $0x1c8] sm:$0xff]
  %v76 = vld [vmem:[%s0 + $0x1d0] sm:$0xff]
  %v77 = vld [vmem:[%s0 + $0x1d8] sm:$0xff]
  %v78 = vld [vmem:[%s0 + $0x1e0] sm:$0xff]
  %v79 = vld [vmem:[%s0 + $0x1e8] sm:$0xff]
  %v80 = vld [vmem:[%s0 + $0x1f0] sm:$0xff]
  %v81 = vld [vmem:[%s0 + $0x1f8] sm:$0xff]
  %v82 = vld [vmem:[%s1] sm:$0xf]
  %v83 = vld [vmem:[%s1 + $0x4] sm:$0xf]
  %v84 = vld [vmem:[%s1 + $0x8] sm:$0xf]
  %v85 = vld [vmem:[%s1 + $0xc] sm:$0xf]
  %v86 = vld [vmem:[%s1 + $0x10] sm:$0xf]
  %v87 = vld [vmem:[%s1 + $0x14] sm:$0xf]
  %v88 = vld [vmem:[%s1 + $0x18] sm:$0xf]
  %v89 = vld [vmem:[%s1 + $0x1c] sm:$0xf]
  %v90 = vld [vmem:[%s1 + $0x20] sm:$0xf]
  %v91 = vld [vmem:[%s1 + $0x24] sm:$0xf]
  %v92 = vld [vmem:[%s1 + $0x28] sm:$0xf]
  %v93 = vld [vmem:[%s1 + $0x2c] sm:$0xf]
  %v94 = vld [vmem:[%s1 + $0x30] sm:$0xf]
  %v95 = vld [vmem:[%s1 + $0x34] sm:$0xf]
  %v96 = vld [vmem:[%s1 + $0x38] sm:$0xf]
  %v97 = vld [vmem:[%s1 + $0x3c] sm:$0xf]
  %v98 = vld [vmem:[%s1 + $0x40] sm:$0xf]
  %v99 = vld [vmem:[%s1 + $0x44] sm:$0xf]
  %v164 = vunpack.c.l.b16 %v18
  %v165 = vunpack.c.h.b16 %v18
  %v166 = vunpack.c.l.b16 %v19
  %v167 = vunpack.c.h.b16 %v19
  %v168 = vunpack.c.l.b16 %v20
  %v169 = vunpack.c.h.b16 %v20
  %v170 = vunpack.c.l.b16 %v21
  %v171 = vunpack.c.h.b16 %v21
  %v172 = vunpack.c.l.b16 %v22
  %v173 = vunpack.c.h.b16 %v22
  %v174 = vunpack.c.l.b16 %v23
  %v175 = vunpack.c.h.b16 %v23
  %v176 = vunpack.c.l.b16 %v24
  %v177 = vunpack.c.h.b16 %v24
  %v178 = vunpack.c.l.b16 %v25
  %v179 = vunpack.c.h.b16 %v25
  %v180 = vunpack.c.l.b16 %v26
  %v181 = vunpack.c.h.b16 %v26
  %v182 = vunpack.c.l.b16 %v27
  %v183 = vunpack.c.h.b16 %v27
  %v184 = vunpack.c.l.b16 %v28
  %v185 = vunpack.c.h.b16 %v28
  %v186 = vunpack.c.l.b16 %v29
  %v187 = vunpack.c.h.b16 %v29
  %v188 = vunpack.c.l.b16 %v30
  %v189 = vunpack.c.h.b16 %v30
  %v190 = vunpack.c.l.b16 %v31
  %v191 = vunpack.c.h.b16 %v31
  %v192 = vunpack.c.l.b16 %v32
  %v193 = vunpack.c.h.b16 %v32
  %v194 = vunpack.c.l.b16 %v33
  %v195 = vunpack.c.h.b16 %v33
  %v196 = vunpack.c.l.b16 %v34
  %v197 = vunpack.c.h.b16 %v34
  %v198 = vunpack.c.l.b16 %v35
  %v199 = vunpack.c.h.b16 %v35
  %v200 = vunpack.c.l.b16 %v36
  %v201 = vunpack.c.h.b16 %v36
  %v202 = vunpack.c.l.b16 %v37
  %v203 = vunpack.c.h.b16 %v37
  %v204 = vunpack.c.l.b16 %v38
  %v205 = vunpack.c.h.b16 %v38
  %v206 = vunpack.c.l.b16 %v39
  %v207 = vunpack.c.h.b16 %v39
  %v208 = vunpack.c.l.b16 %v40
  %v209 = vunpack.c.h.b16 %v40
  %v210 = vunpack.c.l.b16 %v41
  %v211 = vunpack.c.h.b16 %v41
  %v212 = vunpack.c.l.b16 %v42
  %v213 = vunpack.c.h.b16 %v42
  %v214 = vunpack.c.l.b16 %v43
  %v215 = vunpack.c.h.b16 %v43
  %v216 = vunpack.c.l.b16 %v44
  %v217 = vunpack.c.h.b16 %v44
  %v218 = vunpack.c.l.b16 %v45
  %v219 = vunpack.c.h.b16 %v45
  %v220 = vunpack.c.l.b16 %v46
  %v221 = vunpack.c.h.b16 %v46
  %v222 = vunpack.c.l.b16 %v47
  %v223 = vunpack.c.h.b16 %v47
  %v224 = vunpack.c.l.b16 %v48
  %v225 = vunpack.c.h.b16 %v48
  %v226 = vunpack.c.l.b16 %v49
  %v227 = vunpack.c.h.b16 %v49
  %v228 = vunpack.c.l.b16 %v50
  %v229 = vunpack.c.h.b16 %v50
  %v230 = vunpack.c.l.b16 %v51
  %v231 = vunpack.c.h.b16 %v51
  %v232 = vunpack.c.l.b16 %v52
  %v233 = vunpack.c.h.b16 %v52
  %v234 = vunpack.c.l.b16 %v53
  %v235 = vunpack.c.h.b16 %v53
  %v236 = vunpack.c.l.b16 %v54
  %v237 = vunpack.c.h.b16 %v54
  %v238 = vunpack.c.l.b16 %v55
  %v239 = vunpack.c.h.b16 %v55
  %v240 = vunpack.c.l.b16 %v56
  %v241 = vunpack.c.h.b16 %v56
  %v242 = vunpack.c.l.b16 %v57
  %v243 = vunpack.c.h.b16 %v57
  %v244 = vunpack.c.l.b16 %v58
  %v245 = vunpack.c.h.b16 %v58
  %v246 = vunpack.c.l.b16 %v59
  %v247 = vunpack.c.h.b16 %v59
  %v248 = vunpack.c.l.b16 %v60
  %v249 = vunpack.c.h.b16 %v60
  %v250 = vunpack.c.l.b16 %v61
  %v251 = vunpack.c.h.b16 %v61
  %v252 = vunpack.c.l.b16 %v62
  %v253 = vunpack.c.h.b16 %v62
  %v254 = vunpack.c.l.b16 %v63
  %v255 = vunpack.c.h.b16 %v63
  %v256 = vunpack.c.l.b16 %v64
  %v257 = vunpack.c.h.b16 %v64
  %v258 = vunpack.c.l.b16 %v65
  %v259 = vunpack.c.h.b16 %v65
  %v260 = vunpack.c.l.b16 %v66
  %v261 = vunpack.c.h.b16 %v66
  %v262 = vunpack.c.l.b16 %v67
  %v263 = vunpack.c.h.b16 %v67
  %v264 = vunpack.c.l.b16 %v68
  %v265 = vunpack.c.h.b16 %v68
  %v266 = vunpack.c.l.b16 %v69
  %v267 = vunpack.c.h.b16 %v69
  %v268 = vunpack.c.l.b16 %v70
  %v269 = vunpack.c.h.b16 %v70
  %v270 = vunpack.c.l.b16 %v71
  %v271 = vunpack.c.h.b16 %v71
  %v272 = vunpack.c.l.b16 %v72
  %v273 = vunpack.c.h.b16 %v72
  %v274 = vunpack.c.l.b16 %v73
  %v275 = vunpack.c.h.b16 %v73
  %v276 = vunpack.c.l.b16 %v74
  %v277 = vunpack.c.h.b16 %v74
  %v278 = vunpack.c.l.b16 %v75
  %v279 = vunpack.c.h.b16 %v75
  %v280 = vunpack.c.l.b16 %v76
  %v281 = vunpack.c.h.b16 %v76
  %v282 = vunpack.c.l.b16 %v77
  %v283 = vunpack.c.h.b16 %v77
  %v284 = vunpack.c.l.b16 %v78
  %v285 = vunpack.c.h.b16 %v78
  %v286 = vunpack.c.l.b16 %v79
  %v287 = vunpack.c.h.b16 %v79
  %v288 = vunpack.c.l.b16 %v80
  %v289 = vunpack.c.h.b16 %v80
  %v290 = vunpack.c.l.b16 %v81
  %v291 = vunpack.c.h.b16 %v81
  %v292 = vpack.c.b16 %v166, %v164
  %v293 = vpack.c.b16 %v167, %v165
  %v294 = vpack.c.b16 %v170, %v168
  %v295 = vpack.c.b16 %v171, %v169
  %v296 = vpack.c.b16 %v174, %v172
  %v297 = vpack.c.b16 %v175, %v173
  %v298 = vpack.c.b16 %v178, %v176
  %v299 = vpack.c.b16 %v179, %v177
  %v300 = vpack.c.b16 %v182, %v180
  %v301 = vpack.c.b16 %v183, %v181
  %v302 = vpack.c.b16 %v186, %v184
  %v303 = vpack.c.b16 %v187, %v185
  %v304 = vpack.c.b16 %v190, %v188
  %v305 = vpack.c.b16 %v191, %v189
  %v306 = vpack.c.b16 %v194, %v192
  %v307 = vpack.c.b16 %v195, %v193
  %v308 = vpack.c.b16 %v198, %v196
  %v309 = vpack.c.b16 %v199, %v197
  %v310 = vpack.c.b16 %v202, %v200
  %v311 = vpack.c.b16 %v203, %v201
  %v312 = vpack.c.b16 %v206, %v204
  %v313 = vpack.c.b16 %v207, %v205
  %v314 = vpack.c.b16 %v210, %v208
  %v315 = vpack.c.b16 %v211, %v209
  %v316 = vpack.c.b16 %v214, %v212
  %v317 = vpack.c.b16 %v215, %v213
  %v318 = vpack.c.b16 %v218, %v216
  %v319 = vpack.c.b16 %v219, %v217
  %v320 = vpack.c.b16 %v222, %v220
  %v321 = vpack.c.b16 %v223, %v221
  %v322 = vpack.c.b16 %v226, %v224
  %v323 = vpack.c.b16 %v227, %v225
  %v324 = vpack.c.b16 %v230, %v228
  %v325 = vpack.c.b16 %v231, %v229
  %v326 = vpack.c.b16 %v234, %v232
  %v327 = vpack.c.b16 %v235, %v233
  %v328 = vpack.c.b16 %v238, %v236
  %v329 = vpack.c.b16 %v239, %v237
  %v330 = vpack.c.b16 %v242, %v240
  %v331 = vpack.c.b16 %v243, %v241
  %v332 = vpack.c.b16 %v246, %v244
  %v333 = vpack.c.b16 %v247, %v245
  %v334 = vpack.c.b16 %v250, %v248
  %v335 = vpack.c.b16 %v251, %v249
  %v336 = vpack.c.b16 %v254, %v252
  %v337 = vpack.c.b16 %v255, %v253
  %v338 = vpack.c.b16 %v258, %v256
  %v339 = vpack.c.b16 %v259, %v257
  %v340 = vpack.c.b16 %v262, %v260
  %v341 = vpack.c.b16 %v263, %v261
  %v342 = vpack.c.b16 %v266, %v264
  %v343 = vpack.c.b16 %v267, %v265
  %v344 = vpack.c.b16 %v270, %v268
  %v345 = vpack.c.b16 %v271, %v269
  %v346 = vpack.c.b16 %v274, %v272
  %v347 = vpack.c.b16 %v275, %v273
  %v348 = vpack.c.b16 %v278, %v276
  %v349 = vpack.c.b16 %v279, %v277
  %v350 = vpack.c.b16 %v282, %v280
  %v351 = vpack.c.b16 %v283, %v281
  %v352 = vpack.c.b16 %v286, %v284
  %v353 = vpack.c.b16 %v287, %v285
  %v354 = vpack.c.b16 %v290, %v288
  %v355 = vpack.c.b16 %v291, %v289
  %v406 = vunpack.c.l.b16 %v82
  %v407 = vunpack.c.l.b16 %v83
  %v408 = vunpack.c.l.b16 %v84
  %v409 = vunpack.c.l.b16 %v85
  %v410 = vunpack.c.l.b16 %v86
  %v411 = vunpack.c.l.b16 %v87
  %v412 = vunpack.c.l.b16 %v88
  %v413 = vunpack.c.l.b16 %v89
  %v414 = vunpack.c.l.b16 %v90
  %v415 = vunpack.c.l.b16 %v91
  %v416 = vunpack.c.l.b16 %v92
  %v417 = vunpack.c.l.b16 %v93
  %v418 = vunpack.c.l.b16 %v94
  %v419 = vunpack.c.l.b16 %v95
  %v420 = vunpack.c.l.b16 %v96
  %v421 = vunpack.c.l.b16 %v97
  %v422 = vunpack.c.l.b16 %v98
  %v423 = vunpack.c.l.b16 %v99
  %v424 = vpack.c.b16 %v407, %v406
  %v425 = vpack.c.b16 %v409, %v408
  %v426 = vpack.c.b16 %v411, %v410
  %v427 = vpack.c.b16 %v413, %v412
  %v428 = vpack.c.b16 %v415, %v414
  %v429 = vpack.c.b16 %v417, %v416
  %v430 = vpack.c.b16 %v419, %v418
  %v431 = vpack.c.b16 %v421, %v420
  %v432 = vpack.c.b16 %v423, %v422
  %vm442 = vcmask 130048
  %v444 = vsel %vm442, %v293, 0
  %v447 = vsel %vm442, %v295, 0
  %v450 = vsel %vm442, %v297, 0
  %v453 = vsel %vm442, %v299, 0
  %v456 = vsel %vm442, %v301, 0
  %v459 = vsel %vm442, %v303, 0
  %v462 = vsel %vm442, %v305, 0
  %v465 = vsel %vm442, %v307, 0
  %v468 = vsel %vm442, %v309, 0
  %v471 = vsel %vm442, %v311, 0
  %v474 = vsel %vm442, %v313, 0
  %v477 = vsel %vm442, %v315, 0
  %v480 = vsel %vm442, %v317, 0
  %v483 = vsel %vm442, %v319, 0
  %v486 = vsel %vm442, %v321, 0
  %v489 = vsel %vm442, %v323, 0
  %v492 = vsel %vm442, %v325, 0
  %v495 = vsel %vm442, %v327, 0
  %v498 = vsel %vm442, %v329, 0
  %v501 = vsel %vm442, %v331, 0
  %v504 = vsel %vm442, %v333, 0
  %v507 = vsel %vm442, %v335, 0
  %v510 = vsel %vm442, %v337, 0
  %v513 = vsel %vm442, %v339, 0
  %v516 = vsel %vm442, %v341, 0
  %v519 = vsel %vm442, %v343, 0
  %v522 = vsel %vm442, %v345, 0
  %v525 = vsel %vm442, %v347, 0
  %v528 = vsel %vm442, %v349, 0
  %v531 = vsel %vm442, %v351, 0
  %v534 = vsel %vm442, %v353, 0
  %v537 = vsel %vm442, %v355, 0
  %539 = vmatpush.bf16.msra.mxu0 %v431
  %540 = vmatpush.bf16.msra.mxu0 %v430
  %541 = vmatpush.bf16.msra.mxu0 %v429
  %542 = vmatpush.bf16.msra.mxu0 %v428
  %543 = vmatpush.bf16.msra.mxu0 %v427
  %544 = vmatpush.bf16.msra.mxu0 %v426
  %545 = vmatpush.bf16.msra.mxu0 %v425
  %546 = vmatpush.bf16.msra.mxu0 %v424
  %547 = vmatmul.bf16.gmra.mxu0 %v292
  %v548 = vpop.f32.mrf.mxu0
  %v549 = vadd.f32 0.0, %v548
  %v550 = vpop.f32.mrf.mxu0
  %v551 = vadd.f32 0.0, %v550
  %552 = vmatmul.bf16.gmra.mxu0 %v294
  %v553 = vpop.f32.mrf.mxu0
  %v554 = vadd.f32 0.0, %v553
  %v555 = vpop.f32.mrf.mxu0
  %v556 = vadd.f32 0.0, %v555
  %557 = vmatmul.bf16.gmra.mxu0 %v296
  %v558 = vpop.f32.mrf.mxu0
  %v559 = vadd.f32 0.0, %v558
  %v560 = vpop.f32.mrf.mxu0
  %v561 = vadd.f32 0.0, %v560
  %562 = vmatmul.bf16.gmra.mxu0 %v298
  %v563 = vpop.f32.mrf.mxu0
  %v564 = vadd.f32 0.0, %v563
  %v565 = vpop.f32.mrf.mxu0
  %v566 = vadd.f32 0.0, %v565
  %567 = vmatmul.bf16.gmra.mxu0 %v300
  %v568 = vpop.f32.mrf.mxu0
  %v569 = vadd.f32 0.0, %v568
  %v570 = vpop.f32.mrf.mxu0
  %v571 = vadd.f32 0.0, %v570
  %572 = vmatmul.bf16.gmra.mxu0 %v302
  %v573 = vpop.f32.mrf.mxu0
  %v574 = vadd.f32 0.0, %v573
  %v575 = vpop.f32.mrf.mxu0
  %v576 = vadd.f32 0.0, %v575
  %577 = vmatmul.bf16.gmra.mxu0 %v304
  %v578 = vpop.f32.mrf.mxu0
  %v579 = vadd.f32 0.0, %v578
  %v580 = vpop.f32.mrf.mxu0
  %v581 = vadd.f32 0.0, %v580
  %582 = vmatmul.bf16.gmra.mxu0 %v306
  %v583 = vpop.f32.mrf.mxu0
  %v584 = vadd.f32 0.0, %v583
  %v585 = vpop.f32.mrf.mxu0
  %v586 = vadd.f32 0.0, %v585
  %587 = vmatmul.bf16.gmra.mxu0 %v308
  %v588 = vpop.f32.mrf.mxu0
  %v589 = vadd.f32 0.0, %v588
  %v590 = vpop.f32.mrf.mxu0
  %v591 = vadd.f32 0.0, %v590
  %592 = vmatmul.bf16.gmra.mxu0 %v310
  %v593 = vpop.f32.mrf.mxu0
  %v594 = vadd.f32 0.0, %v593
  %v595 = vpop.f32.mrf.mxu0
  %v596 = vadd.f32 0.0, %v595
  %597 = vmatmul.bf16.gmra.mxu0 %v312
  %v598 = vpop.f32.mrf.mxu0
  %v599 = vadd.f32 0.0, %v598
  %v600 = vpop.f32.mrf.mxu0
  %v601 = vadd.f32 0.0, %v600
  %602 = vmatmul.bf16.gmra.mxu0 %v314
  %v603 = vpop.f32.mrf.mxu0
  %v604 = vadd.f32 0.0, %v603
  %v605 = vpop.f32.mrf.mxu0
  %v606 = vadd.f32 0.0, %v605
  %607 = vmatmul.bf16.gmra.mxu0 %v316
  %v608 = vpop.f32.mrf.mxu0
  %v609 = vadd.f32 0.0, %v608
  %v610 = vpop.f32.mrf.mxu0
  %v611 = vadd.f32 0.0, %v610
  %612 = vmatmul.bf16.gmra.mxu0 %v318
  %v613 = vpop.f32.mrf.mxu0
  %v614 = vadd.f32 0.0, %v613
  %v615 = vpop.f32.mrf.mxu0
  %v616 = vadd.f32 0.0, %v615
  %617 = vmatmul.bf16.gmra.mxu0 %v320
  %v618 = vpop.f32.mrf.mxu0
  %v619 = vadd.f32 0.0, %v618
  %v620 = vpop.f32.mrf.mxu0
  %v621 = vadd.f32 0.0, %v620
  %622 = vmatmul.bf16.gmra.mxu0 %v322
  %v623 = vpop.f32.mrf.mxu0
  %v624 = vadd.f32 0.0, %v623
  %v625 = vpop.f32.mrf.mxu0
  %v626 = vadd.f32 0.0, %v625
  %627 = vmatmul.bf16.gmra.mxu0 %v324
  %v628 = vpop.f32.mrf.mxu0
  %v629 = vadd.f32 0.0, %v628
  %v630 = vpop.f32.mrf.mxu0
  %v631 = vadd.f32 0.0, %v630
  %632 = vmatmul.bf16.gmra.mxu0 %v326
  %v633 = vpop.f32.mrf.mxu0
  %v634 = vadd.f32 0.0, %v633
  %v635 = vpop.f32.mrf.mxu0
  %v636 = vadd.f32 0.0, %v635
  %637 = vmatmul.bf16.gmra.mxu0 %v328
  %v638 = vpop.f32.mrf.mxu0
  %v639 = vadd.f32 0.0, %v638
  %v640 = vpop.f32.mrf.mxu0
  %v641 = vadd.f32 0.0, %v640
  %642 = vmatmul.bf16.gmra.mxu0 %v330
  %v643 = vpop.f32.mrf.mxu0
  %v644 = vadd.f32 0.0, %v643
  %v645 = vpop.f32.mrf.mxu0
  %v646 = vadd.f32 0.0, %v645
  %647 = vmatmul.bf16.gmra.mxu0 %v332
  %v648 = vpop.f32.mrf.mxu0
  %v649 = vadd.f32 0.0, %v648
  %v650 = vpop.f32.mrf.mxu0
  %v651 = vadd.f32 0.0, %v650
  %652 = vmatmul.bf16.gmra.mxu0 %v334
  %v653 = vpop.f32.mrf.mxu0
  %v654 = vadd.f32 0.0, %v653
  %v655 = vpop.f32.mrf.mxu0
  %v656 = vadd.f32 0.0, %v655
  %657 = vmatmul.bf16.gmra.mxu0 %v336
  %v658 = vpop.f32.mrf.mxu0
  %v659 = vadd.f32 0.0, %v658
  %v660 = vpop.f32.mrf.mxu0
  %v661 = vadd.f32 0.0, %v660
  %662 = vmatmul.bf16.gmra.mxu0 %v338
  %v663 = vpop.f32.mrf.mxu0
  %v664 = vadd.f32 0.0, %v663
  %v665 = vpop.f32.mrf.mxu0
  %v666 = vadd.f32 0.0, %v665
  %667 = vmatmul.bf16.gmra.mxu0 %v340
  %v668 = vpop.f32.mrf.mxu0
  %v669 = vadd.f32 0.0, %v668
  %v670 = vpop.f32.mrf.mxu0
  %v671 = vadd.f32 0.0, %v670
  %672 = vmatmul.bf16.gmra.mxu0 %v342
  %v673 = vpop.f32.mrf.mxu0
  %v674 = vadd.f32 0.0, %v673
  %v675 = vpop.f32.mrf.mxu0
  %v676 = vadd.f32 0.0, %v675
  %677 = vmatmul.bf16.gmra.mxu0 %v344
  %v678 = vpop.f32.mrf.mxu0
  %v679 = vadd.f32 0.0, %v678
  %v680 = vpop.f32.mrf.mxu0
  %v681 = vadd.f32 0.0, %v680
  %682 = vmatmul.bf16.gmra.mxu0 %v346
  %v683 = vpop.f32.mrf.mxu0
  %v684 = vadd.f32 0.0, %v683
  %v685 = vpop.f32.mrf.mxu0
  %v686 = vadd.f32 0.0, %v685
  %687 = vmatmul.bf16.gmra.mxu0 %v348
  %v688 = vpop.f32.mrf.mxu0
  %v689 = vadd.f32 0.0, %v688
  %v690 = vpop.f32.mrf.mxu0
  %v691 = vadd.f32 0.0, %v690
  %692 = vmatmul.bf16.gmra.mxu0 %v350
  %v693 = vpop.f32.mrf.mxu0
  %v694 = vadd.f32 0.0, %v693
  %v695 = vpop.f32.mrf.mxu0
  %v696 = vadd.f32 0.0, %v695
  %697 = vmatmul.bf16.gmra.mxu0 %v352
  %v698 = vpop.f32.mrf.mxu0
  %v699 = vadd.f32 0.0, %v698
  %v700 = vpop.f32.mrf.mxu0
  %v701 = vadd.f32 0.0, %v700
  %702 = vmatmul.bf16.gmra.mxu0 %v354
  %v703 = vpop.f32.mrf.mxu0
  %v704 = vadd.f32 0.0, %v703
  %v705 = vpop.f32.mrf.mxu0
  %v706 = vadd.f32 0.0, %v705
  %707 = vdwg.mxu0
  %708 = vmatpush.bf16.msra.mxu0 0
  %709 = vmatpush.bf16.msra.mxu0 0
  %710 = vmatpush.bf16.msra.mxu0 0
  %711 = vmatpush.bf16.msra.mxu0 0
  %712 = vmatpush.bf16.msra.mxu0 0
  %713 = vmatpush.bf16.msra.mxu0 0
  %714 = vmatpush.bf16.msra.mxu0 0
  %715 = vmatpush.bf16.msra.mxu0 %v432
  %716 = vmatmul.bf16.gmra.mxu0 %v444
  %v717 = vpop.f32.mrf.mxu0
  %v718 = vadd.f32 %v549, %v717
  %v719 = vpop.f32.mrf.mxu0
  %v720 = vadd.f32 %v551, %v719
  %721 = vmatmul.bf16.gmra.mxu0 %v447
  %v722 = vpop.f32.mrf.mxu0
  %v723 = vadd.f32 %v554, %v722
  %v724 = vpop.f32.mrf.mxu0
  %v725 = vadd.f32 %v556, %v724
  %726 = vmatmul.bf16.gmra.mxu0 %v450
  %v727 = vpop.f32.mrf.mxu0
  %v728 = vadd.f32 %v559, %v727
  %v729 = vpop.f32.mrf.mxu0
  %v730 = vadd.f32 %v561, %v729
  %731 = vmatmul.bf16.gmra.mxu0 %v453
  %v732 = vpop.f32.mrf.mxu0
  %v733 = vadd.f32 %v564, %v732
  %v734 = vpop.f32.mrf.mxu0
  %v735 = vadd.f32 %v566, %v734
  %736 = vmatmul.bf16.gmra.mxu0 %v456
  %v737 = vpop.f32.mrf.mxu0
  %v738 = vadd.f32 %v569, %v737
  %v739 = vpop.f32.mrf.mxu0
  %v740 = vadd.f32 %v571, %v739
  %741 = vmatmul.bf16.gmra.mxu0 %v459
  %v742 = vpop.f32.mrf.mxu0
  %v743 = vadd.f32 %v574, %v742
  %v744 = vpop.f32.mrf.mxu0
  %v745 = vadd.f32 %v576, %v744
  %746 = vmatmul.bf16.gmra.mxu0 %v462
  %v747 = vpop.f32.mrf.mxu0
  %v748 = vadd.f32 %v579, %v747
  %v749 = vpop.f32.mrf.mxu0
  %v750 = vadd.f32 %v581, %v749
  %751 = vmatmul.bf16.gmra.mxu0 %v465
  %v752 = vpop.f32.mrf.mxu0
  %v753 = vadd.f32 %v584, %v752
  %v754 = vpop.f32.mrf.mxu0
  %v755 = vadd.f32 %v586, %v754
  %756 = vmatmul.bf16.gmra.mxu0 %v468
  %v757 = vpop.f32.mrf.mxu0
  %v758 = vadd.f32 %v589, %v757
  %v759 = vpop.f32.mrf.mxu0
  %v760 = vadd.f32 %v591, %v759
  %761 = vmatmul.bf16.gmra.mxu0 %v471
  %v762 = vpop.f32.mrf.mxu0
  %v763 = vadd.f32 %v594, %v762
  %v764 = vpop.f32.mrf.mxu0
  %v765 = vadd.f32 %v596, %v764
  %766 = vmatmul.bf16.gmra.mxu0 %v474
  %v767 = vpop.f32.mrf.mxu0
  %v768 = vadd.f32 %v599, %v767
  %v769 = vpop.f32.mrf.mxu0
  %v770 = vadd.f32 %v601, %v769
  %771 = vmatmul.bf16.gmra.mxu0 %v477
  %v772 = vpop.f32.mrf.mxu0
  %v773 = vadd.f32 %v604, %v772
  %v774 = vpop.f32.mrf.mxu0
  %v775 = vadd.f32 %v606, %v774
  %776 = vmatmul.bf16.gmra.mxu0 %v480
  %v777 = vpop.f32.mrf.mxu0
  %v778 = vadd.f32 %v609, %v777
  %v779 = vpop.f32.mrf.mxu0
  %v780 = vadd.f32 %v611, %v779
  %781 = vmatmul.bf16.gmra.mxu0 %v483
  %v782 = vpop.f32.mrf.mxu0
  %v783 = vadd.f32 %v614, %v782
  %v784 = vpop.f32.mrf.mxu0
  %v785 = vadd.f32 %v616, %v784
  %786 = vmatmul.bf16.gmra.mxu0 %v486
  %v787 = vpop.f32.mrf.mxu0
  %v788 = vadd.f32 %v619, %v787
  %v789 = vpop.f32.mrf.mxu0
  %v790 = vadd.f32 %v621, %v789
  %791 = vmatmul.bf16.gmra.mxu0 %v489
  %v792 = vpop.f32.mrf.mxu0
  %v793 = vadd.f32 %v624, %v792
  %v794 = vpop.f32.mrf.mxu0
  %v795 = vadd.f32 %v626, %v794
  %796 = vmatmul.bf16.gmra.mxu0 %v492
  %v797 = vpop.f32.mrf.mxu0
  %v798 = vadd.f32 %v629, %v797
  %v799 = vpop.f32.mrf.mxu0
  %v800 = vadd.f32 %v631, %v799
  %801 = vmatmul.bf16.gmra.mxu0 %v495
  %v802 = vpop.f32.mrf.mxu0
  %v803 = vadd.f32 %v634, %v802
  %v804 = vpop.f32.mrf.mxu0
  %v805 = vadd.f32 %v636, %v804
  %806 = vmatmul.bf16.gmra.mxu0 %v498
  %v807 = vpop.f32.mrf.mxu0
  %v808 = vadd.f32 %v639, %v807
  %v809 = vpop.f32.mrf.mxu0
  %v810 = vadd.f32 %v641, %v809
  %811 = vmatmul.bf16.gmra.mxu0 %v501
  %v812 = vpop.f32.mrf.mxu0
  %v813 = vadd.f32 %v644, %v812
  %v814 = vpop.f32.mrf.mxu0
  %v815 = vadd.f32 %v646, %v814
  %816 = vmatmul.bf16.gmra.mxu0 %v504
  %v817 = vpop.f32.mrf.mxu0
  %v818 = vadd.f32 %v649, %v817
  %v819 = vpop.f32.mrf.mxu0
  %v820 = vadd.f32 %v651, %v819
  %821 = vmatmul.bf16.gmra.mxu0 %v507
  %v822 = vpop.f32.mrf.mxu0
  %v823 = vadd.f32 %v654, %v822
  %v824 = vpop.f32.mrf.mxu0
  %v825 = vadd.f32 %v656, %v824
  %826 = vmatmul.bf16.gmra.mxu0 %v510
  %v827 = vpop.f32.mrf.mxu0
  %v828 = vadd.f32 %v659, %v827
  %v829 = vpop.f32.mrf.mxu0
  %v830 = vadd.f32 %v661, %v829
  %831 = vmatmul.bf16.gmra.mxu0 %v513
  %v832 = vpop.f32.mrf.mxu0
  %v833 = vadd.f32 %v664, %v832
  %v834 = vpop.f32.mrf.mxu0
  %v835 = vadd.f32 %v666, %v834
  %836 = vmatmul.bf16.gmra.mxu0 %v516
  %v837 = vpop.f32.mrf.mxu0
  %v838 = vadd.f32 %v669, %v837
  %v839 = vpop.f32.mrf.mxu0
  %v840 = vadd.f32 %v671, %v839
  %841 = vmatmul.bf16.gmra.mxu0 %v519
  %v842 = vpop.f32.mrf.mxu0
  %v843 = vadd.f32 %v674, %v842
  %v844 = vpop.f32.mrf.mxu0
  %v845 = vadd.f32 %v676, %v844
  %846 = vmatmul.bf16.gmra.mxu0 %v522
  %v847 = vpop.f32.mrf.mxu0
  %v848 = vadd.f32 %v679, %v847
  %v849 = vpop.f32.mrf.mxu0
  %v850 = vadd.f32 %v681, %v849
  %851 = vmatmul.bf16.gmra.mxu0 %v525
  %v852 = vpop.f32.mrf.mxu0
  %v853 = vadd.f32 %v684, %v852
  %v854 = vpop.f32.mrf.mxu0
  %v855 = vadd.f32 %v686, %v854
  %856 = vmatmul.bf16.gmra.mxu0 %v528
  %v857 = vpop.f32.mrf.mxu0
  %v858 = vadd.f32 %v689, %v857
  %v859 = vpop.f32.mrf.mxu0
  %v860 = vadd.f32 %v691, %v859
  %861 = vmatmul.bf16.gmra.mxu0 %v531
  %v862 = vpop.f32.mrf.mxu0
  %v863 = vadd.f32 %v694, %v862
  %v864 = vpop.f32.mrf.mxu0
  %v865 = vadd.f32 %v696, %v864
  %866 = vmatmul.bf16.gmra.mxu0 %v534
  %v867 = vpop.f32.mrf.mxu0
  %v868 = vadd.f32 %v699, %v867
  %v869 = vpop.f32.mrf.mxu0
  %v870 = vadd.f32 %v701, %v869
  %871 = vmatmul.bf16.gmra.mxu0 %v537
  %v872 = vpop.f32.mrf.mxu0
  %v873 = vadd.f32 %v704, %v872
  %v874 = vpop.f32.mrf.mxu0
  %v875 = vadd.f32 %v706, %v874
  %876 = vdwg.mxu0
  %v877 = vld [vmem:[%s2] sm:$0x1]
  %v879 = vperm.slane %v877, 0
  %v881 = vmul.f32 %v718, %v879
  %v882 = vmul.f32 %v720, %v879
  %v883 = vmul.f32 %v723, %v879
  %v884 = vmul.f32 %v725, %v879
  %v885 = vmul.f32 %v728, %v879
  %v886 = vmul.f32 %v730, %v879
  %v887 = vmul.f32 %v733, %v879
  %v888 = vmul.f32 %v735, %v879
  %v889 = vmul.f32 %v738, %v879
  %v890 = vmul.f32 %v740, %v879
  %v891 = vmul.f32 %v743, %v879
  %v892 = vmul.f32 %v745, %v879
  %v893 = vmul.f32 %v748, %v879
  %v894 = vmul.f32 %v750, %v879
  %v895 = vmul.f32 %v753, %v879
  %v896 = vmul.f32 %v755, %v879
  %v897 = vmul.f32 %v758, %v879
  %v898 = vmul.f32 %v760, %v879
  %v899 = vmul.f32 %v763, %v879
  %v900 = vmul.f32 %v765, %v879
  %v901 = vmul.f32 %v768, %v879
  %v902 = vmul.f32 %v770, %v879
  %v903 = vmul.f32 %v773, %v879
  %v904 = vmul.f32 %v775, %v879
  %v905 = vmul.f32 %v778, %v879
  %v906 = vmul.f32 %v780, %v879
  %v907 = vmul.f32 %v783, %v879
  %v908 = vmul.f32 %v785, %v879
  %v909 = vmul.f32 %v788, %v879
  %v910 = vmul.f32 %v790, %v879
  %v911 = vmul.f32 %v793, %v879
  %v912 = vmul.f32 %v795, %v879
  %v913 = vmul.f32 %v798, %v879
  %v914 = vmul.f32 %v800, %v879
  %v915 = vmul.f32 %v803, %v879
  %v916 = vmul.f32 %v805, %v879
  %v917 = vmul.f32 %v808, %v879
  %v918 = vmul.f32 %v810, %v879
  %v919 = vmul.f32 %v813, %v879
  %v920 = vmul.f32 %v815, %v879
  %v921 = vmul.f32 %v818, %v879
  %v922 = vmul.f32 %v820, %v879
  %v923 = vmul.f32 %v823, %v879
  %v924 = vmul.f32 %v825, %v879
  %v925 = vmul.f32 %v828, %v879
  %v926 = vmul.f32 %v830, %v879
  %v927 = vmul.f32 %v833, %v879
  %v928 = vmul.f32 %v835, %v879
  %v929 = vmul.f32 %v838, %v879
  %v930 = vmul.f32 %v840, %v879
  %v931 = vmul.f32 %v843, %v879
  %v932 = vmul.f32 %v845, %v879
  %v933 = vmul.f32 %v848, %v879
  %v934 = vmul.f32 %v850, %v879
  %v935 = vmul.f32 %v853, %v879
  %v936 = vmul.f32 %v855, %v879
  %v937 = vmul.f32 %v858, %v879
  %v938 = vmul.f32 %v860, %v879
  %v939 = vmul.f32 %v863, %v879
  %v940 = vmul.f32 %v865, %v879
  %v941 = vmul.f32 %v868, %v879
  %v942 = vmul.f32 %v870, %v879
  %v943 = vmul.f32 %v873, %v879
  %v944 = vmul.f32 %v875, %v879
  %v945 = vld [vmem:[%s3] sm:$0x1]
  %v947 = vperm.slane %v945, 0
  %v949 = vadd.f32 %v881, %v947
  %v950 = vadd.f32 %v882, %v947
  %v951 = vadd.f32 %v883, %v947
  %v952 = vadd.f32 %v884, %v947
  %v953 = vadd.f32 %v885, %v947
  %v954 = vadd.f32 %v886, %v947
  %v955 = vadd.f32 %v887, %v947
  %v956 = vadd.f32 %v888, %v947
  %v957 = vadd.f32 %v889, %v947
  %v958 = vadd.f32 %v890, %v947
  %v959 = vadd.f32 %v891, %v947
  %v960 = vadd.f32 %v892, %v947
  %v961 = vadd.f32 %v893, %v947
  %v962 = vadd.f32 %v894, %v947
  %v963 = vadd.f32 %v895, %v947
  %v964 = vadd.f32 %v896, %v947
  %v965 = vadd.f32 %v897, %v947
  %v966 = vadd.f32 %v898, %v947
  %v967 = vadd.f32 %v899, %v947
  %v968 = vadd.f32 %v900, %v947
  %v969 = vadd.f32 %v901, %v947
  %v970 = vadd.f32 %v902, %v947
  %v971 = vadd.f32 %v903, %v947
  %v972 = vadd.f32 %v904, %v947
  %v973 = vadd.f32 %v905, %v947
  %v974 = vadd.f32 %v906, %v947
  %v975 = vadd.f32 %v907, %v947
  %v976 = vadd.f32 %v908, %v947
  %v977 = vadd.f32 %v909, %v947
  %v978 = vadd.f32 %v910, %v947
  %v979 = vadd.f32 %v911, %v947
  %v980 = vadd.f32 %v912, %v947
  %v981 = vadd.f32 %v913, %v947
  %v982 = vadd.f32 %v914, %v947
  %v983 = vadd.f32 %v915, %v947
  %v984 = vadd.f32 %v916, %v947
  %v985 = vadd.f32 %v917, %v947
  %v986 = vadd.f32 %v918, %v947
  %v987 = vadd.f32 %v919, %v947
  %v988 = vadd.f32 %v920, %v947
  %v989 = vadd.f32 %v921, %v947
  %v990 = vadd.f32 %v922, %v947
  %v991 = vadd.f32 %v923, %v947
  %v992 = vadd.f32 %v924, %v947
  %v993 = vadd.f32 %v925, %v947
  %v994 = vadd.f32 %v926, %v947
  %v995 = vadd.f32 %v927, %v947
  %v996 = vadd.f32 %v928, %v947
  %v997 = vadd.f32 %v929, %v947
  %v998 = vadd.f32 %v930, %v947
  %v999 = vadd.f32 %v931, %v947
  %v1000 = vadd.f32 %v932, %v947
  %v1001 = vadd.f32 %v933, %v947
  %v1002 = vadd.f32 %v934, %v947
  %v1003 = vadd.f32 %v935, %v947
  %v1004 = vadd.f32 %v936, %v947
  %v1005 = vadd.f32 %v937, %v947
  %v1006 = vadd.f32 %v938, %v947
  %v1007 = vadd.f32 %v939, %v947
  %v1008 = vadd.f32 %v940, %v947
  %v1009 = vadd.f32 %v941, %v947
  %v1010 = vadd.f32 %v942, %v947
  %v1011 = vadd.f32 %v943, %v947
  %v1012 = vadd.f32 %v944, %v947
  %v1013 = vmax.f32 %v949, 0.0
  %v1014 = vmax.f32 %v950, 0.0
  %v1015 = vmax.f32 %v951, 0.0
  %v1016 = vmax.f32 %v952, 0.0
  %v1017 = vmax.f32 %v953, 0.0
  %v1018 = vmax.f32 %v954, 0.0
  %v1019 = vmax.f32 %v955, 0.0
  %v1020 = vmax.f32 %v956, 0.0
  %v1021 = vmax.f32 %v957, 0.0
  %v1022 = vmax.f32 %v958, 0.0
  %v1023 = vmax.f32 %v959, 0.0
  %v1024 = vmax.f32 %v960, 0.0
  %v1025 = vmax.f32 %v961, 0.0
  %v1026 = vmax.f32 %v962, 0.0
  %v1027 = vmax.f32 %v963, 0.0
  %v1028 = vmax.f32 %v964, 0.0
  %v1029 = vmax.f32 %v965, 0.0
  %v1030 = vmax.f32 %v966, 0.0
  %v1031 = vmax.f32 %v967, 0.0
  %v1032 = vmax.f32 %v968, 0.0
  %v1033 = vmax.f32 %v969, 0.0
  %v1034 = vmax.f32 %v970, 0.0
  %v1035 = vmax.f32 %v971, 0.0
  %v1036 = vmax.f32 %v972, 0.0
  %v1037 = vmax.f32 %v973, 0.0
  %v1038 = vmax.f32 %v974, 0.0
  %v1039 = vmax.f32 %v975, 0.0
  %v1040 = vmax.f32 %v976, 0.0
  %v1041 = vmax.f32 %v977, 0.0
  %v1042 = vmax.f32 %v978, 0.0
  %v1043 = vmax.f32 %v979, 0.0
  %v1044 = vmax.f32 %v980, 0.0
  %v1045 = vmax.f32 %v981, 0.0
  %v1046 = vmax.f32 %v982, 0.0
  %v1047 = vmax.f32 %v983, 0.0
  %v1048 = vmax.f32 %v984, 0.0
  %v1049 = vmax.f32 %v985, 0.0
  %v1050 = vmax.f32 %v986, 0.0
  %v1051 = vmax.f32 %v987, 0.0
  %v1052 = vmax.f32 %v988, 0.0
  %v1053 = vmax.f32 %v989, 0.0
  %v1054 = vmax.f32 %v990, 0.0
  %v1055 = vmax.f32 %v991, 0.0
  %v1056 = vmax.f32 %v992, 0.0
  %v1057 = vmax.f32 %v993, 0.0
  %v1058 = vmax.f32 %v994, 0.0
  %v1059 = vmax.f32 %v995, 0.0
  %v1060 = vmax.f32 %v996, 0.0
  %v1061 = vmax.f32 %v997, 0.0
  %v1062 = vmax.f32 %v998, 0.0
  %v1063 = vmax.f32 %v999, 0.0
  %v1064 = vmax.f32 %v1000, 0.0
  %v1065 = vmax.f32 %v1001, 0.0
  %v1066 = vmax.f32 %v1002, 0.0
  %v1067 = vmax.f32 %v1003, 0.0
  %v1068 = vmax.f32 %v1004, 0.0
  %v1069 = vmax.f32 %v1005, 0.0
  %v1070 = vmax.f32 %v1006, 0.0
  %v1071 = vmax.f32 %v1007, 0.0
  %v1072 = vmax.f32 %v1008, 0.0
  %v1073 = vmax.f32 %v1009, 0.0
  %v1074 = vmax.f32 %v1010, 0.0
  %v1075 = vmax.f32 %v1011, 0.0
  %v1076 = vmax.f32 %v1012, 0.0
  %v1077 = vpack.c.bf16 %v1013, %v1013
  %v1078 = vpack.c.bf16 %v1014, %v1014
  %v1079 = vpack.c.bf16 %v1015, %v1015
  %v1080 = vpack.c.bf16 %v1016, %v1016
  %v1081 = vpack.c.bf16 %v1017, %v1017
  %v1082 = vpack.c.bf16 %v1018, %v1018
  %v1083 = vpack.c.bf16 %v1019, %v1019
  %v1084 = vpack.c.bf16 %v1020, %v1020
  %v1085 = vpack.c.bf16 %v1021, %v1021
  %v1086 = vpack.c.bf16 %v1022, %v1022
  %v1087 = vpack.c.bf16 %v1023, %v1023
  %v1088 = vpack.c.bf16 %v1024, %v1024
  %v1089 = vpack.c.bf16 %v1025, %v1025
  %v1090 = vpack.c.bf16 %v1026, %v1026
  %v1091 = vpack.c.bf16 %v1027, %v1027
  %v1092 = vpack.c.bf16 %v1028, %v1028
  %v1093 = vpack.c.bf16 %v1029, %v1029
  %v1094 = vpack.c.bf16 %v1030, %v1030
  %v1095 = vpack.c.bf16 %v1031, %v1031
  %v1096 = vpack.c.bf16 %v1032, %v1032
  %v1097 = vpack.c.bf16 %v1033, %v1033
  %v1098 = vpack.c.bf16 %v1034, %v1034
  %v1099 = vpack.c.bf16 %v1035, %v1035
  %v1100 = vpack.c.bf16 %v1036, %v1036
  %v1101 = vpack.c.bf16 %v1037, %v1037
  %v1102 = vpack.c.bf16 %v1038, %v1038
  %v1103 = vpack.c.bf16 %v1039, %v1039
  %v1104 = vpack.c.bf16 %v1040, %v1040
  %v1105 = vpack.c.bf16 %v1041, %v1041
  %v1106 = vpack.c.bf16 %v1042, %v1042
  %v1107 = vpack.c.bf16 %v1043, %v1043
  %v1108 = vpack.c.bf16 %v1044, %v1044
  %v1109 = vpack.c.bf16 %v1045, %v1045
  %v1110 = vpack.c.bf16 %v1046, %v1046
  %v1111 = vpack.c.bf16 %v1047, %v1047
  %v1112 = vpack.c.bf16 %v1048, %v1048
  %v1113 = vpack.c.bf16 %v1049, %v1049
  %v1114 = vpack.c.bf16 %v1050, %v1050
  %v1115 = vpack.c.bf16 %v1051, %v1051
  %v1116 = vpack.c.bf16 %v1052, %v1052
  %v1117 = vpack.c.bf16 %v1053, %v1053
  %v1118 = vpack.c.bf16 %v1054, %v1054
  %v1119 = vpack.c.bf16 %v1055, %v1055
  %v1120 = vpack.c.bf16 %v1056, %v1056
  %v1121 = vpack.c.bf16 %v1057, %v1057
  %v1122 = vpack.c.bf16 %v1058, %v1058
  %v1123 = vpack.c.bf16 %v1059, %v1059
  %v1124 = vpack.c.bf16 %v1060, %v1060
  %v1125 = vpack.c.bf16 %v1061, %v1061
  %v1126 = vpack.c.bf16 %v1062, %v1062
  %v1127 = vpack.c.bf16 %v1063, %v1063
  %v1128 = vpack.c.bf16 %v1064, %v1064
  %v1129 = vpack.c.bf16 %v1065, %v1065
  %v1130 = vpack.c.bf16 %v1066, %v1066
  %v1131 = vpack.c.bf16 %v1067, %v1067
  %v1132 = vpack.c.bf16 %v1068, %v1068
  %v1133 = vpack.c.bf16 %v1069, %v1069
  %v1134 = vpack.c.bf16 %v1070, %v1070
  %v1135 = vpack.c.bf16 %v1071, %v1071
  %v1136 = vpack.c.bf16 %v1072, %v1072
  %v1137 = vpack.c.bf16 %v1073, %v1073
  %v1138 = vpack.c.bf16 %v1074, %v1074
  %v1139 = vpack.c.bf16 %v1075, %v1075
  %v1140 = vpack.c.bf16 %v1076, %v1076
  %vm1141 = vcmask 257024
  %1142 = vst.msk [vmem:[%s4] sm:$0xf] %vm1141, %v1077
  %1143 = vst.msk [vmem:[%s4 + $0x4] sm:$0xf] %vm1141, %v1078
  %1144 = vst.msk [vmem:[%s4 + $0x8] sm:$0xf] %vm1141, %v1079
  %1145 = vst.msk [vmem:[%s4 + $0xc] sm:$0xf] %vm1141, %v1080
  %1146 = vst.msk [vmem:[%s4 + $0x10] sm:$0xf] %vm1141, %v1081
  %1147 = vst.msk [vmem:[%s4 + $0x14] sm:$0xf] %vm1141, %v1082
  %1148 = vst.msk [vmem:[%s4 + $0x18] sm:$0xf] %vm1141, %v1083
  %1149 = vst.msk [vmem:[%s4 + $0x1c] sm:$0xf] %vm1141, %v1084
  %1150 = vst.msk [vmem:[%s4 + $0x20] sm:$0xf] %vm1141, %v1085
  %1151 = vst.msk [vmem:[%s4 + $0x24] sm:$0xf] %vm1141, %v1086
  %1152 = vst.msk [vmem:[%s4 + $0x28] sm:$0xf] %vm1141, %v1087
  %1153 = vst.msk [vmem:[%s4 + $0x2c] sm:$0xf] %vm1141, %v1088
  %1154 = vst.msk [vmem:[%s4 + $0x30] sm:$0xf] %vm1141, %v1089
  %1155 = vst.msk [vmem:[%s4 + $0x34] sm:$0xf] %vm1141, %v1090
  %1156 = vst.msk [vmem:[%s4 + $0x38] sm:$0xf] %vm1141, %v1091
  %1157 = vst.msk [vmem:[%s4 + $0x3c] sm:$0xf] %vm1141, %v1092
  %1158 = vst.msk [vmem:[%s4 + $0x40] sm:$0xf] %vm1141, %v1093
  %1159 = vst.msk [vmem:[%s4 + $0x44] sm:$0xf] %vm1141, %v1094
  %1160 = vst.msk [vmem:[%s4 + $0x48] sm:$0xf] %vm1141, %v1095
  %1161 = vst.msk [vmem:[%s4 + $0x4c] sm:$0xf] %vm1141, %v1096
  %1162 = vst.msk [vmem:[%s4 + $0x50] sm:$0xf] %vm1141, %v1097
  %1163 = vst.msk [vmem:[%s4 + $0x54] sm:$0xf] %vm1141, %v1098
  %1164 = vst.msk [vmem:[%s4 + $0x58] sm:$0xf] %vm1141, %v1099
  %1165 = vst.msk [vmem:[%s4 + $0x5c] sm:$0xf] %vm1141, %v1100
  %1166 = vst.msk [vmem:[%s4 + $0x60] sm:$0xf] %vm1141, %v1101
  %1167 = vst.msk [vmem:[%s4 + $0x64] sm:$0xf] %vm1141, %v1102
  %1168 = vst.msk [vmem:[%s4 + $0x68] sm:$0xf] %vm1141, %v1103
  %1169 = vst.msk [vmem:[%s4 + $0x6c] sm:$0xf] %vm1141, %v1104
  %1170 = vst.msk [vmem:[%s4 + $0x70] sm:$0xf] %vm1141, %v1105
  %1171 = vst.msk [vmem:[%s4 + $0x74] sm:$0xf] %vm1141, %v1106
  %1172 = vst.msk [vmem:[%s4 + $0x78] sm:$0xf] %vm1141, %v1107
  %1173 = vst.msk [vmem:[%s4 + $0x7c] sm:$0xf] %vm1141, %v1108
  %1174 = vst.msk [vmem:[%s4 + $0x80] sm:$0xf] %vm1141, %v1109
  %1175 = vst.msk [vmem:[%s4 + $0x84] sm:$0xf] %vm1141, %v1110
  %1176 = vst.msk [vmem:[%s4 + $0x88] sm:$0xf] %vm1141, %v1111
  %1177 = vst.msk [vmem:[%s4 + $0x8c] sm:$0xf] %vm1141, %v1112
  %1178 = vst.msk [vmem:[%s4 + $0x90] sm:$0xf] %vm1141, %v1113
  %1179 = vst.msk [vmem:[%s4 + $0x94] sm:$0xf] %vm1141, %v1114
  %1180 = vst.msk [vmem:[%s4 + $0x98] sm:$0xf] %vm1141, %v1115
  %1181 = vst.msk [vmem:[%s4 + $0x9c] sm:$0xf] %vm1141, %v1116
  %1182 = vst.msk [vmem:[%s4 + $0xa0] sm:$0xf] %vm1141, %v1117
  %1183 = vst.msk [vmem:[%s4 + $0xa4] sm:$0xf] %vm1141, %v1118
  %1184 = vst.msk [vmem:[%s4 + $0xa8] sm:$0xf] %vm1141, %v1119
  %1185 = vst.msk [vmem:[%s4 + $0xac] sm:$0xf] %vm1141, %v1120
  %1186 = vst.msk [vmem:[%s4 + $0xb0] sm:$0xf] %vm1141, %v1121
  %1187 = vst.msk [vmem:[%s4 + $0xb4] sm:$0xf] %vm1141, %v1122
  %1188 = vst.msk [vmem:[%s4 + $0xb8] sm:$0xf] %vm1141, %v1123
  %1189 = vst.msk [vmem:[%s4 + $0xbc] sm:$0xf] %vm1141, %v1124
  %1190 = vst.msk [vmem:[%s4 + $0xc0] sm:$0xf] %vm1141, %v1125
  %1191 = vst.msk [vmem:[%s4 + $0xc4] sm:$0xf] %vm1141, %v1126
  %1192 = vst.msk [vmem:[%s4 + $0xc8] sm:$0xf] %vm1141, %v1127
  %1193 = vst.msk [vmem:[%s4 + $0xcc] sm:$0xf] %vm1141, %v1128
  %1194 = vst.msk [vmem:[%s4 + $0xd0] sm:$0xf] %vm1141, %v1129
  %1195 = vst.msk [vmem:[%s4 + $0xd4] sm:$0xf] %vm1141, %v1130
  %1196 = vst.msk [vmem:[%s4 + $0xd8] sm:$0xf] %vm1141, %v1131
  %1197 = vst.msk [vmem:[%s4 + $0xdc] sm:$0xf] %vm1141, %v1132
  %1198 = vst.msk [vmem:[%s4 + $0xe0] sm:$0xf] %vm1141, %v1133
  %1199 = vst.msk [vmem:[%s4 + $0xe4] sm:$0xf] %vm1141, %v1134
  %1200 = vst.msk [vmem:[%s4 + $0xe8] sm:$0xf] %vm1141, %v1135
  %1201 = vst.msk [vmem:[%s4 + $0xec] sm:$0xf] %vm1141, %v1136
  %1202 = vst.msk [vmem:[%s4 + $0xf0] sm:$0xf] %vm1141, %v1137
  %1203 = vst.msk [vmem:[%s4 + $0xf4] sm:$0xf] %vm1141, %v1138
  %1204 = vst.msk [vmem:[%s4 + $0xf8] sm:$0xf] %vm1141, %v1139
  %1205 = vst.msk [vmem:[%s4 + $0xfc] sm:$0xf] %vm1141, %v1140
  // Predicated region
  $region18: #{_lambda_.21} parent=0 // pred_check
    _
  $region19: #{_lambda_.21} parent=0 // pred_check_branch
    %1207 = sbr.rel (0) target = $region21
  $region20: #{_lambda_.21} parent=0 // pred_region
    _
  $region21: #{_lambda_.21} parent=0 // pred_fallthru
    _
  // Predicated region
  $region22: #{_lambda_.21} parent=0 // pred_check
    _
  $region23: #{_lambda_.21} parent=0 // pred_check_branch
    %1209 = sbr.rel (0) target = $region25
  $region24: #{_lambda_.21} parent=0 // pred_region
    _
  $region25: #{_lambda_.21} parent=0 // pred_fallthru
    _

// kernel: _lambda_.22
$region0: #{_lambda_.22}
  #allocation0 [shape = 'u32[]', space=smem, size = 0x4, offset = 0x4, fixed_abs, tag = 'smem constant byte address 0x4 - core index']
  #allocation1 [shape = 'u32[72,128]{1,0:T(1,128)}', space=vmem, size = 0x9000, scoped, tag = 'internal scratch']
  %s0 = inlined_call_operand.vmem [shape: bf16[64,128], index: 0, kind: input, shape index: {}]
  %s1 = inlined_call_operand.vmem [shape: bf16[128,256], index: 1, kind: input, shape index: {}]
  %s2 = inlined_call_operand.vmem [shape: f32[1,256], index: 2, kind: input, shape index: {}]
  %s3 = inlined_call_operand.vmem [shape: f32[1,256], index: 3, kind: input, shape index: {}]
  %s4 = inlined_call_operand.vmem [shape: bf16[64,256], index: 4, kind: output, shape index: {}]
  %s5 = sld [smem:[#allocation0]]
  $region26: #{_lambda_.22} parent=0
    _
  %s7 = ssub.s32 1, %s5
  %s8 = scalar_select 0, %s7, %s5
  // Predicated region
  $region2: #{_lambda_.22} parent=0 // pred_check
    _
  $region3: #{_lambda_.22} parent=0 // pred_check_branch
    %10 = sbr.rel (0) target = $region5
  $region4: #{_lambda_.22} parent=0 // pred_region
    _
  $region5: #{_lambda_.22} parent=0 // pred_fallthru
    _
  // Predicated region
  $region6: #{_lambda_.22} parent=0 // pred_check
    _
  $region7: #{_lambda_.22} parent=0 // pred_check_branch
    %12 = sbr.rel (0) target = $region9
  $region8: #{_lambda_.22} parent=0 // pred_region
    _
  $region9: #{_lambda_.22} parent=0 // pred_fallthru
    _
  // Predicated region
  $region10: #{_lambda_.22} parent=0 // pred_check
    _
  $region11: #{_lambda_.22} parent=0 // pred_check_branch
    %14 = sbr.rel (0) target = $region13
  $region12: #{_lambda_.22} parent=0 // pred_region
    _
  $region13: #{_lambda_.22} parent=0 // pred_fallthru
    _
  // Predicated region
  $region14: #{_lambda_.22} parent=0 // pred_check
    _
  $region15: #{_lambda_.22} parent=0 // pred_check_branch
    %16 = sbr.rel (0) target = $region17
  $region16: #{_lambda_.22} parent=0 // pred_region
    _
  $region17: #{_lambda_.22} parent=0 // pred_fallthru
    _
  %v17 = vld [vmem:[%s0] sm:$0xf]
  %v18 = vld [vmem:[%s0 + $0x4] sm:$0xf]
  %v19 = vld [vmem:[%s0 + $0x8] sm:$0xf]
  %v20 = vld [vmem:[%s0 + $0xc] sm:$0xf]
  %v21 = vld [vmem:[%s0 + $0x10] sm:$0xf]
  %v22 = vld [vmem:[%s0 + $0x14] sm:$0xf]
  %v23 = vld [vmem:[%s0 + $0x18] sm:$0xf]
  %v24 = vld [vmem:[%s0 + $0x1c] sm:$0xf]
  %v25 = vld [vmem:[%s1] sm:$0xff]
  %v26 = vld [vmem:[%s1 + $0x8] sm:$0xff]
  %v27 = vld [vmem:[%s1 + $0x10] sm:$0xff]
  %v28 = vld [vmem:[%s1 + $0x18] sm:$0xff]
  %v29 = vld [vmem:[%s1 + $0x20] sm:$0xff]
  %v30 = vld [vmem:[%s1 + $0x28] sm:$0xff]
  %v31 = vld [vmem:[%s1 + $0x30] sm:$0xff]
  %v32 = vld [vmem:[%s1 + $0x38] sm:$0xff]
  %v33 = vld [vmem:[%s1 + $0x40] sm:$0xff]
  %v34 = vld [vmem:[%s1 + $0x48] sm:$0xff]
  %v35 = vld [vmem:[%s1 + $0x50] sm:$0xff]
  %v36 = vld [vmem:[%s1 + $0x58] sm:$0xff]
  %v37 = vld [vmem:[%s1 + $0x60] sm:$0xff]
  %v38 = vld [vmem:[%s1 + $0x68] sm:$0xff]
  %v39 = vld [vmem:[%s1 + $0x70] sm:$0xff]
  %v40 = vld [vmem:[%s1 + $0x78] sm:$0xff]
  %v49 = vunpack.c.l.b16 %v17
  %v50 = vunpack.c.l.b16 %v18
  %v51 = vunpack.c.l.b16 %v19
  %v52 = vunpack.c.l.b16 %v20
  %v53 = vunpack.c.l.b16 %v21
  %v54 = vunpack.c.l.b16 %v22
  %v55 = vunpack.c.l.b16 %v23
  %v56 = vunpack.c.l.b16 %v24
  %v57 = vpack.c.b16 %v50, %v49
  %v58 = vpack.c.b16 %v52, %v51
  %v59 = vpack.c.b16 %v54, %v53
  %v60 = vpack.c.b16 %v56, %v55
  %v81 = vunpack.c.l.b16 %v25
  %v82 = vunpack.c.h.b16 %v25
  %v83 = vunpack.c.l.b16 %v26
  %v84 = vunpack.c.h.b16 %v26
  %v85 = vunpack.c.l.b16 %v27
  %v86 = vunpack.c.h.b16 %v27
  %v87 = vunpack.c.l.b16 %v28
  %v88 = vunpack.c.h.b16 %v28
  %v89 = vunpack.c.l.b16 %v29
  %v90 = vunpack.c.h.b16 %v29
  %v91 = vunpack.c.l.b16 %v30
  %v92 = vunpack.c.h.b16 %v30
  %v93 = vunpack.c.l.b16 %v31
  %v94 = vunpack.c.h.b16 %v31
  %v95 = vunpack.c.l.b16 %v32
  %v96 = vunpack.c.h.b16 %v32
  %v97 = vunpack.c.l.b16 %v33
  %v98 = vunpack.c.h.b16 %v33
  %v99 = vunpack.c.l.b16 %v34
  %v100 = vunpack.c.h.b16 %v34
  %v101 = vunpack.c.l.b16 %v35
  %v102 = vunpack.c.h.b16 %v35
  %v103 = vunpack.c.l.b16 %v36
  %v104 = vunpack.c.h.b16 %v36
  %v105 = vunpack.c.l.b16 %v37
  %v106 = vunpack.c.h.b16 %v37
  %v107 = vunpack.c.l.b16 %v38
  %v108 = vunpack.c.h.b16 %v38
  %v109 = vunpack.c.l.b16 %v39
  %v110 = vunpack.c.h.b16 %v39
  %v111 = vunpack.c.l.b16 %v40
  %v112 = vunpack.c.h.b16 %v40
  %v113 = vpack.c.b16 %v83, %v81
  %v114 = vpack.c.b16 %v84, %v82
  %v115 = vpack.c.b16 %v87, %v85
  %v116 = vpack.c.b16 %v88, %v86
  %v117 = vpack.c.b16 %v91, %v89
  %v118 = vpack.c.b16 %v92, %v90
  %v119 = vpack.c.b16 %v95, %v93
  %v120 = vpack.c.b16 %v96, %v94
  %v121 = vpack.c.b16 %v99, %v97
  %v122 = vpack.c.b16 %v100, %v98
  %v123 = vpack.c.b16 %v103, %v101
  %v124 = vpack.c.b16 %v104, %v102
  %v125 = vpack.c.b16 %v107, %v105
  %v126 = vpack.c.b16 %v108, %v106
  %v127 = vpack.c.b16 %v111, %v109
  %v128 = vpack.c.b16 %v112, %v110
  %145 = vmatpush.bf16.msra.mxu0 %v127
  %146 = vmatpush.bf16.msra.mxu0 %v125
  %147 = vmatpush.bf16.msra.mxu0 %v123
  %148 = vmatpush.bf16.msra.mxu0 %v121
  %149 = vmatpush.bf16.msra.mxu0 %v119
  %150 = vmatpush.bf16.msra.mxu0 %v117
  %151 = vmatpush.bf16.msra.mxu0 %v115
  %152 = vmatpush.bf16.msra.mxu0 %v113
  %153 = vmatmul.bf16.gmra.mxu0 %v57
  %v154 = vpop.f32.mrf.mxu0
  %v155 = vadd.f32 0.0, %v154
  %v156 = vpop.f32.mrf.mxu0
  %v157 = vadd.f32 0.0, %v156
  %158 = vmatmul.bf16.gmra.mxu0 %v58
  %v159 = vpop.f32.mrf.mxu0
  %v160 = vadd.f32 0.0, %v159
  %v161 = vpop.f32.mrf.mxu0
  %v162 = vadd.f32 0.0, %v161
  %163 = vmatmul.bf16.gmra.mxu0 %v59
  %v164 = vpop.f32.mrf.mxu0
  %v165 = vadd.f32 0.0, %v164
  %v166 = vpop.f32.mrf.mxu0
  %v167 = vadd.f32 0.0, %v166
  %168 = vmatmul.bf16.gmra.mxu0 %v60
  %v169 = vpop.f32.mrf.mxu0
  %v170 = vadd.f32 0.0, %v169
  %v171 = vpop.f32.mrf.mxu0
  %v172 = vadd.f32 0.0, %v171
  %173 = vdwg.mxu0
  %174 = vmatpush.bf16.msra.mxu0 %v128
  %175 = vmatpush.bf16.msra.mxu0 %v126
  %176 = vmatpush.bf16.msra.mxu0 %v124
  %177 = vmatpush.bf16.msra.mxu0 %v122
  %178 = vmatpush.bf16.msra.mxu0 %v120
  %179 = vmatpush.bf16.msra.mxu0 %v118
  %180 = vmatpush.bf16.msra.mxu0 %v116
  %181 = vmatpush.bf16.msra.mxu0 %v114
  %182 = vmatmul.bf16.gmra.mxu0 %v57
  %v183 = vpop.f32.mrf.mxu0
  %v184 = vadd.f32 0.0, %v183
  %v185 = vpop.f32.mrf.mxu0
  %v186 = vadd.f32 0.0, %v185
  %187 = vmatmul.bf16.gmra.mxu0 %v58
  %v188 = vpop.f32.mrf.mxu0
  %v189 = vadd.f32 0.0, %v188
  %v190 = vpop.f32.mrf.mxu0
  %v191 = vadd.f32 0.0, %v190
  %192 = vmatmul.bf16.gmra.mxu0 %v59
  %v193 = vpop.f32.mrf.mxu0
  %v194 = vadd.f32 0.0, %v193
  %v195 = vpop.f32.mrf.mxu0
  %v196 = vadd.f32 0.0, %v195
  %197 = vmatmul.bf16.gmra.mxu0 %v60
  %v198 = vpop.f32.mrf.mxu0
  %v199 = vadd.f32 0.0, %v198
  %v200 = vpop.f32.mrf.mxu0
  %v201 = vadd.f32 0.0, %v200
  %202 = vdwg.mxu0
  %v203 = vld [vmem:[%s2] sm:$0x3]
  %v205 = vperm.slane %v203, 0
  %v206 = vperm.slane %v203, 1
  %v209 = vmul.f32 %v155, %v205
  %v210 = vmul.f32 %v184, %v206
  %v211 = vmul.f32 %v157, %v205
  %v212 = vmul.f32 %v186, %v206
  %v213 = vmul.f32 %v160, %v205
  %v214 = vmul.f32 %v189, %v206
  %v215 = vmul.f32 %v162, %v205
  %v216 = vmul.f32 %v191, %v206
  %v217 = vmul.f32 %v165, %v205
  %v218 = vmul.f32 %v194, %v206
  %v219 = vmul.f32 %v167, %v205
  %v220 = vmul.f32 %v196, %v206
  %v221 = vmul.f32 %v170, %v205
  %v222 = vmul.f32 %v199, %v206
  %v223 = vmul.f32 %v172, %v205
  %v224 = vmul.f32 %v201, %v206
  %v225 = vld [vmem:[%s3] sm:$0x3]
  %v227 = vperm.slane %v225, 0
  %v228 = vperm.slane %v225, 1
  %v231 = vadd.f32 %v209, %v227
  %v232 = vadd.f32 %v210, %v228
  %v233 = vadd.f32 %v211, %v227
  %v234 = vadd.f32 %v212, %v228
  %v235 = vadd.f32 %v213, %v227
  %v236 = vadd.f32 %v214, %v228
  %v237 = vadd.f32 %v215, %v227
  %v238 = vadd.f32 %v216, %v228
  %v239 = vadd.f32 %v217, %v227
  %v240 = vadd.f32 %v218, %v228
  %v241 = vadd.f32 %v219, %v227
  %v242 = vadd.f32 %v220, %v228
  %v243 = vadd.f32 %v221, %v227
  %v244 = vadd.f32 %v222, %v228
  %v245 = vadd.f32 %v223, %v227
  %v246 = vadd.f32 %v224, %v228
  %v247 = vpack.c.bf16 %v232, %v231
  %v248 = vpack.c.bf16 %v234, %v233
  %v249 = vpack.c.bf16 %v236, %v235
  %v250 = vpack.c.bf16 %v238, %v237
  %v251 = vpack.c.bf16 %v240, %v239
  %v252 = vpack.c.bf16 %v242, %v241
  %v253 = vpack.c.bf16 %v244, %v243
  %v254 = vpack.c.bf16 %v246, %v245
  %255 = vst [vmem:[%s4] sm:$0xff] %v247
  %256 = vst [vmem:[%s4 + $0x8] sm:$0xff] %v248
  %257 = vst [vmem:[%s4 + $0x10] sm:$0xff] %v249
  %258 = vst [vmem:[%s4 + $0x18] sm:$0xff] %v250
  %259 = vst [vmem:[%s4 + $0x20] sm:$0xff] %v251
  %260 = vst [vmem:[%s4 + $0x28] sm:$0xff] %v252
  %261 = vst [vmem:[%s4 + $0x30] sm:$0xff] %v253
  %262 = vst [vmem:[%s4 + $0x38] sm:$0xff] %v254
  // Predicated region
  $region18: #{_lambda_.22} parent=0 // pred_check
    _
  $region19: #{_lambda_.22} parent=0 // pred_check_branch
    %264 = sbr.rel (0) target = $region21
  $region20: #{_lambda_.22} parent=0 // pred_region
    _
  $region21: #{_lambda_.22} parent=0 // pred_fallthru
    _
  // Predicated region
  $region22: #{_lambda_.22} parent=0 // pred_check
    _
  $region23: #{_lambda_.22} parent=0 // pred_check_branch
    %266 = sbr.rel (0) target = $region25
  $region24: #{_lambda_.22} parent=0 // pred_region
    _
  $region25: #{_lambda_.22} parent=0 // pred_fallthru
    _

// kernel: _lambda_.23
$region0: #{_lambda_.23}
  #allocation0 [shape = 'u32[]', space=smem, size = 0x4, offset = 0x4, fixed_abs, tag = 'smem constant byte address 0x4 - core index']
  #allocation1 [shape = 'u32[72,128]{1,0:T(1,128)}', space=vmem, size = 0x9000, scoped, tag = 'internal scratch']
  %s0 = inlined_call_operand.vmem [shape: bf16[64,256], index: 0, kind: input, shape index: {}]
  %s1 = inlined_call_operand.vmem [shape: bf16[256,128], index: 1, kind: input, shape index: {}]
  %s2 = inlined_call_operand.vmem [shape: f32[1,128], index: 2, kind: input, shape index: {}]
  %s3 = inlined_call_operand.vmem [shape: f32[1,128], index: 3, kind: input, shape index: {}]
  %s4 = inlined_call_operand.vmem [shape: f32[64,128], index: 4, kind: output, shape index: {}]
  %s5 = sld [smem:[#allocation0]]
  $region26: #{_lambda_.23} parent=0
    _
  %s7 = ssub.s32 1, %s5
  %s8 = scalar_select 0, %s7, %s5
  // Predicated region
  $region2: #{_lambda_.23} parent=0 // pred_check
    _
  $region3: #{_lambda_.23} parent=0 // pred_check_branch
    %10 = sbr.rel (0) target = $region5
  $region4: #{_lambda_.23} parent=0 // pred_region
    _
  $region5: #{_lambda_.23} parent=0 // pred_fallthru
    _
  // Predicated region
  $region6: #{_lambda_.23} parent=0 // pred_check
    _
  $region7: #{_lambda_.23} parent=0 // pred_check_branch
    %12 = sbr.rel (0) target = $region9
  $region8: #{_lambda_.23} parent=0 // pred_region
    _
  $region9: #{_lambda_.23} parent=0 // pred_fallthru
    _
  // Predicated region
  $region10: #{_lambda_.23} parent=0 // pred_check
    _
  $region11: #{_lambda_.23} parent=0 // pred_check_branch
    %14 = sbr.rel (0) target = $region13
  $region12: #{_lambda_.23} parent=0 // pred_region
    _
  $region13: #{_lambda_.23} parent=0 // pred_fallthru
    _
  // Predicated region
  $region14: #{_lambda_.23} parent=0 // pred_check
    _
  $region15: #{_lambda_.23} parent=0 // pred_check_branch
    %16 = sbr.rel (0) target = $region17
  $region16: #{_lambda_.23} parent=0 // pred_region
    _
  $region17: #{_lambda_.23} parent=0 // pred_fallthru
    _
  %v17 = vld [vmem:[%s0] sm:$0xff]
  %v18 = vld [vmem:[%s0 + $0x8] sm:$0xff]
  %v19 = vld [vmem:[%s0 + $0x10] sm:$0xff]
  %v20 = vld [vmem:[%s0 + $0x18] sm:$0xff]
  %v21 = vld [vmem:[%s0 + $0x20] sm:$0xff]
  %v22 = vld [vmem:[%s0 + $0x28] sm:$0xff]
  %v23 = vld [vmem:[%s0 + $0x30] sm:$0xff]
  %v24 = vld [vmem:[%s0 + $0x38] sm:$0xff]
  %v25 = vld [vmem:[%s1] sm:$0xf]
  %v26 = vld [vmem:[%s1 + $0x4] sm:$0xf]
  %v27 = vld [vmem:[%s1 + $0x8] sm:$0xf]
  %v28 = vld [vmem:[%s1 + $0xc] sm:$0xf]
  %v29 = vld [vmem:[%s1 + $0x10] sm:$0xf]
  %v30 = vld [vmem:[%s1 + $0x14] sm:$0xf]
  %v31 = vld [vmem:[%s1 + $0x18] sm:$0xf]
  %v32 = vld [vmem:[%s1 + $0x1c] sm:$0xf]
  %v33 = vld [vmem:[%s1 + $0x20] sm:$0xf]
  %v34 = vld [vmem:[%s1 + $0x24] sm:$0xf]
  %v35 = vld [vmem:[%s1 + $0x28] sm:$0xf]
  %v36 = vld [vmem:[%s1 + $0x2c] sm:$0xf]
  %v37 = vld [vmem:[%s1 + $0x30] sm:$0xf]
  %v38 = vld [vmem:[%s1 + $0x34] sm:$0xf]
  %v39 = vld [vmem:[%s1 + $0x38] sm:$0xf]
  %v40 = vld [vmem:[%s1 + $0x3c] sm:$0xf]
  %v41 = vld [vmem:[%s1 + $0x40] sm:$0xf]
  %v42 = vld [vmem:[%s1 + $0x44] sm:$0xf]
  %v43 = vld [vmem:[%s1 + $0x48] sm:$0xf]
  %v44 = vld [vmem:[%s1 + $0x4c] sm:$0xf]
  %v45 = vld [vmem:[%s1 + $0x50] sm:$0xf]
  %v46 = vld [vmem:[%s1 + $0x54] sm:$0xf]
  %v47 = vld [vmem:[%s1 + $0x58] sm:$0xf]
  %v48 = vld [vmem:[%s1 + $0x5c] sm:$0xf]
  %v49 = vld [vmem:[%s1 + $0x60] sm:$0xf]
  %v50 = vld [vmem:[%s1 + $0x64] sm:$0xf]
  %v51 = vld [vmem:[%s1 + $0x68] sm:$0xf]
  %v52 = vld [vmem:[%s1 + $0x6c] sm:$0xf]
  %v53 = vld [vmem:[%s1 + $0x70] sm:$0xf]
  %v54 = vld [vmem:[%s1 + $0x74] sm:$0xf]
  %v55 = vld [vmem:[%s1 + $0x78] sm:$0xf]
  %v56 = vld [vmem:[%s1 + $0x7c] sm:$0xf]
  %v65 = vunpack.c.l.b16 %v17
  %v66 = vunpack.c.h.b16 %v17
  %v67 = vunpack.c.l.b16 %v18
  %v68 = vunpack.c.h.b16 %v18
  %v69 = vunpack.c.l.b16 %v19
  %v70 = vunpack.c.h.b16 %v19
  %v71 = vunpack.c.l.b16 %v20
  %v72 = vunpack.c.h.b16 %v20
  %v73 = vunpack.c.l.b16 %v21
  %v74 = vunpack.c.h.b16 %v21
  %v75 = vunpack.c.l.b16 %v22
  %v76 = vunpack.c.h.b16 %v22
  %v77 = vunpack.c.l.b16 %v23
  %v78 = vunpack.c.h.b16 %v23
  %v79 = vunpack.c.l.b16 %v24
  %v80 = vunpack.c.h.b16 %v24
  %v81 = vpack.c.b16 %v67, %v65
  %v82 = vpack.c.b16 %v68, %v66
  %v83 = vpack.c.b16 %v71, %v69
  %v84 = vpack.c.b16 %v72, %v70
  %v85 = vpack.c.b16 %v75, %v73
  %v86 = vpack.c.b16 %v76, %v74
  %v87 = vpack.c.b16 %v79, %v77
  %v88 = vpack.c.b16 %v80, %v78
  %v129 = vunpack.c.l.b16 %v25
  %v130 = vunpack.c.l.b16 %v26
  %v131 = vunpack.c.l.b16 %v27
  %v132 = vunpack.c.l.b16 %v28
  %v133 = vunpack.c.l.b16 %v29
  %v134 = vunpack.c.l.b16 %v30
  %v135 = vunpack.c.l.b16 %v31
  %v136 = vunpack.c.l.b16 %v32
  %v137 = vunpack.c.l.b16 %v33
  %v138 = vunpack.c.l.b16 %v34
  %v139 = vunpack.c.l.b16 %v35
  %v140 = vunpack.c.l.b16 %v36
  %v141 = vunpack.c.l.b16 %v37
  %v142 = vunpack.c.l.b16 %v38
  %v143 = vunpack.c.l.b16 %v39
  %v144 = vunpack.c.l.b16 %v40
  %v145 = vunpack.c.l.b16 %v41
  %v146 = vunpack.c.l.b16 %v42
  %v147 = vunpack.c.l.b16 %v43
  %v148 = vunpack.c.l.b16 %v44
  %v149 = vunpack.c.l.b16 %v45
  %v150 = vunpack.c.l.b16 %v46
  %v151 = vunpack.c.l.b16 %v47
  %v152 = vunpack.c.l.b16 %v48
  %v153 = vunpack.c.l.b16 %v49
  %v154 = vunpack.c.l.b16 %v50
  %v155 = vunpack.c.l.b16 %v51
  %v156 = vunpack.c.l.b16 %v52
  %v157 = vunpack.c.l.b16 %v53
  %v158 = vunpack.c.l.b16 %v54
  %v159 = vunpack.c.l.b16 %v55
  %v160 = vunpack.c.l.b16 %v56
  %v161 = vpack.c.b16 %v130, %v129
  %v162 = vpack.c.b16 %v132, %v131
  %v163 = vpack.c.b16 %v134, %v133
  %v164 = vpack.c.b16 %v136, %v135
  %v165 = vpack.c.b16 %v138, %v137
  %v166 = vpack.c.b16 %v140, %v139
  %v167 = vpack.c.b16 %v142, %v141
  %v168 = vpack.c.b16 %v144, %v143
  %v169 = vpack.c.b16 %v146, %v145
  %v170 = vpack.c.b16 %v148, %v147
  %v171 = vpack.c.b16 %v150, %v149
  %v172 = vpack.c.b16 %v152, %v151
  %v173 = vpack.c.b16 %v154, %v153
  %v174 = vpack.c.b16 %v156, %v155
  %v175 = vpack.c.b16 %v158, %v157
  %v176 = vpack.c.b16 %v160, %v159
  %193 = vmatpush.bf16.msra.mxu0 %v168
  %194 = vmatpush.bf16.msra.mxu0 %v167
  %195 = vmatpush.bf16.msra.mxu0 %v166
  %196 = vmatpush.bf16.msra.mxu0 %v165
  %197 = vmatpush.bf16.msra.mxu0 %v164
  %198 = vmatpush.bf16.msra.mxu0 %v163
  %199 = vmatpush.bf16.msra.mxu0 %v162
  %200 = vmatpush.bf16.msra.mxu0 %v161
  %201 = vmatmul.bf16.gmra.mxu0 %v81
  %v202 = vpop.f32.mrf.mxu0
  %v203 = vadd.f32 0.0, %v202
  %v204 = vpop.f32.mrf.mxu0
  %v205 = vadd.f32 0.0, %v204
  %206 = vmatmul.bf16.gmra.mxu0 %v83
  %v207 = vpop.f32.mrf.mxu0
  %v208 = vadd.f32 0.0, %v207
  %v209 = vpop.f32.mrf.mxu0
  %v210 = vadd.f32 0.0, %v209
  %211 = vmatmul.bf16.gmra.mxu0 %v85
  %v212 = vpop.f32.mrf.mxu0
  %v213 = vadd.f32 0.0, %v212
  %v214 = vpop.f32.mrf.mxu0
  %v215 = vadd.f32 0.0, %v214
  %216 = vmatmul.bf16.gmra.mxu0 %v87
  %v217 = vpop.f32.mrf.mxu0
  %v218 = vadd.f32 0.0, %v217
  %v219 = vpop.f32.mrf.mxu0
  %v220 = vadd.f32 0.0, %v219
  %221 = vdwg.mxu0
  %222 = vmatpush.bf16.msra.mxu0 %v176
  %223 = vmatpush.bf16.msra.mxu0 %v175
  %224 = vmatpush.bf16.msra.mxu0 %v174
  %225 = vmatpush.bf16.msra.mxu0 %v173
  %226 = vmatpush.bf16.msra.mxu0 %v172
  %227 = vmatpush.bf16.msra.mxu0 %v171
  %228 = vmatpush.bf16.msra.mxu0 %v170
  %229 = vmatpush.bf16.msra.mxu0 %v169
  %230 = vmatmul.bf16.gmra.mxu0 %v82
  %v231 = vpop.f32.mrf.mxu0
  %v232 = vadd.f32 %v203, %v231
  %v233 = vpop.f32.mrf.mxu0
  %v234 = vadd.f32 %v205, %v233
  %235 = vmatmul.bf16.gmra.mxu0 %v84
  %v236 = vpop.f32.mrf.mxu0
  %v237 = vadd.f32 %v208, %v236
  %v238 = vpop.f32.mrf.mxu0
  %v239 = vadd.f32 %v210, %v238
  %240 = vmatmul.bf16.gmra.mxu0 %v86
  %v241 = vpop.f32.mrf.mxu0
  %v242 = vadd.f32 %v213, %v241
  %v243 = vpop.f32.mrf.mxu0
  %v244 = vadd.f32 %v215, %v243
  %245 = vmatmul.bf16.gmra.mxu0 %v88
  %v246 = vpop.f32.mrf.mxu0
  %v247 = vadd.f32 %v218, %v246
  %v248 = vpop.f32.mrf.mxu0
  %v249 = vadd.f32 %v220, %v248
  %250 = vdwg.mxu0
  %v251 = vld [vmem:[%s2] sm:$0x1]
  %v253 = vperm.slane %v251, 0
  %v255 = vmul.f32 %v232, %v253
  %v256 = vmul.f32 %v234, %v253
  %v257 = vmul.f32 %v237, %v253
  %v258 = vmul.f32 %v239, %v253
  %v259 = vmul.f32 %v242, %v253
  %v260 = vmul.f32 %v244, %v253
  %v261 = vmul.f32 %v247, %v253
  %v262 = vmul.f32 %v249, %v253
  %v263 = vld [vmem:[%s3] sm:$0x1]
  %v265 = vperm.slane %v263, 0
  %v267 = vadd.f32 %v255, %v265
  %v268 = vadd.f32 %v256, %v265
  %v269 = vadd.f32 %v257, %v265
  %v270 = vadd.f32 %v258, %v265
  %v271 = vadd.f32 %v259, %v265
  %v272 = vadd.f32 %v260, %v265
  %v273 = vadd.f32 %v261, %v265
  %v274 = vadd.f32 %v262, %v265
  %v275 = vsub.f32 0.0, %v267
  %v276 = vsub.f32 0.0, %v268
  %v277 = vsub.f32 0.0, %v269
  %v278 = vsub.f32 0.0, %v270
  %v279 = vsub.f32 0.0, %v271
  %v280 = vsub.f32 0.0, %v272
  %v281 = vsub.f32 0.0, %v273
  %v282 = vsub.f32 0.0, %v274
  %v283 = vmul.f32 %v275, 1.442695
  %v284 = vpow.pop %v283
  %v285 = vmul.f32 %v276, 1.442695
  %v286 = vpow.pop %v285
  %v287 = vmul.f32 %v277, 1.442695
  %v288 = vpow.pop %v287
  %v289 = vmul.f32 %v278, 1.442695
  %v290 = vpow.pop %v289
  %v291 = vmul.f32 %v279, 1.442695
  %v292 = vpow.pop %v291
  %v293 = vmul.f32 %v280, 1.442695
  %v294 = vpow.pop %v293
  %v295 = vmul.f32 %v281, 1.442695
  %v296 = vpow.pop %v295
  %v297 = vmul.f32 %v282, 1.442695
  %v298 = vpow.pop %v297
  %v299 = vadd.f32 %v284, 1.0
  %v300 = vadd.f32 %v286, 1.0
  %v301 = vadd.f32 %v288, 1.0
  %v302 = vadd.f32 %v290, 1.0
  %v303 = vadd.f32 %v292, 1.0
  %v304 = vadd.f32 %v294, 1.0
  %v305 = vadd.f32 %v296, 1.0
  %v306 = vadd.f32 %v298, 1.0
  %v307 = vrcp.pop %v299
  %v308 = vmul.f32 %v299, %v307
  %v309 = vsub.f32 1.0, %v308
  %v310 = vmul.f32 %v307, %v309
  %v311 = vadd.f32 %v307, %v310
  %vm312 = vweird.f32 %v299
  %vm313 = vweird.f32 %v307
  %vm314 = vmor %vm312, %vm313
  %v315 = vsel %vm314, %v307, %v311
  %v316 = vand.u32 2147483647, %v299
  %vm317 = vcmp.eq.f32.partialorder %v316, 8.507059e+37
  %v318 = vand.u32 %v299, 2147483648
  %v319 = vor.u32 1.1754944e-38, %v318
  %v320 = vsel %vm317, %v319, %v315
  %v321 = vmul.f32 1.0, %v320
  %v322 = vrcp.pop %v300
  %v323 = vmul.f32 %v300, %v322
  %v324 = vsub.f32 1.0, %v323
  %v325 = vmul.f32 %v322, %v324
  %v326 = vadd.f32 %v322, %v325
  %vm327 = vweird.f32 %v300
  %vm328 = vweird.f32 %v322
  %vm329 = vmor %vm327, %vm328
  %v330 = vsel %vm329, %v322, %v326
  %v331 = vand.u32 2147483647, %v300
  %vm332 = vcmp.eq.f32.partialorder %v331, 8.507059e+37
  %v333 = vand.u32 %v300, 2147483648
  %v334 = vor.u32 1.1754944e-38, %v333
  %v335 = vsel %vm332, %v334, %v330
  %v336 = vmul.f32 1.0, %v335
  %v337 = vrcp.pop %v301
  %v338 = vmul.f32 %v301, %v337
  %v339 = vsub.f32 1.0, %v338
  %v340 = vmul.f32 %v337, %v339
  %v341 = vadd.f32 %v337, %v340
  %vm342 = vweird.f32 %v301
  %vm343 = vweird.f32 %v337
  %vm344 = vmor %vm342, %vm343
  %v345 = vsel %vm344, %v337, %v341
  %v346 = vand.u32 2147483647, %v301
  %vm347 = vcmp.eq.f32.partialorder %v346, 8.507059e+37
  %v348 = vand.u32 %v301, 2147483648
  %v349 = vor.u32 1.1754944e-38, %v348
  %v350 = vsel %vm347, %v349, %v345
  %v351 = vmul.f32 1.0, %v350
  %v352 = vrcp.pop %v302
  %v353 = vmul.f32 %v302, %v352
  %v354 = vsub.f32 1.0, %v353
  %v355 = vmul.f32 %v352, %v354
  %v356 = vadd.f32 %v352, %v355
  %vm357 = vweird.f32 %v302
  %vm358 = vweird.f32 %v352
  %vm359 = vmor %vm357, %vm358
  %v360 = vsel %vm359, %v352, %v356
  %v361 = vand.u32 2147483647, %v302
  %vm362 = vcmp.eq.f32.partialorder %v361, 8.507059e+37
  %v363 = vand.u32 %v302, 2147483648
  %v364 = vor.u32 1.1754944e-38, %v363
  %v365 = vsel %vm362, %v364, %v360
  %v366 = vmul.f32 1.0, %v365
  %v367 = vrcp.pop %v303
  %v368 = vmul.f32 %v303, %v367
  %v369 = vsub.f32 1.0, %v368
  %v370 = vmul.f32 %v367, %v369
  %v371 = vadd.f32 %v367, %v370
  %vm372 = vweird.f32 %v303
  %vm373 = vweird.f32 %v367
  %vm374 = vmor %vm372, %vm373
  %v375 = vsel %vm374, %v367, %v371
  %v376 = vand.u32 2147483647, %v303
  %vm377 = vcmp.eq.f32.partialorder %v376, 8.507059e+37
  %v378 = vand.u32 %v303, 2147483648
  %v379 = vor.u32 1.1754944e-38, %v378
  %v380 = vsel %vm377, %v379, %v375
  %v381 = vmul.f32 1.0, %v380
  %v382 = vrcp.pop %v304
  %v383 = vmul.f32 %v304, %v382
  %v384 = vsub.f32 1.0, %v383
  %v385 = vmul.f32 %v382, %v384
  %v386 = vadd.f32 %v382, %v385
  %vm387 = vweird.f32 %v304
  %vm388 = vweird.f32 %v382
  %vm389 = vmor %vm387, %vm388
  %v390 = vsel %vm389, %v382, %v386
  %v391 = vand.u32 2147483647, %v304
  %vm392 = vcmp.eq.f32.partialorder %v391, 8.507059e+37
  %v393 = vand.u32 %v304, 2147483648
  %v394 = vor.u32 1.1754944e-38, %v393
  %v395 = vsel %vm392, %v394, %v390
  %v396 = vmul.f32 1.0, %v395
  %v397 = vrcp.pop %v305
  %v398 = vmul.f32 %v305, %v397
  %v399 = vsub.f32 1.0, %v398
  %v400 = vmul.f32 %v397, %v399
  %v401 = vadd.f32 %v397, %v400
  %vm402 = vweird.f32 %v305
  %vm403 = vweird.f32 %v397
  %vm404 = vmor %vm402, %vm403
  %v405 = vsel %vm404, %v397, %v401
  %v406 = vand.u32 2147483647, %v305
  %vm407 = vcmp.eq.f32.partialorder %v406, 8.507059e+37
  %v408 = vand.u32 %v305, 2147483648
  %v409 = vor.u32 1.1754944e-38, %v408
  %v410 = vsel %vm407, %v409, %v405
  %v411 = vmul.f32 1.0, %v410
  %v412 = vrcp.pop %v306
  %v413 = vmul.f32 %v306, %v412
  %v414 = vsub.f32 1.0, %v413
  %v415 = vmul.f32 %v412, %v414
  %v416 = vadd.f32 %v412, %v415
  %vm417 = vweird.f32 %v306
  %vm418 = vweird.f32 %v412
  %vm419 = vmor %vm417, %vm418
  %v420 = vsel %vm419, %v412, %v416
  %v421 = vand.u32 2147483647, %v306
  %vm422 = vcmp.eq.f32.partialorder %v421, 8.507059e+37
  %v423 = vand.u32 %v306, 2147483648
  %v424 = vor.u32 1.1754944e-38, %v423
  %v425 = vsel %vm422, %v424, %v420
  %v426 = vmul.f32 1.0, %v425
  %427 = vst [vmem:[%s4] sm:$0xff] %v321
  %428 = vst [vmem:[%s4 + $0x8] sm:$0xff] %v336
  %429 = vst [vmem:[%s4 + $0x10] sm:$0xff] %v351
  %430 = vst [vmem:[%s4 + $0x18] sm:$0xff] %v366
  %431 = vst [vmem:[%s4 + $0x20] sm:$0xff] %v381
  %432 = vst [vmem:[%s4 + $0x28] sm:$0xff] %v396
  %433 = vst [vmem:[%s4 + $0x30] sm:$0xff] %v411
  %434 = vst [vmem:[%s4 + $0x38] sm:$0xff] %v426
  // Predicated region
  $region18: #{_lambda_.23} parent=0 // pred_check
    _
  $region19: #{_lambda_.23} parent=0 // pred_check_branch
    %436 = sbr.rel (0) target = $region21
  $region20: #{_lambda_.23} parent=0 // pred_region
    _
  $region21: #{_lambda_.23} parent=0 // pred_fallthru
    _
  // Predicated region
  $region22: #{_lambda_.23} parent=0 // pred_check
    _
  $region23: #{_lambda_.23} parent=0 // pred_check_branch
    %438 = sbr.rel (0) target = $region25
  $region24: #{_lambda_.23} parent=0 // pred_region
    _
  $region25: #{_lambda_.23} parent=0 // pred_fallthru
    _

</llo_original>
